<compile_context>
chip_gen: v6e
topology: v6e:2x2x1
jax: 0.10.0
libtpu: 0.0.40
codegen_flags: <defaults>
</compile_context>

<pallas_src>
import functools
import math

import jax
import jax.numpy as jnp
from jax.experimental import pallas as pl
from jax.experimental.pallas import tpu as pltpu

MAX_BM = 256   # rows tile
MAX_BN = 256   # output-feature tile
MAX_BK = 512   # contraction tile
LANE = 128


# ----------------------------------------------------------------------------
# Tiling / padding helpers
# ----------------------------------------------------------------------------
def _round_up(x, m):
    return (x + m - 1) // m * m


def _sublane_tiling(dim, max_tile):
    """(padded_dim, block) for a second-to-last-axis dimension."""
    if dim > max_tile:
        return _round_up(dim, max_tile), max_tile
    p = _round_up(dim, 8)
    return p, p          # full-dim block (allowed for any size)


def _lane_tiling(dim, max_tile):
    """(padded_dim, block) for a last-axis (128-lane) dimension."""
    if dim > max_tile:
        return _round_up(dim, max_tile), max_tile
    if dim % 8 == 0:     # already friendly -> full-dim block, no pad copy
        return dim, dim
    p = _round_up(dim, LANE)
    return p, p


def _pad2(a, rows, cols):
    """Zero-pad a 2-D array; no-op (no copy) when already the right shape."""
    r, c = a.shape
    if r == rows and c == cols:
        return a
    return jnp.pad(a, ((0, rows - r), (0, cols - c)))


# ----------------------------------------------------------------------------
# Pallas kernels
# ----------------------------------------------------------------------------
def _linear_kernel(*refs, relu, has_residual, has_ln):
    """out = LN(act(x @ w + b) [+ residual]); grid = (M/bm, N/bn, K/bk)."""
    it = iter(refs)
    x_ref = next(it)
    w_ref = next(it)
    b_ref = next(it)
    r_ref = next(it) if has_residual else None
    g_ref = next(it) if has_ln else None
    beta_ref = next(it) if has_ln else None
    o_ref = next(it)

    k = pl.program_id(2)

    @pl.when(k == 0)
    def _():
        o_ref[...] = jnp.zeros_like(o_ref)

    # bf16 x bf16 on the MXU, accumulate into the resident f32 output block.
    o_ref[...] += jnp.dot(x_ref[...], w_ref[...],
                          preferred_element_type=jnp.float32)

    @pl.when(k == pl.num_programs(2) - 1)
    def _():
        y = o_ref[...] + b_ref[...]
        if relu:
            y = jnp.maximum(y, 0.0)
        if has_residual:
            y = y + r_ref[...]
        if has_ln:
            # Fused LayerNorm: only used when the block spans the full,
            # unpadded feature width, so the lane-axis statistics are exact.
            mu = jnp.mean(y, axis=-1, keepdims=True)
            yc = y - mu
            var = jnp.mean(yc * yc, axis=-1, keepdims=True)
            y = yc * jax.lax.rsqrt(var + 1e-5) * g_ref[...] + beta_ref[...]
        o_ref[...] = y


def _attention_kernel(q_ref, k_ref, v_ref, o_ref, *, scale):
    """softmax(q k^T * scale) v for one (batch, head)."""
    q = q_ref[0]                                   # (Tq, dh) bf16
    k = k_ref[0]                                   # (Tk, dh) bf16
    v = v_ref[0]                                   # (Tk, dh) bf16
    s = jax.lax.dot_general(q, k, (((1,), (1,)), ((), ())),
                            preferred_element_type=jnp.float32) * scale
    m = jnp.max(s, axis=-1, keepdims=True)
    p = jnp.exp(s - m)
    p = p / jnp.sum(p, axis=-1, keepdims=True)
    o = jnp.dot(p.astype(v.dtype), v, preferred_element_type=jnp.float32)
    o_ref[0] = o.astype(o_ref.dtype)


def _layernorm_kernel(x_ref, g_ref, b_ref, o_ref):
    """Row-wise LayerNorm over the feature (lane) axis. eps = 1e-5."""
    x = x_ref[...].astype(jnp.float32)
    mu = jnp.mean(x, axis=-1, keepdims=True)
    xc = x - mu
    var = jnp.mean(xc * xc, axis=-1, keepdims=True)
    inv = jax.lax.rsqrt(var + 1e-5)
    o_ref[...] = (xc * inv * g_ref[...] + b_ref[...]).astype(o_ref.dtype)


# ----------------------------------------------------------------------------
# pallas_call wrappers
# ----------------------------------------------------------------------------
def pallas_layernorm(x, gamma, beta):
    """Row-gridded LayerNorm: x:(M,D) -> (M,D). Fallback when not fusable."""
    M, D = x.shape
    Mp, bm = _sublane_tiling(M, 512)
    x_p = _pad2(x, Mp, D)
    out = pl.pallas_call(
        _layernorm_kernel,
        out_shape=jax.ShapeDtypeStruct((Mp, D), jnp.float32),
        grid_spec=pltpu.PrefetchScalarGridSpec(
            num_scalar_prefetch=0,
            grid=(Mp // bm,),
            in_specs=[
                pl.BlockSpec((bm, D), lambda i: (i, 0)),
                pl.BlockSpec((1, D), lambda i: (0, 0)),
                pl.BlockSpec((1, D), lambda i: (0, 0)),
            ],
            out_specs=pl.BlockSpec((bm, D), lambda i: (i, 0)),
        ),
        compiler_params=pltpu.CompilerParams(
            dimension_semantics=("parallel",)),
    )(x_p, gamma.reshape(1, D).astype(jnp.float32),
      beta.reshape(1, D).astype(jnp.float32))
    return out[:M] if Mp != M else out


def pallas_linear(x, w, b, *, relu=False, residual=None, layernorm=None):
    """y = LN(act(x @ w + b) [+ residual]).

    x:(M,K) w:(K,N) b:(N,) residual:(M,N) layernorm: optional (gamma, beta).
    LayerNorm is fused into the matmul epilogue when the full (unpadded)
    feature width is resident in one output block; otherwise it falls back to
    pallas_layernorm.
    """
    M, K = x.shape
    K2, N = w.shape
    assert K == K2
    Mp, bm = _sublane_tiling(M, MAX_BM)
    Kp, bk = _lane_tiling(K, MAX_BK)
    Np, bn = _lane_tiling(N, MAX_BN)

    fuse_ln = (layernorm is not None) and (Np == N) and (bn == N)

    x_p = _pad2(x.astype(jnp.bfloat16), Mp, Kp)
    w_p = _pad2(w.astype(jnp.bfloat16), Kp, Np)
    b_p = _pad2(b.reshape(1, N).astype(jnp.float32), 1, Np)

    has_res = residual is not None
    args = [x_p, w_p, b_p]
    in_specs = [
        pl.BlockSpec((bm, bk), lambda i, j, k: (i, k)),
        pl.BlockSpec((bk, bn), lambda i, j, k: (k, j)),
        pl.BlockSpec((1, bn), lambda i, j, k: (0, j)),
    ]
    if has_res:
        args.append(_pad2(residual.astype(jnp.float32), Mp, Np))
        in_specs.append(pl.BlockSpec((bm, bn), lambda i, j, k: (i, j)))
    if fuse_ln:
        gamma, beta = layernorm
        args.append(gamma.reshape(1, N).astype(jnp.float32))
        args.append(beta.reshape(1, N).astype(jnp.float32))
        in_specs.append(pl.BlockSpec((1, bn), lambda i, j, k: (0, j)))
        in_specs.append(pl.BlockSpec((1, bn), lambda i, j, k: (0, j)))

    bytes_accessed = (M * K + K * N) * 2 + (M * N + N) * 4
    if has_res:
        bytes_accessed += M * N * 4

    out = pl.pallas_call(
        functools.partial(_linear_kernel, relu=relu, has_residual=has_res,
                          has_ln=fuse_ln),
        out_shape=jax.ShapeDtypeStruct((Mp, Np), jnp.float32),
        grid_spec=pltpu.PrefetchScalarGridSpec(
            num_scalar_prefetch=0,
            grid=(Mp // bm, Np // bn, Kp // bk),
            in_specs=in_specs,
            out_specs=pl.BlockSpec((bm, bn), lambda i, j, k: (i, j)),
        ),
        compiler_params=pltpu.CompilerParams(
            dimension_semantics=("parallel", "parallel", "arbitrary")),
        cost_estimate=pl.CostEstimate(
            flops=int(2 * M * N * K), transcendentals=0,
            bytes_accessed=int(bytes_accessed)),
    )(*args)
    if Mp != M or Np != N:
        out = out[:M, :N]
    if layernorm is not None and not fuse_ln:
        out = pallas_layernorm(out, *layernorm)
    return out


def pallas_attention(q, k, v):
    """q:(BH,Tq,dh) k,v:(BH,Tk,dh) f32 -> (BH,Tq,dh) f32 (bf16 MXU inside)."""
    BH, Tq, dh = q.shape
    _, Tk, _ = k.shape
    scale = 1.0 / math.sqrt(dh)
    return pl.pallas_call(
        functools.partial(_attention_kernel, scale=scale),
        out_shape=jax.ShapeDtypeStruct((BH, Tq, dh), jnp.float32),
        grid_spec=pltpu.PrefetchScalarGridSpec(
            num_scalar_prefetch=0,
            grid=(BH,),
            in_specs=[
                pl.BlockSpec((1, Tq, dh), lambda h: (h, 0, 0)),
                pl.BlockSpec((1, Tk, dh), lambda h: (h, 0, 0)),
                pl.BlockSpec((1, Tk, dh), lambda h: (h, 0, 0)),
            ],
            out_specs=pl.BlockSpec((1, Tq, dh), lambda h: (h, 0, 0)),
        ),
        compiler_params=pltpu.CompilerParams(
            dimension_semantics=("parallel",)),
    )(q.astype(jnp.bfloat16), k.astype(jnp.bfloat16), v.astype(jnp.bfloat16))


# ----------------------------------------------------------------------------
# Transformer building blocks (PyTorch post-norm semantics, eval mode)
# ----------------------------------------------------------------------------
def multi_head_attention(q_in, kv_in, p, nheads, *, self_attn):
    """q_in:(B,Tq,D) kv_in:(B,Tk,D) -> (B*Tq, D) concatenated heads (pre out-proj)."""
    B, Tq, D = q_in.shape
    _, Tk, _ = kv_in.shape
    dh = D // nheads
    q2 = q_in.reshape(B * Tq, D)

    if self_attn:
        # Fused QKV projection: one (K, 3D) matmul instead of three.
        wqkv = jnp.concatenate([p["wq"], p["wk"], p["wv"]], axis=1)
        bqkv = jnp.concatenate([p["bq"], p["bk"], p["bv"]])
        qkv = pallas_linear(q2, wqkv, bqkv)
        q, k, v = qkv[:, :D], qkv[:, D:2 * D], qkv[:, 2 * D:]
    else:
        kv2 = kv_in.reshape(B * Tk, D)
        q = pallas_linear(q2, p["wq"], p["bq"])
        # Fused KV projection on the memory.
        wkv = jnp.concatenate([p["wk"], p["wv"]], axis=1)
        bkv = jnp.concatenate([p["bk"], p["bv"]])
        kv = pallas_linear(kv2, wkv, bkv)
        k, v = kv[:, :D], kv[:, D:]

    def split(t, T):
        return (t.reshape(B, T, nheads, dh).transpose(0, 2, 1, 3)
                .reshape(B * nheads, T, dh))

    o = pallas_attention(split(q, Tq), split(k, Tk), split(v, Tk))
    return (o.reshape(B, nheads, Tq, dh).transpose(0, 2, 1, 3)
            .reshape(B * Tq, D))


def encoder_layer(x, lp, nhead):
    B, S, D = x.shape
    x2 = x.reshape(B * S, D)
    attn = multi_head_attention(x, x, lp["self"], nhead, self_attn=True)
    # out-proj + residual + LayerNorm fused in one kernel.
    h = pallas_linear(attn, lp["self"]["wo"], lp["self"]["bo"], residual=x2,
                      layernorm=(lp["ln1_g"], lp["ln1_b"]))
    ff = pallas_linear(h, lp["ff1_w"], lp["ff1_b"], relu=True)
    out = pallas_linear(ff, lp["ff2_w"], lp["ff2_b"], residual=h,
                        layernorm=(lp["ln2_g"], lp["ln2_b"]))
    return out.reshape(B, S, D)


def decoder_layer(t, memory, lp, nhead):
    B, T, D = t.shape
    t2 = t.reshape(B * T, D)
    sa = multi_head_attention(t, t, lp["self"], nhead, self_attn=True)
    h = pallas_linear(sa, lp["self"]["wo"], lp["self"]["bo"], residual=t2,
                      layernorm=(lp["ln1_g"], lp["ln1_b"]))
    ca = multi_head_attention(h.reshape(B, T, D), memory, lp["cross"], nhead,
                              self_attn=False)
    h2 = pallas_linear(ca, lp["cross"]["wo"], lp["cross"]["bo"], residual=h,
                       layernorm=(lp["ln2_g"], lp["ln2_b"]))
    ff = pallas_linear(h2, lp["ff1_w"], lp["ff1_b"], relu=True)
    out = pallas_linear(ff, lp["ff2_w"], lp["ff2_b"], residual=h2,
                        layernorm=(lp["ln3_g"], lp["ln3_b"]))
    return out.reshape(B, T, D)


def transformer_encoder_decoder_seg_forward(params, x, class_labels, coords, *,
                                            nhead):
    """Mirrors Transformer_EncoderDecoder_Seg.forward (eval-mode)."""
    B, S = x.shape[0], x.shape[1]
    D = params["proj_w"].shape[1]
    x = x.reshape(B, S, -1).astype(jnp.float32)                 # (B, S, E*E)
    h = pallas_linear(x.reshape(B * S, -1), params["proj_w"], params["proj_b"])
    h = h.reshape(B, S, D)
    for lp in params["enc"]:
        h = encoder_layer(h, lp, nhead)
    memory = h

    T = coords.shape[1]
    rep = jnp.broadcast_to(class_labels[:, None, :].astype(jnp.float32),
                           (B, T, class_labels.shape[-1]))
    tgt = jnp.concatenate([coords.astype(jnp.float32), rep], axis=-1)
    t = pallas_linear(tgt.reshape(B * T, -1), params["in_w"], params["in_b"],
                      relu=True)
    t = t.reshape(B, T, D)
    nhead_dec = nhead // 2
    for lp in params["dec"]:
        t = decoder_layer(t, memory, lp, nhead_dec)
    out = pallas_linear(t.reshape(B * T, D), params["final_w"],
                        params["final_b"])
    return out.reshape(B, T, params["final_w"].shape[1])


# ----------------------------------------------------------------------------
# Synthetic, deterministic parameter init (PyTorch-style Linear init)
# ----------------------------------------------------------------------------
def _linear_params(key, fan_in, fan_out):
    kw, kb = jax.random.split(key)
    bound = 1.0 / math.sqrt(fan_in)
    w = jax.random.uniform(kw, (fan_in, fan_out), jnp.float32, -bound, bound)
    b = jax.random.uniform(kb, (fan_out,), jnp.float32, -bound, bound)
    return w, b


def _attn_params(keys, D):
    p = {}
    for name in ("q", "k", "v", "o"):
        w, b = _linear_params(next(keys), D, D)
        p["w" + name] = w
        p["b" + name] = b
    return p


def _ln(D):
    return jnp.ones((D,), jnp.float32), jnp.zeros((D,), jnp.float32)


def _enc_layer_params(keys, D, dff):
    p = {"self": _attn_params(keys, D)}
    p["ff1_w"], p["ff1_b"] = _linear_params(next(keys), D, dff)
    p["ff2_w"], p["ff2_b"] = _linear_params(next(keys), dff, D)
    p["ln1_g"], p["ln1_b"] = _ln(D)
    p["ln2_g"], p["ln2_b"] = _ln(D)
    return p


def _dec_layer_params(keys, D, dff):
    p = {"self": _attn_params(keys, D), "cross": _attn_params(keys, D)}
    p["ff1_w"], p["ff1_b"] = _linear_params(next(keys), D, dff)
    p["ff2_w"], p["ff2_b"] = _linear_params(next(keys), dff, D)
    p["ln1_g"], p["ln1_b"] = _ln(D)
    p["ln2_g"], p["ln2_b"] = _ln(D)
    p["ln3_g"], p["ln3_b"] = _ln(D)
    return p


def init_params(key, *, embedding_dim, projection_dim, num_layers=8,
                num_classes=10, num_parts=50, dim_feedforward=1024):
    D = projection_dim
    keys = iter(jax.random.split(key, 512))
    params = {}
    params["proj_w"], params["proj_b"] = _linear_params(
        next(keys), embedding_dim * embedding_dim, D)
    params["enc"] = [_enc_layer_params(keys, D, dim_feedforward)
                     for _ in range(num_layers)]
    params["in_w"], params["in_b"] = _linear_params(
        next(keys), 63 + num_classes, D)
    params["dec"] = [_dec_layer_params(keys, D, dim_feedforward)
                     for _ in range(num_layers // 2)]
    params["final_w"], params["final_b"] = _linear_params(
        next(keys), D, num_parts)
    return params


# ----------------------------------------------------------------------------
# Example run
# ----------------------------------------------------------------------------
if __name__ == "__main__":
    key = jax.random.PRNGKey(0)
    kp, kx, kc, kl = jax.random.split(key, 4)

    # Small config consistent with the module:
    #   embedding_dim=8 -> tokens are (8,8) patches flattened to 64,
    #   projection_dim=64, nhead=4 (decoder uses nhead//2=2),
    #   num_layers=2 (decoder gets num_layers//2=1), num_classes=10, num_parts=50.
    B, S, T = 2, 8, 16
    E, D, nhead = 8, 64, 4
    num_layers, num_classes, num_parts = 2, 10, 50

    params = init_params(kp, embedding_dim=E, projection_dim=D,
                         num_layers=num_layers, num_classes=num_classes,
                         num_parts=num_parts)

    x = jax.random.normal(kx, (B, S, E, E), jnp.float32)        # token grid
    coords = jax.random.normal(kc, (B, T, 63), jnp.float32)     # point features
    class_labels = jax.nn.one_hot(
        jax.random.randint(kl, (B,), 0, num_classes), num_classes,
        dtype=jnp.float32)

    fwd = jax.jit(functools.partial(transformer_encoder_decoder_seg_forward,
                                    nhead=nhead))
    out = fwd(params, x, class_labels, coords)
    out = jax.block_until_ready(out)

    assert out.shape == (B, T, num_parts) and out.dtype == jnp.float32
    assert bool(jnp.all(jnp.isfinite(out)))
    print("KERNEL_OK")
</pallas_src>

<mosaic_0001>
module attributes {stable_mosaic.version = 11 : i64} {
  func.func @_linear_kernel(%arg0: i32, %arg1: i32, %arg2: i32, %arg3: memref<16x64xbf16, #tpu.memory_space<vmem>>, %arg4: memref<64x64xbf16, #tpu.memory_space<vmem>>, %arg5: memref<1x64xf32, #tpu.memory_space<vmem>>, %arg6: memref<16x64xf32, #tpu.memory_space<vmem>>) attributes {dimension_semantics = [#tpu.dimension_semantics<parallel>, #tpu.dimension_semantics<parallel>, #tpu.dimension_semantics<arbitrary>], iteration_bounds = array<i64: 1, 1, 1>, scalar_prefetch = 0 : i64, scratch_operands = 0 : i64, tpu.core_type = #tpu.core_type<tc>, window_params = [{transform_indices = @transform_0, window_bounds = array<i64: 16, 64>}, {transform_indices = @transform_1, window_bounds = array<i64: 64, 64>}, {transform_indices = @transform_2, window_bounds = array<i64: 1, 64>}, {transform_indices = @transform_3, window_bounds = array<i64: 16, 64>}]} {
    %c0_i32 = arith.constant 0 : i32
    %0 = arith.cmpi eq, %arg2, %c0_i32 : i32
    %1 = arith.extui %0 : i1 to i32
    %c0_i32_0 = arith.constant 0 : i32
    %2 = arith.cmpi ne, %1, %c0_i32_0 : i32
    scf.if %2 {
      %cst_10 = arith.constant 0.000000e+00 : f32
      %12 = vector.broadcast %cst_10 : f32 to vector<16x64xf32>
      %c0_11 = arith.constant 0 : index
      %c0_12 = arith.constant 0 : index
      %13 = vector.load %arg6[%c0_11, %c0_12] : memref<16x64xf32, #tpu.memory_space<vmem>>, vector<16x64xf32>
      tpu.vector_store %arg6[%c0_11, %c0_12], %12 {strides = array<i32>} : memref<16x64xf32, #tpu.memory_space<vmem>>, vector<16x64xf32>,
    } else {
    }
    %c0 = arith.constant 0 : index
    %c0_1 = arith.constant 0 : index
    %3 = vector.load %arg6[%c0, %c0_1] : memref<16x64xf32, #tpu.memory_space<vmem>>, vector<16x64xf32>
    %c0_2 = arith.constant 0 : index
    %c0_3 = arith.constant 0 : index
    %4 = vector.load %arg3[%c0_2, %c0_3] : memref<16x64xbf16, #tpu.memory_space<vmem>>, vector<16x64xbf16>
    %c0_4 = arith.constant 0 : index
    %c0_5 = arith.constant 0 : index
    %5 = vector.load %arg4[%c0_4, %c0_5] : memref<64x64xbf16, #tpu.memory_space<vmem>>, vector<64x64xbf16>
    %cst = arith.constant dense<0.000000e+00> : vector<16x64xf32>
    %6 = tpu.matmul %4, %5, %cst {dimension_numbers = #tpu.dot_dimension_numbers<[1], [0], [0], [1], [0, 0, 1, 1], [], []>} : vector<16x64xbf16>, vector<64x64xbf16>, vector<16x64xf32> -> vector<16x64xf32>
    %7 = arith.addf %3, %6 : vector<16x64xf32>
    %c0_6 = arith.constant 0 : index
    %c0_7 = arith.constant 0 : index
    %8 = vector.load %arg6[%c0_6, %c0_7] : memref<16x64xf32, #tpu.memory_space<vmem>>, vector<16x64xf32>
    tpu.vector_store %arg6[%c0_6, %c0_7], %7 {strides = array<i32>} : memref<16x64xf32, #tpu.memory_space<vmem>>, vector<16x64xf32>,
    %c0_i32_8 = arith.constant 0 : i32
    %9 = arith.cmpi eq, %arg2, %c0_i32_8 : i32
    %10 = arith.extui %9 : i1 to i32
    %c0_i32_9 = arith.constant 0 : i32
    %11 = arith.cmpi ne, %10, %c0_i32_9 : i32
    scf.if %11 {
      %c0_10 = arith.constant 0 : index
      %c0_11 = arith.constant 0 : index
      %12 = vector.load %arg6[%c0_10, %c0_11] : memref<16x64xf32, #tpu.memory_space<vmem>>, vector<16x64xf32>
      %c0_12 = arith.constant 0 : index
      %c0_13 = arith.constant 0 : index
      %13 = vector.load %arg5[%c0_12, %c0_13] : memref<1x64xf32, #tpu.memory_space<vmem>>, vector<1x64xf32>
      %14 = vector.broadcast %13 : vector<1x64xf32> to vector<16x64xf32>
      %15 = arith.addf %12, %14 : vector<16x64xf32>
      %c0_14 = arith.constant 0 : index
      %c0_15 = arith.constant 0 : index
      %16 = vector.load %arg6[%c0_14, %c0_15] : memref<16x64xf32, #tpu.memory_space<vmem>>, vector<16x64xf32>
      tpu.vector_store %arg6[%c0_14, %c0_15], %15 {strides = array<i32>} : memref<16x64xf32, #tpu.memory_space<vmem>>, vector<16x64xf32>,
    } else {
    }
    return
  }
  func.func @transform_0(%arg0: i32, %arg1: i32, %arg2: i32) -> (i32, i32) {
    %c0_i32 = arith.constant 0 : i32
    return %arg0, %arg2 : i32, i32
  }
  func.func @transform_1(%arg0: i32, %arg1: i32, %arg2: i32) -> (i32, i32) {
    %c0_i32 = arith.constant 0 : i32
    return %arg2, %arg1 : i32, i32
  }
  func.func @transform_2(%arg0: i32, %arg1: i32, %arg2: i32) -> (i32, i32) {
    %c0_i32 = arith.constant 0 : i32
    %c0_i32_0 = arith.constant 0 : i32
    return %c0_i32, %arg1 : i32, i32
  }
  func.func @transform_3(%arg0: i32, %arg1: i32, %arg2: i32) -> (i32, i32) {
    %c0_i32 = arith.constant 0 : i32
    return %arg0, %arg1 : i32, i32
  }
}

module attributes {stable_mosaic.version = 11 : i64} {
  func.func @_linear_kernel(%arg0: i32, %arg1: i32, %arg2: i32, %arg3: memref<16x64xbf16, #tpu.memory_space<vmem>>, %arg4: memref<64x192xbf16, #tpu.memory_space<vmem>>, %arg5: memref<1x192xf32, #tpu.memory_space<vmem>>, %arg6: memref<16x192xf32, #tpu.memory_space<vmem>>) attributes {dimension_semantics = [#tpu.dimension_semantics<parallel>, #tpu.dimension_semantics<parallel>, #tpu.dimension_semantics<arbitrary>], iteration_bounds = array<i64: 1, 1, 1>, scalar_prefetch = 0 : i64, scratch_operands = 0 : i64, tpu.core_type = #tpu.core_type<tc>, window_params = [{transform_indices = @transform_0, window_bounds = array<i64: 16, 64>}, {transform_indices = @transform_1, window_bounds = array<i64: 64, 192>}, {transform_indices = @transform_2, window_bounds = array<i64: 1, 192>}, {transform_indices = @transform_3, window_bounds = array<i64: 16, 192>}]} {
    %c0_i32 = arith.constant 0 : i32
    %0 = arith.cmpi eq, %arg2, %c0_i32 : i32
    %1 = arith.extui %0 : i1 to i32
    %c0_i32_0 = arith.constant 0 : i32
    %2 = arith.cmpi ne, %1, %c0_i32_0 : i32
    scf.if %2 {
      %cst_10 = arith.constant 0.000000e+00 : f32
      %12 = vector.broadcast %cst_10 : f32 to vector<16x192xf32>
      %c0_11 = arith.constant 0 : index
      %c0_12 = arith.constant 0 : index
      %13 = vector.load %arg6[%c0_11, %c0_12] : memref<16x192xf32, #tpu.memory_space<vmem>>, vector<16x192xf32>
      tpu.vector_store %arg6[%c0_11, %c0_12], %12 {strides = array<i32>} : memref<16x192xf32, #tpu.memory_space<vmem>>, vector<16x192xf32>,
    } else {
    }
    %c0 = arith.constant 0 : index
    %c0_1 = arith.constant 0 : index
    %3 = vector.load %arg6[%c0, %c0_1] : memref<16x192xf32, #tpu.memory_space<vmem>>, vector<16x192xf32>
    %c0_2 = arith.constant 0 : index
    %c0_3 = arith.constant 0 : index
    %4 = vector.load %arg3[%c0_2, %c0_3] : memref<16x64xbf16, #tpu.memory_space<vmem>>, vector<16x64xbf16>
    %c0_4 = arith.constant 0 : index
    %c0_5 = arith.constant 0 : index
    %5 = vector.load %arg4[%c0_4, %c0_5] : memref<64x192xbf16, #tpu.memory_space<vmem>>, vector<64x192xbf16>
    %cst = arith.constant dense<0.000000e+00> : vector<16x192xf32>
    %6 = tpu.matmul %4, %5, %cst {dimension_numbers = #tpu.dot_dimension_numbers<[1], [0], [0], [1], [0, 0, 1, 1], [], []>} : vector<16x64xbf16>, vector<64x192xbf16>, vector<16x192xf32> -> vector<16x192xf32>
    %7 = arith.addf %3, %6 : vector<16x192xf32>
    %c0_6 = arith.constant 0 : index
    %c0_7 = arith.constant 0 : index
    %8 = vector.load %arg6[%c0_6, %c0_7] : memref<16x192xf32, #tpu.memory_space<vmem>>, vector<16x192xf32>
    tpu.vector_store %arg6[%c0_6, %c0_7], %7 {strides = array<i32>} : memref<16x192xf32, #tpu.memory_space<vmem>>, vector<16x192xf32>,
    %c0_i32_8 = arith.constant 0 : i32
    %9 = arith.cmpi eq, %arg2, %c0_i32_8 : i32
    %10 = arith.extui %9 : i1 to i32
    %c0_i32_9 = arith.constant 0 : i32
    %11 = arith.cmpi ne, %10, %c0_i32_9 : i32
    scf.if %11 {
      %c0_10 = arith.constant 0 : index
      %c0_11 = arith.constant 0 : index
      %12 = vector.load %arg6[%c0_10, %c0_11] : memref<16x192xf32, #tpu.memory_space<vmem>>, vector<16x192xf32>
      %c0_12 = arith.constant 0 : index
      %c0_13 = arith.constant 0 : index
      %13 = vector.load %arg5[%c0_12, %c0_13] : memref<1x192xf32, #tpu.memory_space<vmem>>, vector<1x192xf32>
      %14 = vector.broadcast %13 : vector<1x192xf32> to vector<16x192xf32>
      %15 = arith.addf %12, %14 : vector<16x192xf32>
      %c0_14 = arith.constant 0 : index
      %c0_15 = arith.constant 0 : index
      %16 = vector.load %arg6[%c0_14, %c0_15] : memref<16x192xf32, #tpu.memory_space<vmem>>, vector<16x192xf32>
      tpu.vector_store %arg6[%c0_14, %c0_15], %15 {strides = array<i32>} : memref<16x192xf32, #tpu.memory_space<vmem>>, vector<16x192xf32>,
    } else {
    }
    return
  }
  func.func @transform_0(%arg0: i32, %arg1: i32, %arg2: i32) -> (i32, i32) {
    %c0_i32 = arith.constant 0 : i32
    return %arg0, %arg2 : i32, i32
  }
  func.func @transform_1(%arg0: i32, %arg1: i32, %arg2: i32) -> (i32, i32) {
    %c0_i32 = arith.constant 0 : i32
    return %arg2, %arg1 : i32, i32
  }
  func.func @transform_2(%arg0: i32, %arg1: i32, %arg2: i32) -> (i32, i32) {
    %c0_i32 = arith.constant 0 : i32
    %c0_i32_0 = arith.constant 0 : i32
    return %c0_i32, %arg1 : i32, i32
  }
  func.func @transform_3(%arg0: i32, %arg1: i32, %arg2: i32) -> (i32, i32) {
    %c0_i32 = arith.constant 0 : i32
    return %arg0, %arg1 : i32, i32
  }
}

module attributes {stable_mosaic.version = 11 : i64} {
  func.func @_attention_kernel(%arg0: i32, %arg1: memref<1x8x16xbf16, #tpu.memory_space<vmem>>, %arg2: memref<1x8x16xbf16, #tpu.memory_space<vmem>>, %arg3: memref<1x8x16xbf16, #tpu.memory_space<vmem>>, %arg4: memref<1x8x16xf32, #tpu.memory_space<vmem>>) attributes {dimension_semantics = [#tpu.dimension_semantics<parallel>], iteration_bounds = array<i64: 8>, scalar_prefetch = 0 : i64, scratch_operands = 0 : i64, tpu.core_type = #tpu.core_type<tc>, window_params = [{transform_indices = @transform_0, window_bounds = array<i64: 1, 8, 16>}, {transform_indices = @transform_1, window_bounds = array<i64: 1, 8, 16>}, {transform_indices = @transform_2, window_bounds = array<i64: 1, 8, 16>}, {transform_indices = @transform_3, window_bounds = array<i64: 1, 8, 16>}]} {
    %c0 = arith.constant 0 : index
    %c0_0 = arith.constant 0 : index
    %c0_1 = arith.constant 0 : index
    %0 = vector.load %arg1[%c0, %c0_0, %c0_1] : memref<1x8x16xbf16, #tpu.memory_space<vmem>>, vector<1x8x16xbf16>
    %1 = vector.shape_cast %0 : vector<1x8x16xbf16> to vector<8x16xbf16>
    %c0_2 = arith.constant 0 : index
    %c0_3 = arith.constant 0 : index
    %c0_4 = arith.constant 0 : index
    %2 = vector.load %arg2[%c0_2, %c0_3, %c0_4] : memref<1x8x16xbf16, #tpu.memory_space<vmem>>, vector<1x8x16xbf16>
    %3 = vector.shape_cast %2 : vector<1x8x16xbf16> to vector<8x16xbf16>
    %c0_5 = arith.constant 0 : index
    %c0_6 = arith.constant 0 : index
    %c0_7 = arith.constant 0 : index
    %4 = vector.load %arg3[%c0_5, %c0_6, %c0_7] : memref<1x8x16xbf16, #tpu.memory_space<vmem>>, vector<1x8x16xbf16>
    %5 = vector.shape_cast %4 : vector<1x8x16xbf16> to vector<8x16xbf16>
    %cst = arith.constant dense<0.000000e+00> : vector<8x8xf32>
    %6 = tpu.matmul %1, %3, %cst {dimension_numbers = #tpu.dot_dimension_numbers<[1], [1], [0], [0], [0, 0, 1, 0], [], []>} : vector<8x16xbf16>, vector<8x16xbf16>, vector<8x8xf32> -> vector<8x8xf32>
    %cst_8 = arith.constant 2.500000e-01 : f32
    %7 = vector.broadcast %cst_8 : f32 to vector<8x8xf32>
    %8 = arith.mulf %6, %7 : vector<8x8xf32>
    %cst_9 = arith.constant dense<0xFF800000> : vector<8xf32>
    %9 = vector.multi_reduction <maximumf>, %8, %cst_9 [1] : vector<8x8xf32> to vector<8xf32>
    %10 = vector.shape_cast %9 : vector<8xf32> to vector<8x1xf32>
    %11 = vector.broadcast %10 : vector<8x1xf32> to vector<8x8xf32>
    %12 = arith.subf %8, %11 : vector<8x8xf32>
    %13 = math.exp %12 : vector<8x8xf32>
    %cst_10 = arith.constant dense<0.000000e+00> : vector<8xf32>
    %14 = vector.multi_reduction <add>, %13, %cst_10 [1] : vector<8x8xf32> to vector<8xf32>
    %15 = vector.shape_cast %14 : vector<8xf32> to vector<8x1xf32>
    %16 = vector.broadcast %15 : vector<8x1xf32> to vector<8x8xf32>
    %17 = arith.divf %13, %16 : vector<8x8xf32>
    %18 = arith.truncf %17 : vector<8x8xf32> to vector<8x8xbf16>
    %cst_11 = arith.constant dense<0.000000e+00> : vector<8x16xf32>
    %19 = tpu.matmul %18, %5, %cst_11 {dimension_numbers = #tpu.dot_dimension_numbers<[1], [0], [0], [1], [0, 0, 1, 1], [], []>} : vector<8x8xbf16>, vector<8x16xbf16>, vector<8x16xf32> -> vector<8x16xf32>
    %c0_12 = arith.constant 0 : index
    %c0_13 = arith.constant 0 : index
    %c0_14 = arith.constant 0 : index
    %20 = vector.load %arg4[%c0_12, %c0_13, %c0_14] : memref<1x8x16xf32, #tpu.memory_space<vmem>>, vector<1x8x16xf32>
    %21 = vector.shape_cast %20 : vector<1x8x16xf32> to vector<8x16xf32>
    %22 = vector.shape_cast %19 : vector<8x16xf32> to vector<1x8x16xf32>
    tpu.vector_store %arg4[%c0_12, %c0_13, %c0_14], %22 {strides = array<i32>} : memref<1x8x16xf32, #tpu.memory_space<vmem>>, vector<1x8x16xf32>,
    return
  }
  func.func @transform_0(%arg0: i32) -> (i32, i32, i32) {
    %c0_i32 = arith.constant 0 : i32
    %c0_i32_0 = arith.constant 0 : i32
    %c0_i32_1 = arith.constant 0 : i32
    return %arg0, %c0_i32, %c0_i32_0 : i32, i32, i32
  }
  func.func @transform_1(%arg0: i32) -> (i32, i32, i32) {
    %c0_i32 = arith.constant 0 : i32
    %c0_i32_0 = arith.constant 0 : i32
    %c0_i32_1 = arith.constant 0 : i32
    return %arg0, %c0_i32, %c0_i32_0 : i32, i32, i32
  }
  func.func @transform_2(%arg0: i32) -> (i32, i32, i32) {
    %c0_i32 = arith.constant 0 : i32
    %c0_i32_0 = arith.constant 0 : i32
    %c0_i32_1 = arith.constant 0 : i32
    return %arg0, %c0_i32, %c0_i32_0 : i32, i32, i32
  }
  func.func @transform_3(%arg0: i32) -> (i32, i32, i32) {
    %c0_i32 = arith.constant 0 : i32
    %c0_i32_0 = arith.constant 0 : i32
    %c0_i32_1 = arith.constant 0 : i32
    return %arg0, %c0_i32, %c0_i32_0 : i32, i32, i32
  }
}

module attributes {stable_mosaic.version = 11 : i64} {
  func.func @_linear_kernel(%arg0: i32, %arg1: i32, %arg2: i32, %arg3: memref<16x64xbf16, #tpu.memory_space<vmem>>, %arg4: memref<64x256xbf16, #tpu.memory_space<vmem>>, %arg5: memref<1x256xf32, #tpu.memory_space<vmem>>, %arg6: memref<16x256xf32, #tpu.memory_space<vmem>>) attributes {dimension_semantics = [#tpu.dimension_semantics<parallel>, #tpu.dimension_semantics<parallel>, #tpu.dimension_semantics<arbitrary>], iteration_bounds = array<i64: 1, 4, 1>, scalar_prefetch = 0 : i64, scratch_operands = 0 : i64, tpu.core_type = #tpu.core_type<tc>, window_params = [{transform_indices = @transform_0, window_bounds = array<i64: 16, 64>}, {transform_indices = @transform_1, window_bounds = array<i64: 64, 256>}, {transform_indices = @transform_2, window_bounds = array<i64: 1, 256>}, {transform_indices = @transform_3, window_bounds = array<i64: 16, 256>}]} {
    %c0_i32 = arith.constant 0 : i32
    %0 = arith.cmpi eq, %arg2, %c0_i32 : i32
    %1 = arith.extui %0 : i1 to i32
    %c0_i32_0 = arith.constant 0 : i32
    %2 = arith.cmpi ne, %1, %c0_i32_0 : i32
    scf.if %2 {
      %cst_10 = arith.constant 0.000000e+00 : f32
      %12 = vector.broadcast %cst_10 : f32 to vector<16x256xf32>
      %c0_11 = arith.constant 0 : index
      %c0_12 = arith.constant 0 : index
      %13 = vector.load %arg6[%c0_11, %c0_12] : memref<16x256xf32, #tpu.memory_space<vmem>>, vector<16x256xf32>
      tpu.vector_store %arg6[%c0_11, %c0_12], %12 {strides = array<i32>} : memref<16x256xf32, #tpu.memory_space<vmem>>, vector<16x256xf32>,
    } else {
    }
    %c0 = arith.constant 0 : index
    %c0_1 = arith.constant 0 : index
    %3 = vector.load %arg6[%c0, %c0_1] : memref<16x256xf32, #tpu.memory_space<vmem>>, vector<16x256xf32>
    %c0_2 = arith.constant 0 : index
    %c0_3 = arith.constant 0 : index
    %4 = vector.load %arg3[%c0_2, %c0_3] : memref<16x64xbf16, #tpu.memory_space<vmem>>, vector<16x64xbf16>
    %c0_4 = arith.constant 0 : index
    %c0_5 = arith.constant 0 : index
    %5 = vector.load %arg4[%c0_4, %c0_5] : memref<64x256xbf16, #tpu.memory_space<vmem>>, vector<64x256xbf16>
    %cst = arith.constant dense<0.000000e+00> : vector<16x256xf32>
    %6 = tpu.matmul %4, %5, %cst {dimension_numbers = #tpu.dot_dimension_numbers<[1], [0], [0], [1], [0, 0, 1, 1], [], []>} : vector<16x64xbf16>, vector<64x256xbf16>, vector<16x256xf32> -> vector<16x256xf32>
    %7 = arith.addf %3, %6 : vector<16x256xf32>
    %c0_6 = arith.constant 0 : index
    %c0_7 = arith.constant 0 : index
    %8 = vector.load %arg6[%c0_6, %c0_7] : memref<16x256xf32, #tpu.memory_space<vmem>>, vector<16x256xf32>
    tpu.vector_store %arg6[%c0_6, %c0_7], %7 {strides = array<i32>} : memref<16x256xf32, #tpu.memory_space<vmem>>, vector<16x256xf32>,
    %c0_i32_8 = arith.constant 0 : i32
    %9 = arith.cmpi eq, %arg2, %c0_i32_8 : i32
    %10 = arith.extui %9 : i1 to i32
    %c0_i32_9 = arith.constant 0 : i32
    %11 = arith.cmpi ne, %10, %c0_i32_9 : i32
    scf.if %11 {
      %c0_10 = arith.constant 0 : index
      %c0_11 = arith.constant 0 : index
      %12 = vector.load %arg6[%c0_10, %c0_11] : memref<16x256xf32, #tpu.memory_space<vmem>>, vector<16x256xf32>
      %c0_12 = arith.constant 0 : index
      %c0_13 = arith.constant 0 : index
      %13 = vector.load %arg5[%c0_12, %c0_13] : memref<1x256xf32, #tpu.memory_space<vmem>>, vector<1x256xf32>
      %14 = vector.broadcast %13 : vector<1x256xf32> to vector<16x256xf32>
      %15 = arith.addf %12, %14 : vector<16x256xf32>
      %cst_14 = arith.constant 0.000000e+00 : f32
      %16 = vector.broadcast %cst_14 : f32 to vector<16x256xf32>
      %17 = arith.maximumf %15, %16 : vector<16x256xf32>
      %c0_15 = arith.constant 0 : index
      %c0_16 = arith.constant 0 : index
      %18 = vector.load %arg6[%c0_15, %c0_16] : memref<16x256xf32, #tpu.memory_space<vmem>>, vector<16x256xf32>
      tpu.vector_store %arg6[%c0_15, %c0_16], %17 {strides = array<i32>} : memref<16x256xf32, #tpu.memory_space<vmem>>, vector<16x256xf32>,
    } else {
    }
    return
  }
  func.func @transform_0(%arg0: i32, %arg1: i32, %arg2: i32) -> (i32, i32) {
    %c0_i32 = arith.constant 0 : i32
    return %arg0, %arg2 : i32, i32
  }
  func.func @transform_1(%arg0: i32, %arg1: i32, %arg2: i32) -> (i32, i32) {
    %c0_i32 = arith.constant 0 : i32
    return %arg2, %arg1 : i32, i32
  }
  func.func @transform_2(%arg0: i32, %arg1: i32, %arg2: i32) -> (i32, i32) {
    %c0_i32 = arith.constant 0 : i32
    %c0_i32_0 = arith.constant 0 : i32
    return %c0_i32, %arg1 : i32, i32
  }
  func.func @transform_3(%arg0: i32, %arg1: i32, %arg2: i32) -> (i32, i32) {
    %c0_i32 = arith.constant 0 : i32
    return %arg0, %arg1 : i32, i32
  }
}

module attributes {stable_mosaic.version = 11 : i64} {
  func.func @_linear_kernel(%arg0: i32, %arg1: i32, %arg2: i32, %arg3: memref<16x64xbf16, #tpu.memory_space<vmem>>, %arg4: memref<64x64xbf16, #tpu.memory_space<vmem>>, %arg5: memref<1x64xf32, #tpu.memory_space<vmem>>, %arg6: memref<16x64xf32, #tpu.memory_space<vmem>>, %arg7: memref<1x64xf32, #tpu.memory_space<vmem>>, %arg8: memref<1x64xf32, #tpu.memory_space<vmem>>, %arg9: memref<16x64xf32, #tpu.memory_space<vmem>>) attributes {dimension_semantics = [#tpu.dimension_semantics<parallel>, #tpu.dimension_semantics<parallel>, #tpu.dimension_semantics<arbitrary>], iteration_bounds = array<i64: 1, 1, 1>, scalar_prefetch = 0 : i64, scratch_operands = 0 : i64, tpu.core_type = #tpu.core_type<tc>, window_params = [{transform_indices = @transform_0, window_bounds = array<i64: 16, 64>}, {transform_indices = @transform_1, window_bounds = array<i64: 64, 64>}, {transform_indices = @transform_2, window_bounds = array<i64: 1, 64>}, {transform_indices = @transform_3, window_bounds = array<i64: 16, 64>}, {transform_indices = @transform_4, window_bounds = array<i64: 1, 64>}, {transform_indices = @transform_5, window_bounds = array<i64: 1, 64>}, {transform_indices = @transform_6, window_bounds = array<i64: 16, 64>}]} {
    %c0_i32 = arith.constant 0 : i32
    %0 = arith.cmpi eq, %arg2, %c0_i32 : i32
    %1 = arith.extui %0 : i1 to i32
    %c0_i32_0 = arith.constant 0 : i32
    %2 = arith.cmpi ne, %1, %c0_i32_0 : i32
    scf.if %2 {
      %cst_10 = arith.constant 0.000000e+00 : f32
      %12 = vector.broadcast %cst_10 : f32 to vector<16x64xf32>
      %c0_11 = arith.constant 0 : index
      %c0_12 = arith.constant 0 : index
      %13 = vector.load %arg9[%c0_11, %c0_12] : memref<16x64xf32, #tpu.memory_space<vmem>>, vector<16x64xf32>
      tpu.vector_store %arg9[%c0_11, %c0_12], %12 {strides = array<i32>} : memref<16x64xf32, #tpu.memory_space<vmem>>, vector<16x64xf32>,
    } else {
    }
    %c0 = arith.constant 0 : index
    %c0_1 = arith.constant 0 : index
    %3 = vector.load %arg9[%c0, %c0_1] : memref<16x64xf32, #tpu.memory_space<vmem>>, vector<16x64xf32>
    %c0_2 = arith.constant 0 : index
    %c0_3 = arith.constant 0 : index
    %4 = vector.load %arg3[%c0_2, %c0_3] : memref<16x64xbf16, #tpu.memory_space<vmem>>, vector<16x64xbf16>
    %c0_4 = arith.constant 0 : index
    %c0_5 = arith.constant 0 : index
    %5 = vector.load %arg4[%c0_4, %c0_5] : memref<64x64xbf16, #tpu.memory_space<vmem>>, vector<64x64xbf16>
    %cst = arith.constant dense<0.000000e+00> : vector<16x64xf32>
    %6 = tpu.matmul %4, %5, %cst {dimension_numbers = #tpu.dot_dimension_numbers<[1], [0], [0], [1], [0, 0, 1, 1], [], []>} : vector<16x64xbf16>, vector<64x64xbf16>, vector<16x64xf32> -> vector<16x64xf32>
    %7 = arith.addf %3, %6 : vector<16x64xf32>
    %c0_6 = arith.constant 0 : index
    %c0_7 = arith.constant 0 : index
    %8 = vector.load %arg9[%c0_6, %c0_7] : memref<16x64xf32, #tpu.memory_space<vmem>>, vector<16x64xf32>
    tpu.vector_store %arg9[%c0_6, %c0_7], %7 {strides = array<i32>} : memref<16x64xf32, #tpu.memory_space<vmem>>, vector<16x64xf32>,
    %c0_i32_8 = arith.constant 0 : i32
    %9 = arith.cmpi eq, %arg2, %c0_i32_8 : i32
    %10 = arith.extui %9 : i1 to i32
    %c0_i32_9 = arith.constant 0 : i32
    %11 = arith.cmpi ne, %10, %c0_i32_9 : i32
    scf.if %11 {
      %c0_10 = arith.constant 0 : index
      %c0_11 = arith.constant 0 : index
      %12 = vector.load %arg9[%c0_10, %c0_11] : memref<16x64xf32, #tpu.memory_space<vmem>>, vector<16x64xf32>
      %c0_12 = arith.constant 0 : index
      %c0_13 = arith.constant 0 : index
      %13 = vector.load %arg5[%c0_12, %c0_13] : memref<1x64xf32, #tpu.memory_space<vmem>>, vector<1x64xf32>
      %14 = vector.broadcast %13 : vector<1x64xf32> to vector<16x64xf32>
      %15 = arith.addf %12, %14 : vector<16x64xf32>
      %c0_14 = arith.constant 0 : index
      %c0_15 = arith.constant 0 : index
      %16 = vector.load %arg6[%c0_14, %c0_15] : memref<16x64xf32, #tpu.memory_space<vmem>>, vector<16x64xf32>
      %17 = arith.addf %15, %16 : vector<16x64xf32>
      %cst_16 = arith.constant dense<0.000000e+00> : vector<16xf32>
      %18 = vector.multi_reduction <add>, %17, %cst_16 [1] : vector<16x64xf32> to vector<16xf32>
      %19 = vector.shape_cast %18 : vector<16xf32> to vector<16x1xf32>
      %cst_17 = arith.constant 6.400000e+01 : f32
      %20 = vector.broadcast %cst_17 : f32 to vector<16x1xf32>
      %21 = arith.divf %19, %20 : vector<16x1xf32>
      %22 = vector.broadcast %21 : vector<16x1xf32> to vector<16x64xf32>
      %23 = arith.subf %17, %22 : vector<16x64xf32>
      %24 = arith.mulf %23, %23 : vector<16x64xf32>
      %cst_18 = arith.constant dense<0.000000e+00> : vector<16xf32>
      %25 = vector.multi_reduction <add>, %24, %cst_18 [1] : vector<16x64xf32> to vector<16xf32>
      %26 = vector.shape_cast %25 : vector<16xf32> to vector<16x1xf32>
      %cst_19 = arith.constant 6.400000e+01 : f32
      %27 = vector.broadcast %cst_19 : f32 to vector<16x1xf32>
      %28 = arith.divf %26, %27 : vector<16x1xf32>
      %cst_20 = arith.constant 9.99999974E-6 : f32
      %29 = vector.broadcast %cst_20 : f32 to vector<16x1xf32>
      %30 = arith.addf %28, %29 : vector<16x1xf32>
      %31 = math.rsqrt %30 : vector<16x1xf32>
      %32 = vector.broadcast %31 : vector<16x1xf32> to vector<16x64xf32>
      %33 = arith.mulf %23, %32 : vector<16x64xf32>
      %c0_21 = arith.constant 0 : index
      %c0_22 = arith.constant 0 : index
      %34 = vector.load %arg7[%c0_21, %c0_22] : memref<1x64xf32, #tpu.memory_space<vmem>>, vector<1x64xf32>
      %35 = vector.broadcast %34 : vector<1x64xf32> to vector<16x64xf32>
      %36 = arith.mulf %33, %35 : vector<16x64xf32>
      %c0_23 = arith.constant 0 : index
      %c0_24 = arith.constant 0 : index
      %37 = vector.load %arg8[%c0_23, %c0_24] : memref<1x64xf32, #tpu.memory_space<vmem>>, vector<1x64xf32>
      %38 = vector.broadcast %37 : vector<1x64xf32> to vector<16x64xf32>
      %39 = arith.addf %36, %38 : vector<16x64xf32>
      %c0_25 = arith.constant 0 : index
      %c0_26 = arith.constant 0 : index
      %40 = vector.load %arg9[%c0_25, %c0_26] : memref<16x64xf32, #tpu.memory_space<vmem>>, vector<16x64xf32>
      tpu.vector_store %arg9[%c0_25, %c0_26], %39 {strides = array<i32>} : memref<16x64xf32, #tpu.memory_space<vmem>>, vector<16x64xf32>,
    } else {
    }
    return
  }
  func.func @transform_0(%arg0: i32, %arg1: i32, %arg2: i32) -> (i32, i32) {
    %c0_i32 = arith.constant 0 : i32
    return %arg0, %arg2 : i32, i32
  }
  func.func @transform_1(%arg0: i32, %arg1: i32, %arg2: i32) -> (i32, i32) {
    %c0_i32 = arith.constant 0 : i32
    return %arg2, %arg1 : i32, i32
  }
  func.func @transform_2(%arg0: i32, %arg1: i32, %arg2: i32) -> (i32, i32) {
    %c0_i32 = arith.constant 0 : i32
    %c0_i32_0 = arith.constant 0 : i32
    return %c0_i32, %arg1 : i32, i32
  }
  func.func @transform_3(%arg0: i32, %arg1: i32, %arg2: i32) -> (i32, i32) {
    %c0_i32 = arith.constant 0 : i32
    return %arg0, %arg1 : i32, i32
  }
  func.func @transform_4(%arg0: i32, %arg1: i32, %arg2: i32) -> (i32, i32) {
    %c0_i32 = arith.constant 0 : i32
    %c0_i32_0 = arith.constant 0 : i32
    return %c0_i32, %arg1 : i32, i32
  }
  func.func @transform_5(%arg0: i32, %arg1: i32, %arg2: i32) -> (i32, i32) {
    %c0_i32 = arith.constant 0 : i32
    %c0_i32_0 = arith.constant 0 : i32
    return %c0_i32, %arg1 : i32, i32
  }
  func.func @transform_6(%arg0: i32, %arg1: i32, %arg2: i32) -> (i32, i32) {
    %c0_i32 = arith.constant 0 : i32
    return %arg0, %arg1 : i32, i32
  }
}

module attributes {stable_mosaic.version = 11 : i64} {
  func.func @_linear_kernel(%arg0: i32, %arg1: i32, %arg2: i32, %arg3: memref<16x512xbf16, #tpu.memory_space<vmem>>, %arg4: memref<512x64xbf16, #tpu.memory_space<vmem>>, %arg5: memref<1x64xf32, #tpu.memory_space<vmem>>, %arg6: memref<16x64xf32, #tpu.memory_space<vmem>>, %arg7: memref<1x64xf32, #tpu.memory_space<vmem>>, %arg8: memref<1x64xf32, #tpu.memory_space<vmem>>, %arg9: memref<16x64xf32, #tpu.memory_space<vmem>>) attributes {dimension_semantics = [#tpu.dimension_semantics<parallel>, #tpu.dimension_semantics<parallel>, #tpu.dimension_semantics<arbitrary>], iteration_bounds = array<i64: 1, 1, 2>, scalar_prefetch = 0 : i64, scratch_operands = 0 : i64, tpu.core_type = #tpu.core_type<tc>, window_params = [{transform_indices = @transform_0, window_bounds = array<i64: 16, 512>}, {transform_indices = @transform_1, window_bounds = array<i64: 512, 64>}, {transform_indices = @transform_2, window_bounds = array<i64: 1, 64>}, {transform_indices = @transform_3, window_bounds = array<i64: 16, 64>}, {transform_indices = @transform_4, window_bounds = array<i64: 1, 64>}, {transform_indices = @transform_5, window_bounds = array<i64: 1, 64>}, {transform_indices = @transform_6, window_bounds = array<i64: 16, 64>}]} {
    %c0_i32 = arith.constant 0 : i32
    %0 = arith.cmpi eq, %arg2, %c0_i32 : i32
    %1 = arith.extui %0 : i1 to i32
    %c0_i32_0 = arith.constant 0 : i32
    %2 = arith.cmpi ne, %1, %c0_i32_0 : i32
    scf.if %2 {
      %cst_9 = arith.constant 0.000000e+00 : f32
      %12 = vector.broadcast %cst_9 : f32 to vector<16x64xf32>
      %c0_10 = arith.constant 0 : index
      %c0_11 = arith.constant 0 : index
      %13 = vector.load %arg9[%c0_10, %c0_11] : memref<16x64xf32, #tpu.memory_space<vmem>>, vector<16x64xf32>
      tpu.vector_store %arg9[%c0_10, %c0_11], %12 {strides = array<i32>} : memref<16x64xf32, #tpu.memory_space<vmem>>, vector<16x64xf32>,
    } else {
    }
    %c0 = arith.constant 0 : index
    %c0_1 = arith.constant 0 : index
    %3 = vector.load %arg9[%c0, %c0_1] : memref<16x64xf32, #tpu.memory_space<vmem>>, vector<16x64xf32>
    %c0_2 = arith.constant 0 : index
    %c0_3 = arith.constant 0 : index
    %4 = vector.load %arg3[%c0_2, %c0_3] : memref<16x512xbf16, #tpu.memory_space<vmem>>, vector<16x512xbf16>
    %c0_4 = arith.constant 0 : index
    %c0_5 = arith.constant 0 : index
    %5 = vector.load %arg4[%c0_4, %c0_5] : memref<512x64xbf16, #tpu.memory_space<vmem>>, vector<512x64xbf16>
    %cst = arith.constant dense<0.000000e+00> : vector<16x64xf32>
    %6 = tpu.matmul %4, %5, %cst {dimension_numbers = #tpu.dot_dimension_numbers<[1], [0], [0], [1], [0, 0, 1, 1], [], []>} : vector<16x512xbf16>, vector<512x64xbf16>, vector<16x64xf32> -> vector<16x64xf32>
    %7 = arith.addf %3, %6 : vector<16x64xf32>
    %c0_6 = arith.constant 0 : index
    %c0_7 = arith.constant 0 : index
    %8 = vector.load %arg9[%c0_6, %c0_7] : memref<16x64xf32, #tpu.memory_space<vmem>>, vector<16x64xf32>
    tpu.vector_store %arg9[%c0_6, %c0_7], %7 {strides = array<i32>} : memref<16x64xf32, #tpu.memory_space<vmem>>, vector<16x64xf32>,
    %c1_i32 = arith.constant 1 : i32
    %9 = arith.cmpi eq, %arg2, %c1_i32 : i32
    %10 = arith.extui %9 : i1 to i32
    %c0_i32_8 = arith.constant 0 : i32
    %11 = arith.cmpi ne, %10, %c0_i32_8 : i32
    scf.if %11 {
      %c0_9 = arith.constant 0 : index
      %c0_10 = arith.constant 0 : index
      %12 = vector.load %arg9[%c0_9, %c0_10] : memref<16x64xf32, #tpu.memory_space<vmem>>, vector<16x64xf32>
      %c0_11 = arith.constant 0 : index
      %c0_12 = arith.constant 0 : index
      %13 = vector.load %arg5[%c0_11, %c0_12] : memref<1x64xf32, #tpu.memory_space<vmem>>, vector<1x64xf32>
      %14 = vector.broadcast %13 : vector<1x64xf32> to vector<16x64xf32>
      %15 = arith.addf %12, %14 : vector<16x64xf32>
      %c0_13 = arith.constant 0 : index
      %c0_14 = arith.constant 0 : index
      %16 = vector.load %arg6[%c0_13, %c0_14] : memref<16x64xf32, #tpu.memory_space<vmem>>, vector<16x64xf32>
      %17 = arith.addf %15, %16 : vector<16x64xf32>
      %cst_15 = arith.constant dense<0.000000e+00> : vector<16xf32>
      %18 = vector.multi_reduction <add>, %17, %cst_15 [1] : vector<16x64xf32> to vector<16xf32>
      %19 = vector.shape_cast %18 : vector<16xf32> to vector<16x1xf32>
      %cst_16 = arith.constant 6.400000e+01 : f32
      %20 = vector.broadcast %cst_16 : f32 to vector<16x1xf32>
      %21 = arith.divf %19, %20 : vector<16x1xf32>
      %22 = vector.broadcast %21 : vector<16x1xf32> to vector<16x64xf32>
      %23 = arith.subf %17, %22 : vector<16x64xf32>
      %24 = arith.mulf %23, %23 : vector<16x64xf32>
      %cst_17 = arith.constant dense<0.000000e+00> : vector<16xf32>
      %25 = vector.multi_reduction <add>, %24, %cst_17 [1] : vector<16x64xf32> to vector<16xf32>
      %26 = vector.shape_cast %25 : vector<16xf32> to vector<16x1xf32>
      %cst_18 = arith.constant 6.400000e+01 : f32
      %27 = vector.broadcast %cst_18 : f32 to vector<16x1xf32>
      %28 = arith.divf %26, %27 : vector<16x1xf32>
      %cst_19 = arith.constant 9.99999974E-6 : f32
      %29 = vector.broadcast %cst_19 : f32 to vector<16x1xf32>
      %30 = arith.addf %28, %29 : vector<16x1xf32>
      %31 = math.rsqrt %30 : vector<16x1xf32>
      %32 = vector.broadcast %31 : vector<16x1xf32> to vector<16x64xf32>
      %33 = arith.mulf %23, %32 : vector<16x64xf32>
      %c0_20 = arith.constant 0 : index
      %c0_21 = arith.constant 0 : index
      %34 = vector.load %arg7[%c0_20, %c0_21] : memref<1x64xf32, #tpu.memory_space<vmem>>, vector<1x64xf32>
      %35 = vector.broadcast %34 : vector<1x64xf32> to vector<16x64xf32>
      %36 = arith.mulf %33, %35 : vector<16x64xf32>
      %c0_22 = arith.constant 0 : index
      %c0_23 = arith.constant 0 : index
      %37 = vector.load %arg8[%c0_22, %c0_23] : memref<1x64xf32, #tpu.memory_space<vmem>>, vector<1x64xf32>
      %38 = vector.broadcast %37 : vector<1x64xf32> to vector<16x64xf32>
      %39 = arith.addf %36, %38 : vector<16x64xf32>
      %c0_24 = arith.constant 0 : index
      %c0_25 = arith.constant 0 : index
      %40 = vector.load %arg9[%c0_24, %c0_25] : memref<16x64xf32, #tpu.memory_space<vmem>>, vector<16x64xf32>
      tpu.vector_store %arg9[%c0_24, %c0_25], %39 {strides = array<i32>} : memref<16x64xf32, #tpu.memory_space<vmem>>, vector<16x64xf32>,
    } else {
    }
    return
  }
  func.func @transform_0(%arg0: i32, %arg1: i32, %arg2: i32) -> (i32, i32) {
    %c0_i32 = arith.constant 0 : i32
    return %arg0, %arg2 : i32, i32
  }
  func.func @transform_1(%arg0: i32, %arg1: i32, %arg2: i32) -> (i32, i32) {
    %c0_i32 = arith.constant 0 : i32
    return %arg2, %arg1 : i32, i32
  }
  func.func @transform_2(%arg0: i32, %arg1: i32, %arg2: i32) -> (i32, i32) {
    %c0_i32 = arith.constant 0 : i32
    %c0_i32_0 = arith.constant 0 : i32
    return %c0_i32, %arg1 : i32, i32
  }
  func.func @transform_3(%arg0: i32, %arg1: i32, %arg2: i32) -> (i32, i32) {
    %c0_i32 = arith.constant 0 : i32
    return %arg0, %arg1 : i32, i32
  }
  func.func @transform_4(%arg0: i32, %arg1: i32, %arg2: i32) -> (i32, i32) {
    %c0_i32 = arith.constant 0 : i32
    %c0_i32_0 = arith.constant 0 : i32
    return %c0_i32, %arg1 : i32, i32
  }
  func.func @transform_5(%arg0: i32, %arg1: i32, %arg2: i32) -> (i32, i32) {
    %c0_i32 = arith.constant 0 : i32
    %c0_i32_0 = arith.constant 0 : i32
    return %c0_i32, %arg1 : i32, i32
  }
  func.func @transform_6(%arg0: i32, %arg1: i32, %arg2: i32) -> (i32, i32) {
    %c0_i32 = arith.constant 0 : i32
    return %arg0, %arg1 : i32, i32
  }
}

module attributes {stable_mosaic.version = 11 : i64} {
  func.func @_linear_kernel(%arg0: i32, %arg1: i32, %arg2: i32, %arg3: memref<16x64xbf16, #tpu.memory_space<vmem>>, %arg4: memref<64x128xbf16, #tpu.memory_space<vmem>>, %arg5: memref<1x128xf32, #tpu.memory_space<vmem>>, %arg6: memref<16x128xf32, #tpu.memory_space<vmem>>) attributes {dimension_semantics = [#tpu.dimension_semantics<parallel>, #tpu.dimension_semantics<parallel>, #tpu.dimension_semantics<arbitrary>], iteration_bounds = array<i64: 1, 1, 1>, scalar_prefetch = 0 : i64, scratch_operands = 0 : i64, tpu.core_type = #tpu.core_type<tc>, window_params = [{transform_indices = @transform_0, window_bounds = array<i64: 16, 64>}, {transform_indices = @transform_1, window_bounds = array<i64: 64, 128>}, {transform_indices = @transform_2, window_bounds = array<i64: 1, 128>}, {transform_indices = @transform_3, window_bounds = array<i64: 16, 128>}]} {
    %c0_i32 = arith.constant 0 : i32
    %0 = arith.cmpi eq, %arg2, %c0_i32 : i32
    %1 = arith.extui %0 : i1 to i32
    %c0_i32_0 = arith.constant 0 : i32
    %2 = arith.cmpi ne, %1, %c0_i32_0 : i32
    scf.if %2 {
      %cst_10 = arith.constant 0.000000e+00 : f32
      %12 = vector.broadcast %cst_10 : f32 to vector<16x128xf32>
      %c0_11 = arith.constant 0 : index
      %c0_12 = arith.constant 0 : index
      %13 = vector.load %arg6[%c0_11, %c0_12] : memref<16x128xf32, #tpu.memory_space<vmem>>, vector<16x128xf32>
      tpu.vector_store %arg6[%c0_11, %c0_12], %12 {strides = array<i32>} : memref<16x128xf32, #tpu.memory_space<vmem>>, vector<16x128xf32>,
    } else {
    }
    %c0 = arith.constant 0 : index
    %c0_1 = arith.constant 0 : index
    %3 = vector.load %arg6[%c0, %c0_1] : memref<16x128xf32, #tpu.memory_space<vmem>>, vector<16x128xf32>
    %c0_2 = arith.constant 0 : index
    %c0_3 = arith.constant 0 : index
    %4 = vector.load %arg3[%c0_2, %c0_3] : memref<16x64xbf16, #tpu.memory_space<vmem>>, vector<16x64xbf16>
    %c0_4 = arith.constant 0 : index
    %c0_5 = arith.constant 0 : index
    %5 = vector.load %arg4[%c0_4, %c0_5] : memref<64x128xbf16, #tpu.memory_space<vmem>>, vector<64x128xbf16>
    %cst = arith.constant dense<0.000000e+00> : vector<16x128xf32>
    %6 = tpu.matmul %4, %5, %cst {dimension_numbers = #tpu.dot_dimension_numbers<[1], [0], [0], [1], [0, 0, 1, 1], [], []>} : vector<16x64xbf16>, vector<64x128xbf16>, vector<16x128xf32> -> vector<16x128xf32>
    %7 = arith.addf %3, %6 : vector<16x128xf32>
    %c0_6 = arith.constant 0 : index
    %c0_7 = arith.constant 0 : index
    %8 = vector.load %arg6[%c0_6, %c0_7] : memref<16x128xf32, #tpu.memory_space<vmem>>, vector<16x128xf32>
    tpu.vector_store %arg6[%c0_6, %c0_7], %7 {strides = array<i32>} : memref<16x128xf32, #tpu.memory_space<vmem>>, vector<16x128xf32>,
    %c0_i32_8 = arith.constant 0 : i32
    %9 = arith.cmpi eq, %arg2, %c0_i32_8 : i32
    %10 = arith.extui %9 : i1 to i32
    %c0_i32_9 = arith.constant 0 : i32
    %11 = arith.cmpi ne, %10, %c0_i32_9 : i32
    scf.if %11 {
      %c0_10 = arith.constant 0 : index
      %c0_11 = arith.constant 0 : index
      %12 = vector.load %arg6[%c0_10, %c0_11] : memref<16x128xf32, #tpu.memory_space<vmem>>, vector<16x128xf32>
      %c0_12 = arith.constant 0 : index
      %c0_13 = arith.constant 0 : index
      %13 = vector.load %arg5[%c0_12, %c0_13] : memref<1x128xf32, #tpu.memory_space<vmem>>, vector<1x128xf32>
      %14 = vector.broadcast %13 : vector<1x128xf32> to vector<16x128xf32>
      %15 = arith.addf %12, %14 : vector<16x128xf32>
      %c0_14 = arith.constant 0 : index
      %c0_15 = arith.constant 0 : index
      %16 = vector.load %arg6[%c0_14, %c0_15] : memref<16x128xf32, #tpu.memory_space<vmem>>, vector<16x128xf32>
      tpu.vector_store %arg6[%c0_14, %c0_15], %15 {strides = array<i32>} : memref<16x128xf32, #tpu.memory_space<vmem>>, vector<16x128xf32>,
    } else {
    }
    return
  }
  func.func @transform_0(%arg0: i32, %arg1: i32, %arg2: i32) -> (i32, i32) {
    %c0_i32 = arith.constant 0 : i32
    return %arg0, %arg2 : i32, i32
  }
  func.func @transform_1(%arg0: i32, %arg1: i32, %arg2: i32) -> (i32, i32) {
    %c0_i32 = arith.constant 0 : i32
    return %arg2, %arg1 : i32, i32
  }
  func.func @transform_2(%arg0: i32, %arg1: i32, %arg2: i32) -> (i32, i32) {
    %c0_i32 = arith.constant 0 : i32
    %c0_i32_0 = arith.constant 0 : i32
    return %c0_i32, %arg1 : i32, i32
  }
  func.func @transform_3(%arg0: i32, %arg1: i32, %arg2: i32) -> (i32, i32) {
    %c0_i32 = arith.constant 0 : i32
    return %arg0, %arg1 : i32, i32
  }
}

module attributes {stable_mosaic.version = 11 : i64} {
  func.func @_linear_kernel(%arg0: i32, %arg1: i32, %arg2: i32, %arg3: memref<32x128xbf16, #tpu.memory_space<vmem>>, %arg4: memref<128x64xbf16, #tpu.memory_space<vmem>>, %arg5: memref<1x64xf32, #tpu.memory_space<vmem>>, %arg6: memref<32x64xf32, #tpu.memory_space<vmem>>) attributes {dimension_semantics = [#tpu.dimension_semantics<parallel>, #tpu.dimension_semantics<parallel>, #tpu.dimension_semantics<arbitrary>], iteration_bounds = array<i64: 1, 1, 1>, scalar_prefetch = 0 : i64, scratch_operands = 0 : i64, tpu.core_type = #tpu.core_type<tc>, window_params = [{transform_indices = @transform_0, window_bounds = array<i64: 32, 128>}, {transform_indices = @transform_1, window_bounds = array<i64: 128, 64>}, {transform_indices = @transform_2, window_bounds = array<i64: 1, 64>}, {transform_indices = @transform_3, window_bounds = array<i64: 32, 64>}]} {
    %c0_i32 = arith.constant 0 : i32
    %0 = arith.cmpi eq, %arg2, %c0_i32 : i32
    %1 = arith.extui %0 : i1 to i32
    %c0_i32_0 = arith.constant 0 : i32
    %2 = arith.cmpi ne, %1, %c0_i32_0 : i32
    scf.if %2 {
      %cst_10 = arith.constant 0.000000e+00 : f32
      %12 = vector.broadcast %cst_10 : f32 to vector<32x64xf32>
      %c0_11 = arith.constant 0 : index
      %c0_12 = arith.constant 0 : index
      %13 = vector.load %arg6[%c0_11, %c0_12] : memref<32x64xf32, #tpu.memory_space<vmem>>, vector<32x64xf32>
      tpu.vector_store %arg6[%c0_11, %c0_12], %12 {strides = array<i32>} : memref<32x64xf32, #tpu.memory_space<vmem>>, vector<32x64xf32>,
    } else {
    }
    %c0 = arith.constant 0 : index
    %c0_1 = arith.constant 0 : index
    %3 = vector.load %arg6[%c0, %c0_1] : memref<32x64xf32, #tpu.memory_space<vmem>>, vector<32x64xf32>
    %c0_2 = arith.constant 0 : index
    %c0_3 = arith.constant 0 : index
    %4 = vector.load %arg3[%c0_2, %c0_3] : memref<32x128xbf16, #tpu.memory_space<vmem>>, vector<32x128xbf16>
    %c0_4 = arith.constant 0 : index
    %c0_5 = arith.constant 0 : index
    %5 = vector.load %arg4[%c0_4, %c0_5] : memref<128x64xbf16, #tpu.memory_space<vmem>>, vector<128x64xbf16>
    %cst = arith.constant dense<0.000000e+00> : vector<32x64xf32>
    %6 = tpu.matmul %4, %5, %cst {dimension_numbers = #tpu.dot_dimension_numbers<[1], [0], [0], [1], [0, 0, 1, 1], [], []>} : vector<32x128xbf16>, vector<128x64xbf16>, vector<32x64xf32> -> vector<32x64xf32>
    %7 = arith.addf %3, %6 : vector<32x64xf32>
    %c0_6 = arith.constant 0 : index
    %c0_7 = arith.constant 0 : index
    %8 = vector.load %arg6[%c0_6, %c0_7] : memref<32x64xf32, #tpu.memory_space<vmem>>, vector<32x64xf32>
    tpu.vector_store %arg6[%c0_6, %c0_7], %7 {strides = array<i32>} : memref<32x64xf32, #tpu.memory_space<vmem>>, vector<32x64xf32>,
    %c0_i32_8 = arith.constant 0 : i32
    %9 = arith.cmpi eq, %arg2, %c0_i32_8 : i32
    %10 = arith.extui %9 : i1 to i32
    %c0_i32_9 = arith.constant 0 : i32
    %11 = arith.cmpi ne, %10, %c0_i32_9 : i32
    scf.if %11 {
      %c0_10 = arith.constant 0 : index
      %c0_11 = arith.constant 0 : index
      %12 = vector.load %arg6[%c0_10, %c0_11] : memref<32x64xf32, #tpu.memory_space<vmem>>, vector<32x64xf32>
      %c0_12 = arith.constant 0 : index
      %c0_13 = arith.constant 0 : index
      %13 = vector.load %arg5[%c0_12, %c0_13] : memref<1x64xf32, #tpu.memory_space<vmem>>, vector<1x64xf32>
      %14 = vector.broadcast %13 : vector<1x64xf32> to vector<32x64xf32>
      %15 = arith.addf %12, %14 : vector<32x64xf32>
      %cst_14 = arith.constant 0.000000e+00 : f32
      %16 = vector.broadcast %cst_14 : f32 to vector<32x64xf32>
      %17 = arith.maximumf %15, %16 : vector<32x64xf32>
      %c0_15 = arith.constant 0 : index
      %c0_16 = arith.constant 0 : index
      %18 = vector.load %arg6[%c0_15, %c0_16] : memref<32x64xf32, #tpu.memory_space<vmem>>, vector<32x64xf32>
      tpu.vector_store %arg6[%c0_15, %c0_16], %17 {strides = array<i32>} : memref<32x64xf32, #tpu.memory_space<vmem>>, vector<32x64xf32>,
    } else {
    }
    return
  }
  func.func @transform_0(%arg0: i32, %arg1: i32, %arg2: i32) -> (i32, i32) {
    %c0_i32 = arith.constant 0 : i32
    return %arg0, %arg2 : i32, i32
  }
  func.func @transform_1(%arg0: i32, %arg1: i32, %arg2: i32) -> (i32, i32) {
    %c0_i32 = arith.constant 0 : i32
    return %arg2, %arg1 : i32, i32
  }
  func.func @transform_2(%arg0: i32, %arg1: i32, %arg2: i32) -> (i32, i32) {
    %c0_i32 = arith.constant 0 : i32
    %c0_i32_0 = arith.constant 0 : i32
    return %c0_i32, %arg1 : i32, i32
  }
  func.func @transform_3(%arg0: i32, %arg1: i32, %arg2: i32) -> (i32, i32) {
    %c0_i32 = arith.constant 0 : i32
    return %arg0, %arg1 : i32, i32
  }
}

module attributes {stable_mosaic.version = 11 : i64} {
  func.func @_linear_kernel(%arg0: i32, %arg1: i32, %arg2: i32, %arg3: memref<32x64xbf16, #tpu.memory_space<vmem>>, %arg4: memref<64x192xbf16, #tpu.memory_space<vmem>>, %arg5: memref<1x192xf32, #tpu.memory_space<vmem>>, %arg6: memref<32x192xf32, #tpu.memory_space<vmem>>) attributes {dimension_semantics = [#tpu.dimension_semantics<parallel>, #tpu.dimension_semantics<parallel>, #tpu.dimension_semantics<arbitrary>], iteration_bounds = array<i64: 1, 1, 1>, scalar_prefetch = 0 : i64, scratch_operands = 0 : i64, tpu.core_type = #tpu.core_type<tc>, window_params = [{transform_indices = @transform_0, window_bounds = array<i64: 32, 64>}, {transform_indices = @transform_1, window_bounds = array<i64: 64, 192>}, {transform_indices = @transform_2, window_bounds = array<i64: 1, 192>}, {transform_indices = @transform_3, window_bounds = array<i64: 32, 192>}]} {
    %c0_i32 = arith.constant 0 : i32
    %0 = arith.cmpi eq, %arg2, %c0_i32 : i32
    %1 = arith.extui %0 : i1 to i32
    %c0_i32_0 = arith.constant 0 : i32
    %2 = arith.cmpi ne, %1, %c0_i32_0 : i32
    scf.if %2 {
      %cst_10 = arith.constant 0.000000e+00 : f32
      %12 = vector.broadcast %cst_10 : f32 to vector<32x192xf32>
      %c0_11 = arith.constant 0 : index
      %c0_12 = arith.constant 0 : index
      %13 = vector.load %arg6[%c0_11, %c0_12] : memref<32x192xf32, #tpu.memory_space<vmem>>, vector<32x192xf32>
      tpu.vector_store %arg6[%c0_11, %c0_12], %12 {strides = array<i32>} : memref<32x192xf32, #tpu.memory_space<vmem>>, vector<32x192xf32>,
    } else {
    }
    %c0 = arith.constant 0 : index
    %c0_1 = arith.constant 0 : index
    %3 = vector.load %arg6[%c0, %c0_1] : memref<32x192xf32, #tpu.memory_space<vmem>>, vector<32x192xf32>
    %c0_2 = arith.constant 0 : index
    %c0_3 = arith.constant 0 : index
    %4 = vector.load %arg3[%c0_2, %c0_3] : memref<32x64xbf16, #tpu.memory_space<vmem>>, vector<32x64xbf16>
    %c0_4 = arith.constant 0 : index
    %c0_5 = arith.constant 0 : index
    %5 = vector.load %arg4[%c0_4, %c0_5] : memref<64x192xbf16, #tpu.memory_space<vmem>>, vector<64x192xbf16>
    %cst = arith.constant dense<0.000000e+00> : vector<32x192xf32>
    %6 = tpu.matmul %4, %5, %cst {dimension_numbers = #tpu.dot_dimension_numbers<[1], [0], [0], [1], [0, 0, 1, 1], [], []>} : vector<32x64xbf16>, vector<64x192xbf16>, vector<32x192xf32> -> vector<32x192xf32>
    %7 = arith.addf %3, %6 : vector<32x192xf32>
    %c0_6 = arith.constant 0 : index
    %c0_7 = arith.constant 0 : index
    %8 = vector.load %arg6[%c0_6, %c0_7] : memref<32x192xf32, #tpu.memory_space<vmem>>, vector<32x192xf32>
    tpu.vector_store %arg6[%c0_6, %c0_7], %7 {strides = array<i32>} : memref<32x192xf32, #tpu.memory_space<vmem>>, vector<32x192xf32>,
    %c0_i32_8 = arith.constant 0 : i32
    %9 = arith.cmpi eq, %arg2, %c0_i32_8 : i32
    %10 = arith.extui %9 : i1 to i32
    %c0_i32_9 = arith.constant 0 : i32
    %11 = arith.cmpi ne, %10, %c0_i32_9 : i32
    scf.if %11 {
      %c0_10 = arith.constant 0 : index
      %c0_11 = arith.constant 0 : index
      %12 = vector.load %arg6[%c0_10, %c0_11] : memref<32x192xf32, #tpu.memory_space<vmem>>, vector<32x192xf32>
      %c0_12 = arith.constant 0 : index
      %c0_13 = arith.constant 0 : index
      %13 = vector.load %arg5[%c0_12, %c0_13] : memref<1x192xf32, #tpu.memory_space<vmem>>, vector<1x192xf32>
      %14 = vector.broadcast %13 : vector<1x192xf32> to vector<32x192xf32>
      %15 = arith.addf %12, %14 : vector<32x192xf32>
      %c0_14 = arith.constant 0 : index
      %c0_15 = arith.constant 0 : index
      %16 = vector.load %arg6[%c0_14, %c0_15] : memref<32x192xf32, #tpu.memory_space<vmem>>, vector<32x192xf32>
      tpu.vector_store %arg6[%c0_14, %c0_15], %15 {strides = array<i32>} : memref<32x192xf32, #tpu.memory_space<vmem>>, vector<32x192xf32>,
    } else {
    }
    return
  }
  func.func @transform_0(%arg0: i32, %arg1: i32, %arg2: i32) -> (i32, i32) {
    %c0_i32 = arith.constant 0 : i32
    return %arg0, %arg2 : i32, i32
  }
  func.func @transform_1(%arg0: i32, %arg1: i32, %arg2: i32) -> (i32, i32) {
    %c0_i32 = arith.constant 0 : i32
    return %arg2, %arg1 : i32, i32
  }
  func.func @transform_2(%arg0: i32, %arg1: i32, %arg2: i32) -> (i32, i32) {
    %c0_i32 = arith.constant 0 : i32
    %c0_i32_0 = arith.constant 0 : i32
    return %c0_i32, %arg1 : i32, i32
  }
  func.func @transform_3(%arg0: i32, %arg1: i32, %arg2: i32) -> (i32, i32) {
    %c0_i32 = arith.constant 0 : i32
    return %arg0, %arg1 : i32, i32
  }
}

module attributes {stable_mosaic.version = 11 : i64} {
  func.func @_attention_kernel(%arg0: i32, %arg1: memref<1x16x32xbf16, #tpu.memory_space<vmem>>, %arg2: memref<1x16x32xbf16, #tpu.memory_space<vmem>>, %arg3: memref<1x16x32xbf16, #tpu.memory_space<vmem>>, %arg4: memref<1x16x32xf32, #tpu.memory_space<vmem>>) attributes {dimension_semantics = [#tpu.dimension_semantics<parallel>], iteration_bounds = array<i64: 4>, scalar_prefetch = 0 : i64, scratch_operands = 0 : i64, tpu.core_type = #tpu.core_type<tc>, window_params = [{transform_indices = @transform_0, window_bounds = array<i64: 1, 16, 32>}, {transform_indices = @transform_1, window_bounds = array<i64: 1, 16, 32>}, {transform_indices = @transform_2, window_bounds = array<i64: 1, 16, 32>}, {transform_indices = @transform_3, window_bounds = array<i64: 1, 16, 32>}]} {
    %c0 = arith.constant 0 : index
    %c0_0 = arith.constant 0 : index
    %c0_1 = arith.constant 0 : index
    %0 = vector.load %arg1[%c0, %c0_0, %c0_1] : memref<1x16x32xbf16, #tpu.memory_space<vmem>>, vector<1x16x32xbf16>
    %1 = vector.shape_cast %0 : vector<1x16x32xbf16> to vector<16x32xbf16>
    %c0_2 = arith.constant 0 : index
    %c0_3 = arith.constant 0 : index
    %c0_4 = arith.constant 0 : index
    %2 = vector.load %arg2[%c0_2, %c0_3, %c0_4] : memref<1x16x32xbf16, #tpu.memory_space<vmem>>, vector<1x16x32xbf16>
    %3 = vector.shape_cast %2 : vector<1x16x32xbf16> to vector<16x32xbf16>
    %c0_5 = arith.constant 0 : index
    %c0_6 = arith.constant 0 : index
    %c0_7 = arith.constant 0 : index
    %4 = vector.load %arg3[%c0_5, %c0_6, %c0_7] : memref<1x16x32xbf16, #tpu.memory_space<vmem>>, vector<1x16x32xbf16>
    %5 = vector.shape_cast %4 : vector<1x16x32xbf16> to vector<16x32xbf16>
    %cst = arith.constant dense<0.000000e+00> : vector<16x16xf32>
    %6 = tpu.matmul %1, %3, %cst {dimension_numbers = #tpu.dot_dimension_numbers<[1], [1], [0], [0], [0, 0, 1, 0], [], []>} : vector<16x32xbf16>, vector<16x32xbf16>, vector<16x16xf32> -> vector<16x16xf32>
    %cst_8 = arith.constant 0.176776692 : f32
    %7 = vector.broadcast %cst_8 : f32 to vector<16x16xf32>
    %8 = arith.mulf %6, %7 : vector<16x16xf32>
    %cst_9 = arith.constant dense<0xFF800000> : vector<16xf32>
    %9 = vector.multi_reduction <maximumf>, %8, %cst_9 [1] : vector<16x16xf32> to vector<16xf32>
    %10 = vector.shape_cast %9 : vector<16xf32> to vector<16x1xf32>
    %11 = vector.broadcast %10 : vector<16x1xf32> to vector<16x16xf32>
    %12 = arith.subf %8, %11 : vector<16x16xf32>
    %13 = math.exp %12 : vector<16x16xf32>
    %cst_10 = arith.constant dense<0.000000e+00> : vector<16xf32>
    %14 = vector.multi_reduction <add>, %13, %cst_10 [1] : vector<16x16xf32> to vector<16xf32>
    %15 = vector.shape_cast %14 : vector<16xf32> to vector<16x1xf32>
    %16 = vector.broadcast %15 : vector<16x1xf32> to vector<16x16xf32>
    %17 = arith.divf %13, %16 : vector<16x16xf32>
    %18 = arith.truncf %17 : vector<16x16xf32> to vector<16x16xbf16>
    %cst_11 = arith.constant dense<0.000000e+00> : vector<16x32xf32>
    %19 = tpu.matmul %18, %5, %cst_11 {dimension_numbers = #tpu.dot_dimension_numbers<[1], [0], [0], [1], [0, 0, 1, 1], [], []>} : vector<16x16xbf16>, vector<16x32xbf16>, vector<16x32xf32> -> vector<16x32xf32>
    %c0_12 = arith.constant 0 : index
    %c0_13 = arith.constant 0 : index
    %c0_14 = arith.constant 0 : index
    %20 = vector.load %arg4[%c0_12, %c0_13, %c0_14] : memref<1x16x32xf32, #tpu.memory_space<vmem>>, vector<1x16x32xf32>
    %21 = vector.shape_cast %20 : vector<1x16x32xf32> to vector<16x32xf32>
    %22 = vector.shape_cast %19 : vector<16x32xf32> to vector<1x16x32xf32>
    tpu.vector_store %arg4[%c0_12, %c0_13, %c0_14], %22 {strides = array<i32>} : memref<1x16x32xf32, #tpu.memory_space<vmem>>, vector<1x16x32xf32>,
    return
  }
  func.func @transform_0(%arg0: i32) -> (i32, i32, i32) {
    %c0_i32 = arith.constant 0 : i32
    %c0_i32_0 = arith.constant 0 : i32
    %c0_i32_1 = arith.constant 0 : i32
    return %arg0, %c0_i32, %c0_i32_0 : i32, i32, i32
  }
  func.func @transform_1(%arg0: i32) -> (i32, i32, i32) {
    %c0_i32 = arith.constant 0 : i32
    %c0_i32_0 = arith.constant 0 : i32
    %c0_i32_1 = arith.constant 0 : i32
    return %arg0, %c0_i32, %c0_i32_0 : i32, i32, i32
  }
  func.func @transform_2(%arg0: i32) -> (i32, i32, i32) {
    %c0_i32 = arith.constant 0 : i32
    %c0_i32_0 = arith.constant 0 : i32
    %c0_i32_1 = arith.constant 0 : i32
    return %arg0, %c0_i32, %c0_i32_0 : i32, i32, i32
  }
  func.func @transform_3(%arg0: i32) -> (i32, i32, i32) {
    %c0_i32 = arith.constant 0 : i32
    %c0_i32_0 = arith.constant 0 : i32
    %c0_i32_1 = arith.constant 0 : i32
    return %arg0, %c0_i32, %c0_i32_0 : i32, i32, i32
  }
}

module attributes {stable_mosaic.version = 11 : i64} {
  func.func @_linear_kernel(%arg0: i32, %arg1: i32, %arg2: i32, %arg3: memref<32x64xbf16, #tpu.memory_space<vmem>>, %arg4: memref<64x64xbf16, #tpu.memory_space<vmem>>, %arg5: memref<1x64xf32, #tpu.memory_space<vmem>>, %arg6: memref<32x64xf32, #tpu.memory_space<vmem>>, %arg7: memref<1x64xf32, #tpu.memory_space<vmem>>, %arg8: memref<1x64xf32, #tpu.memory_space<vmem>>, %arg9: memref<32x64xf32, #tpu.memory_space<vmem>>) attributes {dimension_semantics = [#tpu.dimension_semantics<parallel>, #tpu.dimension_semantics<parallel>, #tpu.dimension_semantics<arbitrary>], iteration_bounds = array<i64: 1, 1, 1>, scalar_prefetch = 0 : i64, scratch_operands = 0 : i64, tpu.core_type = #tpu.core_type<tc>, window_params = [{transform_indices = @transform_0, window_bounds = array<i64: 32, 64>}, {transform_indices = @transform_1, window_bounds = array<i64: 64, 64>}, {transform_indices = @transform_2, window_bounds = array<i64: 1, 64>}, {transform_indices = @transform_3, window_bounds = array<i64: 32, 64>}, {transform_indices = @transform_4, window_bounds = array<i64: 1, 64>}, {transform_indices = @transform_5, window_bounds = array<i64: 1, 64>}, {transform_indices = @transform_6, window_bounds = array<i64: 32, 64>}]} {
    %c0_i32 = arith.constant 0 : i32
    %0 = arith.cmpi eq, %arg2, %c0_i32 : i32
    %1 = arith.extui %0 : i1 to i32
    %c0_i32_0 = arith.constant 0 : i32
    %2 = arith.cmpi ne, %1, %c0_i32_0 : i32
    scf.if %2 {
      %cst_10 = arith.constant 0.000000e+00 : f32
      %12 = vector.broadcast %cst_10 : f32 to vector<32x64xf32>
      %c0_11 = arith.constant 0 : index
      %c0_12 = arith.constant 0 : index
      %13 = vector.load %arg9[%c0_11, %c0_12] : memref<32x64xf32, #tpu.memory_space<vmem>>, vector<32x64xf32>
      tpu.vector_store %arg9[%c0_11, %c0_12], %12 {strides = array<i32>} : memref<32x64xf32, #tpu.memory_space<vmem>>, vector<32x64xf32>,
    } else {
    }
    %c0 = arith.constant 0 : index
    %c0_1 = arith.constant 0 : index
    %3 = vector.load %arg9[%c0, %c0_1] : memref<32x64xf32, #tpu.memory_space<vmem>>, vector<32x64xf32>
    %c0_2 = arith.constant 0 : index
    %c0_3 = arith.constant 0 : index
    %4 = vector.load %arg3[%c0_2, %c0_3] : memref<32x64xbf16, #tpu.memory_space<vmem>>, vector<32x64xbf16>
    %c0_4 = arith.constant 0 : index
    %c0_5 = arith.constant 0 : index
    %5 = vector.load %arg4[%c0_4, %c0_5] : memref<64x64xbf16, #tpu.memory_space<vmem>>, vector<64x64xbf16>
    %cst = arith.constant dense<0.000000e+00> : vector<32x64xf32>
    %6 = tpu.matmul %4, %5, %cst {dimension_numbers = #tpu.dot_dimension_numbers<[1], [0], [0], [1], [0, 0, 1, 1], [], []>} : vector<32x64xbf16>, vector<64x64xbf16>, vector<32x64xf32> -> vector<32x64xf32>
    %7 = arith.addf %3, %6 : vector<32x64xf32>
    %c0_6 = arith.constant 0 : index
    %c0_7 = arith.constant 0 : index
    %8 = vector.load %arg9[%c0_6, %c0_7] : memref<32x64xf32, #tpu.memory_space<vmem>>, vector<32x64xf32>
    tpu.vector_store %arg9[%c0_6, %c0_7], %7 {strides = array<i32>} : memref<32x64xf32, #tpu.memory_space<vmem>>, vector<32x64xf32>,
    %c0_i32_8 = arith.constant 0 : i32
    %9 = arith.cmpi eq, %arg2, %c0_i32_8 : i32
    %10 = arith.extui %9 : i1 to i32
    %c0_i32_9 = arith.constant 0 : i32
    %11 = arith.cmpi ne, %10, %c0_i32_9 : i32
    scf.if %11 {
      %c0_10 = arith.constant 0 : index
      %c0_11 = arith.constant 0 : index
      %12 = vector.load %arg9[%c0_10, %c0_11] : memref<32x64xf32, #tpu.memory_space<vmem>>, vector<32x64xf32>
      %c0_12 = arith.constant 0 : index
      %c0_13 = arith.constant 0 : index
      %13 = vector.load %arg5[%c0_12, %c0_13] : memref<1x64xf32, #tpu.memory_space<vmem>>, vector<1x64xf32>
      %14 = vector.broadcast %13 : vector<1x64xf32> to vector<32x64xf32>
      %15 = arith.addf %12, %14 : vector<32x64xf32>
      %c0_14 = arith.constant 0 : index
      %c0_15 = arith.constant 0 : index
      %16 = vector.load %arg6[%c0_14, %c0_15] : memref<32x64xf32, #tpu.memory_space<vmem>>, vector<32x64xf32>
      %17 = arith.addf %15, %16 : vector<32x64xf32>
      %cst_16 = arith.constant dense<0.000000e+00> : vector<32xf32>
      %18 = vector.multi_reduction <add>, %17, %cst_16 [1] : vector<32x64xf32> to vector<32xf32>
      %19 = vector.shape_cast %18 : vector<32xf32> to vector<32x1xf32>
      %cst_17 = arith.constant 6.400000e+01 : f32
      %20 = vector.broadcast %cst_17 : f32 to vector<32x1xf32>
      %21 = arith.divf %19, %20 : vector<32x1xf32>
      %22 = vector.broadcast %21 : vector<32x1xf32> to vector<32x64xf32>
      %23 = arith.subf %17, %22 : vector<32x64xf32>
      %24 = arith.mulf %23, %23 : vector<32x64xf32>
      %cst_18 = arith.constant dense<0.000000e+00> : vector<32xf32>
      %25 = vector.multi_reduction <add>, %24, %cst_18 [1] : vector<32x64xf32> to vector<32xf32>
      %26 = vector.shape_cast %25 : vector<32xf32> to vector<32x1xf32>
      %cst_19 = arith.constant 6.400000e+01 : f32
      %27 = vector.broadcast %cst_19 : f32 to vector<32x1xf32>
      %28 = arith.divf %26, %27 : vector<32x1xf32>
      %cst_20 = arith.constant 9.99999974E-6 : f32
      %29 = vector.broadcast %cst_20 : f32 to vector<32x1xf32>
      %30 = arith.addf %28, %29 : vector<32x1xf32>
      %31 = math.rsqrt %30 : vector<32x1xf32>
      %32 = vector.broadcast %31 : vector<32x1xf32> to vector<32x64xf32>
      %33 = arith.mulf %23, %32 : vector<32x64xf32>
      %c0_21 = arith.constant 0 : index
      %c0_22 = arith.constant 0 : index
      %34 = vector.load %arg7[%c0_21, %c0_22] : memref<1x64xf32, #tpu.memory_space<vmem>>, vector<1x64xf32>
      %35 = vector.broadcast %34 : vector<1x64xf32> to vector<32x64xf32>
      %36 = arith.mulf %33, %35 : vector<32x64xf32>
      %c0_23 = arith.constant 0 : index
      %c0_24 = arith.constant 0 : index
      %37 = vector.load %arg8[%c0_23, %c0_24] : memref<1x64xf32, #tpu.memory_space<vmem>>, vector<1x64xf32>
      %38 = vector.broadcast %37 : vector<1x64xf32> to vector<32x64xf32>
      %39 = arith.addf %36, %38 : vector<32x64xf32>
      %c0_25 = arith.constant 0 : index
      %c0_26 = arith.constant 0 : index
      %40 = vector.load %arg9[%c0_25, %c0_26] : memref<32x64xf32, #tpu.memory_space<vmem>>, vector<32x64xf32>
      tpu.vector_store %arg9[%c0_25, %c0_26], %39 {strides = array<i32>} : memref<32x64xf32, #tpu.memory_space<vmem>>, vector<32x64xf32>,
    } else {
    }
    return
  }
  func.func @transform_0(%arg0: i32, %arg1: i32, %arg2: i32) -> (i32, i32) {
    %c0_i32 = arith.constant 0 : i32
    return %arg0, %arg2 : i32, i32
  }
  func.func @transform_1(%arg0: i32, %arg1: i32, %arg2: i32) -> (i32, i32) {
    %c0_i32 = arith.constant 0 : i32
    return %arg2, %arg1 : i32, i32
  }
  func.func @transform_2(%arg0: i32, %arg1: i32, %arg2: i32) -> (i32, i32) {
    %c0_i32 = arith.constant 0 : i32
    %c0_i32_0 = arith.constant 0 : i32
    return %c0_i32, %arg1 : i32, i32
  }
  func.func @transform_3(%arg0: i32, %arg1: i32, %arg2: i32) -> (i32, i32) {
    %c0_i32 = arith.constant 0 : i32
    return %arg0, %arg1 : i32, i32
  }
  func.func @transform_4(%arg0: i32, %arg1: i32, %arg2: i32) -> (i32, i32) {
    %c0_i32 = arith.constant 0 : i32
    %c0_i32_0 = arith.constant 0 : i32
    return %c0_i32, %arg1 : i32, i32
  }
  func.func @transform_5(%arg0: i32, %arg1: i32, %arg2: i32) -> (i32, i32) {
    %c0_i32 = arith.constant 0 : i32
    %c0_i32_0 = arith.constant 0 : i32
    return %c0_i32, %arg1 : i32, i32
  }
  func.func @transform_6(%arg0: i32, %arg1: i32, %arg2: i32) -> (i32, i32) {
    %c0_i32 = arith.constant 0 : i32
    return %arg0, %arg1 : i32, i32
  }
}

module attributes {stable_mosaic.version = 11 : i64} {
  func.func @_linear_kernel(%arg0: i32, %arg1: i32, %arg2: i32, %arg3: memref<32x64xbf16, #tpu.memory_space<vmem>>, %arg4: memref<64x64xbf16, #tpu.memory_space<vmem>>, %arg5: memref<1x64xf32, #tpu.memory_space<vmem>>, %arg6: memref<32x64xf32, #tpu.memory_space<vmem>>) attributes {dimension_semantics = [#tpu.dimension_semantics<parallel>, #tpu.dimension_semantics<parallel>, #tpu.dimension_semantics<arbitrary>], iteration_bounds = array<i64: 1, 1, 1>, scalar_prefetch = 0 : i64, scratch_operands = 0 : i64, tpu.core_type = #tpu.core_type<tc>, window_params = [{transform_indices = @transform_0, window_bounds = array<i64: 32, 64>}, {transform_indices = @transform_1, window_bounds = array<i64: 64, 64>}, {transform_indices = @transform_2, window_bounds = array<i64: 1, 64>}, {transform_indices = @transform_3, window_bounds = array<i64: 32, 64>}]} {
    %c0_i32 = arith.constant 0 : i32
    %0 = arith.cmpi eq, %arg2, %c0_i32 : i32
    %1 = arith.extui %0 : i1 to i32
    %c0_i32_0 = arith.constant 0 : i32
    %2 = arith.cmpi ne, %1, %c0_i32_0 : i32
    scf.if %2 {
      %cst_10 = arith.constant 0.000000e+00 : f32
      %12 = vector.broadcast %cst_10 : f32 to vector<32x64xf32>
      %c0_11 = arith.constant 0 : index
      %c0_12 = arith.constant 0 : index
      %13 = vector.load %arg6[%c0_11, %c0_12] : memref<32x64xf32, #tpu.memory_space<vmem>>, vector<32x64xf32>
      tpu.vector_store %arg6[%c0_11, %c0_12], %12 {strides = array<i32>} : memref<32x64xf32, #tpu.memory_space<vmem>>, vector<32x64xf32>,
    } else {
    }
    %c0 = arith.constant 0 : index
    %c0_1 = arith.constant 0 : index
    %3 = vector.load %arg6[%c0, %c0_1] : memref<32x64xf32, #tpu.memory_space<vmem>>, vector<32x64xf32>
    %c0_2 = arith.constant 0 : index
    %c0_3 = arith.constant 0 : index
    %4 = vector.load %arg3[%c0_2, %c0_3] : memref<32x64xbf16, #tpu.memory_space<vmem>>, vector<32x64xbf16>
    %c0_4 = arith.constant 0 : index
    %c0_5 = arith.constant 0 : index
    %5 = vector.load %arg4[%c0_4, %c0_5] : memref<64x64xbf16, #tpu.memory_space<vmem>>, vector<64x64xbf16>
    %cst = arith.constant dense<0.000000e+00> : vector<32x64xf32>
    %6 = tpu.matmul %4, %5, %cst {dimension_numbers = #tpu.dot_dimension_numbers<[1], [0], [0], [1], [0, 0, 1, 1], [], []>} : vector<32x64xbf16>, vector<64x64xbf16>, vector<32x64xf32> -> vector<32x64xf32>
    %7 = arith.addf %3, %6 : vector<32x64xf32>
    %c0_6 = arith.constant 0 : index
    %c0_7 = arith.constant 0 : index
    %8 = vector.load %arg6[%c0_6, %c0_7] : memref<32x64xf32, #tpu.memory_space<vmem>>, vector<32x64xf32>
    tpu.vector_store %arg6[%c0_6, %c0_7], %7 {strides = array<i32>} : memref<32x64xf32, #tpu.memory_space<vmem>>, vector<32x64xf32>,
    %c0_i32_8 = arith.constant 0 : i32
    %9 = arith.cmpi eq, %arg2, %c0_i32_8 : i32
    %10 = arith.extui %9 : i1 to i32
    %c0_i32_9 = arith.constant 0 : i32
    %11 = arith.cmpi ne, %10, %c0_i32_9 : i32
    scf.if %11 {
      %c0_10 = arith.constant 0 : index
      %c0_11 = arith.constant 0 : index
      %12 = vector.load %arg6[%c0_10, %c0_11] : memref<32x64xf32, #tpu.memory_space<vmem>>, vector<32x64xf32>
      %c0_12 = arith.constant 0 : index
      %c0_13 = arith.constant 0 : index
      %13 = vector.load %arg5[%c0_12, %c0_13] : memref<1x64xf32, #tpu.memory_space<vmem>>, vector<1x64xf32>
      %14 = vector.broadcast %13 : vector<1x64xf32> to vector<32x64xf32>
      %15 = arith.addf %12, %14 : vector<32x64xf32>
      %c0_14 = arith.constant 0 : index
      %c0_15 = arith.constant 0 : index
      %16 = vector.load %arg6[%c0_14, %c0_15] : memref<32x64xf32, #tpu.memory_space<vmem>>, vector<32x64xf32>
      tpu.vector_store %arg6[%c0_14, %c0_15], %15 {strides = array<i32>} : memref<32x64xf32, #tpu.memory_space<vmem>>, vector<32x64xf32>,
    } else {
    }
    return
  }
  func.func @transform_0(%arg0: i32, %arg1: i32, %arg2: i32) -> (i32, i32) {
    %c0_i32 = arith.constant 0 : i32
    return %arg0, %arg2 : i32, i32
  }
  func.func @transform_1(%arg0: i32, %arg1: i32, %arg2: i32) -> (i32, i32) {
    %c0_i32 = arith.constant 0 : i32
    return %arg2, %arg1 : i32, i32
  }
  func.func @transform_2(%arg0: i32, %arg1: i32, %arg2: i32) -> (i32, i32) {
    %c0_i32 = arith.constant 0 : i32
    %c0_i32_0 = arith.constant 0 : i32
    return %c0_i32, %arg1 : i32, i32
  }
  func.func @transform_3(%arg0: i32, %arg1: i32, %arg2: i32) -> (i32, i32) {
    %c0_i32 = arith.constant 0 : i32
    return %arg0, %arg1 : i32, i32
  }
}

module attributes {stable_mosaic.version = 11 : i64} {
  func.func @_attention_kernel(%arg0: i32, %arg1: memref<1x16x32xbf16, #tpu.memory_space<vmem>>, %arg2: memref<1x8x32xbf16, #tpu.memory_space<vmem>>, %arg3: memref<1x8x32xbf16, #tpu.memory_space<vmem>>, %arg4: memref<1x16x32xf32, #tpu.memory_space<vmem>>) attributes {dimension_semantics = [#tpu.dimension_semantics<parallel>], iteration_bounds = array<i64: 4>, scalar_prefetch = 0 : i64, scratch_operands = 0 : i64, tpu.core_type = #tpu.core_type<tc>, window_params = [{transform_indices = @transform_0, window_bounds = array<i64: 1, 16, 32>}, {transform_indices = @transform_1, window_bounds = array<i64: 1, 8, 32>}, {transform_indices = @transform_2, window_bounds = array<i64: 1, 8, 32>}, {transform_indices = @transform_3, window_bounds = array<i64: 1, 16, 32>}]} {
    %c0 = arith.constant 0 : index
    %c0_0 = arith.constant 0 : index
    %c0_1 = arith.constant 0 : index
    %0 = vector.load %arg1[%c0, %c0_0, %c0_1] : memref<1x16x32xbf16, #tpu.memory_space<vmem>>, vector<1x16x32xbf16>
    %1 = vector.shape_cast %0 : vector<1x16x32xbf16> to vector<16x32xbf16>
    %c0_2 = arith.constant 0 : index
    %c0_3 = arith.constant 0 : index
    %c0_4 = arith.constant 0 : index
    %2 = vector.load %arg2[%c0_2, %c0_3, %c0_4] : memref<1x8x32xbf16, #tpu.memory_space<vmem>>, vector<1x8x32xbf16>
    %3 = vector.shape_cast %2 : vector<1x8x32xbf16> to vector<8x32xbf16>
    %c0_5 = arith.constant 0 : index
    %c0_6 = arith.constant 0 : index
    %c0_7 = arith.constant 0 : index
    %4 = vector.load %arg3[%c0_5, %c0_6, %c0_7] : memref<1x8x32xbf16, #tpu.memory_space<vmem>>, vector<1x8x32xbf16>
    %5 = vector.shape_cast %4 : vector<1x8x32xbf16> to vector<8x32xbf16>
    %cst = arith.constant dense<0.000000e+00> : vector<16x8xf32>
    %6 = tpu.matmul %1, %3, %cst {dimension_numbers = #tpu.dot_dimension_numbers<[1], [1], [0], [0], [0, 0, 1, 0], [], []>} : vector<16x32xbf16>, vector<8x32xbf16>, vector<16x8xf32> -> vector<16x8xf32>
    %cst_8 = arith.constant 0.176776692 : f32
    %7 = vector.broadcast %cst_8 : f32 to vector<16x8xf32>
    %8 = arith.mulf %6, %7 : vector<16x8xf32>
    %cst_9 = arith.constant dense<0xFF800000> : vector<16xf32>
    %9 = vector.multi_reduction <maximumf>, %8, %cst_9 [1] : vector<16x8xf32> to vector<16xf32>
    %10 = vector.shape_cast %9 : vector<16xf32> to vector<16x1xf32>
    %11 = vector.broadcast %10 : vector<16x1xf32> to vector<16x8xf32>
    %12 = arith.subf %8, %11 : vector<16x8xf32>
    %13 = math.exp %12 : vector<16x8xf32>
    %cst_10 = arith.constant dense<0.000000e+00> : vector<16xf32>
    %14 = vector.multi_reduction <add>, %13, %cst_10 [1] : vector<16x8xf32> to vector<16xf32>
    %15 = vector.shape_cast %14 : vector<16xf32> to vector<16x1xf32>
    %16 = vector.broadcast %15 : vector<16x1xf32> to vector<16x8xf32>
    %17 = arith.divf %13, %16 : vector<16x8xf32>
    %18 = arith.truncf %17 : vector<16x8xf32> to vector<16x8xbf16>
    %cst_11 = arith.constant dense<0.000000e+00> : vector<16x32xf32>
    %19 = tpu.matmul %18, %5, %cst_11 {dimension_numbers = #tpu.dot_dimension_numbers<[1], [0], [0], [1], [0, 0, 1, 1], [], []>} : vector<16x8xbf16>, vector<8x32xbf16>, vector<16x32xf32> -> vector<16x32xf32>
    %c0_12 = arith.constant 0 : index
    %c0_13 = arith.constant 0 : index
    %c0_14 = arith.constant 0 : index
    %20 = vector.load %arg4[%c0_12, %c0_13, %c0_14] : memref<1x16x32xf32, #tpu.memory_space<vmem>>, vector<1x16x32xf32>
    %21 = vector.shape_cast %20 : vector<1x16x32xf32> to vector<16x32xf32>
    %22 = vector.shape_cast %19 : vector<16x32xf32> to vector<1x16x32xf32>
    tpu.vector_store %arg4[%c0_12, %c0_13, %c0_14], %22 {strides = array<i32>} : memref<1x16x32xf32, #tpu.memory_space<vmem>>, vector<1x16x32xf32>,
    return
  }
  func.func @transform_0(%arg0: i32) -> (i32, i32, i32) {
    %c0_i32 = arith.constant 0 : i32
    %c0_i32_0 = arith.constant 0 : i32
    %c0_i32_1 = arith.constant 0 : i32
    return %arg0, %c0_i32, %c0_i32_0 : i32, i32, i32
  }
  func.func @transform_1(%arg0: i32) -> (i32, i32, i32) {
    %c0_i32 = arith.constant 0 : i32
    %c0_i32_0 = arith.constant 0 : i32
    %c0_i32_1 = arith.constant 0 : i32
    return %arg0, %c0_i32, %c0_i32_0 : i32, i32, i32
  }
  func.func @transform_2(%arg0: i32) -> (i32, i32, i32) {
    %c0_i32 = arith.constant 0 : i32
    %c0_i32_0 = arith.constant 0 : i32
    %c0_i32_1 = arith.constant 0 : i32
    return %arg0, %c0_i32, %c0_i32_0 : i32, i32, i32
  }
  func.func @transform_3(%arg0: i32) -> (i32, i32, i32) {
    %c0_i32 = arith.constant 0 : i32
    %c0_i32_0 = arith.constant 0 : i32
    %c0_i32_1 = arith.constant 0 : i32
    return %arg0, %c0_i32, %c0_i32_0 : i32, i32, i32
  }
}

module attributes {stable_mosaic.version = 11 : i64} {
  func.func @_linear_kernel(%arg0: i32, %arg1: i32, %arg2: i32, %arg3: memref<32x64xbf16, #tpu.memory_space<vmem>>, %arg4: memref<64x256xbf16, #tpu.memory_space<vmem>>, %arg5: memref<1x256xf32, #tpu.memory_space<vmem>>, %arg6: memref<32x256xf32, #tpu.memory_space<vmem>>) attributes {dimension_semantics = [#tpu.dimension_semantics<parallel>, #tpu.dimension_semantics<parallel>, #tpu.dimension_semantics<arbitrary>], iteration_bounds = array<i64: 1, 4, 1>, scalar_prefetch = 0 : i64, scratch_operands = 0 : i64, tpu.core_type = #tpu.core_type<tc>, window_params = [{transform_indices = @transform_0, window_bounds = array<i64: 32, 64>}, {transform_indices = @transform_1, window_bounds = array<i64: 64, 256>}, {transform_indices = @transform_2, window_bounds = array<i64: 1, 256>}, {transform_indices = @transform_3, window_bounds = array<i64: 32, 256>}]} {
    %c0_i32 = arith.constant 0 : i32
    %0 = arith.cmpi eq, %arg2, %c0_i32 : i32
    %1 = arith.extui %0 : i1 to i32
    %c0_i32_0 = arith.constant 0 : i32
    %2 = arith.cmpi ne, %1, %c0_i32_0 : i32
    scf.if %2 {
      %cst_10 = arith.constant 0.000000e+00 : f32
      %12 = vector.broadcast %cst_10 : f32 to vector<32x256xf32>
      %c0_11 = arith.constant 0 : index
      %c0_12 = arith.constant 0 : index
      %13 = vector.load %arg6[%c0_11, %c0_12] : memref<32x256xf32, #tpu.memory_space<vmem>>, vector<32x256xf32>
      tpu.vector_store %arg6[%c0_11, %c0_12], %12 {strides = array<i32>} : memref<32x256xf32, #tpu.memory_space<vmem>>, vector<32x256xf32>,
    } else {
    }
    %c0 = arith.constant 0 : index
    %c0_1 = arith.constant 0 : index
    %3 = vector.load %arg6[%c0, %c0_1] : memref<32x256xf32, #tpu.memory_space<vmem>>, vector<32x256xf32>
    %c0_2 = arith.constant 0 : index
    %c0_3 = arith.constant 0 : index
    %4 = vector.load %arg3[%c0_2, %c0_3] : memref<32x64xbf16, #tpu.memory_space<vmem>>, vector<32x64xbf16>
    %c0_4 = arith.constant 0 : index
    %c0_5 = arith.constant 0 : index
    %5 = vector.load %arg4[%c0_4, %c0_5] : memref<64x256xbf16, #tpu.memory_space<vmem>>, vector<64x256xbf16>
    %cst = arith.constant dense<0.000000e+00> : vector<32x256xf32>
    %6 = tpu.matmul %4, %5, %cst {dimension_numbers = #tpu.dot_dimension_numbers<[1], [0], [0], [1], [0, 0, 1, 1], [], []>} : vector<32x64xbf16>, vector<64x256xbf16>, vector<32x256xf32> -> vector<32x256xf32>
    %7 = arith.addf %3, %6 : vector<32x256xf32>
    %c0_6 = arith.constant 0 : index
    %c0_7 = arith.constant 0 : index
    %8 = vector.load %arg6[%c0_6, %c0_7] : memref<32x256xf32, #tpu.memory_space<vmem>>, vector<32x256xf32>
    tpu.vector_store %arg6[%c0_6, %c0_7], %7 {strides = array<i32>} : memref<32x256xf32, #tpu.memory_space<vmem>>, vector<32x256xf32>,
    %c0_i32_8 = arith.constant 0 : i32
    %9 = arith.cmpi eq, %arg2, %c0_i32_8 : i32
    %10 = arith.extui %9 : i1 to i32
    %c0_i32_9 = arith.constant 0 : i32
    %11 = arith.cmpi ne, %10, %c0_i32_9 : i32
    scf.if %11 {
      %c0_10 = arith.constant 0 : index
      %c0_11 = arith.constant 0 : index
      %12 = vector.load %arg6[%c0_10, %c0_11] : memref<32x256xf32, #tpu.memory_space<vmem>>, vector<32x256xf32>
      %c0_12 = arith.constant 0 : index
      %c0_13 = arith.constant 0 : index
      %13 = vector.load %arg5[%c0_12, %c0_13] : memref<1x256xf32, #tpu.memory_space<vmem>>, vector<1x256xf32>
      %14 = vector.broadcast %13 : vector<1x256xf32> to vector<32x256xf32>
      %15 = arith.addf %12, %14 : vector<32x256xf32>
      %cst_14 = arith.constant 0.000000e+00 : f32
      %16 = vector.broadcast %cst_14 : f32 to vector<32x256xf32>
      %17 = arith.maximumf %15, %16 : vector<32x256xf32>
      %c0_15 = arith.constant 0 : index
      %c0_16 = arith.constant 0 : index
      %18 = vector.load %arg6[%c0_15, %c0_16] : memref<32x256xf32, #tpu.memory_space<vmem>>, vector<32x256xf32>
      tpu.vector_store %arg6[%c0_15, %c0_16], %17 {strides = array<i32>} : memref<32x256xf32, #tpu.memory_space<vmem>>, vector<32x256xf32>,
    } else {
    }
    return
  }
  func.func @transform_0(%arg0: i32, %arg1: i32, %arg2: i32) -> (i32, i32) {
    %c0_i32 = arith.constant 0 : i32
    return %arg0, %arg2 : i32, i32
  }
  func.func @transform_1(%arg0: i32, %arg1: i32, %arg2: i32) -> (i32, i32) {
    %c0_i32 = arith.constant 0 : i32
    return %arg2, %arg1 : i32, i32
  }
  func.func @transform_2(%arg0: i32, %arg1: i32, %arg2: i32) -> (i32, i32) {
    %c0_i32 = arith.constant 0 : i32
    %c0_i32_0 = arith.constant 0 : i32
    return %c0_i32, %arg1 : i32, i32
  }
  func.func @transform_3(%arg0: i32, %arg1: i32, %arg2: i32) -> (i32, i32) {
    %c0_i32 = arith.constant 0 : i32
    return %arg0, %arg1 : i32, i32
  }
}

module attributes {stable_mosaic.version = 11 : i64} {
  func.func @_linear_kernel(%arg0: i32, %arg1: i32, %arg2: i32, %arg3: memref<32x512xbf16, #tpu.memory_space<vmem>>, %arg4: memref<512x64xbf16, #tpu.memory_space<vmem>>, %arg5: memref<1x64xf32, #tpu.memory_space<vmem>>, %arg6: memref<32x64xf32, #tpu.memory_space<vmem>>, %arg7: memref<1x64xf32, #tpu.memory_space<vmem>>, %arg8: memref<1x64xf32, #tpu.memory_space<vmem>>, %arg9: memref<32x64xf32, #tpu.memory_space<vmem>>) attributes {dimension_semantics = [#tpu.dimension_semantics<parallel>, #tpu.dimension_semantics<parallel>, #tpu.dimension_semantics<arbitrary>], iteration_bounds = array<i64: 1, 1, 2>, scalar_prefetch = 0 : i64, scratch_operands = 0 : i64, tpu.core_type = #tpu.core_type<tc>, window_params = [{transform_indices = @transform_0, window_bounds = array<i64: 32, 512>}, {transform_indices = @transform_1, window_bounds = array<i64: 512, 64>}, {transform_indices = @transform_2, window_bounds = array<i64: 1, 64>}, {transform_indices = @transform_3, window_bounds = array<i64: 32, 64>}, {transform_indices = @transform_4, window_bounds = array<i64: 1, 64>}, {transform_indices = @transform_5, window_bounds = array<i64: 1, 64>}, {transform_indices = @transform_6, window_bounds = array<i64: 32, 64>}]} {
    %c0_i32 = arith.constant 0 : i32
    %0 = arith.cmpi eq, %arg2, %c0_i32 : i32
    %1 = arith.extui %0 : i1 to i32
    %c0_i32_0 = arith.constant 0 : i32
    %2 = arith.cmpi ne, %1, %c0_i32_0 : i32
    scf.if %2 {
      %cst_9 = arith.constant 0.000000e+00 : f32
      %12 = vector.broadcast %cst_9 : f32 to vector<32x64xf32>
      %c0_10 = arith.constant 0 : index
      %c0_11 = arith.constant 0 : index
      %13 = vector.load %arg9[%c0_10, %c0_11] : memref<32x64xf32, #tpu.memory_space<vmem>>, vector<32x64xf32>
      tpu.vector_store %arg9[%c0_10, %c0_11], %12 {strides = array<i32>} : memref<32x64xf32, #tpu.memory_space<vmem>>, vector<32x64xf32>,
    } else {
    }
    %c0 = arith.constant 0 : index
    %c0_1 = arith.constant 0 : index
    %3 = vector.load %arg9[%c0, %c0_1] : memref<32x64xf32, #tpu.memory_space<vmem>>, vector<32x64xf32>
    %c0_2 = arith.constant 0 : index
    %c0_3 = arith.constant 0 : index
    %4 = vector.load %arg3[%c0_2, %c0_3] : memref<32x512xbf16, #tpu.memory_space<vmem>>, vector<32x512xbf16>
    %c0_4 = arith.constant 0 : index
    %c0_5 = arith.constant 0 : index
    %5 = vector.load %arg4[%c0_4, %c0_5] : memref<512x64xbf16, #tpu.memory_space<vmem>>, vector<512x64xbf16>
    %cst = arith.constant dense<0.000000e+00> : vector<32x64xf32>
    %6 = tpu.matmul %4, %5, %cst {dimension_numbers = #tpu.dot_dimension_numbers<[1], [0], [0], [1], [0, 0, 1, 1], [], []>} : vector<32x512xbf16>, vector<512x64xbf16>, vector<32x64xf32> -> vector<32x64xf32>
    %7 = arith.addf %3, %6 : vector<32x64xf32>
    %c0_6 = arith.constant 0 : index
    %c0_7 = arith.constant 0 : index
    %8 = vector.load %arg9[%c0_6, %c0_7] : memref<32x64xf32, #tpu.memory_space<vmem>>, vector<32x64xf32>
    tpu.vector_store %arg9[%c0_6, %c0_7], %7 {strides = array<i32>} : memref<32x64xf32, #tpu.memory_space<vmem>>, vector<32x64xf32>,
    %c1_i32 = arith.constant 1 : i32
    %9 = arith.cmpi eq, %arg2, %c1_i32 : i32
    %10 = arith.extui %9 : i1 to i32
    %c0_i32_8 = arith.constant 0 : i32
    %11 = arith.cmpi ne, %10, %c0_i32_8 : i32
    scf.if %11 {
      %c0_9 = arith.constant 0 : index
      %c0_10 = arith.constant 0 : index
      %12 = vector.load %arg9[%c0_9, %c0_10] : memref<32x64xf32, #tpu.memory_space<vmem>>, vector<32x64xf32>
      %c0_11 = arith.constant 0 : index
      %c0_12 = arith.constant 0 : index
      %13 = vector.load %arg5[%c0_11, %c0_12] : memref<1x64xf32, #tpu.memory_space<vmem>>, vector<1x64xf32>
      %14 = vector.broadcast %13 : vector<1x64xf32> to vector<32x64xf32>
      %15 = arith.addf %12, %14 : vector<32x64xf32>
      %c0_13 = arith.constant 0 : index
      %c0_14 = arith.constant 0 : index
      %16 = vector.load %arg6[%c0_13, %c0_14] : memref<32x64xf32, #tpu.memory_space<vmem>>, vector<32x64xf32>
      %17 = arith.addf %15, %16 : vector<32x64xf32>
      %cst_15 = arith.constant dense<0.000000e+00> : vector<32xf32>
      %18 = vector.multi_reduction <add>, %17, %cst_15 [1] : vector<32x64xf32> to vector<32xf32>
      %19 = vector.shape_cast %18 : vector<32xf32> to vector<32x1xf32>
      %cst_16 = arith.constant 6.400000e+01 : f32
      %20 = vector.broadcast %cst_16 : f32 to vector<32x1xf32>
      %21 = arith.divf %19, %20 : vector<32x1xf32>
      %22 = vector.broadcast %21 : vector<32x1xf32> to vector<32x64xf32>
      %23 = arith.subf %17, %22 : vector<32x64xf32>
      %24 = arith.mulf %23, %23 : vector<32x64xf32>
      %cst_17 = arith.constant dense<0.000000e+00> : vector<32xf32>
      %25 = vector.multi_reduction <add>, %24, %cst_17 [1] : vector<32x64xf32> to vector<32xf32>
      %26 = vector.shape_cast %25 : vector<32xf32> to vector<32x1xf32>
      %cst_18 = arith.constant 6.400000e+01 : f32
      %27 = vector.broadcast %cst_18 : f32 to vector<32x1xf32>
      %28 = arith.divf %26, %27 : vector<32x1xf32>
      %cst_19 = arith.constant 9.99999974E-6 : f32
      %29 = vector.broadcast %cst_19 : f32 to vector<32x1xf32>
      %30 = arith.addf %28, %29 : vector<32x1xf32>
      %31 = math.rsqrt %30 : vector<32x1xf32>
      %32 = vector.broadcast %31 : vector<32x1xf32> to vector<32x64xf32>
      %33 = arith.mulf %23, %32 : vector<32x64xf32>
      %c0_20 = arith.constant 0 : index
      %c0_21 = arith.constant 0 : index
      %34 = vector.load %arg7[%c0_20, %c0_21] : memref<1x64xf32, #tpu.memory_space<vmem>>, vector<1x64xf32>
      %35 = vector.broadcast %34 : vector<1x64xf32> to vector<32x64xf32>
      %36 = arith.mulf %33, %35 : vector<32x64xf32>
      %c0_22 = arith.constant 0 : index
      %c0_23 = arith.constant 0 : index
      %37 = vector.load %arg8[%c0_22, %c0_23] : memref<1x64xf32, #tpu.memory_space<vmem>>, vector<1x64xf32>
      %38 = vector.broadcast %37 : vector<1x64xf32> to vector<32x64xf32>
      %39 = arith.addf %36, %38 : vector<32x64xf32>
      %c0_24 = arith.constant 0 : index
      %c0_25 = arith.constant 0 : index
      %40 = vector.load %arg9[%c0_24, %c0_25] : memref<32x64xf32, #tpu.memory_space<vmem>>, vector<32x64xf32>
      tpu.vector_store %arg9[%c0_24, %c0_25], %39 {strides = array<i32>} : memref<32x64xf32, #tpu.memory_space<vmem>>, vector<32x64xf32>,
    } else {
    }
    return
  }
  func.func @transform_0(%arg0: i32, %arg1: i32, %arg2: i32) -> (i32, i32) {
    %c0_i32 = arith.constant 0 : i32
    return %arg0, %arg2 : i32, i32
  }
  func.func @transform_1(%arg0: i32, %arg1: i32, %arg2: i32) -> (i32, i32) {
    %c0_i32 = arith.constant 0 : i32
    return %arg2, %arg1 : i32, i32
  }
  func.func @transform_2(%arg0: i32, %arg1: i32, %arg2: i32) -> (i32, i32) {
    %c0_i32 = arith.constant 0 : i32
    %c0_i32_0 = arith.constant 0 : i32
    return %c0_i32, %arg1 : i32, i32
  }
  func.func @transform_3(%arg0: i32, %arg1: i32, %arg2: i32) -> (i32, i32) {
    %c0_i32 = arith.constant 0 : i32
    return %arg0, %arg1 : i32, i32
  }
  func.func @transform_4(%arg0: i32, %arg1: i32, %arg2: i32) -> (i32, i32) {
    %c0_i32 = arith.constant 0 : i32
    %c0_i32_0 = arith.constant 0 : i32
    return %c0_i32, %arg1 : i32, i32
  }
  func.func @transform_5(%arg0: i32, %arg1: i32, %arg2: i32) -> (i32, i32) {
    %c0_i32 = arith.constant 0 : i32
    %c0_i32_0 = arith.constant 0 : i32
    return %c0_i32, %arg1 : i32, i32
  }
  func.func @transform_6(%arg0: i32, %arg1: i32, %arg2: i32) -> (i32, i32) {
    %c0_i32 = arith.constant 0 : i32
    return %arg0, %arg1 : i32, i32
  }
}

module attributes {stable_mosaic.version = 11 : i64} {
  func.func @_linear_kernel(%arg0: i32, %arg1: i32, %arg2: i32, %arg3: memref<32x64xbf16, #tpu.memory_space<vmem>>, %arg4: memref<64x128xbf16, #tpu.memory_space<vmem>>, %arg5: memref<1x128xf32, #tpu.memory_space<vmem>>, %arg6: memref<32x128xf32, #tpu.memory_space<vmem>>) attributes {dimension_semantics = [#tpu.dimension_semantics<parallel>, #tpu.dimension_semantics<parallel>, #tpu.dimension_semantics<arbitrary>], iteration_bounds = array<i64: 1, 1, 1>, scalar_prefetch = 0 : i64, scratch_operands = 0 : i64, tpu.core_type = #tpu.core_type<tc>, window_params = [{transform_indices = @transform_0, window_bounds = array<i64: 32, 64>}, {transform_indices = @transform_1, window_bounds = array<i64: 64, 128>}, {transform_indices = @transform_2, window_bounds = array<i64: 1, 128>}, {transform_indices = @transform_3, window_bounds = array<i64: 32, 128>}]} {
    %c0_i32 = arith.constant 0 : i32
    %0 = arith.cmpi eq, %arg2, %c0_i32 : i32
    %1 = arith.extui %0 : i1 to i32
    %c0_i32_0 = arith.constant 0 : i32
    %2 = arith.cmpi ne, %1, %c0_i32_0 : i32
    scf.if %2 {
      %cst_10 = arith.constant 0.000000e+00 : f32
      %12 = vector.broadcast %cst_10 : f32 to vector<32x128xf32>
      %c0_11 = arith.constant 0 : index
      %c0_12 = arith.constant 0 : index
      %13 = vector.load %arg6[%c0_11, %c0_12] : memref<32x128xf32, #tpu.memory_space<vmem>>, vector<32x128xf32>
      tpu.vector_store %arg6[%c0_11, %c0_12], %12 {strides = array<i32>} : memref<32x128xf32, #tpu.memory_space<vmem>>, vector<32x128xf32>,
    } else {
    }
    %c0 = arith.constant 0 : index
    %c0_1 = arith.constant 0 : index
    %3 = vector.load %arg6[%c0, %c0_1] : memref<32x128xf32, #tpu.memory_space<vmem>>, vector<32x128xf32>
    %c0_2 = arith.constant 0 : index
    %c0_3 = arith.constant 0 : index
    %4 = vector.load %arg3[%c0_2, %c0_3] : memref<32x64xbf16, #tpu.memory_space<vmem>>, vector<32x64xbf16>
    %c0_4 = arith.constant 0 : index
    %c0_5 = arith.constant 0 : index
    %5 = vector.load %arg4[%c0_4, %c0_5] : memref<64x128xbf16, #tpu.memory_space<vmem>>, vector<64x128xbf16>
    %cst = arith.constant dense<0.000000e+00> : vector<32x128xf32>
    %6 = tpu.matmul %4, %5, %cst {dimension_numbers = #tpu.dot_dimension_numbers<[1], [0], [0], [1], [0, 0, 1, 1], [], []>} : vector<32x64xbf16>, vector<64x128xbf16>, vector<32x128xf32> -> vector<32x128xf32>
    %7 = arith.addf %3, %6 : vector<32x128xf32>
    %c0_6 = arith.constant 0 : index
    %c0_7 = arith.constant 0 : index
    %8 = vector.load %arg6[%c0_6, %c0_7] : memref<32x128xf32, #tpu.memory_space<vmem>>, vector<32x128xf32>
    tpu.vector_store %arg6[%c0_6, %c0_7], %7 {strides = array<i32>} : memref<32x128xf32, #tpu.memory_space<vmem>>, vector<32x128xf32>,
    %c0_i32_8 = arith.constant 0 : i32
    %9 = arith.cmpi eq, %arg2, %c0_i32_8 : i32
    %10 = arith.extui %9 : i1 to i32
    %c0_i32_9 = arith.constant 0 : i32
    %11 = arith.cmpi ne, %10, %c0_i32_9 : i32
    scf.if %11 {
      %c0_10 = arith.constant 0 : index
      %c0_11 = arith.constant 0 : index
      %12 = vector.load %arg6[%c0_10, %c0_11] : memref<32x128xf32, #tpu.memory_space<vmem>>, vector<32x128xf32>
      %c0_12 = arith.constant 0 : index
      %c0_13 = arith.constant 0 : index
      %13 = vector.load %arg5[%c0_12, %c0_13] : memref<1x128xf32, #tpu.memory_space<vmem>>, vector<1x128xf32>
      %14 = vector.broadcast %13 : vector<1x128xf32> to vector<32x128xf32>
      %15 = arith.addf %12, %14 : vector<32x128xf32>
      %c0_14 = arith.constant 0 : index
      %c0_15 = arith.constant 0 : index
      %16 = vector.load %arg6[%c0_14, %c0_15] : memref<32x128xf32, #tpu.memory_space<vmem>>, vector<32x128xf32>
      tpu.vector_store %arg6[%c0_14, %c0_15], %15 {strides = array<i32>} : memref<32x128xf32, #tpu.memory_space<vmem>>, vector<32x128xf32>,
    } else {
    }
    return
  }
  func.func @transform_0(%arg0: i32, %arg1: i32, %arg2: i32) -> (i32, i32) {
    %c0_i32 = arith.constant 0 : i32
    return %arg0, %arg2 : i32, i32
  }
  func.func @transform_1(%arg0: i32, %arg1: i32, %arg2: i32) -> (i32, i32) {
    %c0_i32 = arith.constant 0 : i32
    return %arg2, %arg1 : i32, i32
  }
  func.func @transform_2(%arg0: i32, %arg1: i32, %arg2: i32) -> (i32, i32) {
    %c0_i32 = arith.constant 0 : i32
    %c0_i32_0 = arith.constant 0 : i32
    return %c0_i32, %arg1 : i32, i32
  }
  func.func @transform_3(%arg0: i32, %arg1: i32, %arg2: i32) -> (i32, i32) {
    %c0_i32 = arith.constant 0 : i32
    return %arg0, %arg1 : i32, i32
  }
}

</mosaic_0001>

<llo_original>
// kernel: transformer_encoder_decoder_seg_forward.22
$region0: #{transformer_encoder_decoder_seg_forward.22}
  #allocation0 [shape = 'u32[]', space=smem, size = 0x4, offset = 0x4, fixed_abs, tag = 'smem constant byte address 0x4 - core index']
  #allocation1 [shape = 'u32[144,128]{1,0:T(1,128)}', space=vmem, size = 0x12000, scoped, tag = 'internal scratch']
  %s0 = inlined_call_operand.vmem [shape: bf16[16,64], index: 0, kind: input, shape index: {}]
  %s1 = inlined_call_operand.vmem [shape: bf16[64,64], index: 1, kind: input, shape index: {}]
  %s2 = inlined_call_operand.vmem [shape: f32[1,64], index: 2, kind: input, shape index: {}]
  %s3 = inlined_call_operand.vmem [shape: f32[16,64], index: 3, kind: output, shape index: {}]
  %s4 = sld [smem:[#allocation0]]
  $region30: #{transformer_encoder_decoder_seg_forward.22} parent=0
    _
  %s6 = ssub.s32 1, %s4
  %s7 = scalar_select 0, %s6, %s4
  // Predicated region
  $region2: #{transformer_encoder_decoder_seg_forward.22} parent=0 // pred_check
    _
  $region3: #{transformer_encoder_decoder_seg_forward.22} parent=0 // pred_check_branch
    %9 = sbr.rel (0) target = $region5
  $region4: #{transformer_encoder_decoder_seg_forward.22} parent=0 // pred_region
    _
  $region5: #{transformer_encoder_decoder_seg_forward.22} parent=0 // pred_fallthru
    _
  // Predicated region
  $region6: #{transformer_encoder_decoder_seg_forward.22} parent=0 // pred_check
    _
  $region7: #{transformer_encoder_decoder_seg_forward.22} parent=0 // pred_check_branch
    %11 = sbr.rel (0) target = $region9
  $region8: #{transformer_encoder_decoder_seg_forward.22} parent=0 // pred_region
    _
  $region9: #{transformer_encoder_decoder_seg_forward.22} parent=0 // pred_fallthru
    _
  // Predicated region
  $region10: #{transformer_encoder_decoder_seg_forward.22} parent=0 // pred_check
    _
  $region11: #{transformer_encoder_decoder_seg_forward.22} parent=0 // pred_check_branch
    %13 = sbr.rel (0) target = $region13
  $region12: #{transformer_encoder_decoder_seg_forward.22} parent=0 // pred_region
    _
  $region13: #{transformer_encoder_decoder_seg_forward.22} parent=0 // pred_fallthru
    _
  %p15 = scmp.eq.s32.totalorder 0, 0
  // Predicated region
  $region14: #{transformer_encoder_decoder_seg_forward.22} parent=0 // pred_check
    %p16 = pneg %p15
  $region15: #{transformer_encoder_decoder_seg_forward.22} parent=0 // pred_check_branch
    %18 = sbr.rel (%p16) target = $region17
  $region16: #{transformer_encoder_decoder_seg_forward.22} parent=0 // pred_region
    %vm19 = vcmask 523264
    %20 = vst.msk [vmem:[%s3] sm:$0xff] %vm19, 0.0
    %21 = vst.msk [vmem:[%s3 + $0x8] sm:$0xff] %vm19, 0.0
  $region17: #{transformer_encoder_decoder_seg_forward.22} parent=0 // pred_fallthru
    _
  %v22 = vld [vmem:[%s3] sm:$0xff]
  %v23 = vld [vmem:[%s3 + $0x8] sm:$0xff]
  %v24 = vld [vmem:[%s0] sm:$0xf]
  %v25 = vld [vmem:[%s0 + $0x4] sm:$0xf]
  %v26 = vld [vmem:[%s1] sm:$0xf]
  %v27 = vld [vmem:[%s1 + $0x4] sm:$0xf]
  %v28 = vld [vmem:[%s1 + $0x8] sm:$0xf]
  %v29 = vld [vmem:[%s1 + $0xc] sm:$0xf]
  %v30 = vld [vmem:[%s1 + $0x10] sm:$0xf]
  %v31 = vld [vmem:[%s1 + $0x14] sm:$0xf]
  %v32 = vld [vmem:[%s1 + $0x18] sm:$0xf]
  %v33 = vld [vmem:[%s1 + $0x1c] sm:$0xf]
  %v36 = vunpack.c.l.b16 %v24
  %v37 = vunpack.c.l.b16 %v25
  %v38 = vpack.c.b16 %v37, %v36
  %v47 = vunpack.c.l.b16 %v26
  %v48 = vunpack.c.l.b16 %v27
  %v49 = vunpack.c.l.b16 %v28
  %v50 = vunpack.c.l.b16 %v29
  %v51 = vunpack.c.l.b16 %v30
  %v52 = vunpack.c.l.b16 %v31
  %v53 = vunpack.c.l.b16 %v32
  %v54 = vunpack.c.l.b16 %v33
  %v55 = vpack.c.b16 %v48, %v47
  %v56 = vpack.c.b16 %v50, %v49
  %v57 = vpack.c.b16 %v52, %v51
  %v58 = vpack.c.b16 %v54, %v53
  %vm63 = vcmask 523264
  %v65 = vsel %vm63, %v38, 0
  %67 = vmatprep.subr.bf16.mxu0 0
  %68 = vmatpush1.bf16.msra.mxu0 0
  %69 = vmatprep.subr.bf16.mxu0 0
  %70 = vmatpush1.bf16.msra.mxu0 0
  %71 = vmatprep.subr.bf16.mxu0 0
  %72 = vmatpush1.bf16.msra.mxu0 0
  %73 = vmatprep.subr.bf16.mxu0 0
  %74 = vmatpush1.bf16.msra.mxu0 0
  %75 = vmatprep.subr.bf16.mxu0 0
  %76 = vmatpush1.bf16.msra.mxu0 %v58
  %77 = vmatprep.subr.bf16.mxu0 0
  %78 = vmatpush1.bf16.msra.mxu0 %v57
  %79 = vmatprep.subr.bf16.mxu0 0
  %80 = vmatpush1.bf16.msra.mxu0 %v56
  %81 = vmatprep.subr.bf16.mxu0 0
  %82 = vmatpush1.bf16.msra.mxu0 %v55
  %83 = vmatprep.subr.bf16.mxu0 0
  %84 = vmatpush2.bf16.msra.mxu0 0
  %85 = vmatprep.subr.bf16.mxu0 0
  %86 = vmatpush2.bf16.msra.mxu0 0
  %87 = vmatprep.subr.bf16.mxu0 0
  %88 = vmatpush2.bf16.msra.mxu0 0
  %89 = vmatprep.subr.bf16.mxu0 0
  %90 = vmatpush2.bf16.msra.mxu0 0
  %91 = vmatprep.subr.bf16.mxu0 0
  %92 = vmatpush2.bf16.msra.mxu0 0
  %93 = vmatprep.subr.bf16.mxu0 0
  %94 = vmatpush2.bf16.msra.mxu0 0
  %95 = vmatprep.subr.bf16.mxu0 0
  %96 = vmatpush2.bf16.msra.mxu0 0
  %97 = vmatprep.subr.bf16.mxu0 0
  %98 = vmatpush2.bf16.msra.mxu0 0
  %99 = vmatprep.mubr.bf16.mxu0 0
  %100 = vmatmul.mubr.bf16.gmra.mxu0 %v65
  %v101 = vpop.f32.mrf.mxu0
  %v102 = vadd.f32 0.0, %v101
  %v103 = vpop.f32.mrf.mxu0
  %v104 = vpop.f32.mrf.mxu0
  %v105 = vadd.f32 0.0, %v104
  %v106 = vpop.f32.mrf.mxu0
  %107 = vdwg.mxu0
  %v108 = vadd.f32 %v22, %v102
  %v109 = vadd.f32 %v23, %v105
  %110 = vst.msk [vmem:[%s3] sm:$0xff] %vm63, %v108
  %111 = vst.msk [vmem:[%s3 + $0x8] sm:$0xff] %vm63, %v109
  // Predicated region
  $region18: #{transformer_encoder_decoder_seg_forward.22} parent=0 // pred_check
    %p112 = pneg %p15
  $region19: #{transformer_encoder_decoder_seg_forward.22} parent=0 // pred_check_branch
    %114 = sbr.rel (%p112) target = $region21
  $region20: #{transformer_encoder_decoder_seg_forward.22} parent=0 // pred_region
    %v115 = vld [vmem:[%s3] sm:$0xff]
    %v116 = vld [vmem:[%s3 + $0x8] sm:$0xff]
    %v117 = vld [vmem:[%s2] sm:$0x1]
    %v119 = vlaneseq
    %v120 = vshrl.u32 %v119, 7
    %v121 = vsub.s32 0, %v120
    %v122 = vrot.slane %v117, %v121
    %v124 = vadd.f32 %v115, %v122
    %v125 = vadd.f32 %v116, %v122
    %126 = vst.msk [vmem:[%s3] sm:$0xff] %vm63, %v124
    %127 = vst.msk [vmem:[%s3 + $0x8] sm:$0xff] %vm63, %v125
  $region21: #{transformer_encoder_decoder_seg_forward.22} parent=0 // pred_fallthru
    _
  // Predicated region
  $region22: #{transformer_encoder_decoder_seg_forward.22} parent=0 // pred_check
    _
  $region23: #{transformer_encoder_decoder_seg_forward.22} parent=0 // pred_check_branch
    %129 = sbr.rel (0) target = $region25
  $region24: #{transformer_encoder_decoder_seg_forward.22} parent=0 // pred_region
    _
  $region25: #{transformer_encoder_decoder_seg_forward.22} parent=0 // pred_fallthru
    _
  // Predicated region
  $region26: #{transformer_encoder_decoder_seg_forward.22} parent=0 // pred_check
    _
  $region27: #{transformer_encoder_decoder_seg_forward.22} parent=0 // pred_check_branch
    %131 = sbr.rel (0) target = $region29
  $region28: #{transformer_encoder_decoder_seg_forward.22} parent=0 // pred_region
    _
  $region29: #{transformer_encoder_decoder_seg_forward.22} parent=0 // pred_fallthru
    _

// kernel: transformer_encoder_decoder_seg_forward.23
$region0: #{transformer_encoder_decoder_seg_forward.23}
  #allocation0 [shape = 'u32[]', space=smem, size = 0x4, offset = 0x4, fixed_abs, tag = 'smem constant byte address 0x4 - core index']
  #allocation1 [shape = 'u32[144,128]{1,0:T(1,128)}', space=vmem, size = 0x12000, scoped, tag = 'internal scratch']
  %s0 = inlined_call_operand.vmem [shape: bf16[16,64], index: 0, kind: input, shape index: {}]
  %s1 = inlined_call_operand.vmem [shape: bf16[64,192], index: 1, kind: input, shape index: {}]
  %s2 = inlined_call_operand.vmem [shape: f32[1,192], index: 2, kind: input, shape index: {}]
  %s3 = inlined_call_operand.vmem [shape: f32[16,192], index: 3, kind: output, shape index: {}]
  %s4 = sld [smem:[#allocation0]]
  $region30: #{transformer_encoder_decoder_seg_forward.23} parent=0
    _
  %s6 = ssub.s32 1, %s4
  %s7 = scalar_select 0, %s6, %s4
  // Predicated region
  $region2: #{transformer_encoder_decoder_seg_forward.23} parent=0 // pred_check
    _
  $region3: #{transformer_encoder_decoder_seg_forward.23} parent=0 // pred_check_branch
    %9 = sbr.rel (0) target = $region5
  $region4: #{transformer_encoder_decoder_seg_forward.23} parent=0 // pred_region
    _
  $region5: #{transformer_encoder_decoder_seg_forward.23} parent=0 // pred_fallthru
    _
  // Predicated region
  $region6: #{transformer_encoder_decoder_seg_forward.23} parent=0 // pred_check
    _
  $region7: #{transformer_encoder_decoder_seg_forward.23} parent=0 // pred_check_branch
    %11 = sbr.rel (0) target = $region9
  $region8: #{transformer_encoder_decoder_seg_forward.23} parent=0 // pred_region
    _
  $region9: #{transformer_encoder_decoder_seg_forward.23} parent=0 // pred_fallthru
    _
  // Predicated region
  $region10: #{transformer_encoder_decoder_seg_forward.23} parent=0 // pred_check
    _
  $region11: #{transformer_encoder_decoder_seg_forward.23} parent=0 // pred_check_branch
    %13 = sbr.rel (0) target = $region13
  $region12: #{transformer_encoder_decoder_seg_forward.23} parent=0 // pred_region
    _
  $region13: #{transformer_encoder_decoder_seg_forward.23} parent=0 // pred_fallthru
    _
  %p15 = scmp.eq.s32.totalorder 0, 0
  // Predicated region
  $region14: #{transformer_encoder_decoder_seg_forward.23} parent=0 // pred_check
    %p16 = pneg %p15
  $region15: #{transformer_encoder_decoder_seg_forward.23} parent=0 // pred_check_branch
    %18 = sbr.rel (%p16) target = $region17
  $region16: #{transformer_encoder_decoder_seg_forward.23} parent=0 // pred_region
    %19 = vst [vmem:[%s3] sm:$0xff] 0.0
    %vm20 = vcmask 523264
    %21 = vst.msk [vmem:[%s3 + $0x8] sm:$0xff] %vm20, 0.0
    %22 = vst [vmem:[%s3 + $0x10] sm:$0xff] 0.0
    %23 = vst.msk [vmem:[%s3 + $0x18] sm:$0xff] %vm20, 0.0
  $region17: #{transformer_encoder_decoder_seg_forward.23} parent=0 // pred_fallthru
    _
  %v24 = vld [vmem:[%s3] sm:$0xff]
  %v25 = vld [vmem:[%s3 + $0x8] sm:$0xff]
  %v26 = vld [vmem:[%s3 + $0x10] sm:$0xff]
  %v27 = vld [vmem:[%s3 + $0x18] sm:$0xff]
  %v28 = vld [vmem:[%s0] sm:$0xf]
  %v29 = vld [vmem:[%s0 + $0x4] sm:$0xf]
  %v30 = vld [vmem:[%s1] sm:$0xff]
  %v31 = vld [vmem:[%s1 + $0x8] sm:$0xff]
  %v32 = vld [vmem:[%s1 + $0x10] sm:$0xff]
  %v33 = vld [vmem:[%s1 + $0x18] sm:$0xff]
  %v34 = vld [vmem:[%s1 + $0x20] sm:$0xff]
  %v35 = vld [vmem:[%s1 + $0x28] sm:$0xff]
  %v36 = vld [vmem:[%s1 + $0x30] sm:$0xff]
  %v37 = vld [vmem:[%s1 + $0x38] sm:$0xff]
  %v40 = vunpack.c.l.b16 %v28
  %v41 = vunpack.c.l.b16 %v29
  %v42 = vpack.c.b16 %v41, %v40
  %v51 = vunpack.c.l.b16 %v30
  %v52 = vunpack.c.h.b16 %v30
  %v53 = vunpack.c.l.b16 %v31
  %v54 = vunpack.c.h.b16 %v31
  %v55 = vunpack.c.l.b16 %v32
  %v56 = vunpack.c.h.b16 %v32
  %v57 = vunpack.c.l.b16 %v33
  %v58 = vunpack.c.h.b16 %v33
  %v59 = vunpack.c.l.b16 %v34
  %v60 = vunpack.c.h.b16 %v34
  %v61 = vunpack.c.l.b16 %v35
  %v62 = vunpack.c.h.b16 %v35
  %v63 = vunpack.c.l.b16 %v36
  %v64 = vunpack.c.h.b16 %v36
  %v65 = vunpack.c.l.b16 %v37
  %v66 = vunpack.c.h.b16 %v37
  %v67 = vpack.c.b16 %v53, %v51
  %v68 = vpack.c.b16 %v54, %v52
  %v69 = vpack.c.b16 %v57, %v55
  %v70 = vpack.c.b16 %v58, %v56
  %v71 = vpack.c.b16 %v61, %v59
  %v72 = vpack.c.b16 %v62, %v60
  %v73 = vpack.c.b16 %v65, %v63
  %v74 = vpack.c.b16 %v66, %v64
  %vm83 = vcmask 523264
  %v85 = vsel %vm83, %v42, 0
  %87 = vmatprep.subr.bf16.mxu0 0
  %88 = vmatpush1.bf16.msra.mxu0 0
  %89 = vmatprep.subr.bf16.mxu0 0
  %90 = vmatpush1.bf16.msra.mxu0 0
  %91 = vmatprep.subr.bf16.mxu0 0
  %92 = vmatpush1.bf16.msra.mxu0 0
  %93 = vmatprep.subr.bf16.mxu0 0
  %94 = vmatpush1.bf16.msra.mxu0 0
  %95 = vmatprep.subr.bf16.mxu0 %v74
  %96 = vmatpush1.bf16.msra.mxu0 %v73
  %97 = vmatprep.subr.bf16.mxu0 %v72
  %98 = vmatpush1.bf16.msra.mxu0 %v71
  %99 = vmatprep.subr.bf16.mxu0 %v70
  %100 = vmatpush1.bf16.msra.mxu0 %v69
  %101 = vmatprep.subr.bf16.mxu0 %v68
  %102 = vmatpush1.bf16.msra.mxu0 %v67
  %103 = vmatprep.subr.bf16.mxu0 0
  %104 = vmatpush2.bf16.msra.mxu0 0
  %105 = vmatprep.subr.bf16.mxu0 0
  %106 = vmatpush2.bf16.msra.mxu0 0
  %107 = vmatprep.subr.bf16.mxu0 0
  %108 = vmatpush2.bf16.msra.mxu0 0
  %109 = vmatprep.subr.bf16.mxu0 0
  %110 = vmatpush2.bf16.msra.mxu0 0
  %111 = vmatprep.subr.bf16.mxu0 0
  %112 = vmatpush2.bf16.msra.mxu0 0
  %113 = vmatprep.subr.bf16.mxu0 0
  %114 = vmatpush2.bf16.msra.mxu0 0
  %115 = vmatprep.subr.bf16.mxu0 0
  %116 = vmatpush2.bf16.msra.mxu0 0
  %117 = vmatprep.subr.bf16.mxu0 0
  %118 = vmatpush2.bf16.msra.mxu0 0
  %119 = vmatprep.mubr.bf16.mxu0 0
  %120 = vmatmul.mubr.bf16.gmra.mxu0 %v85
  %v121 = vpop.f32.mrf.mxu0
  %v122 = vadd.f32 0.0, %v121
  %v123 = vpop.f32.mrf.mxu0
  %v124 = vadd.f32 0.0, %v123
  %v125 = vpop.f32.mrf.mxu0
  %v126 = vadd.f32 0.0, %v125
  %v127 = vpop.f32.mrf.mxu0
  %v128 = vadd.f32 0.0, %v127
  %129 = vdwg.mxu0
  %v130 = vadd.f32 %v24, %v122
  %v131 = vadd.f32 %v25, %v124
  %v132 = vadd.f32 %v26, %v126
  %v133 = vadd.f32 %v27, %v128
  %134 = vst [vmem:[%s3] sm:$0xff] %v130
  %135 = vst.msk [vmem:[%s3 + $0x8] sm:$0xff] %vm83, %v131
  %136 = vst [vmem:[%s3 + $0x10] sm:$0xff] %v132
  %137 = vst.msk [vmem:[%s3 + $0x18] sm:$0xff] %vm83, %v133
  // Predicated region
  $region18: #{transformer_encoder_decoder_seg_forward.23} parent=0 // pred_check
    %p138 = pneg %p15
  $region19: #{transformer_encoder_decoder_seg_forward.23} parent=0 // pred_check_branch
    %140 = sbr.rel (%p138) target = $region21
  $region20: #{transformer_encoder_decoder_seg_forward.23} parent=0 // pred_region
    %v141 = vld [vmem:[%s3] sm:$0xff]
    %v142 = vld [vmem:[%s3 + $0x8] sm:$0xff]
    %v143 = vld [vmem:[%s3 + $0x10] sm:$0xff]
    %v144 = vld [vmem:[%s3 + $0x18] sm:$0xff]
    %v145 = vld [vmem:[%s2] sm:$0x3]
    %v147 = vlaneseq
    %v148 = vshrl.u32 %v147, 7
    %v149 = vsub.s32 0, %v148
    %v150 = vrot.slane %v145, %v149
    %v151 = vlaneseq
    %v152 = vshrl.u32 %v151, 7
    %v153 = vsub.s32 1, %v152
    %v154 = vrot.slane %v145, %v153
    %v157 = vadd.f32 %v141, %v150
    %v158 = vadd.f32 %v142, %v154
    %v159 = vadd.f32 %v143, %v150
    %v160 = vadd.f32 %v144, %v154
    %161 = vst [vmem:[%s3] sm:$0xff] %v157
    %162 = vst.msk [vmem:[%s3 + $0x8] sm:$0xff] %vm83, %v158
    %163 = vst [vmem:[%s3 + $0x10] sm:$0xff] %v159
    %164 = vst.msk [vmem:[%s3 + $0x18] sm:$0xff] %vm83, %v160
  $region21: #{transformer_encoder_decoder_seg_forward.23} parent=0 // pred_fallthru
    _
  // Predicated region
  $region22: #{transformer_encoder_decoder_seg_forward.23} parent=0 // pred_check
    _
  $region23: #{transformer_encoder_decoder_seg_forward.23} parent=0 // pred_check_branch
    %166 = sbr.rel (0) target = $region25
  $region24: #{transformer_encoder_decoder_seg_forward.23} parent=0 // pred_region
    _
  $region25: #{transformer_encoder_decoder_seg_forward.23} parent=0 // pred_fallthru
    _
  // Predicated region
  $region26: #{transformer_encoder_decoder_seg_forward.23} parent=0 // pred_check
    _
  $region27: #{transformer_encoder_decoder_seg_forward.23} parent=0 // pred_check_branch
    %168 = sbr.rel (0) target = $region29
  $region28: #{transformer_encoder_decoder_seg_forward.23} parent=0 // pred_region
    _
  $region29: #{transformer_encoder_decoder_seg_forward.23} parent=0 // pred_fallthru
    _

// kernel: transformer_encoder_decoder_seg_forward.24
$region0: #{transformer_encoder_decoder_seg_forward.24}
  #allocation0 [shape = 'u32[]', space=smem, size = 0x4, offset = 0x4, fixed_abs, tag = 'smem constant byte address 0x4 - core index']
  #allocation1 [shape = 'u32[144,128]{1,0:T(1,128)}', space=vmem, size = 0x12000, scoped, tag = 'internal scratch']
  %s0 = inlined_call_operand.vmem [shape: bf16[8,8,16], index: 0, kind: input, shape index: {}]
  %s1 = inlined_call_operand.vmem [shape: bf16[8,8,16], index: 1, kind: input, shape index: {}]
  %s2 = inlined_call_operand.vmem [shape: bf16[8,8,16], index: 2, kind: input, shape index: {}]
  %s3 = inlined_call_operand.vmem [shape: f32[8,8,16], index: 3, kind: output, shape index: {}]
  %s4 = sld [smem:[#allocation0]]
  $region45: #{transformer_encoder_decoder_seg_forward.24} parent=0
    _
  %s6 = ssub.s32 1, %s4
  %s7 = scalar_select 0, %s6, %s4
  loop: start=0, step=1, limit=10
  $region2: #{transformer_encoder_decoder_seg_forward.24} parent=0 // loop_pre_header
    _
  $region3: #{transformer_encoder_decoder_seg_forward.24} parent=0 // loop_header
    %s9 = sphi 0, %s13
    %p10 = scmp.ge.s32.totalorder %s9, 10
    %s19 = sphi 0, %s21
    %s22 = sphi 0, %s19
    %s23 = sphi 0, %s22
    %s39 = sphi 0, %s23
    %s45 = sphi 0, %s47
    %s48 = sphi 0, %s45
    %s49 = sphi 0, %s48
    %s65 = sphi 0, %s49
    %s71 = sphi 0, %s73
    %s74 = sphi 0, %s71
    %s75 = sphi 0, %s74
    %s91 = sphi 0, %s75
    %s97 = sphi 0, %s99
    %s100 = sphi 0, %s97
    %s101 = sphi 0, %s100
    %s117 = sphi 0, %s101
  $region4: #{transformer_encoder_decoder_seg_forward.24} parent=0 // loop_header_branch
    %12 = sbr.rel (%p10) target = $region8
  $region5: #{transformer_encoder_decoder_seg_forward.24} parent=0 // loop_body
    %s14 = ssub.s32 %s9, 1
    %s15 = ssub.s32 %s9, 2
    %s16 = sadd.s32 %s9, 1
    %s17 = ssub.s32 %s9, %s16
    %p18 = scmp.eq.s32.totalorder %s17, 0
    %s20 = sadd.s32 %s19, 1
    %s21 = scalar_select %p18, %s19, %s20
    %p24 = pneg %p18
    %p25 = scmp.eq.s32.totalorder %s9, 7
    %p26 = por %p24, %p25
    %p27 = scmp.ne.s32.totalorder %s19, %s22
    %p28 = scmp.eq.s32.totalorder %s9, 0
    %p29 = por %p27, %p28
    %p30 = scmp.ne.s32.totalorder %s19, %s22
    %p31 = scmp.eq.s32.totalorder %s14, 7
    %p32 = por %p30, %p31
    %p33 = scmp.ne.s32.totalorder %s22, %s23
    %p34 = scmp.eq.s32.totalorder %s14, 0
    %p35 = por %p33, %p34
    %p36 = scmp.ne.s32.totalorder %s22, %s23
    %p37 = scmp.eq.s32.totalorder %s15, 7
    %p38 = por %p36, %p37
    %p40 = scmp.ne.s32.totalorder %s23, %s39
    %p41 = scmp.eq.s32.totalorder %s15, 0
    %p42 = por %p40, %p41
    %s43 = ssub.s32 %s9, %s16
    %p44 = scmp.eq.s32.totalorder %s43, 0
    %s46 = sadd.s32 %s45, 1
    %s47 = scalar_select %p44, %s45, %s46
    %p50 = pneg %p44
    %p51 = scmp.eq.s32.totalorder %s9, 7
    %p52 = por %p50, %p51
    %p53 = scmp.ne.s32.totalorder %s45, %s48
    %p54 = scmp.eq.s32.totalorder %s9, 0
    %p55 = por %p53, %p54
    %p56 = scmp.ne.s32.totalorder %s45, %s48
    %p57 = scmp.eq.s32.totalorder %s14, 7
    %p58 = por %p56, %p57
    %p59 = scmp.ne.s32.totalorder %s48, %s49
    %p60 = scmp.eq.s32.totalorder %s14, 0
    %p61 = por %p59, %p60
    %p62 = scmp.ne.s32.totalorder %s48, %s49
    %p63 = scmp.eq.s32.totalorder %s15, 7
    %p64 = por %p62, %p63
    %p66 = scmp.ne.s32.totalorder %s49, %s65
    %p67 = scmp.eq.s32.totalorder %s15, 0
    %p68 = por %p66, %p67
    %s69 = ssub.s32 %s9, %s16
    %p70 = scmp.eq.s32.totalorder %s69, 0
    %s72 = sadd.s32 %s71, 1
    %s73 = scalar_select %p70, %s71, %s72
    %p76 = pneg %p70
    %p77 = scmp.eq.s32.totalorder %s9, 7
    %p78 = por %p76, %p77
    %p79 = scmp.ne.s32.totalorder %s71, %s74
    %p80 = scmp.eq.s32.totalorder %s9, 0
    %p81 = por %p79, %p80
    %p82 = scmp.ne.s32.totalorder %s71, %s74
    %p83 = scmp.eq.s32.totalorder %s14, 7
    %p84 = por %p82, %p83
    %p85 = scmp.ne.s32.totalorder %s74, %s75
    %p86 = scmp.eq.s32.totalorder %s14, 0
    %p87 = por %p85, %p86
    %p88 = scmp.ne.s32.totalorder %s74, %s75
    %p89 = scmp.eq.s32.totalorder %s15, 7
    %p90 = por %p88, %p89
    %p92 = scmp.ne.s32.totalorder %s75, %s91
    %p93 = scmp.eq.s32.totalorder %s15, 0
    %p94 = por %p92, %p93
    %s95 = ssub.s32 %s9, %s16
    %p96 = scmp.eq.s32.totalorder %s95, 0
    %s98 = sadd.s32 %s97, 1
    %s99 = scalar_select %p96, %s97, %s98
    %p102 = pneg %p96
    %p103 = scmp.eq.s32.totalorder %s9, 7
    %p104 = por %p102, %p103
    %p105 = scmp.ne.s32.totalorder %s97, %s100
    %p106 = scmp.eq.s32.totalorder %s9, 0
    %p107 = por %p105, %p106
    %p108 = scmp.ne.s32.totalorder %s97, %s100
    %p109 = scmp.eq.s32.totalorder %s14, 7
    %p110 = por %p108, %p109
    %p111 = scmp.ne.s32.totalorder %s100, %s101
    %p112 = scmp.eq.s32.totalorder %s14, 0
    %p113 = por %p111, %p112
    %p114 = scmp.ne.s32.totalorder %s100, %s101
    %p115 = scmp.eq.s32.totalorder %s15, 7
    %p116 = por %p114, %p115
    %p118 = scmp.ne.s32.totalorder %s101, %s117
    %p119 = scmp.eq.s32.totalorder %s15, 0
    %p120 = por %p118, %p119
    %p121 = scmp.le.s32.totalorder 1, %s9
    %p122 = scmp.lt.s32.totalorder %s9, 9
    %p123 = pnand %p121, %p122
    %p124 = pneg %p123
    // Predicated region
    $region9: #{transformer_encoder_decoder_seg_forward.24} parent=5 // pred_check
      _
    $region10: #{transformer_encoder_decoder_seg_forward.24} parent=5 // pred_check_branch
      %126 = sbr.rel (%p123) target = $region12
    $region11: #{transformer_encoder_decoder_seg_forward.24} parent=5 // pred_region
      %s127 = ssub.s32 %s9, 1
    $region12: #{transformer_encoder_decoder_seg_forward.24} parent=5 // pred_fallthru
      _
    %p128 = scmp.lt.s32.totalorder %s9, 8
    // Predicated region
    $region13: #{transformer_encoder_decoder_seg_forward.24} parent=5 // pred_check
      %p129 = pneg %p128
    $region14: #{transformer_encoder_decoder_seg_forward.24} parent=5 // pred_check_branch
      %131 = sbr.rel (%p129) target = $region16
    $region15: #{transformer_encoder_decoder_seg_forward.24} parent=5 // pred_region
      // Predicated region
      $region17: #{transformer_encoder_decoder_seg_forward.24} parent=15 // pred_check
        %p132 = pneg %p29
      $region18: #{transformer_encoder_decoder_seg_forward.24} parent=15 // pred_check_branch
        %134 = sbr.rel (%p132) target = $region20
      $region19: #{transformer_encoder_decoder_seg_forward.24} parent=15 // pred_region
        %p135 = scmp.lt.s32.totalorder %s9, 7
        %s136 = scalar_select %p135, %s9, 7
        %s137 = smul.addr %s136, 4
        %s138 = scalar_lea.vmem %s0, %s137
      $region20: #{transformer_encoder_decoder_seg_forward.24} parent=15 // pred_fallthru
        _
      // Predicated region
      $region21: #{transformer_encoder_decoder_seg_forward.24} parent=15 // pred_check
        %p139 = pneg %p55
      $region22: #{transformer_encoder_decoder_seg_forward.24} parent=15 // pred_check_branch
        %141 = sbr.rel (%p139) target = $region24
      $region23: #{transformer_encoder_decoder_seg_forward.24} parent=15 // pred_region
        %p142 = scmp.lt.s32.totalorder %s9, 7
        %s143 = scalar_select %p142, %s9, 7
        %s144 = smul.addr %s143, 4
        %s145 = scalar_lea.vmem %s1, %s144
      $region24: #{transformer_encoder_decoder_seg_forward.24} parent=15 // pred_fallthru
        _
      // Predicated region
      $region25: #{transformer_encoder_decoder_seg_forward.24} parent=15 // pred_check
        %p146 = pneg %p81
      $region26: #{transformer_encoder_decoder_seg_forward.24} parent=15 // pred_check_branch
        %148 = sbr.rel (%p146) target = $region28
      $region27: #{transformer_encoder_decoder_seg_forward.24} parent=15 // pred_region
        %p149 = scmp.lt.s32.totalorder %s9, 7
        %s150 = scalar_select %p149, %s9, 7
        %s151 = smul.addr %s150, 4
        %s152 = scalar_lea.vmem %s2, %s151
      $region28: #{transformer_encoder_decoder_seg_forward.24} parent=15 // pred_fallthru
        _
    $region16: #{transformer_encoder_decoder_seg_forward.24} parent=5 // pred_fallthru
      _
    %p153 = scmp.le.s32.totalorder 1, %s9
    %p154 = scmp.lt.s32.totalorder %s9, 9
    %p155 = pnand %p153, %p154
    %p156 = pneg %p155
    // Predicated region
    $region29: #{transformer_encoder_decoder_seg_forward.24} parent=5 // pred_check
      _
    $region30: #{transformer_encoder_decoder_seg_forward.24} parent=5 // pred_check_branch
      %158 = sbr.rel (%p155) target = $region32
    $region31: #{transformer_encoder_decoder_seg_forward.24} parent=5 // pred_region
      %s159 = ssub.s32 %s9, 1
      %p160 = scmp.lt.s32.totalorder %s14, 7
      %s161 = scalar_select %p160, %s14, 7
      %s162 = smul.addr %s161, 4
      %s163 = scalar_lea.vmem %s0, %s162
      %p164 = pneg %p35
      %p165 = pneg %p32
      %p166 = scmp.lt.s32.totalorder %s14, 7
      %s167 = scalar_select %p166, %s14, 7
      %s168 = smul.addr %s167, 4
      %s169 = scalar_lea.vmem %s1, %s168
      %p170 = pneg %p61
      %p171 = pneg %p58
      %p172 = scmp.lt.s32.totalorder %s14, 7
      %s173 = scalar_select %p172, %s14, 7
      %s174 = smul.addr %s173, 4
      %s175 = scalar_lea.vmem %s2, %s174
      %p176 = pneg %p87
      %p177 = pneg %p84
      %p178 = pneg %p113
      %p179 = pneg %p110
      %p180 = scmp.lt.s32.totalorder %s14, 7
      %s181 = scalar_select %p180, %s14, 7
      %s182 = smul.addr %s181, 8
      %s183 = scalar_lea.vmem %s3, %s182
      %p184 = scmp.lt.s32.totalorder %s14, 7
      %s185 = scalar_select %p184, %s14, 7
      %s186 = smul.addr %s185, 4
      %s187 = scalar_lea.vmem %s0, %s186
      %p188 = scmp.lt.s32.totalorder %s14, 7
      %s189 = scalar_select %p188, %s14, 7
      %s190 = smul.addr %s189, 4
      %s191 = scalar_lea.vmem %s1, %s190
      %p192 = scmp.lt.s32.totalorder %s14, 7
      %s193 = scalar_select %p192, %s14, 7
      %s194 = smul.addr %s193, 4
      %s195 = scalar_lea.vmem %s2, %s194
      %p196 = scmp.lt.s32.totalorder %s14, 7
      %s197 = scalar_select %p196, %s14, 7
      %s198 = smul.addr %s197, 8
      %s199 = scalar_lea.vmem %s3, %s198
      %v201 = vld [vmem:[%s187] sm:$0xf]
      %v202 = vld [vmem:[%s191] sm:$0xf]
      %v203 = vld [vmem:[%s195] sm:$0xf]
      %vm204 = vcmask 130048
      %v206 = vsel %vm204, %v201, 0
      %v209 = vsel %vm204, %v202, 0
      %211 = vmatprep.subr.bf16.mxu0 0
      %212 = vmatpush1.bf16.xpose.msra.mxu0 0
      %213 = vmatprep.subr.bf16.mxu0 0
      %214 = vmatpush1.bf16.xpose.msra.mxu0 0
      %215 = vmatprep.subr.bf16.mxu0 0
      %216 = vmatpush1.bf16.xpose.msra.mxu0 0
      %217 = vmatprep.subr.bf16.mxu0 0
      %218 = vmatpush1.bf16.xpose.msra.mxu0 0
      %219 = vmatprep.subr.bf16.mxu0 0
      %220 = vmatpush1.bf16.xpose.msra.mxu0 0
      %221 = vmatprep.subr.bf16.mxu0 0
      %222 = vmatpush1.bf16.xpose.msra.mxu0 0
      %223 = vmatprep.subr.bf16.mxu0 0
      %224 = vmatpush1.bf16.xpose.msra.mxu0 0
      %225 = vmatprep.subr.bf16.mxu0 0
      %226 = vmatpush1.bf16.xpose.msra.mxu0 %v209
      %227 = vmatprep.subr.bf16.mxu0 0
      %228 = vmatpush2.bf16.xpose.msra.mxu0 0
      %229 = vmatprep.subr.bf16.mxu0 0
      %230 = vmatpush2.bf16.xpose.msra.mxu0 0
      %231 = vmatprep.subr.bf16.mxu0 0
      %232 = vmatpush2.bf16.xpose.msra.mxu0 0
      %233 = vmatprep.subr.bf16.mxu0 0
      %234 = vmatpush2.bf16.xpose.msra.mxu0 0
      %235 = vmatprep.subr.bf16.mxu0 0
      %236 = vmatpush2.bf16.xpose.msra.mxu0 0
      %237 = vmatprep.subr.bf16.mxu0 0
      %238 = vmatpush2.bf16.xpose.msra.mxu0 0
      %239 = vmatprep.subr.bf16.mxu0 0
      %240 = vmatpush2.bf16.xpose.msra.mxu0 0
      %241 = vmatprep.subr.bf16.mxu0 0
      %242 = vmatpush2.bf16.xpose.msra.mxu0 0
      %243 = vmatprep.mubr.bf16.mxu0 0
      %244 = vmatmul.mubr.bf16.gmra.mxu0 %v206
      %v245 = vpop.f32.mrf.mxu0
      %v246 = vadd.f32 0.0, %v245
      %v247 = vpop.f32.mrf.mxu0
      %v248 = vpop.f32.mrf.mxu0
      %v249 = vpop.f32.mrf.mxu0
      %250 = vdwg.mxu0
      %v251 = vmul.f32 %v246, 0.25
      %vm252 = vcmask 64512
      %v253 = vsel %vm252, %v251, -inf
      %254 = vmax.xlane.f32.xlu0 %v253
      %v255 = vpop.xlane.xlu0 %254
      %v256 = vsub.f32 %v251, %v255
      %v257 = vmul.f32 %v256, 1.442695
      %v258 = vpow.pop %v257
      %v259 = vsel %vm252, %v258, 0.0
      %260 = vadd.xlane.f32.xlu0 %v259
      %v261 = vpop.xlane.xlu0 %260
      %v262 = vrcp.pop %v261
      %v263 = vmul.f32 %v258, %v262
      %v264 = vpack.c.bf16 %v263, %v263
      %v266 = vsel %vm252, %v264, 0
      %vm268 = vcmask 1043456
      %v270 = vsel %vm268, %v203, 0
      %272 = vmatprep.subr.bf16.mxu0 0
      %273 = vmatpush1.bf16.msra.mxu0 0
      %274 = vmatprep.subr.bf16.mxu0 0
      %275 = vmatpush1.bf16.msra.mxu0 0
      %276 = vmatprep.subr.bf16.mxu0 0
      %277 = vmatpush1.bf16.msra.mxu0 0
      %278 = vmatprep.subr.bf16.mxu0 0
      %279 = vmatpush1.bf16.msra.mxu0 0
      %280 = vmatprep.subr.bf16.mxu0 0
      %281 = vmatpush1.bf16.msra.mxu0 0
      %282 = vmatprep.subr.bf16.mxu0 0
      %283 = vmatpush1.bf16.msra.mxu0 0
      %284 = vmatprep.subr.bf16.mxu0 0
      %285 = vmatpush1.bf16.msra.mxu0 0
      %286 = vmatprep.subr.bf16.mxu0 0
      %287 = vmatpush1.bf16.msra.mxu0 %v270
      %288 = vmatprep.subr.bf16.mxu0 0
      %289 = vmatpush2.bf16.msra.mxu0 0
      %290 = vmatprep.subr.bf16.mxu0 0
      %291 = vmatpush2.bf16.msra.mxu0 0
      %292 = vmatprep.subr.bf16.mxu0 0
      %293 = vmatpush2.bf16.msra.mxu0 0
      %294 = vmatprep.subr.bf16.mxu0 0
      %295 = vmatpush2.bf16.msra.mxu0 0
      %296 = vmatprep.subr.bf16.mxu0 0
      %297 = vmatpush2.bf16.msra.mxu0 0
      %298 = vmatprep.subr.bf16.mxu0 0
      %299 = vmatpush2.bf16.msra.mxu0 0
      %300 = vmatprep.subr.bf16.mxu0 0
      %301 = vmatpush2.bf16.msra.mxu0 0
      %302 = vmatprep.subr.bf16.mxu0 0
      %303 = vmatpush2.bf16.msra.mxu0 0
      %304 = vmatprep.mubr.bf16.mxu0 0
      %305 = vmatmul.mubr.bf16.gmra.mxu0 %v266
      %v306 = vpop.f32.mrf.mxu0
      %v307 = vadd.f32 0.0, %v306
      %v308 = vpop.f32.mrf.mxu0
      %v309 = vpop.f32.mrf.mxu0
      %v310 = vpop.f32.mrf.mxu0
      %311 = vdwg.mxu0
      %312 = vst.msk [vmem:[%s199] sm:$0xff] %vm204, %v307
      %p313 = scmp.lt.s32.totalorder %s14, 7
      %s314 = scalar_select %p313, %s14, 7
      %s315 = smul.addr %s314, 8
      %s316 = scalar_lea.vmem %s3, %s315
      // Predicated region
      $region33: #{transformer_encoder_decoder_seg_forward.24} parent=31 // pred_check
        %p317 = pneg %p110
      $region34: #{transformer_encoder_decoder_seg_forward.24} parent=31 // pred_check_branch
        %319 = sbr.rel (%p317) target = $region36
      $region35: #{transformer_encoder_decoder_seg_forward.24} parent=31 // pred_region
        _
      $region36: #{transformer_encoder_decoder_seg_forward.24} parent=31 // pred_fallthru
        _
    $region32: #{transformer_encoder_decoder_seg_forward.24} parent=5 // pred_fallthru
      _
    %p320 = scmp.le.s32.totalorder 2, %s9
    // Predicated region
    $region37: #{transformer_encoder_decoder_seg_forward.24} parent=5 // pred_check
      %p321 = pneg %p320
    $region38: #{transformer_encoder_decoder_seg_forward.24} parent=5 // pred_check_branch
      %323 = sbr.rel (%p321) target = $region40
    $region39: #{transformer_encoder_decoder_seg_forward.24} parent=5 // pred_region
      %s324 = ssub.s32 %s9, 2
      // Predicated region
      $region41: #{transformer_encoder_decoder_seg_forward.24} parent=39 // pred_check
        %p325 = pneg %p116
      $region42: #{transformer_encoder_decoder_seg_forward.24} parent=39 // pred_check_branch
        %327 = sbr.rel (%p325) target = $region44
      $region43: #{transformer_encoder_decoder_seg_forward.24} parent=39 // pred_region
        %p328 = scmp.lt.s32.totalorder %s15, 7
        %s329 = scalar_select %p328, %s15, 7
        %s330 = smul.addr %s329, 8
        %s331 = scalar_lea.vmem %s3, %s330
      $region44: #{transformer_encoder_decoder_seg_forward.24} parent=39 // pred_fallthru
        _
    $region40: #{transformer_encoder_decoder_seg_forward.24} parent=5 // pred_fallthru
      _
  $region6: #{transformer_encoder_decoder_seg_forward.24} parent=0 // loop_footer
    %s13 = sadd.s32 1, %s9
  $region7: #{transformer_encoder_decoder_seg_forward.24} parent=0 // loop_footer_branch
    %8 = sbr.rel target = $region3
  $region8: #{transformer_encoder_decoder_seg_forward.24} parent=0 // loop_exit
    _

// kernel: transformer_encoder_decoder_seg_forward.26
$region0: #{transformer_encoder_decoder_seg_forward.26}
  #allocation0 [shape = 'u32[]', space=smem, size = 0x4, offset = 0x4, fixed_abs, tag = 'smem constant byte address 0x4 - core index']
  #allocation1 [shape = 'u32[144,128]{1,0:T(1,128)}', space=vmem, size = 0x12000, scoped, tag = 'internal scratch']
  %s0 = inlined_call_operand.vmem [shape: bf16[16,64], index: 0, kind: input, shape index: {}]
  %s1 = inlined_call_operand.vmem [shape: bf16[64,1024], index: 1, kind: input, shape index: {}]
  %s2 = inlined_call_operand.vmem [shape: f32[1,1024], index: 2, kind: input, shape index: {}]
  %s3 = inlined_call_operand.vmem [shape: f32[16,1024], index: 3, kind: output, shape index: {}]
  %s4 = sld [smem:[#allocation0]]
  $region110: #{transformer_encoder_decoder_seg_forward.26} parent=0
    _
  %s6 = ssub.s32 1, %s4
  %s7 = scalar_select 0, %s6, %s4
  $region1: #{transformer_encoder_decoder_seg_forward.26} parent=0
    #allocation2 [shape = 'u8[65536]{0}', space=vmem, size = 0x10000, scoped, tag = 'input window, operand 1']
    #allocation3 [shape = 'u8[32768]{0}', space=vmem, size = 0x8000, scoped, tag = 'output window, operand 0']
    loop: start=0, step=1, limit=6
    $region2: #{transformer_encoder_decoder_seg_forward.26} parent=1 // loop_pre_header
      _
    $region3: #{transformer_encoder_decoder_seg_forward.26} parent=1 // loop_header
      %s9 = sphi 0, %s13
      %p10 = scmp.ge.s32.totalorder %s9, 6
      %s16 = sphi 0, %s35
      %s17 = sphi 0, %s31
      %s18 = sphi 0, %s27
      %s19 = sphi 0, %s16
      %s20 = sphi 0, %s17
      %s21 = sphi 0, %s18
      %s22 = sphi 0, %s19
      %s23 = sphi 0, %s20
      %s24 = sphi 0, %s21
      %s40 = sphi 0, %s42
      %s43 = sphi 0, %s40
      %s44 = sphi 0, %s43
      %s60 = sphi 0, %s44
      %s68 = sphi 0, %s70
      %s71 = sphi 0, %s68
      %s72 = sphi 0, %s71
      %s88 = sphi 0, %s72
      %s94 = sphi 0, %s96
      %s97 = sphi 0, %s94
      %s98 = sphi 0, %s97
      %s114 = sphi 0, %s98
      %s122 = sphi 0, %s124
      %s125 = sphi 0, %s122
      %s126 = sphi 0, %s125
      %s142 = sphi 0, %s126
    $region4: #{transformer_encoder_decoder_seg_forward.26} parent=1 // loop_header_branch
      %12 = sbr.rel (%p10) target = $region8
    $region5: #{transformer_encoder_decoder_seg_forward.26} parent=1 // loop_body
      %s14 = ssub.s32 %s9, 1
      %s15 = ssub.s32 %s9, 2
      %s25 = sadd.s32 1, %s18
      %p26 = scmp.ge.s32.totalorder %s25, 1
      %s27 = scalar_select %p26, 0, %s25
      %s28 = sadd.s32 1, %s17
      %s29 = scalar_select %p26, %s28, %s17
      %p30 = scmp.ge.s32.totalorder %s29, 4
      %s31 = scalar_select %p30, 0, %s29
      %s32 = sadd.s32 1, %s16
      %s33 = scalar_select %p30, %s32, %s16
      %p34 = scmp.ge.s32.totalorder %s33, 1
      %s35 = scalar_select %p34, 0, %s33
      %s36 = ssub.s32 %s16, %s35
      %s37 = ssub.s32 %s18, %s27
      %s38 = sor.u32 %s36, %s37
      %p39 = scmp.eq.s32.totalorder %s38, 0
      %s41 = sadd.s32 %s40, 1
      %s42 = scalar_select %p39, %s40, %s41
      %p45 = pneg %p39
      %p46 = scmp.eq.s32.totalorder %s9, 3
      %p47 = por %p45, %p46
      %p48 = scmp.ne.s32.totalorder %s40, %s43
      %p49 = scmp.eq.s32.totalorder %s9, 0
      %p50 = por %p48, %p49
      %p51 = scmp.ne.s32.totalorder %s40, %s43
      %p52 = scmp.eq.s32.totalorder %s14, 3
      %p53 = por %p51, %p52
      %p54 = scmp.ne.s32.totalorder %s43, %s44
      %p55 = scmp.eq.s32.totalorder %s14, 0
      %p56 = por %p54, %p55
      %p57 = scmp.ne.s32.totalorder %s43, %s44
      %p58 = scmp.eq.s32.totalorder %s15, 3
      %p59 = por %p57, %p58
      %p61 = scmp.ne.s32.totalorder %s44, %s60
      %p62 = scmp.eq.s32.totalorder %s15, 0
      %p63 = por %p61, %p62
      %s64 = ssub.s32 %s18, %s27
      %s65 = ssub.s32 %s17, %s31
      %s66 = sor.u32 %s64, %s65
      %p67 = scmp.eq.s32.totalorder %s66, 0
      %s69 = sadd.s32 %s68, 1
      %s70 = scalar_select %p67, %s68, %s69
      %p73 = pneg %p67
      %p74 = scmp.eq.s32.totalorder %s9, 3
      %p75 = por %p73, %p74
      %p76 = scmp.ne.s32.totalorder %s68, %s71
      %p77 = scmp.eq.s32.totalorder %s9, 0
      %p78 = por %p76, %p77
      %p79 = scmp.ne.s32.totalorder %s68, %s71
      %p80 = scmp.eq.s32.totalorder %s14, 3
      %p81 = por %p79, %p80
      %p82 = scmp.ne.s32.totalorder %s71, %s72
      %p83 = scmp.eq.s32.totalorder %s14, 0
      %p84 = por %p82, %p83
      %p85 = scmp.ne.s32.totalorder %s71, %s72
      %p86 = scmp.eq.s32.totalorder %s15, 3
      %p87 = por %p85, %p86
      %p89 = scmp.ne.s32.totalorder %s72, %s88
      %p90 = scmp.eq.s32.totalorder %s15, 0
      %p91 = por %p89, %p90
      %s92 = ssub.s32 %s17, %s31
      %p93 = scmp.eq.s32.totalorder %s92, 0
      %s95 = sadd.s32 %s94, 1
      %s96 = scalar_select %p93, %s94, %s95
      %p99 = pneg %p93
      %p100 = scmp.eq.s32.totalorder %s9, 3
      %p101 = por %p99, %p100
      %p102 = scmp.ne.s32.totalorder %s94, %s97
      %p103 = scmp.eq.s32.totalorder %s9, 0
      %p104 = por %p102, %p103
      %p105 = scmp.ne.s32.totalorder %s94, %s97
      %p106 = scmp.eq.s32.totalorder %s14, 3
      %p107 = por %p105, %p106
      %p108 = scmp.ne.s32.totalorder %s97, %s98
      %p109 = scmp.eq.s32.totalorder %s14, 0
      %p110 = por %p108, %p109
      %p111 = scmp.ne.s32.totalorder %s97, %s98
      %p112 = scmp.eq.s32.totalorder %s15, 3
      %p113 = por %p111, %p112
      %p115 = scmp.ne.s32.totalorder %s98, %s114
      %p116 = scmp.eq.s32.totalorder %s15, 0
      %p117 = por %p115, %p116
      %s118 = ssub.s32 %s16, %s35
      %s119 = ssub.s32 %s17, %s31
      %s120 = sor.u32 %s118, %s119
      %p121 = scmp.eq.s32.totalorder %s120, 0
      %s123 = sadd.s32 %s122, 1
      %s124 = scalar_select %p121, %s122, %s123
      %p127 = pneg %p121
      %p128 = scmp.eq.s32.totalorder %s9, 3
      %p129 = por %p127, %p128
      %p130 = scmp.ne.s32.totalorder %s122, %s125
      %p131 = scmp.eq.s32.totalorder %s9, 0
      %p132 = por %p130, %p131
      %p133 = scmp.ne.s32.totalorder %s122, %s125
      %p134 = scmp.eq.s32.totalorder %s14, 3
      %p135 = por %p133, %p134
      %p136 = scmp.ne.s32.totalorder %s125, %s126
      %p137 = scmp.eq.s32.totalorder %s14, 0
      %p138 = por %p136, %p137
      %p139 = scmp.ne.s32.totalorder %s125, %s126
      %p140 = scmp.eq.s32.totalorder %s15, 3
      %p141 = por %p139, %p140
      %p143 = scmp.ne.s32.totalorder %s126, %s142
      %p144 = scmp.eq.s32.totalorder %s15, 0
      %p145 = por %p143, %p144
      %p146 = scmp.le.s32.totalorder 1, %s9
      %p147 = scmp.lt.s32.totalorder %s9, 5
      %p148 = pnand %p146, %p147
      %p149 = pneg %p148
      // Predicated region
      $region9: #{transformer_encoder_decoder_seg_forward.26} parent=5 // pred_check
        _
      $region10: #{transformer_encoder_decoder_seg_forward.26} parent=5 // pred_check_branch
        %151 = sbr.rel (%p148) target = $region12
      $region11: #{transformer_encoder_decoder_seg_forward.26} parent=5 // pred_region
        %s152 = ssub.s32 %s9, 1
        // Predicated region
        $region13: #{transformer_encoder_decoder_seg_forward.26} parent=11 // pred_check
          %p153 = pneg %p56
        $region14: #{transformer_encoder_decoder_seg_forward.26} parent=11 // pred_check_branch
          %155 = sbr.rel (%p153) target = $region16
        $region15: #{transformer_encoder_decoder_seg_forward.26} parent=11 // pred_region
          %s156 = smul.u32 2, %s19
          %p157 = scmp.lt.s32.totalorder %s156, 1
          %s158 = scalar_select %p157, %s156, 1
          %p159 = scmp.lt.s32.totalorder %s21, 0
          %s160 = scalar_select %p159, %s21, 0
          %s161 = sadd.s32 %s160, %s158
          %s162 = smul.addr %s161, 4
          %s163 = scalar_lea.vmem %s0, %s162
          %s164 = smul.u32 2, %s19
        $region16: #{transformer_encoder_decoder_seg_forward.26} parent=11 // pred_fallthru
          _
      $region12: #{transformer_encoder_decoder_seg_forward.26} parent=5 // pred_fallthru
        _
      %p165 = scmp.lt.s32.totalorder %s9, 4
      // Predicated region
      $region17: #{transformer_encoder_decoder_seg_forward.26} parent=5 // pred_check
        %p166 = pneg %p165
      $region18: #{transformer_encoder_decoder_seg_forward.26} parent=5 // pred_check_branch
        %168 = sbr.rel (%p166) target = $region20
      $region19: #{transformer_encoder_decoder_seg_forward.26} parent=5 // pred_region
        // Predicated region
        $region21: #{transformer_encoder_decoder_seg_forward.26} parent=19 // pred_check
          %p169 = pneg %p78
        $region22: #{transformer_encoder_decoder_seg_forward.26} parent=19 // pred_check_branch
          %171 = sbr.rel (%p169) target = $region24
        $region23: #{transformer_encoder_decoder_seg_forward.26} parent=19 // pred_region
          %s172 = sand.u32 %s68, 1
          %s173 = sand.u32 %s68, 1
          %s174 = smul.addr %s173, 64
          %s175 = scalar_lea.vmem [#allocation2], %s174
          %s176 = smul.u32 8, %s18
          %s177 = smul.u32 2, %s17
          %s178 = smul.addr %s176, 8
          %s179 = sadd.s32 %s177, %s178
          %s180 = smul.addr %s179, 4
          %s181 = scalar_lea.vmem %s1, %s180
          // Predicated region
          $region25: #{transformer_encoder_decoder_seg_forward.26} parent=23 // pred_check
            _
          $region26: #{transformer_encoder_decoder_seg_forward.26} parent=23 // pred_check_branch
            %183 = sbr.rel (0) target = $region28
          $region27: #{transformer_encoder_decoder_seg_forward.26} parent=23 // pred_region
            // Predicated region
            $region29: #{transformer_encoder_decoder_seg_forward.26} parent=27 // pred_check
              _
            $region30: #{transformer_encoder_decoder_seg_forward.26} parent=27 // pred_check_branch
              %185 = sbr.rel (0) target = $region32
            $region31: #{transformer_encoder_decoder_seg_forward.26} parent=27 // pred_region
              // Predicated region
              $region44: #{transformer_encoder_decoder_seg_forward.26} parent=31 // pred_check
                _
              $region45: #{transformer_encoder_decoder_seg_forward.26} parent=31 // pred_check_branch
                %215 = sbr.rel (0) target = $region47
              $region46: #{transformer_encoder_decoder_seg_forward.26} parent=31 // pred_region
                loop: start=0, step=1, limit=1
                $region48: #{transformer_encoder_decoder_seg_forward.26} parent=46 // loop_pre_header
                  _
                $region49: #{transformer_encoder_decoder_seg_forward.26} parent=46 // loop_header
                  %s217 = sphi 0, %s221
                  %p218 = scmp.ge.s32.totalorder %s217, 1
                  %s222 = sphi %s181, %s181
                  %s223 = sphi %s175, %s175
                $region50: #{transformer_encoder_decoder_seg_forward.26} parent=46 // loop_header_branch
                  %220 = sbr.rel (%p218) target = $region54
                $region51: #{transformer_encoder_decoder_seg_forward.26} parent=46 // loop_body
                  %v224 = vld [vmem:[%s222] sm:$0xff]
                  %225 = vst [vmem:[%s223] sm:$0xff] %v224
                  %v226 = vld [vmem:[%s222 + $0x20] sm:$0xff]
                  %227 = vst [vmem:[%s223 + $0x8] sm:$0xff] %v226
                  %v228 = vld [vmem:[%s222 + $0x40] sm:$0xff]
                  %229 = vst [vmem:[%s223 + $0x10] sm:$0xff] %v228
                  %v230 = vld [vmem:[%s222 + $0x60] sm:$0xff]
                  %231 = vst [vmem:[%s223 + $0x18] sm:$0xff] %v230
                  %v232 = vld [vmem:[%s222 + $0x80] sm:$0xff]
                  %233 = vst [vmem:[%s223 + $0x20] sm:$0xff] %v232
                  %v234 = vld [vmem:[%s222 + $0xa0] sm:$0xff]
                  %235 = vst [vmem:[%s223 + $0x28] sm:$0xff] %v234
                  %v236 = vld [vmem:[%s222 + $0xc0] sm:$0xff]
                  %237 = vst [vmem:[%s223 + $0x30] sm:$0xff] %v236
                  %v238 = vld [vmem:[%s222 + $0xe0] sm:$0xff]
                  %239 = vst [vmem:[%s223 + $0x38] sm:$0xff] %v238
                $region52: #{transformer_encoder_decoder_seg_forward.26} parent=46 // loop_footer
                  %s221 = sadd.s32 1, %s217
                $region53: #{transformer_encoder_decoder_seg_forward.26} parent=46 // loop_footer_branch
                  %216 = sbr.rel target = $region49
                $region54: #{transformer_encoder_decoder_seg_forward.26} parent=46 // loop_exit
                  _
              $region47: #{transformer_encoder_decoder_seg_forward.26} parent=31 // pred_fallthru
                _
              // Predicated region
              $region55: #{transformer_encoder_decoder_seg_forward.26} parent=31 // pred_check
                _
              $region56: #{transformer_encoder_decoder_seg_forward.26} parent=31 // pred_check_branch
                %241 = sbr.rel target = $region58
              $region57: #{transformer_encoder_decoder_seg_forward.26} parent=31 // pred_region
                _
              $region58: #{transformer_encoder_decoder_seg_forward.26} parent=31 // pred_fallthru
                _
            $region32: #{transformer_encoder_decoder_seg_forward.26} parent=27 // pred_fallthru
              _
            // Predicated region
            $region33: #{transformer_encoder_decoder_seg_forward.26} parent=27 // pred_check
              _
            $region34: #{transformer_encoder_decoder_seg_forward.26} parent=27 // pred_check_branch
              %187 = sbr.rel target = $region36
            $region35: #{transformer_encoder_decoder_seg_forward.26} parent=27 // pred_region
              %s189 = ssub.s32 256, 1
              loop: start=0, step=1, limit=1
              $region37: #{transformer_encoder_decoder_seg_forward.26} parent=35 // loop_pre_header
                _
              $region38: #{transformer_encoder_decoder_seg_forward.26} parent=35 // loop_header
                %s191 = sphi 0, %s195
                %p192 = scmp.ge.s32.totalorder %s191, 1
                %s196 = sphi %s181, %s181
                %s197 = sphi %s175, %s175
              $region39: #{transformer_encoder_decoder_seg_forward.26} parent=35 // loop_header_branch
                %194 = sbr.rel (%p192) target = $region43
              $region40: #{transformer_encoder_decoder_seg_forward.26} parent=35 // loop_body
                %v198 = vld [vmem:[%s196] sm:%s189]
                %199 = vst [vmem:[%s197] sm:%s189] %v198
                %v200 = vld [vmem:[%s196 + $0x20] sm:%s189]
                %201 = vst [vmem:[%s197 + $0x8] sm:%s189] %v200
                %v202 = vld [vmem:[%s196 + $0x40] sm:%s189]
                %203 = vst [vmem:[%s197 + $0x10] sm:%s189] %v202
                %v204 = vld [vmem:[%s196 + $0x60] sm:%s189]
                %205 = vst [vmem:[%s197 + $0x18] sm:%s189] %v204
                %v206 = vld [vmem:[%s196 + $0x80] sm:%s189]
                %207 = vst [vmem:[%s197 + $0x20] sm:%s189] %v206
                %v208 = vld [vmem:[%s196 + $0xa0] sm:%s189]
                %209 = vst [vmem:[%s197 + $0x28] sm:%s189] %v208
                %v210 = vld [vmem:[%s196 + $0xc0] sm:%s189]
                %211 = vst [vmem:[%s197 + $0x30] sm:%s189] %v210
                %v212 = vld [vmem:[%s196 + $0xe0] sm:%s189]
                %213 = vst [vmem:[%s197 + $0x38] sm:%s189] %v212
              $region41: #{transformer_encoder_decoder_seg_forward.26} parent=35 // loop_footer
                %s195 = sadd.s32 1, %s191
              $region42: #{transformer_encoder_decoder_seg_forward.26} parent=35 // loop_footer_branch
                %190 = sbr.rel target = $region38
              $region43: #{transformer_encoder_decoder_seg_forward.26} parent=35 // loop_exit
                _
            $region36: #{transformer_encoder_decoder_seg_forward.26} parent=27 // pred_fallthru
              _
          $region28: #{transformer_encoder_decoder_seg_forward.26} parent=23 // pred_fallthru
            _
          %242 = vnop
        $region24: #{transformer_encoder_decoder_seg_forward.26} parent=19 // pred_fallthru
          _
        // Predicated region
        $region59: #{transformer_encoder_decoder_seg_forward.26} parent=19 // pred_check
          %p243 = pneg %p104
        $region60: #{transformer_encoder_decoder_seg_forward.26} parent=19 // pred_check_branch
          %245 = sbr.rel (%p243) target = $region62
        $region61: #{transformer_encoder_decoder_seg_forward.26} parent=19 // pred_region
          %s246 = smul.u32 2, %s17
          %p247 = scmp.lt.s32.totalorder %s246, 7
          %s248 = scalar_select %p247, %s246, 7
          %s249 = scalar_lea.vmem %s2, %s248
          %s250 = smul.u32 2, %s17
        $region62: #{transformer_encoder_decoder_seg_forward.26} parent=19 // pred_fallthru
          _
      $region20: #{transformer_encoder_decoder_seg_forward.26} parent=5 // pred_fallthru
        _
      %p251 = scmp.le.s32.totalorder 1, %s9
      %p252 = scmp.lt.s32.totalorder %s9, 5
      %p253 = pnand %p251, %p252
      %p254 = pneg %p253
      // Predicated region
      $region63: #{transformer_encoder_decoder_seg_forward.26} parent=5 // pred_check
        _
      $region64: #{transformer_encoder_decoder_seg_forward.26} parent=5 // pred_check_branch
        %256 = sbr.rel (%p253) target = $region66
      $region65: #{transformer_encoder_decoder_seg_forward.26} parent=5 // pred_region
        %s257 = ssub.s32 %s9, 1
        %s258 = sand.u32 %s71, 1
        %s259 = sand.u32 %s71, 1
        %s260 = smul.addr %s259, 64
        %s261 = scalar_lea.vmem [#allocation2], %s260
        // Predicated region
        $region67: #{transformer_encoder_decoder_seg_forward.26} parent=65 // pred_check
          %p262 = pneg %p84
        $region68: #{transformer_encoder_decoder_seg_forward.26} parent=65 // pred_check_branch
          %264 = sbr.rel (%p262) target = $region70
        $region69: #{transformer_encoder_decoder_seg_forward.26} parent=65 // pred_region
          _
        $region70: #{transformer_encoder_decoder_seg_forward.26} parent=65 // pred_fallthru
          _
        %s265 = smul.u32 2, %s19
        %p266 = scmp.lt.s32.totalorder %s265, 1
        %s267 = scalar_select %p266, %s265, 1
        %p268 = scmp.lt.s32.totalorder %s21, 0
        %s269 = scalar_select %p268, %s21, 0
        %s270 = sadd.s32 %s269, %s267
        %s271 = smul.addr %s270, 4
        %s272 = scalar_lea.vmem %s0, %s271
        %p273 = pneg %p56
        %p274 = pneg %p53
        %s275 = sand.u32 %s71, 1
        %s276 = sand.u32 %s71, 1
        %s277 = smul.addr %s276, 64
        %s278 = scalar_lea.vmem [#allocation2], %s277
        %p279 = pneg %p84
        %p280 = pneg %p81
        %s281 = smul.u32 2, %s20
        %p282 = scmp.lt.s32.totalorder %s281, 7
        %s283 = scalar_select %p282, %s281, 7
        %s284 = scalar_lea.vmem %s2, %s283
        %p285 = pneg %p110
        %p286 = pneg %p107
        %p287 = pneg %p138
        %p288 = pneg %p135
        %s289 = sand.u32 %s125, 1
        %s290 = sand.u32 %s125, 1
        %s291 = smul.addr %s290, 32
        %s292 = scalar_lea.vmem [#allocation3], %s291
        %s293 = smul.u32 2, %s19
        %p294 = scmp.lt.s32.totalorder %s293, 1
        %s295 = scalar_select %p294, %s293, 1
        %p296 = scmp.lt.s32.totalorder %s21, 0
        %s297 = scalar_select %p296, %s21, 0
        %s298 = sadd.s32 %s297, %s295
        %s299 = smul.addr %s298, 4
        %s300 = scalar_lea.vmem %s0, %s299
        %s301 = smul.u32 2, %s19
        %s302 = smul.u32 8, %s21
        %s303 = smul.u32 2, %s20
        %s304 = smul.u32 2, %s20
        %p305 = scmp.lt.s32.totalorder %s304, 7
        %s306 = scalar_select %p305, %s304, 7
        %s307 = scalar_lea.vmem %s2, %s306
        %s308 = smul.u32 2, %s20
        %s309 = smul.u32 2, %s19
        %s310 = smul.u32 2, %s20
        %p312 = scmp.eq.s32.totalorder %s21, 0
        // Predicated region
        $region71: #{transformer_encoder_decoder_seg_forward.26} parent=65 // pred_check
          %p313 = pneg %p312
        $region72: #{transformer_encoder_decoder_seg_forward.26} parent=65 // pred_check_branch
          %315 = sbr.rel (%p313) target = $region74
        $region73: #{transformer_encoder_decoder_seg_forward.26} parent=65 // pred_region
          %316 = vst [vmem:[%s292] sm:$0xff] 0.0
          %317 = vst [vmem:[%s292 + $0x8] sm:$0xff] 0.0
          %318 = vst [vmem:[%s292 + $0x10] sm:$0xff] 0.0
          %319 = vst [vmem:[%s292 + $0x18] sm:$0xff] 0.0
        $region74: #{transformer_encoder_decoder_seg_forward.26} parent=65 // pred_fallthru
          _
        %v320 = vld [vmem:[%s292] sm:$0xff]
        %v321 = vld [vmem:[%s292 + $0x8] sm:$0xff]
        %v322 = vld [vmem:[%s292 + $0x10] sm:$0xff]
        %v323 = vld [vmem:[%s292 + $0x18] sm:$0xff]
        %v324 = vld [vmem:[%s300] sm:$0xf]
        %v325 = vld [vmem:[%s300 + $0x4] sm:$0xf]
        %v326 = vld [vmem:[%s261] sm:$0xff]
        %v327 = vld [vmem:[%s261 + $0x8] sm:$0xff]
        %v328 = vld [vmem:[%s261 + $0x10] sm:$0xff]
        %v329 = vld [vmem:[%s261 + $0x18] sm:$0xff]
        %v330 = vld [vmem:[%s261 + $0x20] sm:$0xff]
        %v331 = vld [vmem:[%s261 + $0x28] sm:$0xff]
        %v332 = vld [vmem:[%s261 + $0x30] sm:$0xff]
        %v333 = vld [vmem:[%s261 + $0x38] sm:$0xff]
        %v336 = vunpack.c.l.b16 %v324
        %v337 = vunpack.c.l.b16 %v325
        %v338 = vpack.c.b16 %v337, %v336
        %v347 = vunpack.c.l.b16 %v326
        %v348 = vunpack.c.h.b16 %v326
        %v349 = vunpack.c.l.b16 %v327
        %v350 = vunpack.c.h.b16 %v327
        %v351 = vunpack.c.l.b16 %v328
        %v352 = vunpack.c.h.b16 %v328
        %v353 = vunpack.c.l.b16 %v329
        %v354 = vunpack.c.h.b16 %v329
        %v355 = vunpack.c.l.b16 %v330
        %v356 = vunpack.c.h.b16 %v330
        %v357 = vunpack.c.l.b16 %v331
        %v358 = vunpack.c.h.b16 %v331
        %v359 = vunpack.c.l.b16 %v332
        %v360 = vunpack.c.h.b16 %v332
        %v361 = vunpack.c.l.b16 %v333
        %v362 = vunpack.c.h.b16 %v333
        %v363 = vpack.c.b16 %v349, %v347
        %v364 = vpack.c.b16 %v350, %v348
        %v365 = vpack.c.b16 %v353, %v351
        %v366 = vpack.c.b16 %v354, %v352
        %v367 = vpack.c.b16 %v357, %v355
        %v368 = vpack.c.b16 %v358, %v356
        %v369 = vpack.c.b16 %v361, %v359
        %v370 = vpack.c.b16 %v362, %v360
        %vm379 = vcmask 523264
        %v381 = vsel %vm379, %v338, 0
        %383 = vmatprep.subr.bf16.mxu0 0
        %384 = vmatpush1.bf16.msra.mxu0 0
        %385 = vmatprep.subr.bf16.mxu0 0
        %386 = vmatpush1.bf16.msra.mxu0 0
        %387 = vmatprep.subr.bf16.mxu0 0
        %388 = vmatpush1.bf16.msra.mxu0 0
        %389 = vmatprep.subr.bf16.mxu0 0
        %390 = vmatpush1.bf16.msra.mxu0 0
        %391 = vmatprep.subr.bf16.mxu0 %v370
        %392 = vmatpush1.bf16.msra.mxu0 %v369
        %393 = vmatprep.subr.bf16.mxu0 %v368
        %394 = vmatpush1.bf16.msra.mxu0 %v367
        %395 = vmatprep.subr.bf16.mxu0 %v366
        %396 = vmatpush1.bf16.msra.mxu0 %v365
        %397 = vmatprep.subr.bf16.mxu0 %v364
        %398 = vmatpush1.bf16.msra.mxu0 %v363
        %399 = vmatprep.subr.bf16.mxu0 0
        %400 = vmatpush2.bf16.msra.mxu0 0
        %401 = vmatprep.subr.bf16.mxu0 0
        %402 = vmatpush2.bf16.msra.mxu0 0
        %403 = vmatprep.subr.bf16.mxu0 0
        %404 = vmatpush2.bf16.msra.mxu0 0
        %405 = vmatprep.subr.bf16.mxu0 0
        %406 = vmatpush2.bf16.msra.mxu0 0
        %407 = vmatprep.subr.bf16.mxu0 0
        %408 = vmatpush2.bf16.msra.mxu0 0
        %409 = vmatprep.subr.bf16.mxu0 0
        %410 = vmatpush2.bf16.msra.mxu0 0
        %411 = vmatprep.subr.bf16.mxu0 0
        %412 = vmatpush2.bf16.msra.mxu0 0
        %413 = vmatprep.subr.bf16.mxu0 0
        %414 = vmatpush2.bf16.msra.mxu0 0
        %415 = vmatprep.mubr.bf16.mxu0 0
        %416 = vmatmul.mubr.bf16.gmra.mxu0 %v381
        %v417 = vpop.f32.mrf.mxu0
        %v418 = vadd.f32 0.0, %v417
        %v419 = vpop.f32.mrf.mxu0
        %v420 = vadd.f32 0.0, %v419
        %v421 = vpop.f32.mrf.mxu0
        %v422 = vadd.f32 0.0, %v421
        %v423 = vpop.f32.mrf.mxu0
        %v424 = vadd.f32 0.0, %v423
        %425 = vdwg.mxu0
        %v426 = vadd.f32 %v320, %v418
        %v427 = vadd.f32 %v321, %v420
        %v428 = vadd.f32 %v322, %v422
        %v429 = vadd.f32 %v323, %v424
        %430 = vst [vmem:[%s292] sm:$0xff] %v426
        %431 = vst [vmem:[%s292 + $0x8] sm:$0xff] %v427
        %432 = vst [vmem:[%s292 + $0x10] sm:$0xff] %v428
        %433 = vst [vmem:[%s292 + $0x18] sm:$0xff] %v429
        // Predicated region
        $region75: #{transformer_encoder_decoder_seg_forward.26} parent=65 // pred_check
          %p434 = pneg %p312
        $region76: #{transformer_encoder_decoder_seg_forward.26} parent=65 // pred_check_branch
          %436 = sbr.rel (%p434) target = $region78
        $region77: #{transformer_encoder_decoder_seg_forward.26} parent=65 // pred_region
          %v437 = vld [vmem:[%s292] sm:$0xff]
          %v438 = vld [vmem:[%s292 + $0x8] sm:$0xff]
          %v439 = vld [vmem:[%s292 + $0x10] sm:$0xff]
          %v440 = vld [vmem:[%s292 + $0x18] sm:$0xff]
          %v441 = vld [vmem:[%s307] sm:$0x3]
          %v443 = vlaneseq
          %v444 = vshrl.u32 %v443, 7
          %v445 = vsub.s32 0, %v444
          %v446 = vrot.slane %v441, %v445
          %v447 = vlaneseq
          %v448 = vshrl.u32 %v447, 7
          %v449 = vsub.s32 1, %v448
          %v450 = vrot.slane %v441, %v449
          %v453 = vadd.f32 %v437, %v446
          %v454 = vadd.f32 %v438, %v450
          %v455 = vadd.f32 %v439, %v446
          %v456 = vadd.f32 %v440, %v450
          %v457 = vmax.f32 %v453, 0.0
          %v458 = vmax.f32 %v454, 0.0
          %v459 = vmax.f32 %v455, 0.0
          %v460 = vmax.f32 %v456, 0.0
          %461 = vst [vmem:[%s292] sm:$0xff] %v457
          %462 = vst [vmem:[%s292 + $0x8] sm:$0xff] %v458
          %463 = vst [vmem:[%s292 + $0x10] sm:$0xff] %v459
          %464 = vst [vmem:[%s292 + $0x18] sm:$0xff] %v460
        $region78: #{transformer_encoder_decoder_seg_forward.26} parent=65 // pred_fallthru
          _
        %s465 = sand.u32 %s125, 1
        %s466 = sand.u32 %s125, 1
        %s467 = smul.addr %s466, 32
        %s468 = scalar_lea.vmem [#allocation3], %s467
        // Predicated region
        $region79: #{transformer_encoder_decoder_seg_forward.26} parent=65 // pred_check
          %p469 = pneg %p135
        $region80: #{transformer_encoder_decoder_seg_forward.26} parent=65 // pred_check_branch
          %471 = sbr.rel (%p469) target = $region82
        $region81: #{transformer_encoder_decoder_seg_forward.26} parent=65 // pred_region
          %s472 = smul.u32 2, %s19
          %s473 = smul.u32 2, %s20
          %s474 = smul.addr %s472, 8
          %s475 = sadd.s32 %s473, %s474
          %s476 = smul.addr %s475, 8
          %s477 = scalar_lea.vmem %s3, %s476
          // Predicated region
          $region83: #{transformer_encoder_decoder_seg_forward.26} parent=81 // pred_check
            _
          $region84: #{transformer_encoder_decoder_seg_forward.26} parent=81 // pred_check_branch
            %479 = sbr.rel (0) target = $region86
          $region85: #{transformer_encoder_decoder_seg_forward.26} parent=81 // pred_region
            // Predicated region
            $region87: #{transformer_encoder_decoder_seg_forward.26} parent=85 // pred_check
              _
            $region88: #{transformer_encoder_decoder_seg_forward.26} parent=85 // pred_check_branch
              %481 = sbr.rel (0) target = $region90
            $region89: #{transformer_encoder_decoder_seg_forward.26} parent=85 // pred_region
              loop: start=0, step=1, limit=1
              $region91: #{transformer_encoder_decoder_seg_forward.26} parent=89 // loop_pre_header
                _
              $region92: #{transformer_encoder_decoder_seg_forward.26} parent=89 // loop_header
                %s483 = sphi 0, %s487
                %p484 = scmp.ge.s32.totalorder %s483, 1
                %s488 = sphi %s468, %s468
                %s489 = sphi %s477, %s477
              $region93: #{transformer_encoder_decoder_seg_forward.26} parent=89 // loop_header_branch
                %486 = sbr.rel (%p484) target = $region97
              $region94: #{transformer_encoder_decoder_seg_forward.26} parent=89 // loop_body
                %v490 = vld [vmem:[%s488] sm:$0xff]
                %491 = vst [vmem:[%s489] sm:$0xff] %v490
                %v492 = vld [vmem:[%s488 + $0x8] sm:$0xff]
                %493 = vst [vmem:[%s489 + $0x8] sm:$0xff] %v492
                %v494 = vld [vmem:[%s488 + $0x10] sm:$0xff]
                %495 = vst [vmem:[%s489 + $0x40] sm:$0xff] %v494
                %v496 = vld [vmem:[%s488 + $0x18] sm:$0xff]
                %497 = vst [vmem:[%s489 + $0x48] sm:$0xff] %v496
              $region95: #{transformer_encoder_decoder_seg_forward.26} parent=89 // loop_footer
                %s487 = sadd.s32 1, %s483
              $region96: #{transformer_encoder_decoder_seg_forward.26} parent=89 // loop_footer_branch
                %482 = sbr.rel target = $region92
              $region97: #{transformer_encoder_decoder_seg_forward.26} parent=89 // loop_exit
                _
            $region90: #{transformer_encoder_decoder_seg_forward.26} parent=85 // pred_fallthru
              _
            // Predicated region
            $region98: #{transformer_encoder_decoder_seg_forward.26} parent=85 // pred_check
              _
            $region99: #{transformer_encoder_decoder_seg_forward.26} parent=85 // pred_check_branch
              %499 = sbr.rel target = $region101
            $region100: #{transformer_encoder_decoder_seg_forward.26} parent=85 // pred_region
              _
            $region101: #{transformer_encoder_decoder_seg_forward.26} parent=85 // pred_fallthru
              _
          $region86: #{transformer_encoder_decoder_seg_forward.26} parent=81 // pred_fallthru
            _
          %500 = vnop
        $region82: #{transformer_encoder_decoder_seg_forward.26} parent=65 // pred_fallthru
          _
      $region66: #{transformer_encoder_decoder_seg_forward.26} parent=5 // pred_fallthru
        _
      %p501 = scmp.le.s32.totalorder 2, %s9
      // Predicated region
      $region102: #{transformer_encoder_decoder_seg_forward.26} parent=5 // pred_check
        %p502 = pneg %p501
      $region103: #{transformer_encoder_decoder_seg_forward.26} parent=5 // pred_check_branch
        %504 = sbr.rel (%p502) target = $region105
      $region104: #{transformer_encoder_decoder_seg_forward.26} parent=5 // pred_region
        %s505 = ssub.s32 %s9, 2
        // Predicated region
        $region106: #{transformer_encoder_decoder_seg_forward.26} parent=104 // pred_check
          %p506 = pneg %p141
        $region107: #{transformer_encoder_decoder_seg_forward.26} parent=104 // pred_check_branch
          %508 = sbr.rel (%p506) target = $region109
        $region108: #{transformer_encoder_decoder_seg_forward.26} parent=104 // pred_region
          %s509 = sand.u32 %s126, 1
          %s510 = sand.u32 %s126, 1
          %s511 = smul.addr %s510, 32
          %s512 = scalar_lea.vmem [#allocation3], %s511
        $region109: #{transformer_encoder_decoder_seg_forward.26} parent=104 // pred_fallthru
          _
      $region105: #{transformer_encoder_decoder_seg_forward.26} parent=5 // pred_fallthru
        _
    $region6: #{transformer_encoder_decoder_seg_forward.26} parent=1 // loop_footer
      %s13 = sadd.s32 1, %s9
    $region7: #{transformer_encoder_decoder_seg_forward.26} parent=1 // loop_footer_branch
      %8 = sbr.rel target = $region3
    $region8: #{transformer_encoder_decoder_seg_forward.26} parent=1 // loop_exit
      _

// kernel: transformer_encoder_decoder_seg_forward.25
$region0: #{transformer_encoder_decoder_seg_forward.25}
  #allocation0 [shape = 'u32[]', space=smem, size = 0x4, offset = 0x4, fixed_abs, tag = 'smem constant byte address 0x4 - core index']
  #allocation1 [shape = 'u32[144,128]{1,0:T(1,128)}', space=vmem, size = 0x12000, scoped, tag = 'internal scratch']
  %s0 = inlined_call_operand.vmem [shape: bf16[16,64], index: 0, kind: input, shape index: {}]
  %s1 = inlined_call_operand.vmem [shape: bf16[64,64], index: 1, kind: input, shape index: {}]
  %s2 = inlined_call_operand.vmem [shape: f32[1,64], index: 2, kind: input, shape index: {}]
  %s3 = inlined_call_operand.vmem [shape: f32[16,64], index: 3, kind: input, shape index: {}]
  %s4 = inlined_call_operand.vmem [shape: f32[1,64], index: 4, kind: input, shape index: {}]
  %s5 = inlined_call_operand.vmem [shape: f32[1,64], index: 5, kind: input, shape index: {}]
  %s6 = inlined_call_operand.vmem [shape: f32[16,64], index: 6, kind: output, shape index: {}]
  %s7 = sld [smem:[#allocation0]]
  $region42: #{transformer_encoder_decoder_seg_forward.25} parent=0
    _
  %s9 = ssub.s32 1, %s7
  %s10 = scalar_select 0, %s9, %s7
  // Predicated region
  $region2: #{transformer_encoder_decoder_seg_forward.25} parent=0 // pred_check
    _
  $region3: #{transformer_encoder_decoder_seg_forward.25} parent=0 // pred_check_branch
    %12 = sbr.rel (0) target = $region5
  $region4: #{transformer_encoder_decoder_seg_forward.25} parent=0 // pred_region
    _
  $region5: #{transformer_encoder_decoder_seg_forward.25} parent=0 // pred_fallthru
    _
  // Predicated region
  $region6: #{transformer_encoder_decoder_seg_forward.25} parent=0 // pred_check
    _
  $region7: #{transformer_encoder_decoder_seg_forward.25} parent=0 // pred_check_branch
    %14 = sbr.rel (0) target = $region9
  $region8: #{transformer_encoder_decoder_seg_forward.25} parent=0 // pred_region
    _
  $region9: #{transformer_encoder_decoder_seg_forward.25} parent=0 // pred_fallthru
    _
  // Predicated region
  $region10: #{transformer_encoder_decoder_seg_forward.25} parent=0 // pred_check
    _
  $region11: #{transformer_encoder_decoder_seg_forward.25} parent=0 // pred_check_branch
    %16 = sbr.rel (0) target = $region13
  $region12: #{transformer_encoder_decoder_seg_forward.25} parent=0 // pred_region
    _
  $region13: #{transformer_encoder_decoder_seg_forward.25} parent=0 // pred_fallthru
    _
  // Predicated region
  $region14: #{transformer_encoder_decoder_seg_forward.25} parent=0 // pred_check
    _
  $region15: #{transformer_encoder_decoder_seg_forward.25} parent=0 // pred_check_branch
    %18 = sbr.rel (0) target = $region17
  $region16: #{transformer_encoder_decoder_seg_forward.25} parent=0 // pred_region
    _
  $region17: #{transformer_encoder_decoder_seg_forward.25} parent=0 // pred_fallthru
    _
  // Predicated region
  $region18: #{transformer_encoder_decoder_seg_forward.25} parent=0 // pred_check
    _
  $region19: #{transformer_encoder_decoder_seg_forward.25} parent=0 // pred_check_branch
    %20 = sbr.rel (0) target = $region21
  $region20: #{transformer_encoder_decoder_seg_forward.25} parent=0 // pred_region
    _
  $region21: #{transformer_encoder_decoder_seg_forward.25} parent=0 // pred_fallthru
    _
  // Predicated region
  $region22: #{transformer_encoder_decoder_seg_forward.25} parent=0 // pred_check
    _
  $region23: #{transformer_encoder_decoder_seg_forward.25} parent=0 // pred_check_branch
    %22 = sbr.rel (0) target = $region25
  $region24: #{transformer_encoder_decoder_seg_forward.25} parent=0 // pred_region
    _
  $region25: #{transformer_encoder_decoder_seg_forward.25} parent=0 // pred_fallthru
    _
  %p24 = scmp.eq.s32.totalorder 0, 0
  // Predicated region
  $region26: #{transformer_encoder_decoder_seg_forward.25} parent=0 // pred_check
    %p25 = pneg %p24
  $region27: #{transformer_encoder_decoder_seg_forward.25} parent=0 // pred_check_branch
    %27 = sbr.rel (%p25) target = $region29
  $region28: #{transformer_encoder_decoder_seg_forward.25} parent=0 // pred_region
    %vm28 = vcmask 523264
    %29 = vst.msk [vmem:[%s6] sm:$0xff] %vm28, 0.0
    %30 = vst.msk [vmem:[%s6 + $0x8] sm:$0xff] %vm28, 0.0
  $region29: #{transformer_encoder_decoder_seg_forward.25} parent=0 // pred_fallthru
    _
  %v31 = vld [vmem:[%s6] sm:$0xff]
  %v32 = vld [vmem:[%s6 + $0x8] sm:$0xff]
  %v33 = vld [vmem:[%s0] sm:$0xf]
  %v34 = vld [vmem:[%s0 + $0x4] sm:$0xf]
  %v35 = vld [vmem:[%s1] sm:$0xf]
  %v36 = vld [vmem:[%s1 + $0x4] sm:$0xf]
  %v37 = vld [vmem:[%s1 + $0x8] sm:$0xf]
  %v38 = vld [vmem:[%s1 + $0xc] sm:$0xf]
  %v39 = vld [vmem:[%s1 + $0x10] sm:$0xf]
  %v40 = vld [vmem:[%s1 + $0x14] sm:$0xf]
  %v41 = vld [vmem:[%s1 + $0x18] sm:$0xf]
  %v42 = vld [vmem:[%s1 + $0x1c] sm:$0xf]
  %v45 = vunpack.c.l.b16 %v33
  %v46 = vunpack.c.l.b16 %v34
  %v47 = vpack.c.b16 %v46, %v45
  %v56 = vunpack.c.l.b16 %v35
  %v57 = vunpack.c.l.b16 %v36
  %v58 = vunpack.c.l.b16 %v37
  %v59 = vunpack.c.l.b16 %v38
  %v60 = vunpack.c.l.b16 %v39
  %v61 = vunpack.c.l.b16 %v40
  %v62 = vunpack.c.l.b16 %v41
  %v63 = vunpack.c.l.b16 %v42
  %v64 = vpack.c.b16 %v57, %v56
  %v65 = vpack.c.b16 %v59, %v58
  %v66 = vpack.c.b16 %v61, %v60
  %v67 = vpack.c.b16 %v63, %v62
  %vm72 = vcmask 523264
  %v74 = vsel %vm72, %v47, 0
  %76 = vmatprep.subr.bf16.mxu0 0
  %77 = vmatpush1.bf16.msra.mxu0 0
  %78 = vmatprep.subr.bf16.mxu0 0
  %79 = vmatpush1.bf16.msra.mxu0 0
  %80 = vmatprep.subr.bf16.mxu0 0
  %81 = vmatpush1.bf16.msra.mxu0 0
  %82 = vmatprep.subr.bf16.mxu0 0
  %83 = vmatpush1.bf16.msra.mxu0 0
  %84 = vmatprep.subr.bf16.mxu0 0
  %85 = vmatpush1.bf16.msra.mxu0 %v67
  %86 = vmatprep.subr.bf16.mxu0 0
  %87 = vmatpush1.bf16.msra.mxu0 %v66
  %88 = vmatprep.subr.bf16.mxu0 0
  %89 = vmatpush1.bf16.msra.mxu0 %v65
  %90 = vmatprep.subr.bf16.mxu0 0
  %91 = vmatpush1.bf16.msra.mxu0 %v64
  %92 = vmatprep.subr.bf16.mxu0 0
  %93 = vmatpush2.bf16.msra.mxu0 0
  %94 = vmatprep.subr.bf16.mxu0 0
  %95 = vmatpush2.bf16.msra.mxu0 0
  %96 = vmatprep.subr.bf16.mxu0 0
  %97 = vmatpush2.bf16.msra.mxu0 0
  %98 = vmatprep.subr.bf16.mxu0 0
  %99 = vmatpush2.bf16.msra.mxu0 0
  %100 = vmatprep.subr.bf16.mxu0 0
  %101 = vmatpush2.bf16.msra.mxu0 0
  %102 = vmatprep.subr.bf16.mxu0 0
  %103 = vmatpush2.bf16.msra.mxu0 0
  %104 = vmatprep.subr.bf16.mxu0 0
  %105 = vmatpush2.bf16.msra.mxu0 0
  %106 = vmatprep.subr.bf16.mxu0 0
  %107 = vmatpush2.bf16.msra.mxu0 0
  %108 = vmatprep.mubr.bf16.mxu0 0
  %109 = vmatmul.mubr.bf16.gmra.mxu0 %v74
  %v110 = vpop.f32.mrf.mxu0
  %v111 = vadd.f32 0.0, %v110
  %v112 = vpop.f32.mrf.mxu0
  %v113 = vpop.f32.mrf.mxu0
  %v114 = vadd.f32 0.0, %v113
  %v115 = vpop.f32.mrf.mxu0
  %116 = vdwg.mxu0
  %v117 = vadd.f32 %v31, %v111
  %v118 = vadd.f32 %v32, %v114
  %119 = vst.msk [vmem:[%s6] sm:$0xff] %vm72, %v117
  %120 = vst.msk [vmem:[%s6 + $0x8] sm:$0xff] %vm72, %v118
  // Predicated region
  $region30: #{transformer_encoder_decoder_seg_forward.25} parent=0 // pred_check
    %p121 = pneg %p24
  $region31: #{transformer_encoder_decoder_seg_forward.25} parent=0 // pred_check_branch
    %123 = sbr.rel (%p121) target = $region33
  $region32: #{transformer_encoder_decoder_seg_forward.25} parent=0 // pred_region
    %v124 = vld [vmem:[%s6] sm:$0xff]
    %v125 = vld [vmem:[%s6 + $0x8] sm:$0xff]
    %v126 = vld [vmem:[%s2] sm:$0x1]
    %v128 = vlaneseq
    %v129 = vshrl.u32 %v128, 7
    %v130 = vsub.s32 0, %v129
    %v131 = vrot.slane %v126, %v130
    %v133 = vadd.f32 %v124, %v131
    %v134 = vadd.f32 %v125, %v131
    %v135 = vld [vmem:[%s3] sm:$0xff]
    %v136 = vld [vmem:[%s3 + $0x8] sm:$0xff]
    %v137 = vadd.f32 %v133, %v135
    %v138 = vadd.f32 %v134, %v136
    %v139 = vsel %vm72, %v137, 0.0
    %140 = vadd.xlane.f32.xlu0 %v139
    %v141 = vpop.xlane.xlu0 %140
    %v142 = vsel %vm72, %v138, 0.0
    %143 = vadd.xlane.f32.xlu0 %v142
    %v144 = vpop.xlane.xlu0 %143
    %v145 = vrcp.pop 64.0
    %v146 = vmul.f32 %v141, %v145
    %v147 = vmul.f32 %v144, %v145
    %v148 = vsub.f32 %v137, %v146
    %v149 = vsub.f32 %v138, %v147
    %v150 = vmul.f32 %v148, %v148
    %v151 = vmul.f32 %v149, %v149
    %v152 = vsel %vm72, %v150, 0.0
    %153 = vadd.xlane.f32.xlu0 %v152
    %v154 = vpop.xlane.xlu0 %153
    %v155 = vsel %vm72, %v151, 0.0
    %156 = vadd.xlane.f32.xlu0 %v155
    %v157 = vpop.xlane.xlu0 %156
    %v158 = vmul.f32 %v154, %v145
    %v159 = vmul.f32 %v157, %v145
    %v160 = vadd.f32 %v158, 1e-05
    %v161 = vadd.f32 %v159, 1e-05
    %v162 = vrsqrt.pop %v160
    %v163 = vrsqrt.pop %v161
    %v164 = vmul.f32 %v148, %v162
    %v165 = vmul.f32 %v149, %v163
    %v166 = vld [vmem:[%s4] sm:$0x1]
    %v168 = vlaneseq
    %v169 = vshrl.u32 %v168, 7
    %v170 = vsub.s32 0, %v169
    %v171 = vrot.slane %v166, %v170
    %v173 = vmul.f32 %v164, %v171
    %v174 = vmul.f32 %v165, %v171
    %v175 = vld [vmem:[%s5] sm:$0x1]
    %v177 = vlaneseq
    %v178 = vshrl.u32 %v177, 7
    %v179 = vsub.s32 0, %v178
    %v180 = vrot.slane %v175, %v179
    %v182 = vadd.f32 %v173, %v180
    %v183 = vadd.f32 %v174, %v180
    %184 = vst.msk [vmem:[%s6] sm:$0xff] %vm72, %v182
    %185 = vst.msk [vmem:[%s6 + $0x8] sm:$0xff] %vm72, %v183
  $region33: #{transformer_encoder_decoder_seg_forward.25} parent=0 // pred_fallthru
    _
  // Predicated region
  $region34: #{transformer_encoder_decoder_seg_forward.25} parent=0 // pred_check
    _
  $region35: #{transformer_encoder_decoder_seg_forward.25} parent=0 // pred_check_branch
    %187 = sbr.rel (0) target = $region37
  $region36: #{transformer_encoder_decoder_seg_forward.25} parent=0 // pred_region
    _
  $region37: #{transformer_encoder_decoder_seg_forward.25} parent=0 // pred_fallthru
    _
  // Predicated region
  $region38: #{transformer_encoder_decoder_seg_forward.25} parent=0 // pred_check
    _
  $region39: #{transformer_encoder_decoder_seg_forward.25} parent=0 // pred_check_branch
    %189 = sbr.rel (0) target = $region41
  $region40: #{transformer_encoder_decoder_seg_forward.25} parent=0 // pred_region
    _
  $region41: #{transformer_encoder_decoder_seg_forward.25} parent=0 // pred_fallthru
    _

// kernel: transformer_encoder_decoder_seg_forward.38
$region0: #{transformer_encoder_decoder_seg_forward.38}
  #allocation0 [shape = 'u32[]', space=smem, size = 0x4, offset = 0x4, fixed_abs, tag = 'smem constant byte address 0x4 - core index']
  #allocation1 [shape = 'u32[144,128]{1,0:T(1,128)}', space=vmem, size = 0x12000, scoped, tag = 'internal scratch']
  %s0 = inlined_call_operand.vmem [shape: bf16[16,64], index: 0, kind: input, shape index: {}]
  %s1 = inlined_call_operand.vmem [shape: bf16[64,128], index: 1, kind: input, shape index: {}]
  %s2 = inlined_call_operand.vmem [shape: f32[1,128], index: 2, kind: input, shape index: {}]
  %s3 = inlined_call_operand.vmem [shape: f32[16,128], index: 3, kind: output, shape index: {}]
  %s4 = sld [smem:[#allocation0]]
  $region30: #{transformer_encoder_decoder_seg_forward.38} parent=0
    _
  %s6 = ssub.s32 1, %s4
  %s7 = scalar_select 0, %s6, %s4
  // Predicated region
  $region2: #{transformer_encoder_decoder_seg_forward.38} parent=0 // pred_check
    _
  $region3: #{transformer_encoder_decoder_seg_forward.38} parent=0 // pred_check_branch
    %9 = sbr.rel (0) target = $region5
  $region4: #{transformer_encoder_decoder_seg_forward.38} parent=0 // pred_region
    _
  $region5: #{transformer_encoder_decoder_seg_forward.38} parent=0 // pred_fallthru
    _
  // Predicated region
  $region6: #{transformer_encoder_decoder_seg_forward.38} parent=0 // pred_check
    _
  $region7: #{transformer_encoder_decoder_seg_forward.38} parent=0 // pred_check_branch
    %11 = sbr.rel (0) target = $region9
  $region8: #{transformer_encoder_decoder_seg_forward.38} parent=0 // pred_region
    _
  $region9: #{transformer_encoder_decoder_seg_forward.38} parent=0 // pred_fallthru
    _
  // Predicated region
  $region10: #{transformer_encoder_decoder_seg_forward.38} parent=0 // pred_check
    _
  $region11: #{transformer_encoder_decoder_seg_forward.38} parent=0 // pred_check_branch
    %13 = sbr.rel (0) target = $region13
  $region12: #{transformer_encoder_decoder_seg_forward.38} parent=0 // pred_region
    _
  $region13: #{transformer_encoder_decoder_seg_forward.38} parent=0 // pred_fallthru
    _
  %p15 = scmp.eq.s32.totalorder 0, 0
  // Predicated region
  $region14: #{transformer_encoder_decoder_seg_forward.38} parent=0 // pred_check
    %p16 = pneg %p15
  $region15: #{transformer_encoder_decoder_seg_forward.38} parent=0 // pred_check_branch
    %18 = sbr.rel (%p16) target = $region17
  $region16: #{transformer_encoder_decoder_seg_forward.38} parent=0 // pred_region
    %19 = vst [vmem:[%s3] sm:$0xff] 0.0
    %20 = vst [vmem:[%s3 + $0x8] sm:$0xff] 0.0
  $region17: #{transformer_encoder_decoder_seg_forward.38} parent=0 // pred_fallthru
    _
  %v21 = vld [vmem:[%s3] sm:$0xff]
  %v22 = vld [vmem:[%s3 + $0x8] sm:$0xff]
  %v23 = vld [vmem:[%s0] sm:$0xf]
  %v24 = vld [vmem:[%s0 + $0x4] sm:$0xf]
  %v25 = vld [vmem:[%s1] sm:$0xf]
  %v26 = vld [vmem:[%s1 + $0x4] sm:$0xf]
  %v27 = vld [vmem:[%s1 + $0x8] sm:$0xf]
  %v28 = vld [vmem:[%s1 + $0xc] sm:$0xf]
  %v29 = vld [vmem:[%s1 + $0x10] sm:$0xf]
  %v30 = vld [vmem:[%s1 + $0x14] sm:$0xf]
  %v31 = vld [vmem:[%s1 + $0x18] sm:$0xf]
  %v32 = vld [vmem:[%s1 + $0x1c] sm:$0xf]
  %v35 = vunpack.c.l.b16 %v23
  %v36 = vunpack.c.l.b16 %v24
  %v37 = vpack.c.b16 %v36, %v35
  %v46 = vunpack.c.l.b16 %v25
  %v47 = vunpack.c.l.b16 %v26
  %v48 = vunpack.c.l.b16 %v27
  %v49 = vunpack.c.l.b16 %v28
  %v50 = vunpack.c.l.b16 %v29
  %v51 = vunpack.c.l.b16 %v30
  %v52 = vunpack.c.l.b16 %v31
  %v53 = vunpack.c.l.b16 %v32
  %v54 = vpack.c.b16 %v47, %v46
  %v55 = vpack.c.b16 %v49, %v48
  %v56 = vpack.c.b16 %v51, %v50
  %v57 = vpack.c.b16 %v53, %v52
  %vm62 = vcmask 523264
  %v64 = vsel %vm62, %v37, 0
  %66 = vmatprep.subr.bf16.mxu0 0
  %67 = vmatpush1.bf16.msra.mxu0 0
  %68 = vmatprep.subr.bf16.mxu0 0
  %69 = vmatpush1.bf16.msra.mxu0 0
  %70 = vmatprep.subr.bf16.mxu0 0
  %71 = vmatpush1.bf16.msra.mxu0 0
  %72 = vmatprep.subr.bf16.mxu0 0
  %73 = vmatpush1.bf16.msra.mxu0 0
  %74 = vmatprep.subr.bf16.mxu0 0
  %75 = vmatpush1.bf16.msra.mxu0 %v57
  %76 = vmatprep.subr.bf16.mxu0 0
  %77 = vmatpush1.bf16.msra.mxu0 %v56
  %78 = vmatprep.subr.bf16.mxu0 0
  %79 = vmatpush1.bf16.msra.mxu0 %v55
  %80 = vmatprep.subr.bf16.mxu0 0
  %81 = vmatpush1.bf16.msra.mxu0 %v54
  %82 = vmatprep.subr.bf16.mxu0 0
  %83 = vmatpush2.bf16.msra.mxu0 0
  %84 = vmatprep.subr.bf16.mxu0 0
  %85 = vmatpush2.bf16.msra.mxu0 0
  %86 = vmatprep.subr.bf16.mxu0 0
  %87 = vmatpush2.bf16.msra.mxu0 0
  %88 = vmatprep.subr.bf16.mxu0 0
  %89 = vmatpush2.bf16.msra.mxu0 0
  %90 = vmatprep.subr.bf16.mxu0 0
  %91 = vmatpush2.bf16.msra.mxu0 0
  %92 = vmatprep.subr.bf16.mxu0 0
  %93 = vmatpush2.bf16.msra.mxu0 0
  %94 = vmatprep.subr.bf16.mxu0 0
  %95 = vmatpush2.bf16.msra.mxu0 0
  %96 = vmatprep.subr.bf16.mxu0 0
  %97 = vmatpush2.bf16.msra.mxu0 0
  %98 = vmatprep.mubr.bf16.mxu0 0
  %99 = vmatmul.mubr.bf16.gmra.mxu0 %v64
  %v100 = vpop.f32.mrf.mxu0
  %v101 = vadd.f32 0.0, %v100
  %v102 = vpop.f32.mrf.mxu0
  %v103 = vpop.f32.mrf.mxu0
  %v104 = vadd.f32 0.0, %v103
  %v105 = vpop.f32.mrf.mxu0
  %106 = vdwg.mxu0
  %v107 = vadd.f32 %v21, %v101
  %v108 = vadd.f32 %v22, %v104
  %109 = vst [vmem:[%s3] sm:$0xff] %v107
  %110 = vst [vmem:[%s3 + $0x8] sm:$0xff] %v108
  // Predicated region
  $region18: #{transformer_encoder_decoder_seg_forward.38} parent=0 // pred_check
    %p111 = pneg %p15
  $region19: #{transformer_encoder_decoder_seg_forward.38} parent=0 // pred_check_branch
    %113 = sbr.rel (%p111) target = $region21
  $region20: #{transformer_encoder_decoder_seg_forward.38} parent=0 // pred_region
    %v114 = vld [vmem:[%s3] sm:$0xff]
    %v115 = vld [vmem:[%s3 + $0x8] sm:$0xff]
    %v116 = vld [vmem:[%s2] sm:$0x1]
    %v118 = vlaneseq
    %v119 = vshrl.u32 %v118, 7
    %v120 = vsub.s32 0, %v119
    %v121 = vrot.slane %v116, %v120
    %v123 = vadd.f32 %v114, %v121
    %v124 = vadd.f32 %v115, %v121
    %125 = vst [vmem:[%s3] sm:$0xff] %v123
    %126 = vst [vmem:[%s3 + $0x8] sm:$0xff] %v124
  $region21: #{transformer_encoder_decoder_seg_forward.38} parent=0 // pred_fallthru
    _
  // Predicated region
  $region22: #{transformer_encoder_decoder_seg_forward.38} parent=0 // pred_check
    _
  $region23: #{transformer_encoder_decoder_seg_forward.38} parent=0 // pred_check_branch
    %128 = sbr.rel (0) target = $region25
  $region24: #{transformer_encoder_decoder_seg_forward.38} parent=0 // pred_region
    _
  $region25: #{transformer_encoder_decoder_seg_forward.38} parent=0 // pred_fallthru
    _
  // Predicated region
  $region26: #{transformer_encoder_decoder_seg_forward.38} parent=0 // pred_check
    _
  $region27: #{transformer_encoder_decoder_seg_forward.38} parent=0 // pred_check_branch
    %130 = sbr.rel (0) target = $region29
  $region28: #{transformer_encoder_decoder_seg_forward.38} parent=0 // pred_region
    _
  $region29: #{transformer_encoder_decoder_seg_forward.38} parent=0 // pred_fallthru
    _

// kernel: transformer_encoder_decoder_seg_forward.27
$region0: #{transformer_encoder_decoder_seg_forward.27}
  #allocation0 [shape = 'u32[]', space=smem, size = 0x4, offset = 0x4, fixed_abs, tag = 'smem constant byte address 0x4 - core index']
  #allocation1 [shape = 'u32[144,128]{1,0:T(1,128)}', space=vmem, size = 0x12000, scoped, tag = 'internal scratch']
  %s0 = inlined_call_operand.vmem [shape: bf16[16,1024], index: 0, kind: input, shape index: {}]
  %s1 = inlined_call_operand.vmem [shape: bf16[1024,64], index: 1, kind: input, shape index: {}]
  %s2 = inlined_call_operand.vmem [shape: f32[1,64], index: 2, kind: input, shape index: {}]
  %s3 = inlined_call_operand.vmem [shape: f32[16,64], index: 3, kind: input, shape index: {}]
  %s4 = inlined_call_operand.vmem [shape: f32[1,64], index: 4, kind: input, shape index: {}]
  %s5 = inlined_call_operand.vmem [shape: f32[1,64], index: 5, kind: input, shape index: {}]
  %s6 = inlined_call_operand.vmem [shape: f32[16,64], index: 6, kind: output, shape index: {}]
  %s7 = sld [smem:[#allocation0]]
  $region88: #{transformer_encoder_decoder_seg_forward.27} parent=0
    _
  %s9 = ssub.s32 1, %s7
  %s10 = scalar_select 0, %s9, %s7
  $region1: #{transformer_encoder_decoder_seg_forward.27} parent=0
    #allocation2 [shape = 'u8[32768]{0}', space=vmem, size = 0x8000, scoped, tag = 'input window, operand 0']
    loop: start=0, step=1, limit=4
    $region2: #{transformer_encoder_decoder_seg_forward.27} parent=1 // loop_pre_header
      _
    $region3: #{transformer_encoder_decoder_seg_forward.27} parent=1 // loop_header
      %s12 = sphi 0, %s16
      %p13 = scmp.ge.s32.totalorder %s12, 4
      %s19 = sphi 0, %s38
      %s20 = sphi 0, %s34
      %s21 = sphi 0, %s30
      %s22 = sphi 0, %s19
      %s23 = sphi 0, %s20
      %s24 = sphi 0, %s21
      %s25 = sphi 0, %s22
      %s26 = sphi 0, %s23
      %s27 = sphi 0, %s24
      %s43 = sphi 0, %s45
      %s46 = sphi 0, %s43
      %s47 = sphi 0, %s46
      %s63 = sphi 0, %s47
      %s71 = sphi 0, %s73
      %s74 = sphi 0, %s71
      %s75 = sphi 0, %s74
      %s91 = sphi 0, %s75
      %s97 = sphi 0, %s99
      %s100 = sphi 0, %s97
      %s101 = sphi 0, %s100
      %s117 = sphi 0, %s101
      %s125 = sphi 0, %s127
      %s128 = sphi 0, %s125
      %s129 = sphi 0, %s128
      %s145 = sphi 0, %s129
      %s151 = sphi 0, %s153
      %s154 = sphi 0, %s151
      %s155 = sphi 0, %s154
      %s171 = sphi 0, %s155
      %s177 = sphi 0, %s179
      %s180 = sphi 0, %s177
      %s181 = sphi 0, %s180
      %s197 = sphi 0, %s181
      %s205 = sphi 0, %s207
      %s208 = sphi 0, %s205
      %s209 = sphi 0, %s208
      %s225 = sphi 0, %s209
    $region4: #{transformer_encoder_decoder_seg_forward.27} parent=1 // loop_header_branch
      %15 = sbr.rel (%p13) target = $region8
    $region5: #{transformer_encoder_decoder_seg_forward.27} parent=1 // loop_body
      %s17 = ssub.s32 %s12, 1
      %s18 = ssub.s32 %s12, 2
      %s28 = sadd.s32 1, %s21
      %p29 = scmp.ge.s32.totalorder %s28, 2
      %s30 = scalar_select %p29, 0, %s28
      %s31 = sadd.s32 1, %s20
      %s32 = scalar_select %p29, %s31, %s20
      %p33 = scmp.ge.s32.totalorder %s32, 1
      %s34 = scalar_select %p33, 0, %s32
      %s35 = sadd.s32 1, %s19
      %s36 = scalar_select %p33, %s35, %s19
      %p37 = scmp.ge.s32.totalorder %s36, 1
      %s38 = scalar_select %p37, 0, %s36
      %s39 = ssub.s32 %s19, %s38
      %s40 = ssub.s32 %s21, %s30
      %s41 = sor.u32 %s39, %s40
      %p42 = scmp.eq.s32.totalorder %s41, 0
      %s44 = sadd.s32 %s43, 1
      %s45 = scalar_select %p42, %s43, %s44
      %p48 = pneg %p42
      %p49 = scmp.eq.s32.totalorder %s12, 1
      %p50 = por %p48, %p49
      %p51 = scmp.ne.s32.totalorder %s43, %s46
      %p52 = scmp.eq.s32.totalorder %s12, 0
      %p53 = por %p51, %p52
      %p54 = scmp.ne.s32.totalorder %s43, %s46
      %p55 = scmp.eq.s32.totalorder %s17, 1
      %p56 = por %p54, %p55
      %p57 = scmp.ne.s32.totalorder %s46, %s47
      %p58 = scmp.eq.s32.totalorder %s17, 0
      %p59 = por %p57, %p58
      %p60 = scmp.ne.s32.totalorder %s46, %s47
      %p61 = scmp.eq.s32.totalorder %s18, 1
      %p62 = por %p60, %p61
      %p64 = scmp.ne.s32.totalorder %s47, %s63
      %p65 = scmp.eq.s32.totalorder %s18, 0
      %p66 = por %p64, %p65
      %s67 = ssub.s32 %s21, %s30
      %s68 = ssub.s32 %s20, %s34
      %s69 = sor.u32 %s67, %s68
      %p70 = scmp.eq.s32.totalorder %s69, 0
      %s72 = sadd.s32 %s71, 1
      %s73 = scalar_select %p70, %s71, %s72
      %p76 = pneg %p70
      %p77 = scmp.eq.s32.totalorder %s12, 1
      %p78 = por %p76, %p77
      %p79 = scmp.ne.s32.totalorder %s71, %s74
      %p80 = scmp.eq.s32.totalorder %s12, 0
      %p81 = por %p79, %p80
      %p82 = scmp.ne.s32.totalorder %s71, %s74
      %p83 = scmp.eq.s32.totalorder %s17, 1
      %p84 = por %p82, %p83
      %p85 = scmp.ne.s32.totalorder %s74, %s75
      %p86 = scmp.eq.s32.totalorder %s17, 0
      %p87 = por %p85, %p86
      %p88 = scmp.ne.s32.totalorder %s74, %s75
      %p89 = scmp.eq.s32.totalorder %s18, 1
      %p90 = por %p88, %p89
      %p92 = scmp.ne.s32.totalorder %s75, %s91
      %p93 = scmp.eq.s32.totalorder %s18, 0
      %p94 = por %p92, %p93
      %s95 = ssub.s32 %s20, %s34
      %p96 = scmp.eq.s32.totalorder %s95, 0
      %s98 = sadd.s32 %s97, 1
      %s99 = scalar_select %p96, %s97, %s98
      %p102 = pneg %p96
      %p103 = scmp.eq.s32.totalorder %s12, 1
      %p104 = por %p102, %p103
      %p105 = scmp.ne.s32.totalorder %s97, %s100
      %p106 = scmp.eq.s32.totalorder %s12, 0
      %p107 = por %p105, %p106
      %p108 = scmp.ne.s32.totalorder %s97, %s100
      %p109 = scmp.eq.s32.totalorder %s17, 1
      %p110 = por %p108, %p109
      %p111 = scmp.ne.s32.totalorder %s100, %s101
      %p112 = scmp.eq.s32.totalorder %s17, 0
      %p113 = por %p111, %p112
      %p114 = scmp.ne.s32.totalorder %s100, %s101
      %p115 = scmp.eq.s32.totalorder %s18, 1
      %p116 = por %p114, %p115
      %p118 = scmp.ne.s32.totalorder %s101, %s117
      %p119 = scmp.eq.s32.totalorder %s18, 0
      %p120 = por %p118, %p119
      %s121 = ssub.s32 %s19, %s38
      %s122 = ssub.s32 %s20, %s34
      %s123 = sor.u32 %s121, %s122
      %p124 = scmp.eq.s32.totalorder %s123, 0
      %s126 = sadd.s32 %s125, 1
      %s127 = scalar_select %p124, %s125, %s126
      %p130 = pneg %p124
      %p131 = scmp.eq.s32.totalorder %s12, 1
      %p132 = por %p130, %p131
      %p133 = scmp.ne.s32.totalorder %s125, %s128
      %p134 = scmp.eq.s32.totalorder %s12, 0
      %p135 = por %p133, %p134
      %p136 = scmp.ne.s32.totalorder %s125, %s128
      %p137 = scmp.eq.s32.totalorder %s17, 1
      %p138 = por %p136, %p137
      %p139 = scmp.ne.s32.totalorder %s128, %s129
      %p140 = scmp.eq.s32.totalorder %s17, 0
      %p141 = por %p139, %p140
      %p142 = scmp.ne.s32.totalorder %s128, %s129
      %p143 = scmp.eq.s32.totalorder %s18, 1
      %p144 = por %p142, %p143
      %p146 = scmp.ne.s32.totalorder %s129, %s145
      %p147 = scmp.eq.s32.totalorder %s18, 0
      %p148 = por %p146, %p147
      %s149 = ssub.s32 %s20, %s34
      %p150 = scmp.eq.s32.totalorder %s149, 0
      %s152 = sadd.s32 %s151, 1
      %s153 = scalar_select %p150, %s151, %s152
      %p156 = pneg %p150
      %p157 = scmp.eq.s32.totalorder %s12, 1
      %p158 = por %p156, %p157
      %p159 = scmp.ne.s32.totalorder %s151, %s154
      %p160 = scmp.eq.s32.totalorder %s12, 0
      %p161 = por %p159, %p160
      %p162 = scmp.ne.s32.totalorder %s151, %s154
      %p163 = scmp.eq.s32.totalorder %s17, 1
      %p164 = por %p162, %p163
      %p165 = scmp.ne.s32.totalorder %s154, %s155
      %p166 = scmp.eq.s32.totalorder %s17, 0
      %p167 = por %p165, %p166
      %p168 = scmp.ne.s32.totalorder %s154, %s155
      %p169 = scmp.eq.s32.totalorder %s18, 1
      %p170 = por %p168, %p169
      %p172 = scmp.ne.s32.totalorder %s155, %s171
      %p173 = scmp.eq.s32.totalorder %s18, 0
      %p174 = por %p172, %p173
      %s175 = ssub.s32 %s20, %s34
      %p176 = scmp.eq.s32.totalorder %s175, 0
      %s178 = sadd.s32 %s177, 1
      %s179 = scalar_select %p176, %s177, %s178
      %p182 = pneg %p176
      %p183 = scmp.eq.s32.totalorder %s12, 1
      %p184 = por %p182, %p183
      %p185 = scmp.ne.s32.totalorder %s177, %s180
      %p186 = scmp.eq.s32.totalorder %s12, 0
      %p187 = por %p185, %p186
      %p188 = scmp.ne.s32.totalorder %s177, %s180
      %p189 = scmp.eq.s32.totalorder %s17, 1
      %p190 = por %p188, %p189
      %p191 = scmp.ne.s32.totalorder %s180, %s181
      %p192 = scmp.eq.s32.totalorder %s17, 0
      %p193 = por %p191, %p192
      %p194 = scmp.ne.s32.totalorder %s180, %s181
      %p195 = scmp.eq.s32.totalorder %s18, 1
      %p196 = por %p194, %p195
      %p198 = scmp.ne.s32.totalorder %s181, %s197
      %p199 = scmp.eq.s32.totalorder %s18, 0
      %p200 = por %p198, %p199
      %s201 = ssub.s32 %s19, %s38
      %s202 = ssub.s32 %s20, %s34
      %s203 = sor.u32 %s201, %s202
      %p204 = scmp.eq.s32.totalorder %s203, 0
      %s206 = sadd.s32 %s205, 1
      %s207 = scalar_select %p204, %s205, %s206
      %p210 = pneg %p204
      %p211 = scmp.eq.s32.totalorder %s12, 1
      %p212 = por %p210, %p211
      %p213 = scmp.ne.s32.totalorder %s205, %s208
      %p214 = scmp.eq.s32.totalorder %s12, 0
      %p215 = por %p213, %p214
      %p216 = scmp.ne.s32.totalorder %s205, %s208
      %p217 = scmp.eq.s32.totalorder %s17, 1
      %p218 = por %p216, %p217
      %p219 = scmp.ne.s32.totalorder %s208, %s209
      %p220 = scmp.eq.s32.totalorder %s17, 0
      %p221 = por %p219, %p220
      %p222 = scmp.ne.s32.totalorder %s208, %s209
      %p223 = scmp.eq.s32.totalorder %s18, 1
      %p224 = por %p222, %p223
      %p226 = scmp.ne.s32.totalorder %s209, %s225
      %p227 = scmp.eq.s32.totalorder %s18, 0
      %p228 = por %p226, %p227
      %p229 = scmp.le.s32.totalorder 1, %s12
      %p230 = scmp.lt.s32.totalorder %s12, 3
      %p231 = pnand %p229, %p230
      %p232 = pneg %p231
      // Predicated region
      $region9: #{transformer_encoder_decoder_seg_forward.27} parent=5 // pred_check
        _
      $region10: #{transformer_encoder_decoder_seg_forward.27} parent=5 // pred_check_branch
        %234 = sbr.rel (%p231) target = $region12
      $region11: #{transformer_encoder_decoder_seg_forward.27} parent=5 // pred_region
        %s235 = ssub.s32 %s12, 1
        // Predicated region
        $region13: #{transformer_encoder_decoder_seg_forward.27} parent=11 // pred_check
          %p236 = pneg %p113
        $region14: #{transformer_encoder_decoder_seg_forward.27} parent=11 // pred_check_branch
          %238 = sbr.rel (%p236) target = $region16
        $region15: #{transformer_encoder_decoder_seg_forward.27} parent=11 // pred_region
          %p239 = scmp.lt.s32.totalorder %s23, 0
          %s240 = scalar_select %p239, %s23, 0
          %s241 = scalar_lea.vmem %s2, %s240
        $region16: #{transformer_encoder_decoder_seg_forward.27} parent=11 // pred_fallthru
          _
        // Predicated region
        $region17: #{transformer_encoder_decoder_seg_forward.27} parent=11 // pred_check
          %p242 = pneg %p141
        $region18: #{transformer_encoder_decoder_seg_forward.27} parent=11 // pred_check_branch
          %244 = sbr.rel (%p242) target = $region20
        $region19: #{transformer_encoder_decoder_seg_forward.27} parent=11 // pred_region
          %s245 = smul.u32 2, %s22
          %p246 = scmp.lt.s32.totalorder %s245, 1
          %s247 = scalar_select %p246, %s245, 1
          %p248 = scmp.lt.s32.totalorder %s23, 0
          %s249 = scalar_select %p248, %s23, 0
          %s250 = sadd.s32 %s249, %s247
          %s251 = smul.addr %s250, 8
          %s252 = scalar_lea.vmem %s3, %s251
          %s253 = smul.u32 2, %s22
        $region20: #{transformer_encoder_decoder_seg_forward.27} parent=11 // pred_fallthru
          _
        // Predicated region
        $region21: #{transformer_encoder_decoder_seg_forward.27} parent=11 // pred_check
          %p254 = pneg %p167
        $region22: #{transformer_encoder_decoder_seg_forward.27} parent=11 // pred_check_branch
          %256 = sbr.rel (%p254) target = $region24
        $region23: #{transformer_encoder_decoder_seg_forward.27} parent=11 // pred_region
          %p257 = scmp.lt.s32.totalorder %s23, 0
          %s258 = scalar_select %p257, %s23, 0
          %s259 = scalar_lea.vmem %s4, %s258
        $region24: #{transformer_encoder_decoder_seg_forward.27} parent=11 // pred_fallthru
          _
        // Predicated region
        $region25: #{transformer_encoder_decoder_seg_forward.27} parent=11 // pred_check
          %p260 = pneg %p193
        $region26: #{transformer_encoder_decoder_seg_forward.27} parent=11 // pred_check_branch
          %262 = sbr.rel (%p260) target = $region28
        $region27: #{transformer_encoder_decoder_seg_forward.27} parent=11 // pred_region
          %p263 = scmp.lt.s32.totalorder %s23, 0
          %s264 = scalar_select %p263, %s23, 0
          %s265 = scalar_lea.vmem %s5, %s264
        $region28: #{transformer_encoder_decoder_seg_forward.27} parent=11 // pred_fallthru
          _
      $region12: #{transformer_encoder_decoder_seg_forward.27} parent=5 // pred_fallthru
        _
      %p266 = scmp.lt.s32.totalorder %s12, 2
      // Predicated region
      $region29: #{transformer_encoder_decoder_seg_forward.27} parent=5 // pred_check
        %p267 = pneg %p266
      $region30: #{transformer_encoder_decoder_seg_forward.27} parent=5 // pred_check_branch
        %269 = sbr.rel (%p267) target = $region32
      $region31: #{transformer_encoder_decoder_seg_forward.27} parent=5 // pred_region
        // Predicated region
        $region33: #{transformer_encoder_decoder_seg_forward.27} parent=31 // pred_check
          %p270 = pneg %p53
        $region34: #{transformer_encoder_decoder_seg_forward.27} parent=31 // pred_check_branch
          %272 = sbr.rel (%p270) target = $region36
        $region35: #{transformer_encoder_decoder_seg_forward.27} parent=31 // pred_region
          %s273 = sand.u32 %s43, 1
          %s274 = sand.u32 %s43, 1
          %s275 = smul.addr %s274, 32
          %s276 = scalar_lea.vmem [#allocation2], %s275
          %s277 = smul.u32 2, %s19
          %s278 = smul.u32 4, %s21
          %s279 = smul.addr %s277, 8
          %s280 = sadd.s32 %s278, %s279
          %s281 = smul.addr %s280, 4
          %s282 = scalar_lea.vmem %s0, %s281
          // Predicated region
          $region37: #{transformer_encoder_decoder_seg_forward.27} parent=35 // pred_check
            _
          $region38: #{transformer_encoder_decoder_seg_forward.27} parent=35 // pred_check_branch
            %284 = sbr.rel (0) target = $region40
          $region39: #{transformer_encoder_decoder_seg_forward.27} parent=35 // pred_region
            // Predicated region
            $region41: #{transformer_encoder_decoder_seg_forward.27} parent=39 // pred_check
              _
            $region42: #{transformer_encoder_decoder_seg_forward.27} parent=39 // pred_check_branch
              %286 = sbr.rel (0) target = $region44
            $region43: #{transformer_encoder_decoder_seg_forward.27} parent=39 // pred_region
              loop: start=0, step=1, limit=1
              $region45: #{transformer_encoder_decoder_seg_forward.27} parent=43 // loop_pre_header
                _
              $region46: #{transformer_encoder_decoder_seg_forward.27} parent=43 // loop_header
                %s288 = sphi 0, %s292
                %p289 = scmp.ge.s32.totalorder %s288, 1
                %s293 = sphi %s282, %s282
                %s294 = sphi %s276, %s276
              $region47: #{transformer_encoder_decoder_seg_forward.27} parent=43 // loop_header_branch
                %291 = sbr.rel (%p289) target = $region51
              $region48: #{transformer_encoder_decoder_seg_forward.27} parent=43 // loop_body
                %v295 = vld [vmem:[%s293] sm:$0xff]
                %296 = vst [vmem:[%s294] sm:$0xff] %v295
                %v297 = vld [vmem:[%s293 + $0x8] sm:$0xff]
                %298 = vst [vmem:[%s294 + $0x8] sm:$0xff] %v297
                %v299 = vld [vmem:[%s293 + $0x20] sm:$0xff]
                %300 = vst [vmem:[%s294 + $0x10] sm:$0xff] %v299
                %v301 = vld [vmem:[%s293 + $0x28] sm:$0xff]
                %302 = vst [vmem:[%s294 + $0x18] sm:$0xff] %v301
              $region49: #{transformer_encoder_decoder_seg_forward.27} parent=43 // loop_footer
                %s292 = sadd.s32 1, %s288
              $region50: #{transformer_encoder_decoder_seg_forward.27} parent=43 // loop_footer_branch
                %287 = sbr.rel target = $region46
              $region51: #{transformer_encoder_decoder_seg_forward.27} parent=43 // loop_exit
                _
            $region44: #{transformer_encoder_decoder_seg_forward.27} parent=39 // pred_fallthru
              _
            // Predicated region
            $region52: #{transformer_encoder_decoder_seg_forward.27} parent=39 // pred_check
              _
            $region53: #{transformer_encoder_decoder_seg_forward.27} parent=39 // pred_check_branch
              %304 = sbr.rel target = $region55
            $region54: #{transformer_encoder_decoder_seg_forward.27} parent=39 // pred_region
              _
            $region55: #{transformer_encoder_decoder_seg_forward.27} parent=39 // pred_fallthru
              _
          $region40: #{transformer_encoder_decoder_seg_forward.27} parent=35 // pred_fallthru
            _
          %305 = vnop
        $region36: #{transformer_encoder_decoder_seg_forward.27} parent=31 // pred_fallthru
          _
        // Predicated region
        $region56: #{transformer_encoder_decoder_seg_forward.27} parent=31 // pred_check
          %p306 = pneg %p81
        $region57: #{transformer_encoder_decoder_seg_forward.27} parent=31 // pred_check_branch
          %308 = sbr.rel (%p306) target = $region59
        $region58: #{transformer_encoder_decoder_seg_forward.27} parent=31 // pred_region
          %s309 = smul.u32 64, %s21
          %p310 = scmp.lt.s32.totalorder %s309, 127
          %s311 = scalar_select %p310, %s309, 127
          %p312 = scmp.lt.s32.totalorder %s20, 0
          %s313 = scalar_select %p312, %s20, 0
          %s314 = sadd.s32 %s313, %s311
          %s315 = smul.addr %s314, 4
          %s316 = scalar_lea.vmem %s1, %s315
          %s317 = smul.u32 64, %s21
        $region59: #{transformer_encoder_decoder_seg_forward.27} parent=31 // pred_fallthru
          _
      $region32: #{transformer_encoder_decoder_seg_forward.27} parent=5 // pred_fallthru
        _
      %p318 = scmp.le.s32.totalorder 1, %s12
      %p319 = scmp.lt.s32.totalorder %s12, 3
      %p320 = pnand %p318, %p319
      %p321 = pneg %p320
      // Predicated region
      $region60: #{transformer_encoder_decoder_seg_forward.27} parent=5 // pred_check
        _
      $region61: #{transformer_encoder_decoder_seg_forward.27} parent=5 // pred_check_branch
        %323 = sbr.rel (%p320) target = $region63
      $region62: #{transformer_encoder_decoder_seg_forward.27} parent=5 // pred_region
        %s324 = ssub.s32 %s12, 1
        %s325 = sand.u32 %s46, 1
        %s326 = sand.u32 %s46, 1
        %s327 = smul.addr %s326, 32
        %s328 = scalar_lea.vmem [#allocation2], %s327
        // Predicated region
        $region64: #{transformer_encoder_decoder_seg_forward.27} parent=62 // pred_check
          %p329 = pneg %p59
        $region65: #{transformer_encoder_decoder_seg_forward.27} parent=62 // pred_check_branch
          %331 = sbr.rel (%p329) target = $region67
        $region66: #{transformer_encoder_decoder_seg_forward.27} parent=62 // pred_region
          _
        $region67: #{transformer_encoder_decoder_seg_forward.27} parent=62 // pred_fallthru
          _
        %s332 = sand.u32 %s46, 1
        %s333 = sand.u32 %s46, 1
        %s334 = smul.addr %s333, 32
        %s335 = scalar_lea.vmem [#allocation2], %s334
        %p336 = pneg %p59
        %p337 = pneg %p56
        %s338 = smul.u32 64, %s24
        %p339 = scmp.lt.s32.totalorder %s338, 127
        %s340 = scalar_select %p339, %s338, 127
        %p341 = scmp.lt.s32.totalorder %s23, 0
        %s342 = scalar_select %p341, %s23, 0
        %s343 = sadd.s32 %s342, %s340
        %s344 = smul.addr %s343, 4
        %s345 = scalar_lea.vmem %s1, %s344
        %p346 = pneg %p87
        %p347 = pneg %p84
        %p348 = scmp.lt.s32.totalorder %s23, 0
        %s349 = scalar_select %p348, %s23, 0
        %s350 = scalar_lea.vmem %s2, %s349
        %p351 = pneg %p113
        %p352 = pneg %p110
        %s353 = smul.u32 2, %s22
        %p354 = scmp.lt.s32.totalorder %s353, 1
        %s355 = scalar_select %p354, %s353, 1
        %p356 = scmp.lt.s32.totalorder %s23, 0
        %s357 = scalar_select %p356, %s23, 0
        %s358 = sadd.s32 %s357, %s355
        %s359 = smul.addr %s358, 8
        %s360 = scalar_lea.vmem %s3, %s359
        %p361 = pneg %p141
        %p362 = pneg %p138
        %p363 = scmp.lt.s32.totalorder %s23, 0
        %s364 = scalar_select %p363, %s23, 0
        %s365 = scalar_lea.vmem %s4, %s364
        %p366 = pneg %p167
        %p367 = pneg %p164
        %p368 = scmp.lt.s32.totalorder %s23, 0
        %s369 = scalar_select %p368, %s23, 0
        %s370 = scalar_lea.vmem %s5, %s369
        %p371 = pneg %p193
        %p372 = pneg %p190
        %p373 = pneg %p221
        %p374 = pneg %p218
        %s375 = smul.u32 2, %s22
        %p376 = scmp.lt.s32.totalorder %s375, 1
        %s377 = scalar_select %p376, %s375, 1
        %p378 = scmp.lt.s32.totalorder %s23, 0
        %s379 = scalar_select %p378, %s23, 0
        %s380 = sadd.s32 %s379, %s377
        %s381 = smul.addr %s380, 8
        %s382 = scalar_lea.vmem %s6, %s381
        %s383 = smul.u32 2, %s22
        %s384 = smul.u32 4, %s24
        %s385 = smul.u32 64, %s24
        %p386 = scmp.lt.s32.totalorder %s385, 127
        %s387 = scalar_select %p386, %s385, 127
        %p388 = scmp.lt.s32.totalorder %s23, 0
        %s389 = scalar_select %p388, %s23, 0
        %s390 = sadd.s32 %s389, %s387
        %s391 = smul.addr %s390, 4
        %s392 = scalar_lea.vmem %s1, %s391
        %s393 = smul.u32 64, %s24
        %p394 = scmp.lt.s32.totalorder %s23, 0
        %s395 = scalar_select %p394, %s23, 0
        %s396 = scalar_lea.vmem %s2, %s395
        %s397 = smul.u32 2, %s22
        %p398 = scmp.lt.s32.totalorder %s397, 1
        %s399 = scalar_select %p398, %s397, 1
        %p400 = scmp.lt.s32.totalorder %s23, 0
        %s401 = scalar_select %p400, %s23, 0
        %s402 = sadd.s32 %s401, %s399
        %s403 = smul.addr %s402, 8
        %s404 = scalar_lea.vmem %s3, %s403
        %s405 = smul.u32 2, %s22
        %p406 = scmp.lt.s32.totalorder %s23, 0
        %s407 = scalar_select %p406, %s23, 0
        %s408 = scalar_lea.vmem %s4, %s407
        %p409 = scmp.lt.s32.totalorder %s23, 0
        %s410 = scalar_select %p409, %s23, 0
        %s411 = scalar_lea.vmem %s5, %s410
        %s412 = smul.u32 2, %s22
        %p413 = scmp.lt.s32.totalorder %s412, 1
        %s414 = scalar_select %p413, %s412, 1
        %p415 = scmp.lt.s32.totalorder %s23, 0
        %s416 = scalar_select %p415, %s23, 0
        %s417 = sadd.s32 %s416, %s414
        %s418 = smul.addr %s417, 8
        %s419 = scalar_lea.vmem %s6, %s418
        %s420 = smul.u32 2, %s22
        %p422 = scmp.eq.s32.totalorder %s24, 0
        // Predicated region
        $region68: #{transformer_encoder_decoder_seg_forward.27} parent=62 // pred_check
          %p423 = pneg %p422
        $region69: #{transformer_encoder_decoder_seg_forward.27} parent=62 // pred_check_branch
          %425 = sbr.rel (%p423) target = $region71
        $region70: #{transformer_encoder_decoder_seg_forward.27} parent=62 // pred_region
          %vm426 = vcmask 523264
          %427 = vst.msk [vmem:[%s419] sm:$0xff] %vm426, 0.0
          %428 = vst.msk [vmem:[%s419 + $0x8] sm:$0xff] %vm426, 0.0
        $region71: #{transformer_encoder_decoder_seg_forward.27} parent=62 // pred_fallthru
          _
        %v429 = vld [vmem:[%s419] sm:$0xff]
        %v430 = vld [vmem:[%s419 + $0x8] sm:$0xff]
        %v431 = vld [vmem:[%s328] sm:$0xff]
        %v432 = vld [vmem:[%s328 + $0x8] sm:$0xff]
        %v433 = vld [vmem:[%s328 + $0x10] sm:$0xff]
        %v434 = vld [vmem:[%s328 + $0x18] sm:$0xff]
        %v435 = vld [vmem:[%s392] sm:$0xf]
        %v436 = vld [vmem:[%s392 + $0x4] sm:$0xf]
        %v437 = vld [vmem:[%s392 + $0x8] sm:$0xf]
        %v438 = vld [vmem:[%s392 + $0xc] sm:$0xf]
        %v439 = vld [vmem:[%s392 + $0x10] sm:$0xf]
        %v440 = vld [vmem:[%s392 + $0x14] sm:$0xf]
        %v441 = vld [vmem:[%s392 + $0x18] sm:$0xf]
        %v442 = vld [vmem:[%s392 + $0x1c] sm:$0xf]
        %v443 = vld [vmem:[%s392 + $0x20] sm:$0xf]
        %v444 = vld [vmem:[%s392 + $0x24] sm:$0xf]
        %v445 = vld [vmem:[%s392 + $0x28] sm:$0xf]
        %v446 = vld [vmem:[%s392 + $0x2c] sm:$0xf]
        %v447 = vld [vmem:[%s392 + $0x30] sm:$0xf]
        %v448 = vld [vmem:[%s392 + $0x34] sm:$0xf]
        %v449 = vld [vmem:[%s392 + $0x38] sm:$0xf]
        %v450 = vld [vmem:[%s392 + $0x3c] sm:$0xf]
        %v451 = vld [vmem:[%s392 + $0x40] sm:$0xf]
        %v452 = vld [vmem:[%s392 + $0x44] sm:$0xf]
        %v453 = vld [vmem:[%s392 + $0x48] sm:$0xf]
        %v454 = vld [vmem:[%s392 + $0x4c] sm:$0xf]
        %v455 = vld [vmem:[%s392 + $0x50] sm:$0xf]
        %v456 = vld [vmem:[%s392 + $0x54] sm:$0xf]
        %v457 = vld [vmem:[%s392 + $0x58] sm:$0xf]
        %v458 = vld [vmem:[%s392 + $0x5c] sm:$0xf]
        %v459 = vld [vmem:[%s392 + $0x60] sm:$0xf]
        %v460 = vld [vmem:[%s392 + $0x64] sm:$0xf]
        %v461 = vld [vmem:[%s392 + $0x68] sm:$0xf]
        %v462 = vld [vmem:[%s392 + $0x6c] sm:$0xf]
        %v463 = vld [vmem:[%s392 + $0x70] sm:$0xf]
        %v464 = vld [vmem:[%s392 + $0x74] sm:$0xf]
        %v465 = vld [vmem:[%s392 + $0x78] sm:$0xf]
        %v466 = vld [vmem:[%s392 + $0x7c] sm:$0xf]
        %v467 = vld [vmem:[%s392 + $0x80] sm:$0xf]
        %v468 = vld [vmem:[%s392 + $0x84] sm:$0xf]
        %v469 = vld [vmem:[%s392 + $0x88] sm:$0xf]
        %v470 = vld [vmem:[%s392 + $0x8c] sm:$0xf]
        %v471 = vld [vmem:[%s392 + $0x90] sm:$0xf]
        %v472 = vld [vmem:[%s392 + $0x94] sm:$0xf]
        %v473 = vld [vmem:[%s392 + $0x98] sm:$0xf]
        %v474 = vld [vmem:[%s392 + $0x9c] sm:$0xf]
        %v475 = vld [vmem:[%s392 + $0xa0] sm:$0xf]
        %v476 = vld [vmem:[%s392 + $0xa4] sm:$0xf]
        %v477 = vld [vmem:[%s392 + $0xa8] sm:$0xf]
        %v478 = vld [vmem:[%s392 + $0xac] sm:$0xf]
        %v479 = vld [vmem:[%s392 + $0xb0] sm:$0xf]
        %v480 = vld [vmem:[%s392 + $0xb4] sm:$0xf]
        %v481 = vld [vmem:[%s392 + $0xb8] sm:$0xf]
        %v482 = vld [vmem:[%s392 + $0xbc] sm:$0xf]
        %v483 = vld [vmem:[%s392 + $0xc0] sm:$0xf]
        %v484 = vld [vmem:[%s392 + $0xc4] sm:$0xf]
        %v485 = vld [vmem:[%s392 + $0xc8] sm:$0xf]
        %v486 = vld [vmem:[%s392 + $0xcc] sm:$0xf]
        %v487 = vld [vmem:[%s392 + $0xd0] sm:$0xf]
        %v488 = vld [vmem:[%s392 + $0xd4] sm:$0xf]
        %v489 = vld [vmem:[%s392 + $0xd8] sm:$0xf]
        %v490 = vld [vmem:[%s392 + $0xdc] sm:$0xf]
        %v491 = vld [vmem:[%s392 + $0xe0] sm:$0xf]
        %v492 = vld [vmem:[%s392 + $0xe4] sm:$0xf]
        %v493 = vld [vmem:[%s392 + $0xe8] sm:$0xf]
        %v494 = vld [vmem:[%s392 + $0xec] sm:$0xf]
        %v495 = vld [vmem:[%s392 + $0xf0] sm:$0xf]
        %v496 = vld [vmem:[%s392 + $0xf4] sm:$0xf]
        %v497 = vld [vmem:[%s392 + $0xf8] sm:$0xf]
        %v498 = vld [vmem:[%s392 + $0xfc] sm:$0xf]
        %v503 = vunpack.c.l.b16 %v431
        %v504 = vunpack.c.h.b16 %v431
        %v505 = vunpack.c.l.b16 %v432
        %v506 = vunpack.c.h.b16 %v432
        %v507 = vunpack.c.l.b16 %v433
        %v508 = vunpack.c.h.b16 %v433
        %v509 = vunpack.c.l.b16 %v434
        %v510 = vunpack.c.h.b16 %v434
        %v511 = vpack.c.b16 %v507, %v503
        %v512 = vpack.c.b16 %v508, %v504
        %v513 = vpack.c.b16 %v509, %v505
        %v514 = vpack.c.b16 %v510, %v506
        %v583 = vunpack.c.l.b16 %v435
        %v584 = vunpack.c.l.b16 %v436
        %v585 = vunpack.c.l.b16 %v437
        %v586 = vunpack.c.l.b16 %v438
        %v587 = vunpack.c.l.b16 %v439
        %v588 = vunpack.c.l.b16 %v440
        %v589 = vunpack.c.l.b16 %v441
        %v590 = vunpack.c.l.b16 %v442
        %v591 = vunpack.c.l.b16 %v443
        %v592 = vunpack.c.l.b16 %v444
        %v593 = vunpack.c.l.b16 %v445
        %v594 = vunpack.c.l.b16 %v446
        %v595 = vunpack.c.l.b16 %v447
        %v596 = vunpack.c.l.b16 %v448
        %v597 = vunpack.c.l.b16 %v449
        %v598 = vunpack.c.l.b16 %v450
        %v599 = vunpack.c.l.b16 %v451
        %v600 = vunpack.c.l.b16 %v452
        %v601 = vunpack.c.l.b16 %v453
        %v602 = vunpack.c.l.b16 %v454
        %v603 = vunpack.c.l.b16 %v455
        %v604 = vunpack.c.l.b16 %v456
        %v605 = vunpack.c.l.b16 %v457
        %v606 = vunpack.c.l.b16 %v458
        %v607 = vunpack.c.l.b16 %v459
        %v608 = vunpack.c.l.b16 %v460
        %v609 = vunpack.c.l.b16 %v461
        %v610 = vunpack.c.l.b16 %v462
        %v611 = vunpack.c.l.b16 %v463
        %v612 = vunpack.c.l.b16 %v464
        %v613 = vunpack.c.l.b16 %v465
        %v614 = vunpack.c.l.b16 %v466
        %v615 = vunpack.c.l.b16 %v467
        %v616 = vunpack.c.l.b16 %v468
        %v617 = vunpack.c.l.b16 %v469
        %v618 = vunpack.c.l.b16 %v470
        %v619 = vunpack.c.l.b16 %v471
        %v620 = vunpack.c.l.b16 %v472
        %v621 = vunpack.c.l.b16 %v473
        %v622 = vunpack.c.l.b16 %v474
        %v623 = vunpack.c.l.b16 %v475
        %v624 = vunpack.c.l.b16 %v476
        %v625 = vunpack.c.l.b16 %v477
        %v626 = vunpack.c.l.b16 %v478
        %v627 = vunpack.c.l.b16 %v479
        %v628 = vunpack.c.l.b16 %v480
        %v629 = vunpack.c.l.b16 %v481
        %v630 = vunpack.c.l.b16 %v482
        %v631 = vunpack.c.l.b16 %v483
        %v632 = vunpack.c.l.b16 %v484
        %v633 = vunpack.c.l.b16 %v485
        %v634 = vunpack.c.l.b16 %v486
        %v635 = vunpack.c.l.b16 %v487
        %v636 = vunpack.c.l.b16 %v488
        %v637 = vunpack.c.l.b16 %v489
        %v638 = vunpack.c.l.b16 %v490
        %v639 = vunpack.c.l.b16 %v491
        %v640 = vunpack.c.l.b16 %v492
        %v641 = vunpack.c.l.b16 %v493
        %v642 = vunpack.c.l.b16 %v494
        %v643 = vunpack.c.l.b16 %v495
        %v644 = vunpack.c.l.b16 %v496
        %v645 = vunpack.c.l.b16 %v497
        %v646 = vunpack.c.l.b16 %v498
        %v647 = vpack.c.b16 %v584, %v583
        %v648 = vpack.c.b16 %v586, %v585
        %v649 = vpack.c.b16 %v588, %v587
        %v650 = vpack.c.b16 %v590, %v589
        %v651 = vpack.c.b16 %v592, %v591
        %v652 = vpack.c.b16 %v594, %v593
        %v653 = vpack.c.b16 %v596, %v595
        %v654 = vpack.c.b16 %v598, %v597
        %v655 = vpack.c.b16 %v600, %v599
        %v656 = vpack.c.b16 %v602, %v601
        %v657 = vpack.c.b16 %v604, %v603
        %v658 = vpack.c.b16 %v606, %v605
        %v659 = vpack.c.b16 %v608, %v607
        %v660 = vpack.c.b16 %v610, %v609
        %v661 = vpack.c.b16 %v612, %v611
        %v662 = vpack.c.b16 %v614, %v613
        %v663 = vpack.c.b16 %v616, %v615
        %v664 = vpack.c.b16 %v618, %v617
        %v665 = vpack.c.b16 %v620, %v619
        %v666 = vpack.c.b16 %v622, %v621
        %v667 = vpack.c.b16 %v624, %v623
        %v668 = vpack.c.b16 %v626, %v625
        %v669 = vpack.c.b16 %v628, %v627
        %v670 = vpack.c.b16 %v630, %v629
        %v671 = vpack.c.b16 %v632, %v631
        %v672 = vpack.c.b16 %v634, %v633
        %v673 = vpack.c.b16 %v636, %v635
        %v674 = vpack.c.b16 %v638, %v637
        %v675 = vpack.c.b16 %v640, %v639
        %v676 = vpack.c.b16 %v642, %v641
        %v677 = vpack.c.b16 %v644, %v643
        %v678 = vpack.c.b16 %v646, %v645
        %711 = vmatprep.subr.bf16.mxu0 0
        %712 = vmatpush1.bf16.msra.mxu0 %v654
        %713 = vmatprep.subr.bf16.mxu0 0
        %714 = vmatpush1.bf16.msra.mxu0 %v653
        %715 = vmatprep.subr.bf16.mxu0 0
        %716 = vmatpush1.bf16.msra.mxu0 %v652
        %717 = vmatprep.subr.bf16.mxu0 0
        %718 = vmatpush1.bf16.msra.mxu0 %v651
        %719 = vmatprep.subr.bf16.mxu0 0
        %720 = vmatpush1.bf16.msra.mxu0 %v650
        %721 = vmatprep.subr.bf16.mxu0 0
        %722 = vmatpush1.bf16.msra.mxu0 %v649
        %723 = vmatprep.subr.bf16.mxu0 0
        %724 = vmatpush1.bf16.msra.mxu0 %v648
        %725 = vmatprep.subr.bf16.mxu0 0
        %726 = vmatpush1.bf16.msra.mxu0 %v647
        %727 = vmatprep.subr.bf16.mxu0 0
        %728 = vmatpush2.bf16.msra.mxu0 %v662
        %729 = vmatprep.subr.bf16.mxu0 0
        %730 = vmatpush2.bf16.msra.mxu0 %v661
        %731 = vmatprep.subr.bf16.mxu0 0
        %732 = vmatpush2.bf16.msra.mxu0 %v660
        %733 = vmatprep.subr.bf16.mxu0 0
        %734 = vmatpush2.bf16.msra.mxu0 %v659
        %735 = vmatprep.subr.bf16.mxu0 0
        %736 = vmatpush2.bf16.msra.mxu0 %v658
        %737 = vmatprep.subr.bf16.mxu0 0
        %738 = vmatpush2.bf16.msra.mxu0 %v657
        %739 = vmatprep.subr.bf16.mxu0 0
        %740 = vmatpush2.bf16.msra.mxu0 %v656
        %741 = vmatprep.subr.bf16.mxu0 0
        %742 = vmatpush2.bf16.msra.mxu0 %v655
        %743 = vmatprep.mubr.bf16.mxu0 %v512
        %744 = vmatmul.mubr.bf16.gmra.mxu0 %v511
        %v745 = vpop.f32.mrf.mxu0
        %v746 = vadd.f32 0.0, %v745
        %v747 = vpop.f32.mrf.mxu0
        %v748 = vpop.f32.mrf.mxu0
        %v749 = vadd.f32 0.0, %v748
        %v750 = vpop.f32.mrf.mxu0
        %751 = vdwg.mxu0
        %752 = vmatprep.subr.bf16.mxu0 0
        %753 = vmatpush1.bf16.msra.mxu0 %v670
        %754 = vmatprep.subr.bf16.mxu0 0
        %755 = vmatpush1.bf16.msra.mxu0 %v669
        %756 = vmatprep.subr.bf16.mxu0 0
        %757 = vmatpush1.bf16.msra.mxu0 %v668
        %758 = vmatprep.subr.bf16.mxu0 0
        %759 = vmatpush1.bf16.msra.mxu0 %v667
        %760 = vmatprep.subr.bf16.mxu0 0
        %761 = vmatpush1.bf16.msra.mxu0 %v666
        %762 = vmatprep.subr.bf16.mxu0 0
        %763 = vmatpush1.bf16.msra.mxu0 %v665
        %764 = vmatprep.subr.bf16.mxu0 0
        %765 = vmatpush1.bf16.msra.mxu0 %v664
        %766 = vmatprep.subr.bf16.mxu0 0
        %767 = vmatpush1.bf16.msra.mxu0 %v663
        %768 = vmatprep.subr.bf16.mxu0 0
        %769 = vmatpush2.bf16.msra.mxu0 %v678
        %770 = vmatprep.subr.bf16.mxu0 0
        %771 = vmatpush2.bf16.msra.mxu0 %v677
        %772 = vmatprep.subr.bf16.mxu0 0
        %773 = vmatpush2.bf16.msra.mxu0 %v676
        %774 = vmatprep.subr.bf16.mxu0 0
        %775 = vmatpush2.bf16.msra.mxu0 %v675
        %776 = vmatprep.subr.bf16.mxu0 0
        %777 = vmatpush2.bf16.msra.mxu0 %v674
        %778 = vmatprep.subr.bf16.mxu0 0
        %779 = vmatpush2.bf16.msra.mxu0 %v673
        %780 = vmatprep.subr.bf16.mxu0 0
        %781 = vmatpush2.bf16.msra.mxu0 %v672
        %782 = vmatprep.subr.bf16.mxu0 0
        %783 = vmatpush2.bf16.msra.mxu0 %v671
        %784 = vmatprep.mubr.bf16.mxu0 %v514
        %785 = vmatmul.mubr.bf16.gmra.mxu0 %v513
        %v786 = vpop.f32.mrf.mxu0
        %v787 = vadd.f32 %v746, %v786
        %v788 = vpop.f32.mrf.mxu0
        %v789 = vpop.f32.mrf.mxu0
        %v790 = vadd.f32 %v749, %v789
        %v791 = vpop.f32.mrf.mxu0
        %792 = vdwg.mxu0
        %v793 = vadd.f32 %v429, %v787
        %v794 = vadd.f32 %v430, %v790
        %vm795 = vcmask 523264
        %796 = vst.msk [vmem:[%s419] sm:$0xff] %vm795, %v793
        %797 = vst.msk [vmem:[%s419 + $0x8] sm:$0xff] %vm795, %v794
        %p798 = scmp.eq.s32.totalorder %s24, 1
        // Predicated region
        $region72: #{transformer_encoder_decoder_seg_forward.27} parent=62 // pred_check
          %p799 = pneg %p798
        $region73: #{transformer_encoder_decoder_seg_forward.27} parent=62 // pred_check_branch
          %801 = sbr.rel (%p799) target = $region75
        $region74: #{transformer_encoder_decoder_seg_forward.27} parent=62 // pred_region
          %v802 = vld [vmem:[%s419] sm:$0xff]
          %v803 = vld [vmem:[%s419 + $0x8] sm:$0xff]
          %v804 = vld [vmem:[%s396] sm:$0x1]
          %v806 = vlaneseq
          %v807 = vshrl.u32 %v806, 7
          %v808 = vsub.s32 0, %v807
          %v809 = vrot.slane %v804, %v808
          %v811 = vadd.f32 %v802, %v809
          %v812 = vadd.f32 %v803, %v809
          %v813 = vld [vmem:[%s404] sm:$0xff]
          %v814 = vld [vmem:[%s404 + $0x8] sm:$0xff]
          %v815 = vadd.f32 %v811, %v813
          %v816 = vadd.f32 %v812, %v814
          %v817 = vsel %vm795, %v815, 0.0
          %818 = vadd.xlane.f32.xlu0 %v817
          %v819 = vpop.xlane.xlu0 %818
          %v820 = vsel %vm795, %v816, 0.0
          %821 = vadd.xlane.f32.xlu0 %v820
          %v822 = vpop.xlane.xlu0 %821
          %v823 = vrcp.pop 64.0
          %v824 = vmul.f32 %v819, %v823
          %v825 = vmul.f32 %v822, %v823
          %v826 = vsub.f32 %v815, %v824
          %v827 = vsub.f32 %v816, %v825
          %v828 = vmul.f32 %v826, %v826
          %v829 = vmul.f32 %v827, %v827
          %v830 = vsel %vm795, %v828, 0.0
          %831 = vadd.xlane.f32.xlu0 %v830
          %v832 = vpop.xlane.xlu0 %831
          %v833 = vsel %vm795, %v829, 0.0
          %834 = vadd.xlane.f32.xlu0 %v833
          %v835 = vpop.xlane.xlu0 %834
          %v836 = vmul.f32 %v832, %v823
          %v837 = vmul.f32 %v835, %v823
          %v838 = vadd.f32 %v836, 1e-05
          %v839 = vadd.f32 %v837, 1e-05
          %v840 = vrsqrt.pop %v838
          %v841 = vrsqrt.pop %v839
          %v842 = vmul.f32 %v826, %v840
          %v843 = vmul.f32 %v827, %v841
          %v844 = vld [vmem:[%s408] sm:$0x1]
          %v846 = vlaneseq
          %v847 = vshrl.u32 %v846, 7
          %v848 = vsub.s32 0, %v847
          %v849 = vrot.slane %v844, %v848
          %v851 = vmul.f32 %v842, %v849
          %v852 = vmul.f32 %v843, %v849
          %v853 = vld [vmem:[%s411] sm:$0x1]
          %v855 = vlaneseq
          %v856 = vshrl.u32 %v855, 7
          %v857 = vsub.s32 0, %v856
          %v858 = vrot.slane %v853, %v857
          %v860 = vadd.f32 %v851, %v858
          %v861 = vadd.f32 %v852, %v858
          %862 = vst.msk [vmem:[%s419] sm:$0xff] %vm795, %v860
          %863 = vst.msk [vmem:[%s419 + $0x8] sm:$0xff] %vm795, %v861
        $region75: #{transformer_encoder_decoder_seg_forward.27} parent=62 // pred_fallthru
          _
        %s864 = smul.u32 2, %s22
        %p865 = scmp.lt.s32.totalorder %s864, 1
        %s866 = scalar_select %p865, %s864, 1
        %p867 = scmp.lt.s32.totalorder %s23, 0
        %s868 = scalar_select %p867, %s23, 0
        %s869 = sadd.s32 %s868, %s866
        %s870 = smul.addr %s869, 8
        %s871 = scalar_lea.vmem %s6, %s870
        // Predicated region
        $region76: #{transformer_encoder_decoder_seg_forward.27} parent=62 // pred_check
          %p872 = pneg %p218
        $region77: #{transformer_encoder_decoder_seg_forward.27} parent=62 // pred_check_branch
          %874 = sbr.rel (%p872) target = $region79
        $region78: #{transformer_encoder_decoder_seg_forward.27} parent=62 // pred_region
          %s875 = smul.u32 2, %s22
        $region79: #{transformer_encoder_decoder_seg_forward.27} parent=62 // pred_fallthru
          _
        // Predicated region
        $region80: #{transformer_encoder_decoder_seg_forward.27} parent=62 // pred_check
          %p876 = pneg %p218
        $region81: #{transformer_encoder_decoder_seg_forward.27} parent=62 // pred_check_branch
          %878 = sbr.rel (%p876) target = $region83
        $region82: #{transformer_encoder_decoder_seg_forward.27} parent=62 // pred_region
          %s879 = smul.u32 2, %s22
          %p880 = scmp.lt.s32.totalorder %s879, 1
          %s881 = scalar_select %p880, %s879, 1
          %p882 = scmp.lt.s32.totalorder %s23, 0
          %s883 = scalar_select %p882, %s23, 0
          %s884 = sadd.s32 %s883, %s881
          %s885 = smul.addr %s884, 8
          %s886 = scalar_lea.vmem %s6, %s885
        $region83: #{transformer_encoder_decoder_seg_forward.27} parent=62 // pred_fallthru
          _
      $region63: #{transformer_encoder_decoder_seg_forward.27} parent=5 // pred_fallthru
        _
      %p887 = scmp.le.s32.totalorder 2, %s12
      // Predicated region
      $region84: #{transformer_encoder_decoder_seg_forward.27} parent=5 // pred_check
        %p888 = pneg %p887
      $region85: #{transformer_encoder_decoder_seg_forward.27} parent=5 // pred_check_branch
        %890 = sbr.rel (%p888) target = $region87
      $region86: #{transformer_encoder_decoder_seg_forward.27} parent=5 // pred_region
        %s891 = ssub.s32 %s12, 2
      $region87: #{transformer_encoder_decoder_seg_forward.27} parent=5 // pred_fallthru
        _
    $region6: #{transformer_encoder_decoder_seg_forward.27} parent=1 // loop_footer
      %s16 = sadd.s32 1, %s12
    $region7: #{transformer_encoder_decoder_seg_forward.27} parent=1 // loop_footer_branch
      %11 = sbr.rel target = $region3
    $region8: #{transformer_encoder_decoder_seg_forward.27} parent=1 // loop_exit
      _

// kernel: transformer_encoder_decoder_seg_forward.33
$region0: #{transformer_encoder_decoder_seg_forward.33}
  #allocation0 [shape = 'u32[]', space=smem, size = 0x4, offset = 0x4, fixed_abs, tag = 'smem constant byte address 0x4 - core index']
  #allocation1 [shape = 'u32[144,128]{1,0:T(1,128)}', space=vmem, size = 0x12000, scoped, tag = 'internal scratch']
  %s0 = inlined_call_operand.vmem [shape: bf16[32,128], index: 0, kind: input, shape index: {}]
  %s1 = inlined_call_operand.vmem [shape: bf16[128,64], index: 1, kind: input, shape index: {}]
  %s2 = inlined_call_operand.vmem [shape: f32[1,64], index: 2, kind: input, shape index: {}]
  %s3 = inlined_call_operand.vmem [shape: f32[32,64], index: 3, kind: output, shape index: {}]
  %s4 = sld [smem:[#allocation0]]
  $region30: #{transformer_encoder_decoder_seg_forward.33} parent=0
    _
  %s6 = ssub.s32 1, %s4
  %s7 = scalar_select 0, %s6, %s4
  // Predicated region
  $region2: #{transformer_encoder_decoder_seg_forward.33} parent=0 // pred_check
    _
  $region3: #{transformer_encoder_decoder_seg_forward.33} parent=0 // pred_check_branch
    %9 = sbr.rel (0) target = $region5
  $region4: #{transformer_encoder_decoder_seg_forward.33} parent=0 // pred_region
    _
  $region5: #{transformer_encoder_decoder_seg_forward.33} parent=0 // pred_fallthru
    _
  // Predicated region
  $region6: #{transformer_encoder_decoder_seg_forward.33} parent=0 // pred_check
    _
  $region7: #{transformer_encoder_decoder_seg_forward.33} parent=0 // pred_check_branch
    %11 = sbr.rel (0) target = $region9
  $region8: #{transformer_encoder_decoder_seg_forward.33} parent=0 // pred_region
    _
  $region9: #{transformer_encoder_decoder_seg_forward.33} parent=0 // pred_fallthru
    _
  // Predicated region
  $region10: #{transformer_encoder_decoder_seg_forward.33} parent=0 // pred_check
    _
  $region11: #{transformer_encoder_decoder_seg_forward.33} parent=0 // pred_check_branch
    %13 = sbr.rel (0) target = $region13
  $region12: #{transformer_encoder_decoder_seg_forward.33} parent=0 // pred_region
    _
  $region13: #{transformer_encoder_decoder_seg_forward.33} parent=0 // pred_fallthru
    _
  %p15 = scmp.eq.s32.totalorder 0, 0
  // Predicated region
  $region14: #{transformer_encoder_decoder_seg_forward.33} parent=0 // pred_check
    %p16 = pneg %p15
  $region15: #{transformer_encoder_decoder_seg_forward.33} parent=0 // pred_check_branch
    %18 = sbr.rel (%p16) target = $region17
  $region16: #{transformer_encoder_decoder_seg_forward.33} parent=0 // pred_region
    %vm19 = vcmask 523264
    %20 = vst.msk [vmem:[%s3] sm:$0xff] %vm19, 0.0
    %21 = vst.msk [vmem:[%s3 + $0x8] sm:$0xff] %vm19, 0.0
    %22 = vst.msk [vmem:[%s3 + $0x10] sm:$0xff] %vm19, 0.0
    %23 = vst.msk [vmem:[%s3 + $0x18] sm:$0xff] %vm19, 0.0
  $region17: #{transformer_encoder_decoder_seg_forward.33} parent=0 // pred_fallthru
    _
  %v24 = vld [vmem:[%s3] sm:$0xff]
  %v25 = vld [vmem:[%s3 + $0x8] sm:$0xff]
  %v26 = vld [vmem:[%s3 + $0x10] sm:$0xff]
  %v27 = vld [vmem:[%s3 + $0x18] sm:$0xff]
  %v28 = vld [vmem:[%s0] sm:$0xf]
  %v29 = vld [vmem:[%s0 + $0x4] sm:$0xf]
  %v30 = vld [vmem:[%s0 + $0x8] sm:$0xf]
  %v31 = vld [vmem:[%s0 + $0xc] sm:$0xf]
  %v32 = vld [vmem:[%s1] sm:$0xf]
  %v33 = vld [vmem:[%s1 + $0x4] sm:$0xf]
  %v34 = vld [vmem:[%s1 + $0x8] sm:$0xf]
  %v35 = vld [vmem:[%s1 + $0xc] sm:$0xf]
  %v36 = vld [vmem:[%s1 + $0x10] sm:$0xf]
  %v37 = vld [vmem:[%s1 + $0x14] sm:$0xf]
  %v38 = vld [vmem:[%s1 + $0x18] sm:$0xf]
  %v39 = vld [vmem:[%s1 + $0x1c] sm:$0xf]
  %v40 = vld [vmem:[%s1 + $0x20] sm:$0xf]
  %v41 = vld [vmem:[%s1 + $0x24] sm:$0xf]
  %v42 = vld [vmem:[%s1 + $0x28] sm:$0xf]
  %v43 = vld [vmem:[%s1 + $0x2c] sm:$0xf]
  %v44 = vld [vmem:[%s1 + $0x30] sm:$0xf]
  %v45 = vld [vmem:[%s1 + $0x34] sm:$0xf]
  %v46 = vld [vmem:[%s1 + $0x38] sm:$0xf]
  %v47 = vld [vmem:[%s1 + $0x3c] sm:$0xf]
  %v52 = vunpack.c.l.b16 %v28
  %v53 = vunpack.c.l.b16 %v29
  %v54 = vunpack.c.l.b16 %v30
  %v55 = vunpack.c.l.b16 %v31
  %v56 = vpack.c.b16 %v53, %v52
  %v57 = vpack.c.b16 %v55, %v54
  %v76 = vunpack.c.l.b16 %v32
  %v77 = vunpack.c.l.b16 %v33
  %v78 = vunpack.c.l.b16 %v34
  %v79 = vunpack.c.l.b16 %v35
  %v80 = vunpack.c.l.b16 %v36
  %v81 = vunpack.c.l.b16 %v37
  %v82 = vunpack.c.l.b16 %v38
  %v83 = vunpack.c.l.b16 %v39
  %v84 = vunpack.c.l.b16 %v40
  %v85 = vunpack.c.l.b16 %v41
  %v86 = vunpack.c.l.b16 %v42
  %v87 = vunpack.c.l.b16 %v43
  %v88 = vunpack.c.l.b16 %v44
  %v89 = vunpack.c.l.b16 %v45
  %v90 = vunpack.c.l.b16 %v46
  %v91 = vunpack.c.l.b16 %v47
  %v92 = vpack.c.b16 %v77, %v76
  %v93 = vpack.c.b16 %v79, %v78
  %v94 = vpack.c.b16 %v81, %v80
  %v95 = vpack.c.b16 %v83, %v82
  %v96 = vpack.c.b16 %v85, %v84
  %v97 = vpack.c.b16 %v87, %v86
  %v98 = vpack.c.b16 %v89, %v88
  %v99 = vpack.c.b16 %v91, %v90
  %108 = vmatprep.subr.bf16.mxu0 0
  %109 = vmatpush1.bf16.msra.mxu0 %v99
  %110 = vmatprep.subr.bf16.mxu0 0
  %111 = vmatpush1.bf16.msra.mxu0 %v98
  %112 = vmatprep.subr.bf16.mxu0 0
  %113 = vmatpush1.bf16.msra.mxu0 %v97
  %114 = vmatprep.subr.bf16.mxu0 0
  %115 = vmatpush1.bf16.msra.mxu0 %v96
  %116 = vmatprep.subr.bf16.mxu0 0
  %117 = vmatpush1.bf16.msra.mxu0 %v95
  %118 = vmatprep.subr.bf16.mxu0 0
  %119 = vmatpush1.bf16.msra.mxu0 %v94
  %120 = vmatprep.subr.bf16.mxu0 0
  %121 = vmatpush1.bf16.msra.mxu0 %v93
  %122 = vmatprep.subr.bf16.mxu0 0
  %123 = vmatpush1.bf16.msra.mxu0 %v92
  %124 = vmatprep.subr.bf16.mxu0 0
  %125 = vmatpush2.bf16.msra.mxu0 0
  %126 = vmatprep.subr.bf16.mxu0 0
  %127 = vmatpush2.bf16.msra.mxu0 0
  %128 = vmatprep.subr.bf16.mxu0 0
  %129 = vmatpush2.bf16.msra.mxu0 0
  %130 = vmatprep.subr.bf16.mxu0 0
  %131 = vmatpush2.bf16.msra.mxu0 0
  %132 = vmatprep.subr.bf16.mxu0 0
  %133 = vmatpush2.bf16.msra.mxu0 0
  %134 = vmatprep.subr.bf16.mxu0 0
  %135 = vmatpush2.bf16.msra.mxu0 0
  %136 = vmatprep.subr.bf16.mxu0 0
  %137 = vmatpush2.bf16.msra.mxu0 0
  %138 = vmatprep.subr.bf16.mxu0 0
  %139 = vmatpush2.bf16.msra.mxu0 0
  %140 = vmatprep.mubr.bf16.mxu0 0
  %141 = vmatmul.mubr.bf16.gmra.mxu0 %v56
  %v142 = vpop.f32.mrf.mxu0
  %v143 = vadd.f32 0.0, %v142
  %v144 = vpop.f32.mrf.mxu0
  %v145 = vpop.f32.mrf.mxu0
  %v146 = vadd.f32 0.0, %v145
  %v147 = vpop.f32.mrf.mxu0
  %148 = vmatprep.mubr.bf16.mxu0 0
  %149 = vmatmul.mubr.bf16.gmra.mxu0 %v57
  %v150 = vpop.f32.mrf.mxu0
  %v151 = vadd.f32 0.0, %v150
  %v152 = vpop.f32.mrf.mxu0
  %v153 = vpop.f32.mrf.mxu0
  %v154 = vadd.f32 0.0, %v153
  %v155 = vpop.f32.mrf.mxu0
  %156 = vdwg.mxu0
  %v157 = vadd.f32 %v24, %v143
  %v158 = vadd.f32 %v25, %v146
  %v159 = vadd.f32 %v26, %v151
  %v160 = vadd.f32 %v27, %v154
  %vm161 = vcmask 523264
  %162 = vst.msk [vmem:[%s3] sm:$0xff] %vm161, %v157
  %163 = vst.msk [vmem:[%s3 + $0x8] sm:$0xff] %vm161, %v158
  %164 = vst.msk [vmem:[%s3 + $0x10] sm:$0xff] %vm161, %v159
  %165 = vst.msk [vmem:[%s3 + $0x18] sm:$0xff] %vm161, %v160
  // Predicated region
  $region18: #{transformer_encoder_decoder_seg_forward.33} parent=0 // pred_check
    %p166 = pneg %p15
  $region19: #{transformer_encoder_decoder_seg_forward.33} parent=0 // pred_check_branch
    %168 = sbr.rel (%p166) target = $region21
  $region20: #{transformer_encoder_decoder_seg_forward.33} parent=0 // pred_region
    %v169 = vld [vmem:[%s3] sm:$0xff]
    %v170 = vld [vmem:[%s3 + $0x8] sm:$0xff]
    %v171 = vld [vmem:[%s3 + $0x10] sm:$0xff]
    %v172 = vld [vmem:[%s3 + $0x18] sm:$0xff]
    %v173 = vld [vmem:[%s2] sm:$0x1]
    %v175 = vlaneseq
    %v176 = vshrl.u32 %v175, 7
    %v177 = vsub.s32 0, %v176
    %v178 = vrot.slane %v173, %v177
    %v180 = vadd.f32 %v169, %v178
    %v181 = vadd.f32 %v170, %v178
    %v182 = vadd.f32 %v171, %v178
    %v183 = vadd.f32 %v172, %v178
    %v184 = vmax.f32 %v180, 0.0
    %v185 = vmax.f32 %v181, 0.0
    %v186 = vmax.f32 %v182, 0.0
    %v187 = vmax.f32 %v183, 0.0
    %188 = vst.msk [vmem:[%s3] sm:$0xff] %vm161, %v184
    %189 = vst.msk [vmem:[%s3 + $0x8] sm:$0xff] %vm161, %v185
    %190 = vst.msk [vmem:[%s3 + $0x10] sm:$0xff] %vm161, %v186
    %191 = vst.msk [vmem:[%s3 + $0x18] sm:$0xff] %vm161, %v187
  $region21: #{transformer_encoder_decoder_seg_forward.33} parent=0 // pred_fallthru
    _
  // Predicated region
  $region22: #{transformer_encoder_decoder_seg_forward.33} parent=0 // pred_check
    _
  $region23: #{transformer_encoder_decoder_seg_forward.33} parent=0 // pred_check_branch
    %193 = sbr.rel (0) target = $region25
  $region24: #{transformer_encoder_decoder_seg_forward.33} parent=0 // pred_region
    _
  $region25: #{transformer_encoder_decoder_seg_forward.33} parent=0 // pred_fallthru
    _
  // Predicated region
  $region26: #{transformer_encoder_decoder_seg_forward.33} parent=0 // pred_check
    _
  $region27: #{transformer_encoder_decoder_seg_forward.33} parent=0 // pred_check_branch
    %195 = sbr.rel (0) target = $region29
  $region28: #{transformer_encoder_decoder_seg_forward.33} parent=0 // pred_region
    _
  $region29: #{transformer_encoder_decoder_seg_forward.33} parent=0 // pred_fallthru
    _

// kernel: transformer_encoder_decoder_seg_forward.34
$region0: #{transformer_encoder_decoder_seg_forward.34}
  #allocation0 [shape = 'u32[]', space=smem, size = 0x4, offset = 0x4, fixed_abs, tag = 'smem constant byte address 0x4 - core index']
  #allocation1 [shape = 'u32[144,128]{1,0:T(1,128)}', space=vmem, size = 0x12000, scoped, tag = 'internal scratch']
  %s0 = inlined_call_operand.vmem [shape: bf16[32,64], index: 0, kind: input, shape index: {}]
  %s1 = inlined_call_operand.vmem [shape: bf16[64,192], index: 1, kind: input, shape index: {}]
  %s2 = inlined_call_operand.vmem [shape: f32[1,192], index: 2, kind: input, shape index: {}]
  %s3 = inlined_call_operand.vmem [shape: f32[32,192], index: 3, kind: output, shape index: {}]
  %s4 = sld [smem:[#allocation0]]
  $region30: #{transformer_encoder_decoder_seg_forward.34} parent=0
    _
  %s6 = ssub.s32 1, %s4
  %s7 = scalar_select 0, %s6, %s4
  // Predicated region
  $region2: #{transformer_encoder_decoder_seg_forward.34} parent=0 // pred_check
    _
  $region3: #{transformer_encoder_decoder_seg_forward.34} parent=0 // pred_check_branch
    %9 = sbr.rel (0) target = $region5
  $region4: #{transformer_encoder_decoder_seg_forward.34} parent=0 // pred_region
    _
  $region5: #{transformer_encoder_decoder_seg_forward.34} parent=0 // pred_fallthru
    _
  // Predicated region
  $region6: #{transformer_encoder_decoder_seg_forward.34} parent=0 // pred_check
    _
  $region7: #{transformer_encoder_decoder_seg_forward.34} parent=0 // pred_check_branch
    %11 = sbr.rel (0) target = $region9
  $region8: #{transformer_encoder_decoder_seg_forward.34} parent=0 // pred_region
    _
  $region9: #{transformer_encoder_decoder_seg_forward.34} parent=0 // pred_fallthru
    _
  // Predicated region
  $region10: #{transformer_encoder_decoder_seg_forward.34} parent=0 // pred_check
    _
  $region11: #{transformer_encoder_decoder_seg_forward.34} parent=0 // pred_check_branch
    %13 = sbr.rel (0) target = $region13
  $region12: #{transformer_encoder_decoder_seg_forward.34} parent=0 // pred_region
    _
  $region13: #{transformer_encoder_decoder_seg_forward.34} parent=0 // pred_fallthru
    _
  %p15 = scmp.eq.s32.totalorder 0, 0
  // Predicated region
  $region14: #{transformer_encoder_decoder_seg_forward.34} parent=0 // pred_check
    %p16 = pneg %p15
  $region15: #{transformer_encoder_decoder_seg_forward.34} parent=0 // pred_check_branch
    %18 = sbr.rel (%p16) target = $region17
  $region16: #{transformer_encoder_decoder_seg_forward.34} parent=0 // pred_region
    %19 = vst [vmem:[%s3] sm:$0xff] 0.0
    %vm20 = vcmask 523264
    %21 = vst.msk [vmem:[%s3 + $0x8] sm:$0xff] %vm20, 0.0
    %22 = vst [vmem:[%s3 + $0x10] sm:$0xff] 0.0
    %23 = vst.msk [vmem:[%s3 + $0x18] sm:$0xff] %vm20, 0.0
    %24 = vst [vmem:[%s3 + $0x20] sm:$0xff] 0.0
    %25 = vst.msk [vmem:[%s3 + $0x28] sm:$0xff] %vm20, 0.0
    %26 = vst [vmem:[%s3 + $0x30] sm:$0xff] 0.0
    %27 = vst.msk [vmem:[%s3 + $0x38] sm:$0xff] %vm20, 0.0
  $region17: #{transformer_encoder_decoder_seg_forward.34} parent=0 // pred_fallthru
    _
  %v28 = vld [vmem:[%s3] sm:$0xff]
  %v29 = vld [vmem:[%s3 + $0x8] sm:$0xff]
  %v30 = vld [vmem:[%s3 + $0x10] sm:$0xff]
  %v31 = vld [vmem:[%s3 + $0x18] sm:$0xff]
  %v32 = vld [vmem:[%s3 + $0x20] sm:$0xff]
  %v33 = vld [vmem:[%s3 + $0x28] sm:$0xff]
  %v34 = vld [vmem:[%s3 + $0x30] sm:$0xff]
  %v35 = vld [vmem:[%s3 + $0x38] sm:$0xff]
  %v36 = vld [vmem:[%s0] sm:$0xf]
  %v37 = vld [vmem:[%s0 + $0x4] sm:$0xf]
  %v38 = vld [vmem:[%s0 + $0x8] sm:$0xf]
  %v39 = vld [vmem:[%s0 + $0xc] sm:$0xf]
  %v40 = vld [vmem:[%s1] sm:$0xff]
  %v41 = vld [vmem:[%s1 + $0x8] sm:$0xff]
  %v42 = vld [vmem:[%s1 + $0x10] sm:$0xff]
  %v43 = vld [vmem:[%s1 + $0x18] sm:$0xff]
  %v44 = vld [vmem:[%s1 + $0x20] sm:$0xff]
  %v45 = vld [vmem:[%s1 + $0x28] sm:$0xff]
  %v46 = vld [vmem:[%s1 + $0x30] sm:$0xff]
  %v47 = vld [vmem:[%s1 + $0x38] sm:$0xff]
  %v52 = vunpack.c.l.b16 %v36
  %v53 = vunpack.c.l.b16 %v37
  %v54 = vunpack.c.l.b16 %v38
  %v55 = vunpack.c.l.b16 %v39
  %v56 = vpack.c.b16 %v53, %v52
  %v57 = vpack.c.b16 %v55, %v54
  %v66 = vunpack.c.l.b16 %v40
  %v67 = vunpack.c.h.b16 %v40
  %v68 = vunpack.c.l.b16 %v41
  %v69 = vunpack.c.h.b16 %v41
  %v70 = vunpack.c.l.b16 %v42
  %v71 = vunpack.c.h.b16 %v42
  %v72 = vunpack.c.l.b16 %v43
  %v73 = vunpack.c.h.b16 %v43
  %v74 = vunpack.c.l.b16 %v44
  %v75 = vunpack.c.h.b16 %v44
  %v76 = vunpack.c.l.b16 %v45
  %v77 = vunpack.c.h.b16 %v45
  %v78 = vunpack.c.l.b16 %v46
  %v79 = vunpack.c.h.b16 %v46
  %v80 = vunpack.c.l.b16 %v47
  %v81 = vunpack.c.h.b16 %v47
  %v82 = vpack.c.b16 %v68, %v66
  %v83 = vpack.c.b16 %v69, %v67
  %v84 = vpack.c.b16 %v72, %v70
  %v85 = vpack.c.b16 %v73, %v71
  %v86 = vpack.c.b16 %v76, %v74
  %v87 = vpack.c.b16 %v77, %v75
  %v88 = vpack.c.b16 %v80, %v78
  %v89 = vpack.c.b16 %v81, %v79
  %vm98 = vcmask 523264
  %v100 = vsel %vm98, %v56, 0
  %v103 = vsel %vm98, %v57, 0
  %105 = vmatprep.subr.bf16.mxu0 0
  %106 = vmatpush1.bf16.msra.mxu0 0
  %107 = vmatprep.subr.bf16.mxu0 0
  %108 = vmatpush1.bf16.msra.mxu0 0
  %109 = vmatprep.subr.bf16.mxu0 0
  %110 = vmatpush1.bf16.msra.mxu0 0
  %111 = vmatprep.subr.bf16.mxu0 0
  %112 = vmatpush1.bf16.msra.mxu0 0
  %113 = vmatprep.subr.bf16.mxu0 %v89
  %114 = vmatpush1.bf16.msra.mxu0 %v88
  %115 = vmatprep.subr.bf16.mxu0 %v87
  %116 = vmatpush1.bf16.msra.mxu0 %v86
  %117 = vmatprep.subr.bf16.mxu0 %v85
  %118 = vmatpush1.bf16.msra.mxu0 %v84
  %119 = vmatprep.subr.bf16.mxu0 %v83
  %120 = vmatpush1.bf16.msra.mxu0 %v82
  %121 = vmatprep.subr.bf16.mxu0 0
  %122 = vmatpush2.bf16.msra.mxu0 0
  %123 = vmatprep.subr.bf16.mxu0 0
  %124 = vmatpush2.bf16.msra.mxu0 0
  %125 = vmatprep.subr.bf16.mxu0 0
  %126 = vmatpush2.bf16.msra.mxu0 0
  %127 = vmatprep.subr.bf16.mxu0 0
  %128 = vmatpush2.bf16.msra.mxu0 0
  %129 = vmatprep.subr.bf16.mxu0 0
  %130 = vmatpush2.bf16.msra.mxu0 0
  %131 = vmatprep.subr.bf16.mxu0 0
  %132 = vmatpush2.bf16.msra.mxu0 0
  %133 = vmatprep.subr.bf16.mxu0 0
  %134 = vmatpush2.bf16.msra.mxu0 0
  %135 = vmatprep.subr.bf16.mxu0 0
  %136 = vmatpush2.bf16.msra.mxu0 0
  %137 = vmatprep.mubr.bf16.mxu0 0
  %138 = vmatmul.mubr.bf16.gmra.mxu0 %v100
  %v139 = vpop.f32.mrf.mxu0
  %v140 = vadd.f32 0.0, %v139
  %v141 = vpop.f32.mrf.mxu0
  %v142 = vadd.f32 0.0, %v141
  %v143 = vpop.f32.mrf.mxu0
  %v144 = vadd.f32 0.0, %v143
  %v145 = vpop.f32.mrf.mxu0
  %v146 = vadd.f32 0.0, %v145
  %147 = vmatprep.mubr.bf16.mxu0 0
  %148 = vmatmul.mubr.bf16.gmra.mxu0 %v103
  %v149 = vpop.f32.mrf.mxu0
  %v150 = vadd.f32 0.0, %v149
  %v151 = vpop.f32.mrf.mxu0
  %v152 = vadd.f32 0.0, %v151
  %v153 = vpop.f32.mrf.mxu0
  %v154 = vadd.f32 0.0, %v153
  %v155 = vpop.f32.mrf.mxu0
  %v156 = vadd.f32 0.0, %v155
  %157 = vdwg.mxu0
  %v158 = vadd.f32 %v28, %v140
  %v159 = vadd.f32 %v29, %v142
  %v160 = vadd.f32 %v30, %v144
  %v161 = vadd.f32 %v31, %v146
  %v162 = vadd.f32 %v32, %v150
  %v163 = vadd.f32 %v33, %v152
  %v164 = vadd.f32 %v34, %v154
  %v165 = vadd.f32 %v35, %v156
  %166 = vst [vmem:[%s3] sm:$0xff] %v158
  %167 = vst.msk [vmem:[%s3 + $0x8] sm:$0xff] %vm98, %v159
  %168 = vst [vmem:[%s3 + $0x10] sm:$0xff] %v160
  %169 = vst.msk [vmem:[%s3 + $0x18] sm:$0xff] %vm98, %v161
  %170 = vst [vmem:[%s3 + $0x20] sm:$0xff] %v162
  %171 = vst.msk [vmem:[%s3 + $0x28] sm:$0xff] %vm98, %v163
  %172 = vst [vmem:[%s3 + $0x30] sm:$0xff] %v164
  %173 = vst.msk [vmem:[%s3 + $0x38] sm:$0xff] %vm98, %v165
  // Predicated region
  $region18: #{transformer_encoder_decoder_seg_forward.34} parent=0 // pred_check
    %p174 = pneg %p15
  $region19: #{transformer_encoder_decoder_seg_forward.34} parent=0 // pred_check_branch
    %176 = sbr.rel (%p174) target = $region21
  $region20: #{transformer_encoder_decoder_seg_forward.34} parent=0 // pred_region
    %v177 = vld [vmem:[%s3] sm:$0xff]
    %v178 = vld [vmem:[%s3 + $0x8] sm:$0xff]
    %v179 = vld [vmem:[%s3 + $0x10] sm:$0xff]
    %v180 = vld [vmem:[%s3 + $0x18] sm:$0xff]
    %v181 = vld [vmem:[%s3 + $0x20] sm:$0xff]
    %v182 = vld [vmem:[%s3 + $0x28] sm:$0xff]
    %v183 = vld [vmem:[%s3 + $0x30] sm:$0xff]
    %v184 = vld [vmem:[%s3 + $0x38] sm:$0xff]
    %v185 = vld [vmem:[%s2] sm:$0x3]
    %v187 = vlaneseq
    %v188 = vshrl.u32 %v187, 7
    %v189 = vsub.s32 0, %v188
    %v190 = vrot.slane %v185, %v189
    %v191 = vlaneseq
    %v192 = vshrl.u32 %v191, 7
    %v193 = vsub.s32 1, %v192
    %v194 = vrot.slane %v185, %v193
    %v197 = vadd.f32 %v177, %v190
    %v198 = vadd.f32 %v178, %v194
    %v199 = vadd.f32 %v179, %v190
    %v200 = vadd.f32 %v180, %v194
    %v201 = vadd.f32 %v181, %v190
    %v202 = vadd.f32 %v182, %v194
    %v203 = vadd.f32 %v183, %v190
    %v204 = vadd.f32 %v184, %v194
    %205 = vst [vmem:[%s3] sm:$0xff] %v197
    %206 = vst.msk [vmem:[%s3 + $0x8] sm:$0xff] %vm98, %v198
    %207 = vst [vmem:[%s3 + $0x10] sm:$0xff] %v199
    %208 = vst.msk [vmem:[%s3 + $0x18] sm:$0xff] %vm98, %v200
    %209 = vst [vmem:[%s3 + $0x20] sm:$0xff] %v201
    %210 = vst.msk [vmem:[%s3 + $0x28] sm:$0xff] %vm98, %v202
    %211 = vst [vmem:[%s3 + $0x30] sm:$0xff] %v203
    %212 = vst.msk [vmem:[%s3 + $0x38] sm:$0xff] %vm98, %v204
  $region21: #{transformer_encoder_decoder_seg_forward.34} parent=0 // pred_fallthru
    _
  // Predicated region
  $region22: #{transformer_encoder_decoder_seg_forward.34} parent=0 // pred_check
    _
  $region23: #{transformer_encoder_decoder_seg_forward.34} parent=0 // pred_check_branch
    %214 = sbr.rel (0) target = $region25
  $region24: #{transformer_encoder_decoder_seg_forward.34} parent=0 // pred_region
    _
  $region25: #{transformer_encoder_decoder_seg_forward.34} parent=0 // pred_fallthru
    _
  // Predicated region
  $region26: #{transformer_encoder_decoder_seg_forward.34} parent=0 // pred_check
    _
  $region27: #{transformer_encoder_decoder_seg_forward.34} parent=0 // pred_check_branch
    %216 = sbr.rel (0) target = $region29
  $region28: #{transformer_encoder_decoder_seg_forward.34} parent=0 // pred_region
    _
  $region29: #{transformer_encoder_decoder_seg_forward.34} parent=0 // pred_fallthru
    _

// kernel: transformer_encoder_decoder_seg_forward.35
$region0: #{transformer_encoder_decoder_seg_forward.35}
  #allocation0 [shape = 'u32[]', space=smem, size = 0x4, offset = 0x4, fixed_abs, tag = 'smem constant byte address 0x4 - core index']
  #allocation1 [shape = 'u32[144,128]{1,0:T(1,128)}', space=vmem, size = 0x12000, scoped, tag = 'internal scratch']
  %s0 = inlined_call_operand.vmem [shape: bf16[4,16,32], index: 0, kind: input, shape index: {}]
  %s1 = inlined_call_operand.vmem [shape: bf16[4,16,32], index: 1, kind: input, shape index: {}]
  %s2 = inlined_call_operand.vmem [shape: bf16[4,16,32], index: 2, kind: input, shape index: {}]
  %s3 = inlined_call_operand.vmem [shape: f32[4,16,32], index: 3, kind: output, shape index: {}]
  %s4 = sld [smem:[#allocation0]]
  $region45: #{transformer_encoder_decoder_seg_forward.35} parent=0
    _
  %s6 = ssub.s32 1, %s4
  %s7 = scalar_select 0, %s6, %s4
  loop: start=0, step=1, limit=6
  $region2: #{transformer_encoder_decoder_seg_forward.35} parent=0 // loop_pre_header
    _
  $region3: #{transformer_encoder_decoder_seg_forward.35} parent=0 // loop_header
    %s9 = sphi 0, %s13
    %p10 = scmp.ge.s32.totalorder %s9, 6
    %s19 = sphi 0, %s21
    %s22 = sphi 0, %s19
    %s23 = sphi 0, %s22
    %s39 = sphi 0, %s23
    %s45 = sphi 0, %s47
    %s48 = sphi 0, %s45
    %s49 = sphi 0, %s48
    %s65 = sphi 0, %s49
    %s71 = sphi 0, %s73
    %s74 = sphi 0, %s71
    %s75 = sphi 0, %s74
    %s91 = sphi 0, %s75
    %s97 = sphi 0, %s99
    %s100 = sphi 0, %s97
    %s101 = sphi 0, %s100
    %s117 = sphi 0, %s101
  $region4: #{transformer_encoder_decoder_seg_forward.35} parent=0 // loop_header_branch
    %12 = sbr.rel (%p10) target = $region8
  $region5: #{transformer_encoder_decoder_seg_forward.35} parent=0 // loop_body
    %s14 = ssub.s32 %s9, 1
    %s15 = ssub.s32 %s9, 2
    %s16 = sadd.s32 %s9, 1
    %s17 = ssub.s32 %s9, %s16
    %p18 = scmp.eq.s32.totalorder %s17, 0
    %s20 = sadd.s32 %s19, 1
    %s21 = scalar_select %p18, %s19, %s20
    %p24 = pneg %p18
    %p25 = scmp.eq.s32.totalorder %s9, 3
    %p26 = por %p24, %p25
    %p27 = scmp.ne.s32.totalorder %s19, %s22
    %p28 = scmp.eq.s32.totalorder %s9, 0
    %p29 = por %p27, %p28
    %p30 = scmp.ne.s32.totalorder %s19, %s22
    %p31 = scmp.eq.s32.totalorder %s14, 3
    %p32 = por %p30, %p31
    %p33 = scmp.ne.s32.totalorder %s22, %s23
    %p34 = scmp.eq.s32.totalorder %s14, 0
    %p35 = por %p33, %p34
    %p36 = scmp.ne.s32.totalorder %s22, %s23
    %p37 = scmp.eq.s32.totalorder %s15, 3
    %p38 = por %p36, %p37
    %p40 = scmp.ne.s32.totalorder %s23, %s39
    %p41 = scmp.eq.s32.totalorder %s15, 0
    %p42 = por %p40, %p41
    %s43 = ssub.s32 %s9, %s16
    %p44 = scmp.eq.s32.totalorder %s43, 0
    %s46 = sadd.s32 %s45, 1
    %s47 = scalar_select %p44, %s45, %s46
    %p50 = pneg %p44
    %p51 = scmp.eq.s32.totalorder %s9, 3
    %p52 = por %p50, %p51
    %p53 = scmp.ne.s32.totalorder %s45, %s48
    %p54 = scmp.eq.s32.totalorder %s9, 0
    %p55 = por %p53, %p54
    %p56 = scmp.ne.s32.totalorder %s45, %s48
    %p57 = scmp.eq.s32.totalorder %s14, 3
    %p58 = por %p56, %p57
    %p59 = scmp.ne.s32.totalorder %s48, %s49
    %p60 = scmp.eq.s32.totalorder %s14, 0
    %p61 = por %p59, %p60
    %p62 = scmp.ne.s32.totalorder %s48, %s49
    %p63 = scmp.eq.s32.totalorder %s15, 3
    %p64 = por %p62, %p63
    %p66 = scmp.ne.s32.totalorder %s49, %s65
    %p67 = scmp.eq.s32.totalorder %s15, 0
    %p68 = por %p66, %p67
    %s69 = ssub.s32 %s9, %s16
    %p70 = scmp.eq.s32.totalorder %s69, 0
    %s72 = sadd.s32 %s71, 1
    %s73 = scalar_select %p70, %s71, %s72
    %p76 = pneg %p70
    %p77 = scmp.eq.s32.totalorder %s9, 3
    %p78 = por %p76, %p77
    %p79 = scmp.ne.s32.totalorder %s71, %s74
    %p80 = scmp.eq.s32.totalorder %s9, 0
    %p81 = por %p79, %p80
    %p82 = scmp.ne.s32.totalorder %s71, %s74
    %p83 = scmp.eq.s32.totalorder %s14, 3
    %p84 = por %p82, %p83
    %p85 = scmp.ne.s32.totalorder %s74, %s75
    %p86 = scmp.eq.s32.totalorder %s14, 0
    %p87 = por %p85, %p86
    %p88 = scmp.ne.s32.totalorder %s74, %s75
    %p89 = scmp.eq.s32.totalorder %s15, 3
    %p90 = por %p88, %p89
    %p92 = scmp.ne.s32.totalorder %s75, %s91
    %p93 = scmp.eq.s32.totalorder %s15, 0
    %p94 = por %p92, %p93
    %s95 = ssub.s32 %s9, %s16
    %p96 = scmp.eq.s32.totalorder %s95, 0
    %s98 = sadd.s32 %s97, 1
    %s99 = scalar_select %p96, %s97, %s98
    %p102 = pneg %p96
    %p103 = scmp.eq.s32.totalorder %s9, 3
    %p104 = por %p102, %p103
    %p105 = scmp.ne.s32.totalorder %s97, %s100
    %p106 = scmp.eq.s32.totalorder %s9, 0
    %p107 = por %p105, %p106
    %p108 = scmp.ne.s32.totalorder %s97, %s100
    %p109 = scmp.eq.s32.totalorder %s14, 3
    %p110 = por %p108, %p109
    %p111 = scmp.ne.s32.totalorder %s100, %s101
    %p112 = scmp.eq.s32.totalorder %s14, 0
    %p113 = por %p111, %p112
    %p114 = scmp.ne.s32.totalorder %s100, %s101
    %p115 = scmp.eq.s32.totalorder %s15, 3
    %p116 = por %p114, %p115
    %p118 = scmp.ne.s32.totalorder %s101, %s117
    %p119 = scmp.eq.s32.totalorder %s15, 0
    %p120 = por %p118, %p119
    %p121 = scmp.le.s32.totalorder 1, %s9
    %p122 = scmp.lt.s32.totalorder %s9, 5
    %p123 = pnand %p121, %p122
    %p124 = pneg %p123
    // Predicated region
    $region9: #{transformer_encoder_decoder_seg_forward.35} parent=5 // pred_check
      _
    $region10: #{transformer_encoder_decoder_seg_forward.35} parent=5 // pred_check_branch
      %126 = sbr.rel (%p123) target = $region12
    $region11: #{transformer_encoder_decoder_seg_forward.35} parent=5 // pred_region
      %s127 = ssub.s32 %s9, 1
    $region12: #{transformer_encoder_decoder_seg_forward.35} parent=5 // pred_fallthru
      _
    %p128 = scmp.lt.s32.totalorder %s9, 4
    // Predicated region
    $region13: #{transformer_encoder_decoder_seg_forward.35} parent=5 // pred_check
      %p129 = pneg %p128
    $region14: #{transformer_encoder_decoder_seg_forward.35} parent=5 // pred_check_branch
      %131 = sbr.rel (%p129) target = $region16
    $region15: #{transformer_encoder_decoder_seg_forward.35} parent=5 // pred_region
      // Predicated region
      $region17: #{transformer_encoder_decoder_seg_forward.35} parent=15 // pred_check
        %p132 = pneg %p29
      $region18: #{transformer_encoder_decoder_seg_forward.35} parent=15 // pred_check_branch
        %134 = sbr.rel (%p132) target = $region20
      $region19: #{transformer_encoder_decoder_seg_forward.35} parent=15 // pred_region
        %p135 = scmp.lt.s32.totalorder %s9, 3
        %s136 = scalar_select %p135, %s9, 3
        %s137 = smul.addr %s136, 2
        %s138 = smul.addr %s137, 4
        %s139 = scalar_lea.vmem %s0, %s138
      $region20: #{transformer_encoder_decoder_seg_forward.35} parent=15 // pred_fallthru
        _
      // Predicated region
      $region21: #{transformer_encoder_decoder_seg_forward.35} parent=15 // pred_check
        %p140 = pneg %p55
      $region22: #{transformer_encoder_decoder_seg_forward.35} parent=15 // pred_check_branch
        %142 = sbr.rel (%p140) target = $region24
      $region23: #{transformer_encoder_decoder_seg_forward.35} parent=15 // pred_region
        %p143 = scmp.lt.s32.totalorder %s9, 3
        %s144 = scalar_select %p143, %s9, 3
        %s145 = smul.addr %s144, 2
        %s146 = smul.addr %s145, 4
        %s147 = scalar_lea.vmem %s1, %s146
      $region24: #{transformer_encoder_decoder_seg_forward.35} parent=15 // pred_fallthru
        _
      // Predicated region
      $region25: #{transformer_encoder_decoder_seg_forward.35} parent=15 // pred_check
        %p148 = pneg %p81
      $region26: #{transformer_encoder_decoder_seg_forward.35} parent=15 // pred_check_branch
        %150 = sbr.rel (%p148) target = $region28
      $region27: #{transformer_encoder_decoder_seg_forward.35} parent=15 // pred_region
        %p151 = scmp.lt.s32.totalorder %s9, 3
        %s152 = scalar_select %p151, %s9, 3
        %s153 = smul.addr %s152, 2
        %s154 = smul.addr %s153, 4
        %s155 = scalar_lea.vmem %s2, %s154
      $region28: #{transformer_encoder_decoder_seg_forward.35} parent=15 // pred_fallthru
        _
    $region16: #{transformer_encoder_decoder_seg_forward.35} parent=5 // pred_fallthru
      _
    %p156 = scmp.le.s32.totalorder 1, %s9
    %p157 = scmp.lt.s32.totalorder %s9, 5
    %p158 = pnand %p156, %p157
    %p159 = pneg %p158
    // Predicated region
    $region29: #{transformer_encoder_decoder_seg_forward.35} parent=5 // pred_check
      _
    $region30: #{transformer_encoder_decoder_seg_forward.35} parent=5 // pred_check_branch
      %161 = sbr.rel (%p158) target = $region32
    $region31: #{transformer_encoder_decoder_seg_forward.35} parent=5 // pred_region
      %s162 = ssub.s32 %s9, 1
      %p163 = scmp.lt.s32.totalorder %s14, 3
      %s164 = scalar_select %p163, %s14, 3
      %s165 = smul.addr %s164, 2
      %s166 = smul.addr %s165, 4
      %s167 = scalar_lea.vmem %s0, %s166
      %p168 = pneg %p35
      %p169 = pneg %p32
      %p170 = scmp.lt.s32.totalorder %s14, 3
      %s171 = scalar_select %p170, %s14, 3
      %s172 = smul.addr %s171, 2
      %s173 = smul.addr %s172, 4
      %s174 = scalar_lea.vmem %s1, %s173
      %p175 = pneg %p61
      %p176 = pneg %p58
      %p177 = scmp.lt.s32.totalorder %s14, 3
      %s178 = scalar_select %p177, %s14, 3
      %s179 = smul.addr %s178, 2
      %s180 = smul.addr %s179, 4
      %s181 = scalar_lea.vmem %s2, %s180
      %p182 = pneg %p87
      %p183 = pneg %p84
      %p184 = pneg %p113
      %p185 = pneg %p110
      %p186 = scmp.lt.s32.totalorder %s14, 3
      %s187 = scalar_select %p186, %s14, 3
      %s188 = smul.addr %s187, 2
      %s189 = smul.addr %s188, 8
      %s190 = scalar_lea.vmem %s3, %s189
      %p191 = scmp.lt.s32.totalorder %s14, 3
      %s192 = scalar_select %p191, %s14, 3
      %s193 = smul.addr %s192, 2
      %s194 = smul.addr %s193, 4
      %s195 = scalar_lea.vmem %s0, %s194
      %p196 = scmp.lt.s32.totalorder %s14, 3
      %s197 = scalar_select %p196, %s14, 3
      %s198 = smul.addr %s197, 2
      %s199 = smul.addr %s198, 4
      %s200 = scalar_lea.vmem %s1, %s199
      %p201 = scmp.lt.s32.totalorder %s14, 3
      %s202 = scalar_select %p201, %s14, 3
      %s203 = smul.addr %s202, 2
      %s204 = smul.addr %s203, 4
      %s205 = scalar_lea.vmem %s2, %s204
      %p206 = scmp.lt.s32.totalorder %s14, 3
      %s207 = scalar_select %p206, %s14, 3
      %s208 = smul.addr %s207, 2
      %s209 = smul.addr %s208, 8
      %s210 = scalar_lea.vmem %s3, %s209
      %v212 = vld [vmem:[%s195] sm:$0xf]
      %v213 = vld [vmem:[%s195 + $0x4] sm:$0xf]
      %v214 = vld [vmem:[%s200] sm:$0xf]
      %v215 = vld [vmem:[%s200 + $0x4] sm:$0xf]
      %v216 = vld [vmem:[%s205] sm:$0xf]
      %v217 = vld [vmem:[%s205 + $0x4] sm:$0xf]
      %v220 = vunpack.c.l.b16 %v212
      %v221 = vunpack.c.l.b16 %v213
      %v222 = vpack.c.b16 %v221, %v220
      %v225 = vunpack.c.l.b16 %v214
      %v226 = vunpack.c.l.b16 %v215
      %v227 = vpack.c.b16 %v226, %v225
      %vm228 = vcmask 261120
      %v230 = vsel %vm228, %v222, 0
      %v233 = vsel %vm228, %v227, 0
      %235 = vmatprep.subr.bf16.mxu0 0
      %236 = vmatpush1.bf16.xpose.msra.mxu0 0
      %237 = vmatprep.subr.bf16.mxu0 0
      %238 = vmatpush1.bf16.xpose.msra.mxu0 0
      %239 = vmatprep.subr.bf16.mxu0 0
      %240 = vmatpush1.bf16.xpose.msra.mxu0 0
      %241 = vmatprep.subr.bf16.mxu0 0
      %242 = vmatpush1.bf16.xpose.msra.mxu0 0
      %243 = vmatprep.subr.bf16.mxu0 0
      %244 = vmatpush1.bf16.xpose.msra.mxu0 0
      %245 = vmatprep.subr.bf16.mxu0 0
      %246 = vmatpush1.bf16.xpose.msra.mxu0 0
      %247 = vmatprep.subr.bf16.mxu0 0
      %248 = vmatpush1.bf16.xpose.msra.mxu0 0
      %249 = vmatprep.subr.bf16.mxu0 0
      %250 = vmatpush1.bf16.xpose.msra.mxu0 %v233
      %251 = vmatprep.subr.bf16.mxu0 0
      %252 = vmatpush2.bf16.xpose.msra.mxu0 0
      %253 = vmatprep.subr.bf16.mxu0 0
      %254 = vmatpush2.bf16.xpose.msra.mxu0 0
      %255 = vmatprep.subr.bf16.mxu0 0
      %256 = vmatpush2.bf16.xpose.msra.mxu0 0
      %257 = vmatprep.subr.bf16.mxu0 0
      %258 = vmatpush2.bf16.xpose.msra.mxu0 0
      %259 = vmatprep.subr.bf16.mxu0 0
      %260 = vmatpush2.bf16.xpose.msra.mxu0 0
      %261 = vmatprep.subr.bf16.mxu0 0
      %262 = vmatpush2.bf16.xpose.msra.mxu0 0
      %263 = vmatprep.subr.bf16.mxu0 0
      %264 = vmatpush2.bf16.xpose.msra.mxu0 0
      %265 = vmatprep.subr.bf16.mxu0 0
      %266 = vmatpush2.bf16.xpose.msra.mxu0 0
      %267 = vmatprep.mubr.bf16.mxu0 0
      %268 = vmatmul.mubr.bf16.gmra.mxu0 %v230
      %v269 = vpop.f32.mrf.mxu0
      %v270 = vadd.f32 0.0, %v269
      %v271 = vpop.f32.mrf.mxu0
      %v272 = vpop.f32.mrf.mxu0
      %v273 = vadd.f32 0.0, %v272
      %v274 = vpop.f32.mrf.mxu0
      %275 = vdwg.mxu0
      %v276 = vmul.f32 %v270, 0.17677669
      %v277 = vmul.f32 %v273, 0.17677669
      %vm278 = vcmask 130048
      %v279 = vsel %vm278, %v276, -inf
      %280 = vmax.xlane.f32.xlu0 %v279
      %v281 = vpop.xlane.xlu0 %280
      %v282 = vsel %vm278, %v277, -inf
      %283 = vmax.xlane.f32.xlu0 %v282
      %v284 = vpop.xlane.xlu0 %283
      %v285 = vsub.f32 %v276, %v281
      %v286 = vsub.f32 %v277, %v284
      %v287 = vmul.f32 %v285, 1.442695
      %v288 = vpow.pop %v287
      %v289 = vmul.f32 %v286, 1.442695
      %v290 = vpow.pop %v289
      %v291 = vsel %vm278, %v288, 0.0
      %292 = vadd.xlane.f32.xlu0 %v291
      %v293 = vpop.xlane.xlu0 %292
      %v294 = vsel %vm278, %v290, 0.0
      %295 = vadd.xlane.f32.xlu0 %v294
      %v296 = vpop.xlane.xlu0 %295
      %v297 = vrcp.pop %v293
      %v298 = vmul.f32 %v288, %v297
      %v299 = vrcp.pop %v296
      %v300 = vmul.f32 %v290, %v299
      %v301 = vpack.c.bf16 %v300, %v298
      %v304 = vunpack.c.l.b16 %v216
      %v305 = vunpack.c.l.b16 %v217
      %v306 = vpack.c.b16 %v305, %v304
      %v309 = vsel %vm278, %v301, 0
      %311 = vmatprep.subr.bf16.mxu0 0
      %312 = vmatpush1.bf16.msra.mxu0 0
      %313 = vmatprep.subr.bf16.mxu0 0
      %314 = vmatpush1.bf16.msra.mxu0 0
      %315 = vmatprep.subr.bf16.mxu0 0
      %316 = vmatpush1.bf16.msra.mxu0 0
      %317 = vmatprep.subr.bf16.mxu0 0
      %318 = vmatpush1.bf16.msra.mxu0 0
      %319 = vmatprep.subr.bf16.mxu0 0
      %320 = vmatpush1.bf16.msra.mxu0 0
      %321 = vmatprep.subr.bf16.mxu0 0
      %322 = vmatpush1.bf16.msra.mxu0 0
      %323 = vmatprep.subr.bf16.mxu0 0
      %324 = vmatpush1.bf16.msra.mxu0 0
      %325 = vmatprep.subr.bf16.mxu0 0
      %326 = vmatpush1.bf16.msra.mxu0 %v306
      %327 = vmatprep.subr.bf16.mxu0 0
      %328 = vmatpush2.bf16.msra.mxu0 0
      %329 = vmatprep.subr.bf16.mxu0 0
      %330 = vmatpush2.bf16.msra.mxu0 0
      %331 = vmatprep.subr.bf16.mxu0 0
      %332 = vmatpush2.bf16.msra.mxu0 0
      %333 = vmatprep.subr.bf16.mxu0 0
      %334 = vmatpush2.bf16.msra.mxu0 0
      %335 = vmatprep.subr.bf16.mxu0 0
      %336 = vmatpush2.bf16.msra.mxu0 0
      %337 = vmatprep.subr.bf16.mxu0 0
      %338 = vmatpush2.bf16.msra.mxu0 0
      %339 = vmatprep.subr.bf16.mxu0 0
      %340 = vmatpush2.bf16.msra.mxu0 0
      %341 = vmatprep.subr.bf16.mxu0 0
      %342 = vmatpush2.bf16.msra.mxu0 0
      %343 = vmatprep.mubr.bf16.mxu0 0
      %344 = vmatmul.mubr.bf16.gmra.mxu0 %v309
      %v345 = vpop.f32.mrf.mxu0
      %v346 = vadd.f32 0.0, %v345
      %v347 = vpop.f32.mrf.mxu0
      %v348 = vpop.f32.mrf.mxu0
      %v349 = vadd.f32 0.0, %v348
      %v350 = vpop.f32.mrf.mxu0
      %351 = vdwg.mxu0
      %352 = vst.msk [vmem:[%s210] sm:$0xff] %vm228, %v346
      %353 = vst.msk [vmem:[%s210 + $0x8] sm:$0xff] %vm228, %v349
      %p354 = scmp.lt.s32.totalorder %s14, 3
      %s355 = scalar_select %p354, %s14, 3
      %s356 = smul.addr %s355, 2
      %s357 = smul.addr %s356, 8
      %s358 = scalar_lea.vmem %s3, %s357
      // Predicated region
      $region33: #{transformer_encoder_decoder_seg_forward.35} parent=31 // pred_check
        %p359 = pneg %p110
      $region34: #{transformer_encoder_decoder_seg_forward.35} parent=31 // pred_check_branch
        %361 = sbr.rel (%p359) target = $region36
      $region35: #{transformer_encoder_decoder_seg_forward.35} parent=31 // pred_region
        _
      $region36: #{transformer_encoder_decoder_seg_forward.35} parent=31 // pred_fallthru
        _
    $region32: #{transformer_encoder_decoder_seg_forward.35} parent=5 // pred_fallthru
      _
    %p362 = scmp.le.s32.totalorder 2, %s9
    // Predicated region
    $region37: #{transformer_encoder_decoder_seg_forward.35} parent=5 // pred_check
      %p363 = pneg %p362
    $region38: #{transformer_encoder_decoder_seg_forward.35} parent=5 // pred_check_branch
      %365 = sbr.rel (%p363) target = $region40
    $region39: #{transformer_encoder_decoder_seg_forward.35} parent=5 // pred_region
      %s366 = ssub.s32 %s9, 2
      // Predicated region
      $region41: #{transformer_encoder_decoder_seg_forward.35} parent=39 // pred_check
        %p367 = pneg %p116
      $region42: #{transformer_encoder_decoder_seg_forward.35} parent=39 // pred_check_branch
        %369 = sbr.rel (%p367) target = $region44
      $region43: #{transformer_encoder_decoder_seg_forward.35} parent=39 // pred_region
        %p370 = scmp.lt.s32.totalorder %s15, 3
        %s371 = scalar_select %p370, %s15, 3
        %s372 = smul.addr %s371, 2
        %s373 = smul.addr %s372, 8
        %s374 = scalar_lea.vmem %s3, %s373
      $region44: #{transformer_encoder_decoder_seg_forward.35} parent=39 // pred_fallthru
        _
    $region40: #{transformer_encoder_decoder_seg_forward.35} parent=5 // pred_fallthru
      _
  $region6: #{transformer_encoder_decoder_seg_forward.35} parent=0 // loop_footer
    %s13 = sadd.s32 1, %s9
  $region7: #{transformer_encoder_decoder_seg_forward.35} parent=0 // loop_footer_branch
    %8 = sbr.rel target = $region3
  $region8: #{transformer_encoder_decoder_seg_forward.35} parent=0 // loop_exit
    _

// kernel: transformer_encoder_decoder_seg_forward.36
$region0: #{transformer_encoder_decoder_seg_forward.36}
  #allocation0 [shape = 'u32[]', space=smem, size = 0x4, offset = 0x4, fixed_abs, tag = 'smem constant byte address 0x4 - core index']
  #allocation1 [shape = 'u32[144,128]{1,0:T(1,128)}', space=vmem, size = 0x12000, scoped, tag = 'internal scratch']
  %s0 = inlined_call_operand.vmem [shape: bf16[32,64], index: 0, kind: input, shape index: {}]
  %s1 = inlined_call_operand.vmem [shape: bf16[64,64], index: 1, kind: input, shape index: {}]
  %s2 = inlined_call_operand.vmem [shape: f32[1,64], index: 2, kind: input, shape index: {}]
  %s3 = inlined_call_operand.vmem [shape: f32[32,64], index: 3, kind: input, shape index: {}]
  %s4 = inlined_call_operand.vmem [shape: f32[1,64], index: 4, kind: input, shape index: {}]
  %s5 = inlined_call_operand.vmem [shape: f32[1,64], index: 5, kind: input, shape index: {}]
  %s6 = inlined_call_operand.vmem [shape: f32[32,64], index: 6, kind: output, shape index: {}]
  %s7 = sld [smem:[#allocation0]]
  $region42: #{transformer_encoder_decoder_seg_forward.36} parent=0
    _
  %s9 = ssub.s32 1, %s7
  %s10 = scalar_select 0, %s9, %s7
  // Predicated region
  $region2: #{transformer_encoder_decoder_seg_forward.36} parent=0 // pred_check
    _
  $region3: #{transformer_encoder_decoder_seg_forward.36} parent=0 // pred_check_branch
    %12 = sbr.rel (0) target = $region5
  $region4: #{transformer_encoder_decoder_seg_forward.36} parent=0 // pred_region
    _
  $region5: #{transformer_encoder_decoder_seg_forward.36} parent=0 // pred_fallthru
    _
  // Predicated region
  $region6: #{transformer_encoder_decoder_seg_forward.36} parent=0 // pred_check
    _
  $region7: #{transformer_encoder_decoder_seg_forward.36} parent=0 // pred_check_branch
    %14 = sbr.rel (0) target = $region9
  $region8: #{transformer_encoder_decoder_seg_forward.36} parent=0 // pred_region
    _
  $region9: #{transformer_encoder_decoder_seg_forward.36} parent=0 // pred_fallthru
    _
  // Predicated region
  $region10: #{transformer_encoder_decoder_seg_forward.36} parent=0 // pred_check
    _
  $region11: #{transformer_encoder_decoder_seg_forward.36} parent=0 // pred_check_branch
    %16 = sbr.rel (0) target = $region13
  $region12: #{transformer_encoder_decoder_seg_forward.36} parent=0 // pred_region
    _
  $region13: #{transformer_encoder_decoder_seg_forward.36} parent=0 // pred_fallthru
    _
  // Predicated region
  $region14: #{transformer_encoder_decoder_seg_forward.36} parent=0 // pred_check
    _
  $region15: #{transformer_encoder_decoder_seg_forward.36} parent=0 // pred_check_branch
    %18 = sbr.rel (0) target = $region17
  $region16: #{transformer_encoder_decoder_seg_forward.36} parent=0 // pred_region
    _
  $region17: #{transformer_encoder_decoder_seg_forward.36} parent=0 // pred_fallthru
    _
  // Predicated region
  $region18: #{transformer_encoder_decoder_seg_forward.36} parent=0 // pred_check
    _
  $region19: #{transformer_encoder_decoder_seg_forward.36} parent=0 // pred_check_branch
    %20 = sbr.rel (0) target = $region21
  $region20: #{transformer_encoder_decoder_seg_forward.36} parent=0 // pred_region
    _
  $region21: #{transformer_encoder_decoder_seg_forward.36} parent=0 // pred_fallthru
    _
  // Predicated region
  $region22: #{transformer_encoder_decoder_seg_forward.36} parent=0 // pred_check
    _
  $region23: #{transformer_encoder_decoder_seg_forward.36} parent=0 // pred_check_branch
    %22 = sbr.rel (0) target = $region25
  $region24: #{transformer_encoder_decoder_seg_forward.36} parent=0 // pred_region
    _
  $region25: #{transformer_encoder_decoder_seg_forward.36} parent=0 // pred_fallthru
    _
  %p24 = scmp.eq.s32.totalorder 0, 0
  // Predicated region
  $region26: #{transformer_encoder_decoder_seg_forward.36} parent=0 // pred_check
    %p25 = pneg %p24
  $region27: #{transformer_encoder_decoder_seg_forward.36} parent=0 // pred_check_branch
    %27 = sbr.rel (%p25) target = $region29
  $region28: #{transformer_encoder_decoder_seg_forward.36} parent=0 // pred_region
    %vm28 = vcmask 523264
    %29 = vst.msk [vmem:[%s6] sm:$0xff] %vm28, 0.0
    %30 = vst.msk [vmem:[%s6 + $0x8] sm:$0xff] %vm28, 0.0
    %31 = vst.msk [vmem:[%s6 + $0x10] sm:$0xff] %vm28, 0.0
    %32 = vst.msk [vmem:[%s6 + $0x18] sm:$0xff] %vm28, 0.0
  $region29: #{transformer_encoder_decoder_seg_forward.36} parent=0 // pred_fallthru
    _
  %v33 = vld [vmem:[%s6] sm:$0xff]
  %v34 = vld [vmem:[%s6 + $0x8] sm:$0xff]
  %v35 = vld [vmem:[%s6 + $0x10] sm:$0xff]
  %v36 = vld [vmem:[%s6 + $0x18] sm:$0xff]
  %v37 = vld [vmem:[%s0] sm:$0xf]
  %v38 = vld [vmem:[%s0 + $0x4] sm:$0xf]
  %v39 = vld [vmem:[%s0 + $0x8] sm:$0xf]
  %v40 = vld [vmem:[%s0 + $0xc] sm:$0xf]
  %v41 = vld [vmem:[%s1] sm:$0xf]
  %v42 = vld [vmem:[%s1 + $0x4] sm:$0xf]
  %v43 = vld [vmem:[%s1 + $0x8] sm:$0xf]
  %v44 = vld [vmem:[%s1 + $0xc] sm:$0xf]
  %v45 = vld [vmem:[%s1 + $0x10] sm:$0xf]
  %v46 = vld [vmem:[%s1 + $0x14] sm:$0xf]
  %v47 = vld [vmem:[%s1 + $0x18] sm:$0xf]
  %v48 = vld [vmem:[%s1 + $0x1c] sm:$0xf]
  %v53 = vunpack.c.l.b16 %v37
  %v54 = vunpack.c.l.b16 %v38
  %v55 = vunpack.c.l.b16 %v39
  %v56 = vunpack.c.l.b16 %v40
  %v57 = vpack.c.b16 %v54, %v53
  %v58 = vpack.c.b16 %v56, %v55
  %v67 = vunpack.c.l.b16 %v41
  %v68 = vunpack.c.l.b16 %v42
  %v69 = vunpack.c.l.b16 %v43
  %v70 = vunpack.c.l.b16 %v44
  %v71 = vunpack.c.l.b16 %v45
  %v72 = vunpack.c.l.b16 %v46
  %v73 = vunpack.c.l.b16 %v47
  %v74 = vunpack.c.l.b16 %v48
  %v75 = vpack.c.b16 %v68, %v67
  %v76 = vpack.c.b16 %v70, %v69
  %v77 = vpack.c.b16 %v72, %v71
  %v78 = vpack.c.b16 %v74, %v73
  %vm83 = vcmask 523264
  %v85 = vsel %vm83, %v57, 0
  %v88 = vsel %vm83, %v58, 0
  %90 = vmatprep.subr.bf16.mxu0 0
  %91 = vmatpush1.bf16.msra.mxu0 0
  %92 = vmatprep.subr.bf16.mxu0 0
  %93 = vmatpush1.bf16.msra.mxu0 0
  %94 = vmatprep.subr.bf16.mxu0 0
  %95 = vmatpush1.bf16.msra.mxu0 0
  %96 = vmatprep.subr.bf16.mxu0 0
  %97 = vmatpush1.bf16.msra.mxu0 0
  %98 = vmatprep.subr.bf16.mxu0 0
  %99 = vmatpush1.bf16.msra.mxu0 %v78
  %100 = vmatprep.subr.bf16.mxu0 0
  %101 = vmatpush1.bf16.msra.mxu0 %v77
  %102 = vmatprep.subr.bf16.mxu0 0
  %103 = vmatpush1.bf16.msra.mxu0 %v76
  %104 = vmatprep.subr.bf16.mxu0 0
  %105 = vmatpush1.bf16.msra.mxu0 %v75
  %106 = vmatprep.subr.bf16.mxu0 0
  %107 = vmatpush2.bf16.msra.mxu0 0
  %108 = vmatprep.subr.bf16.mxu0 0
  %109 = vmatpush2.bf16.msra.mxu0 0
  %110 = vmatprep.subr.bf16.mxu0 0
  %111 = vmatpush2.bf16.msra.mxu0 0
  %112 = vmatprep.subr.bf16.mxu0 0
  %113 = vmatpush2.bf16.msra.mxu0 0
  %114 = vmatprep.subr.bf16.mxu0 0
  %115 = vmatpush2.bf16.msra.mxu0 0
  %116 = vmatprep.subr.bf16.mxu0 0
  %117 = vmatpush2.bf16.msra.mxu0 0
  %118 = vmatprep.subr.bf16.mxu0 0
  %119 = vmatpush2.bf16.msra.mxu0 0
  %120 = vmatprep.subr.bf16.mxu0 0
  %121 = vmatpush2.bf16.msra.mxu0 0
  %122 = vmatprep.mubr.bf16.mxu0 0
  %123 = vmatmul.mubr.bf16.gmra.mxu0 %v85
  %v124 = vpop.f32.mrf.mxu0
  %v125 = vadd.f32 0.0, %v124
  %v126 = vpop.f32.mrf.mxu0
  %v127 = vpop.f32.mrf.mxu0
  %v128 = vadd.f32 0.0, %v127
  %v129 = vpop.f32.mrf.mxu0
  %130 = vmatprep.mubr.bf16.mxu0 0
  %131 = vmatmul.mubr.bf16.gmra.mxu0 %v88
  %v132 = vpop.f32.mrf.mxu0
  %v133 = vadd.f32 0.0, %v132
  %v134 = vpop.f32.mrf.mxu0
  %v135 = vpop.f32.mrf.mxu0
  %v136 = vadd.f32 0.0, %v135
  %v137 = vpop.f32.mrf.mxu0
  %138 = vdwg.mxu0
  %v139 = vadd.f32 %v33, %v125
  %v140 = vadd.f32 %v34, %v128
  %v141 = vadd.f32 %v35, %v133
  %v142 = vadd.f32 %v36, %v136
  %143 = vst.msk [vmem:[%s6] sm:$0xff] %vm83, %v139
  %144 = vst.msk [vmem:[%s6 + $0x8] sm:$0xff] %vm83, %v140
  %145 = vst.msk [vmem:[%s6 + $0x10] sm:$0xff] %vm83, %v141
  %146 = vst.msk [vmem:[%s6 + $0x18] sm:$0xff] %vm83, %v142
  // Predicated region
  $region30: #{transformer_encoder_decoder_seg_forward.36} parent=0 // pred_check
    %p147 = pneg %p24
  $region31: #{transformer_encoder_decoder_seg_forward.36} parent=0 // pred_check_branch
    %149 = sbr.rel (%p147) target = $region33
  $region32: #{transformer_encoder_decoder_seg_forward.36} parent=0 // pred_region
    %v150 = vld [vmem:[%s6] sm:$0xff]
    %v151 = vld [vmem:[%s6 + $0x8] sm:$0xff]
    %v152 = vld [vmem:[%s6 + $0x10] sm:$0xff]
    %v153 = vld [vmem:[%s6 + $0x18] sm:$0xff]
    %v154 = vld [vmem:[%s2] sm:$0x1]
    %v156 = vlaneseq
    %v157 = vshrl.u32 %v156, 7
    %v158 = vsub.s32 0, %v157
    %v159 = vrot.slane %v154, %v158
    %v161 = vadd.f32 %v150, %v159
    %v162 = vadd.f32 %v151, %v159
    %v163 = vadd.f32 %v152, %v159
    %v164 = vadd.f32 %v153, %v159
    %v165 = vld [vmem:[%s3] sm:$0xff]
    %v166 = vld [vmem:[%s3 + $0x8] sm:$0xff]
    %v167 = vld [vmem:[%s3 + $0x10] sm:$0xff]
    %v168 = vld [vmem:[%s3 + $0x18] sm:$0xff]
    %v169 = vadd.f32 %v161, %v165
    %v170 = vadd.f32 %v162, %v166
    %v171 = vadd.f32 %v163, %v167
    %v172 = vadd.f32 %v164, %v168
    %v173 = vsel %vm83, %v169, 0.0
    %174 = vadd.xlane.f32.xlu0 %v173
    %v175 = vpop.xlane.xlu0 %174
    %v176 = vsel %vm83, %v170, 0.0
    %177 = vadd.xlane.f32.xlu0 %v176
    %v178 = vpop.xlane.xlu0 %177
    %v179 = vsel %vm83, %v171, 0.0
    %180 = vadd.xlane.f32.xlu0 %v179
    %v181 = vpop.xlane.xlu0 %180
    %v182 = vsel %vm83, %v172, 0.0
    %183 = vadd.xlane.f32.xlu0 %v182
    %v184 = vpop.xlane.xlu0 %183
    %v185 = vrcp.pop 64.0
    %v186 = vmul.f32 %v175, %v185
    %v187 = vmul.f32 %v178, %v185
    %v188 = vmul.f32 %v181, %v185
    %v189 = vmul.f32 %v184, %v185
    %v190 = vsub.f32 %v169, %v186
    %v191 = vsub.f32 %v170, %v187
    %v192 = vsub.f32 %v171, %v188
    %v193 = vsub.f32 %v172, %v189
    %v194 = vmul.f32 %v190, %v190
    %v195 = vmul.f32 %v191, %v191
    %v196 = vmul.f32 %v192, %v192
    %v197 = vmul.f32 %v193, %v193
    %v198 = vsel %vm83, %v194, 0.0
    %199 = vadd.xlane.f32.xlu0 %v198
    %v200 = vpop.xlane.xlu0 %199
    %v201 = vsel %vm83, %v195, 0.0
    %202 = vadd.xlane.f32.xlu0 %v201
    %v203 = vpop.xlane.xlu0 %202
    %v204 = vsel %vm83, %v196, 0.0
    %205 = vadd.xlane.f32.xlu0 %v204
    %v206 = vpop.xlane.xlu0 %205
    %v207 = vsel %vm83, %v197, 0.0
    %208 = vadd.xlane.f32.xlu0 %v207
    %v209 = vpop.xlane.xlu0 %208
    %v210 = vmul.f32 %v200, %v185
    %v211 = vmul.f32 %v203, %v185
    %v212 = vmul.f32 %v206, %v185
    %v213 = vmul.f32 %v209, %v185
    %v214 = vadd.f32 %v210, 1e-05
    %v215 = vadd.f32 %v211, 1e-05
    %v216 = vadd.f32 %v212, 1e-05
    %v217 = vadd.f32 %v213, 1e-05
    %v218 = vrsqrt.pop %v214
    %v219 = vrsqrt.pop %v215
    %v220 = vrsqrt.pop %v216
    %v221 = vrsqrt.pop %v217
    %v222 = vmul.f32 %v190, %v218
    %v223 = vmul.f32 %v191, %v219
    %v224 = vmul.f32 %v192, %v220
    %v225 = vmul.f32 %v193, %v221
    %v226 = vld [vmem:[%s4] sm:$0x1]
    %v228 = vlaneseq
    %v229 = vshrl.u32 %v228, 7
    %v230 = vsub.s32 0, %v229
    %v231 = vrot.slane %v226, %v230
    %v233 = vmul.f32 %v222, %v231
    %v234 = vmul.f32 %v223, %v231
    %v235 = vmul.f32 %v224, %v231
    %v236 = vmul.f32 %v225, %v231
    %v237 = vld [vmem:[%s5] sm:$0x1]
    %v239 = vlaneseq
    %v240 = vshrl.u32 %v239, 7
    %v241 = vsub.s32 0, %v240
    %v242 = vrot.slane %v237, %v241
    %v244 = vadd.f32 %v233, %v242
    %v245 = vadd.f32 %v234, %v242
    %v246 = vadd.f32 %v235, %v242
    %v247 = vadd.f32 %v236, %v242
    %248 = vst.msk [vmem:[%s6] sm:$0xff] %vm83, %v244
    %249 = vst.msk [vmem:[%s6 + $0x8] sm:$0xff] %vm83, %v245
    %250 = vst.msk [vmem:[%s6 + $0x10] sm:$0xff] %vm83, %v246
    %251 = vst.msk [vmem:[%s6 + $0x18] sm:$0xff] %vm83, %v247
  $region33: #{transformer_encoder_decoder_seg_forward.36} parent=0 // pred_fallthru
    _
  // Predicated region
  $region34: #{transformer_encoder_decoder_seg_forward.36} parent=0 // pred_check
    _
  $region35: #{transformer_encoder_decoder_seg_forward.36} parent=0 // pred_check_branch
    %253 = sbr.rel (0) target = $region37
  $region36: #{transformer_encoder_decoder_seg_forward.36} parent=0 // pred_region
    _
  $region37: #{transformer_encoder_decoder_seg_forward.36} parent=0 // pred_fallthru
    _
  // Predicated region
  $region38: #{transformer_encoder_decoder_seg_forward.36} parent=0 // pred_check
    _
  $region39: #{transformer_encoder_decoder_seg_forward.36} parent=0 // pred_check_branch
    %255 = sbr.rel (0) target = $region41
  $region40: #{transformer_encoder_decoder_seg_forward.36} parent=0 // pred_region
    _
  $region41: #{transformer_encoder_decoder_seg_forward.36} parent=0 // pred_fallthru
    _

// kernel: transformer_encoder_decoder_seg_forward.37
$region0: #{transformer_encoder_decoder_seg_forward.37}
  #allocation0 [shape = 'u32[]', space=smem, size = 0x4, offset = 0x4, fixed_abs, tag = 'smem constant byte address 0x4 - core index']
  #allocation1 [shape = 'u32[144,128]{1,0:T(1,128)}', space=vmem, size = 0x12000, scoped, tag = 'internal scratch']
  %s0 = inlined_call_operand.vmem [shape: bf16[32,64], index: 0, kind: input, shape index: {}]
  %s1 = inlined_call_operand.vmem [shape: bf16[64,64], index: 1, kind: input, shape index: {}]
  %s2 = inlined_call_operand.vmem [shape: f32[1,64], index: 2, kind: input, shape index: {}]
  %s3 = inlined_call_operand.vmem [shape: f32[32,64], index: 3, kind: output, shape index: {}]
  %s4 = sld [smem:[#allocation0]]
  $region30: #{transformer_encoder_decoder_seg_forward.37} parent=0
    _
  %s6 = ssub.s32 1, %s4
  %s7 = scalar_select 0, %s6, %s4
  // Predicated region
  $region2: #{transformer_encoder_decoder_seg_forward.37} parent=0 // pred_check
    _
  $region3: #{transformer_encoder_decoder_seg_forward.37} parent=0 // pred_check_branch
    %9 = sbr.rel (0) target = $region5
  $region4: #{transformer_encoder_decoder_seg_forward.37} parent=0 // pred_region
    _
  $region5: #{transformer_encoder_decoder_seg_forward.37} parent=0 // pred_fallthru
    _
  // Predicated region
  $region6: #{transformer_encoder_decoder_seg_forward.37} parent=0 // pred_check
    _
  $region7: #{transformer_encoder_decoder_seg_forward.37} parent=0 // pred_check_branch
    %11 = sbr.rel (0) target = $region9
  $region8: #{transformer_encoder_decoder_seg_forward.37} parent=0 // pred_region
    _
  $region9: #{transformer_encoder_decoder_seg_forward.37} parent=0 // pred_fallthru
    _
  // Predicated region
  $region10: #{transformer_encoder_decoder_seg_forward.37} parent=0 // pred_check
    _
  $region11: #{transformer_encoder_decoder_seg_forward.37} parent=0 // pred_check_branch
    %13 = sbr.rel (0) target = $region13
  $region12: #{transformer_encoder_decoder_seg_forward.37} parent=0 // pred_region
    _
  $region13: #{transformer_encoder_decoder_seg_forward.37} parent=0 // pred_fallthru
    _
  %p15 = scmp.eq.s32.totalorder 0, 0
  // Predicated region
  $region14: #{transformer_encoder_decoder_seg_forward.37} parent=0 // pred_check
    %p16 = pneg %p15
  $region15: #{transformer_encoder_decoder_seg_forward.37} parent=0 // pred_check_branch
    %18 = sbr.rel (%p16) target = $region17
  $region16: #{transformer_encoder_decoder_seg_forward.37} parent=0 // pred_region
    %vm19 = vcmask 523264
    %20 = vst.msk [vmem:[%s3] sm:$0xff] %vm19, 0.0
    %21 = vst.msk [vmem:[%s3 + $0x8] sm:$0xff] %vm19, 0.0
    %22 = vst.msk [vmem:[%s3 + $0x10] sm:$0xff] %vm19, 0.0
    %23 = vst.msk [vmem:[%s3 + $0x18] sm:$0xff] %vm19, 0.0
  $region17: #{transformer_encoder_decoder_seg_forward.37} parent=0 // pred_fallthru
    _
  %v24 = vld [vmem:[%s3] sm:$0xff]
  %v25 = vld [vmem:[%s3 + $0x8] sm:$0xff]
  %v26 = vld [vmem:[%s3 + $0x10] sm:$0xff]
  %v27 = vld [vmem:[%s3 + $0x18] sm:$0xff]
  %v28 = vld [vmem:[%s0] sm:$0xf]
  %v29 = vld [vmem:[%s0 + $0x4] sm:$0xf]
  %v30 = vld [vmem:[%s0 + $0x8] sm:$0xf]
  %v31 = vld [vmem:[%s0 + $0xc] sm:$0xf]
  %v32 = vld [vmem:[%s1] sm:$0xf]
  %v33 = vld [vmem:[%s1 + $0x4] sm:$0xf]
  %v34 = vld [vmem:[%s1 + $0x8] sm:$0xf]
  %v35 = vld [vmem:[%s1 + $0xc] sm:$0xf]
  %v36 = vld [vmem:[%s1 + $0x10] sm:$0xf]
  %v37 = vld [vmem:[%s1 + $0x14] sm:$0xf]
  %v38 = vld [vmem:[%s1 + $0x18] sm:$0xf]
  %v39 = vld [vmem:[%s1 + $0x1c] sm:$0xf]
  %v44 = vunpack.c.l.b16 %v28
  %v45 = vunpack.c.l.b16 %v29
  %v46 = vunpack.c.l.b16 %v30
  %v47 = vunpack.c.l.b16 %v31
  %v48 = vpack.c.b16 %v45, %v44
  %v49 = vpack.c.b16 %v47, %v46
  %v58 = vunpack.c.l.b16 %v32
  %v59 = vunpack.c.l.b16 %v33
  %v60 = vunpack.c.l.b16 %v34
  %v61 = vunpack.c.l.b16 %v35
  %v62 = vunpack.c.l.b16 %v36
  %v63 = vunpack.c.l.b16 %v37
  %v64 = vunpack.c.l.b16 %v38
  %v65 = vunpack.c.l.b16 %v39
  %v66 = vpack.c.b16 %v59, %v58
  %v67 = vpack.c.b16 %v61, %v60
  %v68 = vpack.c.b16 %v63, %v62
  %v69 = vpack.c.b16 %v65, %v64
  %vm74 = vcmask 523264
  %v76 = vsel %vm74, %v48, 0
  %v79 = vsel %vm74, %v49, 0
  %81 = vmatprep.subr.bf16.mxu0 0
  %82 = vmatpush1.bf16.msra.mxu0 0
  %83 = vmatprep.subr.bf16.mxu0 0
  %84 = vmatpush1.bf16.msra.mxu0 0
  %85 = vmatprep.subr.bf16.mxu0 0
  %86 = vmatpush1.bf16.msra.mxu0 0
  %87 = vmatprep.subr.bf16.mxu0 0
  %88 = vmatpush1.bf16.msra.mxu0 0
  %89 = vmatprep.subr.bf16.mxu0 0
  %90 = vmatpush1.bf16.msra.mxu0 %v69
  %91 = vmatprep.subr.bf16.mxu0 0
  %92 = vmatpush1.bf16.msra.mxu0 %v68
  %93 = vmatprep.subr.bf16.mxu0 0
  %94 = vmatpush1.bf16.msra.mxu0 %v67
  %95 = vmatprep.subr.bf16.mxu0 0
  %96 = vmatpush1.bf16.msra.mxu0 %v66
  %97 = vmatprep.subr.bf16.mxu0 0
  %98 = vmatpush2.bf16.msra.mxu0 0
  %99 = vmatprep.subr.bf16.mxu0 0
  %100 = vmatpush2.bf16.msra.mxu0 0
  %101 = vmatprep.subr.bf16.mxu0 0
  %102 = vmatpush2.bf16.msra.mxu0 0
  %103 = vmatprep.subr.bf16.mxu0 0
  %104 = vmatpush2.bf16.msra.mxu0 0
  %105 = vmatprep.subr.bf16.mxu0 0
  %106 = vmatpush2.bf16.msra.mxu0 0
  %107 = vmatprep.subr.bf16.mxu0 0
  %108 = vmatpush2.bf16.msra.mxu0 0
  %109 = vmatprep.subr.bf16.mxu0 0
  %110 = vmatpush2.bf16.msra.mxu0 0
  %111 = vmatprep.subr.bf16.mxu0 0
  %112 = vmatpush2.bf16.msra.mxu0 0
  %113 = vmatprep.mubr.bf16.mxu0 0
  %114 = vmatmul.mubr.bf16.gmra.mxu0 %v76
  %v115 = vpop.f32.mrf.mxu0
  %v116 = vadd.f32 0.0, %v115
  %v117 = vpop.f32.mrf.mxu0
  %v118 = vpop.f32.mrf.mxu0
  %v119 = vadd.f32 0.0, %v118
  %v120 = vpop.f32.mrf.mxu0
  %121 = vmatprep.mubr.bf16.mxu0 0
  %122 = vmatmul.mubr.bf16.gmra.mxu0 %v79
  %v123 = vpop.f32.mrf.mxu0
  %v124 = vadd.f32 0.0, %v123
  %v125 = vpop.f32.mrf.mxu0
  %v126 = vpop.f32.mrf.mxu0
  %v127 = vadd.f32 0.0, %v126
  %v128 = vpop.f32.mrf.mxu0
  %129 = vdwg.mxu0
  %v130 = vadd.f32 %v24, %v116
  %v131 = vadd.f32 %v25, %v119
  %v132 = vadd.f32 %v26, %v124
  %v133 = vadd.f32 %v27, %v127
  %134 = vst.msk [vmem:[%s3] sm:$0xff] %vm74, %v130
  %135 = vst.msk [vmem:[%s3 + $0x8] sm:$0xff] %vm74, %v131
  %136 = vst.msk [vmem:[%s3 + $0x10] sm:$0xff] %vm74, %v132
  %137 = vst.msk [vmem:[%s3 + $0x18] sm:$0xff] %vm74, %v133
  // Predicated region
  $region18: #{transformer_encoder_decoder_seg_forward.37} parent=0 // pred_check
    %p138 = pneg %p15
  $region19: #{transformer_encoder_decoder_seg_forward.37} parent=0 // pred_check_branch
    %140 = sbr.rel (%p138) target = $region21
  $region20: #{transformer_encoder_decoder_seg_forward.37} parent=0 // pred_region
    %v141 = vld [vmem:[%s3] sm:$0xff]
    %v142 = vld [vmem:[%s3 + $0x8] sm:$0xff]
    %v143 = vld [vmem:[%s3 + $0x10] sm:$0xff]
    %v144 = vld [vmem:[%s3 + $0x18] sm:$0xff]
    %v145 = vld [vmem:[%s2] sm:$0x1]
    %v147 = vlaneseq
    %v148 = vshrl.u32 %v147, 7
    %v149 = vsub.s32 0, %v148
    %v150 = vrot.slane %v145, %v149
    %v152 = vadd.f32 %v141, %v150
    %v153 = vadd.f32 %v142, %v150
    %v154 = vadd.f32 %v143, %v150
    %v155 = vadd.f32 %v144, %v150
    %156 = vst.msk [vmem:[%s3] sm:$0xff] %vm74, %v152
    %157 = vst.msk [vmem:[%s3 + $0x8] sm:$0xff] %vm74, %v153
    %158 = vst.msk [vmem:[%s3 + $0x10] sm:$0xff] %vm74, %v154
    %159 = vst.msk [vmem:[%s3 + $0x18] sm:$0xff] %vm74, %v155
  $region21: #{transformer_encoder_decoder_seg_forward.37} parent=0 // pred_fallthru
    _
  // Predicated region
  $region22: #{transformer_encoder_decoder_seg_forward.37} parent=0 // pred_check
    _
  $region23: #{transformer_encoder_decoder_seg_forward.37} parent=0 // pred_check_branch
    %161 = sbr.rel (0) target = $region25
  $region24: #{transformer_encoder_decoder_seg_forward.37} parent=0 // pred_region
    _
  $region25: #{transformer_encoder_decoder_seg_forward.37} parent=0 // pred_fallthru
    _
  // Predicated region
  $region26: #{transformer_encoder_decoder_seg_forward.37} parent=0 // pred_check
    _
  $region27: #{transformer_encoder_decoder_seg_forward.37} parent=0 // pred_check_branch
    %163 = sbr.rel (0) target = $region29
  $region28: #{transformer_encoder_decoder_seg_forward.37} parent=0 // pred_region
    _
  $region29: #{transformer_encoder_decoder_seg_forward.37} parent=0 // pred_fallthru
    _

// kernel: transformer_encoder_decoder_seg_forward.39
$region0: #{transformer_encoder_decoder_seg_forward.39}
  #allocation0 [shape = 'u32[]', space=smem, size = 0x4, offset = 0x4, fixed_abs, tag = 'smem constant byte address 0x4 - core index']
  #allocation1 [shape = 'u32[144,128]{1,0:T(1,128)}', space=vmem, size = 0x12000, scoped, tag = 'internal scratch']
  %s0 = inlined_call_operand.vmem [shape: bf16[4,16,32], index: 0, kind: input, shape index: {}]
  %s1 = inlined_call_operand.vmem [shape: bf16[4,8,32], index: 1, kind: input, shape index: {}]
  %s2 = inlined_call_operand.vmem [shape: bf16[4,8,32], index: 2, kind: input, shape index: {}]
  %s3 = inlined_call_operand.vmem [shape: f32[4,16,32], index: 3, kind: output, shape index: {}]
  %s4 = sld [smem:[#allocation0]]
  $region45: #{transformer_encoder_decoder_seg_forward.39} parent=0
    _
  %s6 = ssub.s32 1, %s4
  %s7 = scalar_select 0, %s6, %s4
  loop: start=0, step=1, limit=6
  $region2: #{transformer_encoder_decoder_seg_forward.39} parent=0 // loop_pre_header
    _
  $region3: #{transformer_encoder_decoder_seg_forward.39} parent=0 // loop_header
    %s9 = sphi 0, %s13
    %p10 = scmp.ge.s32.totalorder %s9, 6
    %s19 = sphi 0, %s21
    %s22 = sphi 0, %s19
    %s23 = sphi 0, %s22
    %s39 = sphi 0, %s23
    %s45 = sphi 0, %s47
    %s48 = sphi 0, %s45
    %s49 = sphi 0, %s48
    %s65 = sphi 0, %s49
    %s71 = sphi 0, %s73
    %s74 = sphi 0, %s71
    %s75 = sphi 0, %s74
    %s91 = sphi 0, %s75
    %s97 = sphi 0, %s99
    %s100 = sphi 0, %s97
    %s101 = sphi 0, %s100
    %s117 = sphi 0, %s101
  $region4: #{transformer_encoder_decoder_seg_forward.39} parent=0 // loop_header_branch
    %12 = sbr.rel (%p10) target = $region8
  $region5: #{transformer_encoder_decoder_seg_forward.39} parent=0 // loop_body
    %s14 = ssub.s32 %s9, 1
    %s15 = ssub.s32 %s9, 2
    %s16 = sadd.s32 %s9, 1
    %s17 = ssub.s32 %s9, %s16
    %p18 = scmp.eq.s32.totalorder %s17, 0
    %s20 = sadd.s32 %s19, 1
    %s21 = scalar_select %p18, %s19, %s20
    %p24 = pneg %p18
    %p25 = scmp.eq.s32.totalorder %s9, 3
    %p26 = por %p24, %p25
    %p27 = scmp.ne.s32.totalorder %s19, %s22
    %p28 = scmp.eq.s32.totalorder %s9, 0
    %p29 = por %p27, %p28
    %p30 = scmp.ne.s32.totalorder %s19, %s22
    %p31 = scmp.eq.s32.totalorder %s14, 3
    %p32 = por %p30, %p31
    %p33 = scmp.ne.s32.totalorder %s22, %s23
    %p34 = scmp.eq.s32.totalorder %s14, 0
    %p35 = por %p33, %p34
    %p36 = scmp.ne.s32.totalorder %s22, %s23
    %p37 = scmp.eq.s32.totalorder %s15, 3
    %p38 = por %p36, %p37
    %p40 = scmp.ne.s32.totalorder %s23, %s39
    %p41 = scmp.eq.s32.totalorder %s15, 0
    %p42 = por %p40, %p41
    %s43 = ssub.s32 %s9, %s16
    %p44 = scmp.eq.s32.totalorder %s43, 0
    %s46 = sadd.s32 %s45, 1
    %s47 = scalar_select %p44, %s45, %s46
    %p50 = pneg %p44
    %p51 = scmp.eq.s32.totalorder %s9, 3
    %p52 = por %p50, %p51
    %p53 = scmp.ne.s32.totalorder %s45, %s48
    %p54 = scmp.eq.s32.totalorder %s9, 0
    %p55 = por %p53, %p54
    %p56 = scmp.ne.s32.totalorder %s45, %s48
    %p57 = scmp.eq.s32.totalorder %s14, 3
    %p58 = por %p56, %p57
    %p59 = scmp.ne.s32.totalorder %s48, %s49
    %p60 = scmp.eq.s32.totalorder %s14, 0
    %p61 = por %p59, %p60
    %p62 = scmp.ne.s32.totalorder %s48, %s49
    %p63 = scmp.eq.s32.totalorder %s15, 3
    %p64 = por %p62, %p63
    %p66 = scmp.ne.s32.totalorder %s49, %s65
    %p67 = scmp.eq.s32.totalorder %s15, 0
    %p68 = por %p66, %p67
    %s69 = ssub.s32 %s9, %s16
    %p70 = scmp.eq.s32.totalorder %s69, 0
    %s72 = sadd.s32 %s71, 1
    %s73 = scalar_select %p70, %s71, %s72
    %p76 = pneg %p70
    %p77 = scmp.eq.s32.totalorder %s9, 3
    %p78 = por %p76, %p77
    %p79 = scmp.ne.s32.totalorder %s71, %s74
    %p80 = scmp.eq.s32.totalorder %s9, 0
    %p81 = por %p79, %p80
    %p82 = scmp.ne.s32.totalorder %s71, %s74
    %p83 = scmp.eq.s32.totalorder %s14, 3
    %p84 = por %p82, %p83
    %p85 = scmp.ne.s32.totalorder %s74, %s75
    %p86 = scmp.eq.s32.totalorder %s14, 0
    %p87 = por %p85, %p86
    %p88 = scmp.ne.s32.totalorder %s74, %s75
    %p89 = scmp.eq.s32.totalorder %s15, 3
    %p90 = por %p88, %p89
    %p92 = scmp.ne.s32.totalorder %s75, %s91
    %p93 = scmp.eq.s32.totalorder %s15, 0
    %p94 = por %p92, %p93
    %s95 = ssub.s32 %s9, %s16
    %p96 = scmp.eq.s32.totalorder %s95, 0
    %s98 = sadd.s32 %s97, 1
    %s99 = scalar_select %p96, %s97, %s98
    %p102 = pneg %p96
    %p103 = scmp.eq.s32.totalorder %s9, 3
    %p104 = por %p102, %p103
    %p105 = scmp.ne.s32.totalorder %s97, %s100
    %p106 = scmp.eq.s32.totalorder %s9, 0
    %p107 = por %p105, %p106
    %p108 = scmp.ne.s32.totalorder %s97, %s100
    %p109 = scmp.eq.s32.totalorder %s14, 3
    %p110 = por %p108, %p109
    %p111 = scmp.ne.s32.totalorder %s100, %s101
    %p112 = scmp.eq.s32.totalorder %s14, 0
    %p113 = por %p111, %p112
    %p114 = scmp.ne.s32.totalorder %s100, %s101
    %p115 = scmp.eq.s32.totalorder %s15, 3
    %p116 = por %p114, %p115
    %p118 = scmp.ne.s32.totalorder %s101, %s117
    %p119 = scmp.eq.s32.totalorder %s15, 0
    %p120 = por %p118, %p119
    %p121 = scmp.le.s32.totalorder 1, %s9
    %p122 = scmp.lt.s32.totalorder %s9, 5
    %p123 = pnand %p121, %p122
    %p124 = pneg %p123
    // Predicated region
    $region9: #{transformer_encoder_decoder_seg_forward.39} parent=5 // pred_check
      _
    $region10: #{transformer_encoder_decoder_seg_forward.39} parent=5 // pred_check_branch
      %126 = sbr.rel (%p123) target = $region12
    $region11: #{transformer_encoder_decoder_seg_forward.39} parent=5 // pred_region
      %s127 = ssub.s32 %s9, 1
    $region12: #{transformer_encoder_decoder_seg_forward.39} parent=5 // pred_fallthru
      _
    %p128 = scmp.lt.s32.totalorder %s9, 4
    // Predicated region
    $region13: #{transformer_encoder_decoder_seg_forward.39} parent=5 // pred_check
      %p129 = pneg %p128
    $region14: #{transformer_encoder_decoder_seg_forward.39} parent=5 // pred_check_branch
      %131 = sbr.rel (%p129) target = $region16
    $region15: #{transformer_encoder_decoder_seg_forward.39} parent=5 // pred_region
      // Predicated region
      $region17: #{transformer_encoder_decoder_seg_forward.39} parent=15 // pred_check
        %p132 = pneg %p29
      $region18: #{transformer_encoder_decoder_seg_forward.39} parent=15 // pred_check_branch
        %134 = sbr.rel (%p132) target = $region20
      $region19: #{transformer_encoder_decoder_seg_forward.39} parent=15 // pred_region
        %p135 = scmp.lt.s32.totalorder %s9, 3
        %s136 = scalar_select %p135, %s9, 3
        %s137 = smul.addr %s136, 2
        %s138 = smul.addr %s137, 4
        %s139 = scalar_lea.vmem %s0, %s138
      $region20: #{transformer_encoder_decoder_seg_forward.39} parent=15 // pred_fallthru
        _
      // Predicated region
      $region21: #{transformer_encoder_decoder_seg_forward.39} parent=15 // pred_check
        %p140 = pneg %p55
      $region22: #{transformer_encoder_decoder_seg_forward.39} parent=15 // pred_check_branch
        %142 = sbr.rel (%p140) target = $region24
      $region23: #{transformer_encoder_decoder_seg_forward.39} parent=15 // pred_region
        %p143 = scmp.lt.s32.totalorder %s9, 3
        %s144 = scalar_select %p143, %s9, 3
        %s145 = smul.addr %s144, 4
        %s146 = scalar_lea.vmem %s1, %s145
      $region24: #{transformer_encoder_decoder_seg_forward.39} parent=15 // pred_fallthru
        _
      // Predicated region
      $region25: #{transformer_encoder_decoder_seg_forward.39} parent=15 // pred_check
        %p147 = pneg %p81
      $region26: #{transformer_encoder_decoder_seg_forward.39} parent=15 // pred_check_branch
        %149 = sbr.rel (%p147) target = $region28
      $region27: #{transformer_encoder_decoder_seg_forward.39} parent=15 // pred_region
        %p150 = scmp.lt.s32.totalorder %s9, 3
        %s151 = scalar_select %p150, %s9, 3
        %s152 = smul.addr %s151, 4
        %s153 = scalar_lea.vmem %s2, %s152
      $region28: #{transformer_encoder_decoder_seg_forward.39} parent=15 // pred_fallthru
        _
    $region16: #{transformer_encoder_decoder_seg_forward.39} parent=5 // pred_fallthru
      _
    %p154 = scmp.le.s32.totalorder 1, %s9
    %p155 = scmp.lt.s32.totalorder %s9, 5
    %p156 = pnand %p154, %p155
    %p157 = pneg %p156
    // Predicated region
    $region29: #{transformer_encoder_decoder_seg_forward.39} parent=5 // pred_check
      _
    $region30: #{transformer_encoder_decoder_seg_forward.39} parent=5 // pred_check_branch
      %159 = sbr.rel (%p156) target = $region32
    $region31: #{transformer_encoder_decoder_seg_forward.39} parent=5 // pred_region
      %s160 = ssub.s32 %s9, 1
      %p161 = scmp.lt.s32.totalorder %s14, 3
      %s162 = scalar_select %p161, %s14, 3
      %s163 = smul.addr %s162, 2
      %s164 = smul.addr %s163, 4
      %s165 = scalar_lea.vmem %s0, %s164
      %p166 = pneg %p35
      %p167 = pneg %p32
      %p168 = scmp.lt.s32.totalorder %s14, 3
      %s169 = scalar_select %p168, %s14, 3
      %s170 = smul.addr %s169, 4
      %s171 = scalar_lea.vmem %s1, %s170
      %p172 = pneg %p61
      %p173 = pneg %p58
      %p174 = scmp.lt.s32.totalorder %s14, 3
      %s175 = scalar_select %p174, %s14, 3
      %s176 = smul.addr %s175, 4
      %s177 = scalar_lea.vmem %s2, %s176
      %p178 = pneg %p87
      %p179 = pneg %p84
      %p180 = pneg %p113
      %p181 = pneg %p110
      %p182 = scmp.lt.s32.totalorder %s14, 3
      %s183 = scalar_select %p182, %s14, 3
      %s184 = smul.addr %s183, 2
      %s185 = smul.addr %s184, 8
      %s186 = scalar_lea.vmem %s3, %s185
      %p187 = scmp.lt.s32.totalorder %s14, 3
      %s188 = scalar_select %p187, %s14, 3
      %s189 = smul.addr %s188, 2
      %s190 = smul.addr %s189, 4
      %s191 = scalar_lea.vmem %s0, %s190
      %p192 = scmp.lt.s32.totalorder %s14, 3
      %s193 = scalar_select %p192, %s14, 3
      %s194 = smul.addr %s193, 4
      %s195 = scalar_lea.vmem %s1, %s194
      %p196 = scmp.lt.s32.totalorder %s14, 3
      %s197 = scalar_select %p196, %s14, 3
      %s198 = smul.addr %s197, 4
      %s199 = scalar_lea.vmem %s2, %s198
      %p200 = scmp.lt.s32.totalorder %s14, 3
      %s201 = scalar_select %p200, %s14, 3
      %s202 = smul.addr %s201, 2
      %s203 = smul.addr %s202, 8
      %s204 = scalar_lea.vmem %s3, %s203
      %v206 = vld [vmem:[%s191] sm:$0xf]
      %v207 = vld [vmem:[%s191 + $0x4] sm:$0xf]
      %v208 = vld [vmem:[%s195] sm:$0xf]
      %v209 = vld [vmem:[%s199] sm:$0xf]
      %v212 = vunpack.c.l.b16 %v206
      %v213 = vunpack.c.l.b16 %v207
      %v214 = vpack.c.b16 %v213, %v212
      %vm215 = vcmask 261120
      %v217 = vsel %vm215, %v214, 0
      %v220 = vsel %vm215, %v208, 0
      %222 = vmatprep.subr.bf16.mxu0 0
      %223 = vmatpush1.bf16.xpose.msra.mxu0 0
      %224 = vmatprep.subr.bf16.mxu0 0
      %225 = vmatpush1.bf16.xpose.msra.mxu0 0
      %226 = vmatprep.subr.bf16.mxu0 0
      %227 = vmatpush1.bf16.xpose.msra.mxu0 0
      %228 = vmatprep.subr.bf16.mxu0 0
      %229 = vmatpush1.bf16.xpose.msra.mxu0 0
      %230 = vmatprep.subr.bf16.mxu0 0
      %231 = vmatpush1.bf16.xpose.msra.mxu0 0
      %232 = vmatprep.subr.bf16.mxu0 0
      %233 = vmatpush1.bf16.xpose.msra.mxu0 0
      %234 = vmatprep.subr.bf16.mxu0 0
      %235 = vmatpush1.bf16.xpose.msra.mxu0 0
      %236 = vmatprep.subr.bf16.mxu0 0
      %237 = vmatpush1.bf16.xpose.msra.mxu0 %v220
      %238 = vmatprep.subr.bf16.mxu0 0
      %239 = vmatpush2.bf16.xpose.msra.mxu0 0
      %240 = vmatprep.subr.bf16.mxu0 0
      %241 = vmatpush2.bf16.xpose.msra.mxu0 0
      %242 = vmatprep.subr.bf16.mxu0 0
      %243 = vmatpush2.bf16.xpose.msra.mxu0 0
      %244 = vmatprep.subr.bf16.mxu0 0
      %245 = vmatpush2.bf16.xpose.msra.mxu0 0
      %246 = vmatprep.subr.bf16.mxu0 0
      %247 = vmatpush2.bf16.xpose.msra.mxu0 0
      %248 = vmatprep.subr.bf16.mxu0 0
      %249 = vmatpush2.bf16.xpose.msra.mxu0 0
      %250 = vmatprep.subr.bf16.mxu0 0
      %251 = vmatpush2.bf16.xpose.msra.mxu0 0
      %252 = vmatprep.subr.bf16.mxu0 0
      %253 = vmatpush2.bf16.xpose.msra.mxu0 0
      %254 = vmatprep.mubr.bf16.mxu0 0
      %255 = vmatmul.mubr.bf16.gmra.mxu0 %v217
      %v256 = vpop.f32.mrf.mxu0
      %v257 = vadd.f32 0.0, %v256
      %v258 = vpop.f32.mrf.mxu0
      %v259 = vpop.f32.mrf.mxu0
      %v260 = vadd.f32 0.0, %v259
      %v261 = vpop.f32.mrf.mxu0
      %262 = vdwg.mxu0
      %v263 = vmul.f32 %v257, 0.17677669
      %v264 = vmul.f32 %v260, 0.17677669
      %vm265 = vcmask 64512
      %v266 = vsel %vm265, %v263, -inf
      %267 = vmax.xlane.f32.xlu0 %v266
      %v268 = vpop.xlane.xlu0 %267
      %v269 = vsel %vm265, %v264, -inf
      %270 = vmax.xlane.f32.xlu0 %v269
      %v271 = vpop.xlane.xlu0 %270
      %v272 = vsub.f32 %v263, %v268
      %v273 = vsub.f32 %v264, %v271
      %v274 = vmul.f32 %v272, 1.442695
      %v275 = vpow.pop %v274
      %v276 = vmul.f32 %v273, 1.442695
      %v277 = vpow.pop %v276
      %v278 = vsel %vm265, %v275, 0.0
      %279 = vadd.xlane.f32.xlu0 %v278
      %v280 = vpop.xlane.xlu0 %279
      %v281 = vsel %vm265, %v277, 0.0
      %282 = vadd.xlane.f32.xlu0 %v281
      %v283 = vpop.xlane.xlu0 %282
      %v284 = vrcp.pop %v280
      %v285 = vmul.f32 %v275, %v284
      %v286 = vrcp.pop %v283
      %v287 = vmul.f32 %v277, %v286
      %v288 = vpack.c.bf16 %v287, %v285
      %v290 = vsel %vm265, %v288, 0
      %vm292 = vcmask 1043456
      %v294 = vsel %vm292, %v209, 0
      %296 = vmatprep.subr.bf16.mxu0 0
      %297 = vmatpush1.bf16.msra.mxu0 0
      %298 = vmatprep.subr.bf16.mxu0 0
      %299 = vmatpush1.bf16.msra.mxu0 0
      %300 = vmatprep.subr.bf16.mxu0 0
      %301 = vmatpush1.bf16.msra.mxu0 0
      %302 = vmatprep.subr.bf16.mxu0 0
      %303 = vmatpush1.bf16.msra.mxu0 0
      %304 = vmatprep.subr.bf16.mxu0 0
      %305 = vmatpush1.bf16.msra.mxu0 0
      %306 = vmatprep.subr.bf16.mxu0 0
      %307 = vmatpush1.bf16.msra.mxu0 0
      %308 = vmatprep.subr.bf16.mxu0 0
      %309 = vmatpush1.bf16.msra.mxu0 0
      %310 = vmatprep.subr.bf16.mxu0 0
      %311 = vmatpush1.bf16.msra.mxu0 %v294
      %312 = vmatprep.subr.bf16.mxu0 0
      %313 = vmatpush2.bf16.msra.mxu0 0
      %314 = vmatprep.subr.bf16.mxu0 0
      %315 = vmatpush2.bf16.msra.mxu0 0
      %316 = vmatprep.subr.bf16.mxu0 0
      %317 = vmatpush2.bf16.msra.mxu0 0
      %318 = vmatprep.subr.bf16.mxu0 0
      %319 = vmatpush2.bf16.msra.mxu0 0
      %320 = vmatprep.subr.bf16.mxu0 0
      %321 = vmatpush2.bf16.msra.mxu0 0
      %322 = vmatprep.subr.bf16.mxu0 0
      %323 = vmatpush2.bf16.msra.mxu0 0
      %324 = vmatprep.subr.bf16.mxu0 0
      %325 = vmatpush2.bf16.msra.mxu0 0
      %326 = vmatprep.subr.bf16.mxu0 0
      %327 = vmatpush2.bf16.msra.mxu0 0
      %328 = vmatprep.mubr.bf16.mxu0 0
      %329 = vmatmul.mubr.bf16.gmra.mxu0 %v290
      %v330 = vpop.f32.mrf.mxu0
      %v331 = vadd.f32 0.0, %v330
      %v332 = vpop.f32.mrf.mxu0
      %v333 = vpop.f32.mrf.mxu0
      %v334 = vadd.f32 0.0, %v333
      %v335 = vpop.f32.mrf.mxu0
      %336 = vdwg.mxu0
      %337 = vst.msk [vmem:[%s204] sm:$0xff] %vm215, %v331
      %338 = vst.msk [vmem:[%s204 + $0x8] sm:$0xff] %vm215, %v334
      %p339 = scmp.lt.s32.totalorder %s14, 3
      %s340 = scalar_select %p339, %s14, 3
      %s341 = smul.addr %s340, 2
      %s342 = smul.addr %s341, 8
      %s343 = scalar_lea.vmem %s3, %s342
      // Predicated region
      $region33: #{transformer_encoder_decoder_seg_forward.39} parent=31 // pred_check
        %p344 = pneg %p110
      $region34: #{transformer_encoder_decoder_seg_forward.39} parent=31 // pred_check_branch
        %346 = sbr.rel (%p344) target = $region36
      $region35: #{transformer_encoder_decoder_seg_forward.39} parent=31 // pred_region
        _
      $region36: #{transformer_encoder_decoder_seg_forward.39} parent=31 // pred_fallthru
        _
    $region32: #{transformer_encoder_decoder_seg_forward.39} parent=5 // pred_fallthru
      _
    %p347 = scmp.le.s32.totalorder 2, %s9
    // Predicated region
    $region37: #{transformer_encoder_decoder_seg_forward.39} parent=5 // pred_check
      %p348 = pneg %p347
    $region38: #{transformer_encoder_decoder_seg_forward.39} parent=5 // pred_check_branch
      %350 = sbr.rel (%p348) target = $region40
    $region39: #{transformer_encoder_decoder_seg_forward.39} parent=5 // pred_region
      %s351 = ssub.s32 %s9, 2
      // Predicated region
      $region41: #{transformer_encoder_decoder_seg_forward.39} parent=39 // pred_check
        %p352 = pneg %p116
      $region42: #{transformer_encoder_decoder_seg_forward.39} parent=39 // pred_check_branch
        %354 = sbr.rel (%p352) target = $region44
      $region43: #{transformer_encoder_decoder_seg_forward.39} parent=39 // pred_region
        %p355 = scmp.lt.s32.totalorder %s15, 3
        %s356 = scalar_select %p355, %s15, 3
        %s357 = smul.addr %s356, 2
        %s358 = smul.addr %s357, 8
        %s359 = scalar_lea.vmem %s3, %s358
      $region44: #{transformer_encoder_decoder_seg_forward.39} parent=39 // pred_fallthru
        _
    $region40: #{transformer_encoder_decoder_seg_forward.39} parent=5 // pred_fallthru
      _
  $region6: #{transformer_encoder_decoder_seg_forward.39} parent=0 // loop_footer
    %s13 = sadd.s32 1, %s9
  $region7: #{transformer_encoder_decoder_seg_forward.39} parent=0 // loop_footer_branch
    %8 = sbr.rel target = $region3
  $region8: #{transformer_encoder_decoder_seg_forward.39} parent=0 // loop_exit
    _

// kernel: transformer_encoder_decoder_seg_forward.41
$region0: #{transformer_encoder_decoder_seg_forward.41}
  #allocation0 [shape = 'u32[]', space=smem, size = 0x4, offset = 0x4, fixed_abs, tag = 'smem constant byte address 0x4 - core index']
  #allocation1 [shape = 'u32[144,128]{1,0:T(1,128)}', space=vmem, size = 0x12000, scoped, tag = 'internal scratch']
  %s0 = inlined_call_operand.vmem [shape: bf16[32,64], index: 0, kind: input, shape index: {}]
  %s1 = inlined_call_operand.vmem [shape: bf16[64,1024], index: 1, kind: input, shape index: {}]
  %s2 = inlined_call_operand.vmem [shape: f32[1,1024], index: 2, kind: input, shape index: {}]
  %s3 = inlined_call_operand.vmem [shape: f32[32,1024], index: 3, kind: output, shape index: {}]
  %s4 = sld [smem:[#allocation0]]
  $region110: #{transformer_encoder_decoder_seg_forward.41} parent=0
    _
  %s6 = ssub.s32 1, %s4
  %s7 = scalar_select 0, %s6, %s4
  $region1: #{transformer_encoder_decoder_seg_forward.41} parent=0
    #allocation2 [shape = 'u8[65536]{0}', space=vmem, size = 0x10000, scoped, tag = 'input window, operand 1']
    #allocation3 [shape = 'u8[65536]{0}', space=vmem, size = 0x10000, scoped, tag = 'output window, operand 0']
    loop: start=0, step=1, limit=6
    $region2: #{transformer_encoder_decoder_seg_forward.41} parent=1 // loop_pre_header
      _
    $region3: #{transformer_encoder_decoder_seg_forward.41} parent=1 // loop_header
      %s9 = sphi 0, %s13
      %p10 = scmp.ge.s32.totalorder %s9, 6
      %s16 = sphi 0, %s35
      %s17 = sphi 0, %s31
      %s18 = sphi 0, %s27
      %s19 = sphi 0, %s16
      %s20 = sphi 0, %s17
      %s21 = sphi 0, %s18
      %s22 = sphi 0, %s19
      %s23 = sphi 0, %s20
      %s24 = sphi 0, %s21
      %s40 = sphi 0, %s42
      %s43 = sphi 0, %s40
      %s44 = sphi 0, %s43
      %s60 = sphi 0, %s44
      %s68 = sphi 0, %s70
      %s71 = sphi 0, %s68
      %s72 = sphi 0, %s71
      %s88 = sphi 0, %s72
      %s94 = sphi 0, %s96
      %s97 = sphi 0, %s94
      %s98 = sphi 0, %s97
      %s114 = sphi 0, %s98
      %s122 = sphi 0, %s124
      %s125 = sphi 0, %s122
      %s126 = sphi 0, %s125
      %s142 = sphi 0, %s126
    $region4: #{transformer_encoder_decoder_seg_forward.41} parent=1 // loop_header_branch
      %12 = sbr.rel (%p10) target = $region8
    $region5: #{transformer_encoder_decoder_seg_forward.41} parent=1 // loop_body
      %s14 = ssub.s32 %s9, 1
      %s15 = ssub.s32 %s9, 2
      %s25 = sadd.s32 1, %s18
      %p26 = scmp.ge.s32.totalorder %s25, 1
      %s27 = scalar_select %p26, 0, %s25
      %s28 = sadd.s32 1, %s17
      %s29 = scalar_select %p26, %s28, %s17
      %p30 = scmp.ge.s32.totalorder %s29, 4
      %s31 = scalar_select %p30, 0, %s29
      %s32 = sadd.s32 1, %s16
      %s33 = scalar_select %p30, %s32, %s16
      %p34 = scmp.ge.s32.totalorder %s33, 1
      %s35 = scalar_select %p34, 0, %s33
      %s36 = ssub.s32 %s16, %s35
      %s37 = ssub.s32 %s18, %s27
      %s38 = sor.u32 %s36, %s37
      %p39 = scmp.eq.s32.totalorder %s38, 0
      %s41 = sadd.s32 %s40, 1
      %s42 = scalar_select %p39, %s40, %s41
      %p45 = pneg %p39
      %p46 = scmp.eq.s32.totalorder %s9, 3
      %p47 = por %p45, %p46
      %p48 = scmp.ne.s32.totalorder %s40, %s43
      %p49 = scmp.eq.s32.totalorder %s9, 0
      %p50 = por %p48, %p49
      %p51 = scmp.ne.s32.totalorder %s40, %s43
      %p52 = scmp.eq.s32.totalorder %s14, 3
      %p53 = por %p51, %p52
      %p54 = scmp.ne.s32.totalorder %s43, %s44
      %p55 = scmp.eq.s32.totalorder %s14, 0
      %p56 = por %p54, %p55
      %p57 = scmp.ne.s32.totalorder %s43, %s44
      %p58 = scmp.eq.s32.totalorder %s15, 3
      %p59 = por %p57, %p58
      %p61 = scmp.ne.s32.totalorder %s44, %s60
      %p62 = scmp.eq.s32.totalorder %s15, 0
      %p63 = por %p61, %p62
      %s64 = ssub.s32 %s18, %s27
      %s65 = ssub.s32 %s17, %s31
      %s66 = sor.u32 %s64, %s65
      %p67 = scmp.eq.s32.totalorder %s66, 0
      %s69 = sadd.s32 %s68, 1
      %s70 = scalar_select %p67, %s68, %s69
      %p73 = pneg %p67
      %p74 = scmp.eq.s32.totalorder %s9, 3
      %p75 = por %p73, %p74
      %p76 = scmp.ne.s32.totalorder %s68, %s71
      %p77 = scmp.eq.s32.totalorder %s9, 0
      %p78 = por %p76, %p77
      %p79 = scmp.ne.s32.totalorder %s68, %s71
      %p80 = scmp.eq.s32.totalorder %s14, 3
      %p81 = por %p79, %p80
      %p82 = scmp.ne.s32.totalorder %s71, %s72
      %p83 = scmp.eq.s32.totalorder %s14, 0
      %p84 = por %p82, %p83
      %p85 = scmp.ne.s32.totalorder %s71, %s72
      %p86 = scmp.eq.s32.totalorder %s15, 3
      %p87 = por %p85, %p86
      %p89 = scmp.ne.s32.totalorder %s72, %s88
      %p90 = scmp.eq.s32.totalorder %s15, 0
      %p91 = por %p89, %p90
      %s92 = ssub.s32 %s17, %s31
      %p93 = scmp.eq.s32.totalorder %s92, 0
      %s95 = sadd.s32 %s94, 1
      %s96 = scalar_select %p93, %s94, %s95
      %p99 = pneg %p93
      %p100 = scmp.eq.s32.totalorder %s9, 3
      %p101 = por %p99, %p100
      %p102 = scmp.ne.s32.totalorder %s94, %s97
      %p103 = scmp.eq.s32.totalorder %s9, 0
      %p104 = por %p102, %p103
      %p105 = scmp.ne.s32.totalorder %s94, %s97
      %p106 = scmp.eq.s32.totalorder %s14, 3
      %p107 = por %p105, %p106
      %p108 = scmp.ne.s32.totalorder %s97, %s98
      %p109 = scmp.eq.s32.totalorder %s14, 0
      %p110 = por %p108, %p109
      %p111 = scmp.ne.s32.totalorder %s97, %s98
      %p112 = scmp.eq.s32.totalorder %s15, 3
      %p113 = por %p111, %p112
      %p115 = scmp.ne.s32.totalorder %s98, %s114
      %p116 = scmp.eq.s32.totalorder %s15, 0
      %p117 = por %p115, %p116
      %s118 = ssub.s32 %s16, %s35
      %s119 = ssub.s32 %s17, %s31
      %s120 = sor.u32 %s118, %s119
      %p121 = scmp.eq.s32.totalorder %s120, 0
      %s123 = sadd.s32 %s122, 1
      %s124 = scalar_select %p121, %s122, %s123
      %p127 = pneg %p121
      %p128 = scmp.eq.s32.totalorder %s9, 3
      %p129 = por %p127, %p128
      %p130 = scmp.ne.s32.totalorder %s122, %s125
      %p131 = scmp.eq.s32.totalorder %s9, 0
      %p132 = por %p130, %p131
      %p133 = scmp.ne.s32.totalorder %s122, %s125
      %p134 = scmp.eq.s32.totalorder %s14, 3
      %p135 = por %p133, %p134
      %p136 = scmp.ne.s32.totalorder %s125, %s126
      %p137 = scmp.eq.s32.totalorder %s14, 0
      %p138 = por %p136, %p137
      %p139 = scmp.ne.s32.totalorder %s125, %s126
      %p140 = scmp.eq.s32.totalorder %s15, 3
      %p141 = por %p139, %p140
      %p143 = scmp.ne.s32.totalorder %s126, %s142
      %p144 = scmp.eq.s32.totalorder %s15, 0
      %p145 = por %p143, %p144
      %p146 = scmp.le.s32.totalorder 1, %s9
      %p147 = scmp.lt.s32.totalorder %s9, 5
      %p148 = pnand %p146, %p147
      %p149 = pneg %p148
      // Predicated region
      $region9: #{transformer_encoder_decoder_seg_forward.41} parent=5 // pred_check
        _
      $region10: #{transformer_encoder_decoder_seg_forward.41} parent=5 // pred_check_branch
        %151 = sbr.rel (%p148) target = $region12
      $region11: #{transformer_encoder_decoder_seg_forward.41} parent=5 // pred_region
        %s152 = ssub.s32 %s9, 1
        // Predicated region
        $region13: #{transformer_encoder_decoder_seg_forward.41} parent=11 // pred_check
          %p153 = pneg %p56
        $region14: #{transformer_encoder_decoder_seg_forward.41} parent=11 // pred_check_branch
          %155 = sbr.rel (%p153) target = $region16
        $region15: #{transformer_encoder_decoder_seg_forward.41} parent=11 // pred_region
          %s156 = smul.u32 4, %s19
          %p157 = scmp.lt.s32.totalorder %s156, 3
          %s158 = scalar_select %p157, %s156, 3
          %p159 = scmp.lt.s32.totalorder %s21, 0
          %s160 = scalar_select %p159, %s21, 0
          %s161 = sadd.s32 %s160, %s158
          %s162 = smul.addr %s161, 4
          %s163 = scalar_lea.vmem %s0, %s162
          %s164 = smul.u32 4, %s19
        $region16: #{transformer_encoder_decoder_seg_forward.41} parent=11 // pred_fallthru
          _
      $region12: #{transformer_encoder_decoder_seg_forward.41} parent=5 // pred_fallthru
        _
      %p165 = scmp.lt.s32.totalorder %s9, 4
      // Predicated region
      $region17: #{transformer_encoder_decoder_seg_forward.41} parent=5 // pred_check
        %p166 = pneg %p165
      $region18: #{transformer_encoder_decoder_seg_forward.41} parent=5 // pred_check_branch
        %168 = sbr.rel (%p166) target = $region20
      $region19: #{transformer_encoder_decoder_seg_forward.41} parent=5 // pred_region
        // Predicated region
        $region21: #{transformer_encoder_decoder_seg_forward.41} parent=19 // pred_check
          %p169 = pneg %p78
        $region22: #{transformer_encoder_decoder_seg_forward.41} parent=19 // pred_check_branch
          %171 = sbr.rel (%p169) target = $region24
        $region23: #{transformer_encoder_decoder_seg_forward.41} parent=19 // pred_region
          %s172 = sand.u32 %s68, 1
          %s173 = sand.u32 %s68, 1
          %s174 = smul.addr %s173, 64
          %s175 = scalar_lea.vmem [#allocation2], %s174
          %s176 = smul.u32 8, %s18
          %s177 = smul.u32 2, %s17
          %s178 = smul.addr %s176, 8
          %s179 = sadd.s32 %s177, %s178
          %s180 = smul.addr %s179, 4
          %s181 = scalar_lea.vmem %s1, %s180
          // Predicated region
          $region25: #{transformer_encoder_decoder_seg_forward.41} parent=23 // pred_check
            _
          $region26: #{transformer_encoder_decoder_seg_forward.41} parent=23 // pred_check_branch
            %183 = sbr.rel (0) target = $region28
          $region27: #{transformer_encoder_decoder_seg_forward.41} parent=23 // pred_region
            // Predicated region
            $region29: #{transformer_encoder_decoder_seg_forward.41} parent=27 // pred_check
              _
            $region30: #{transformer_encoder_decoder_seg_forward.41} parent=27 // pred_check_branch
              %185 = sbr.rel (0) target = $region32
            $region31: #{transformer_encoder_decoder_seg_forward.41} parent=27 // pred_region
              // Predicated region
              $region44: #{transformer_encoder_decoder_seg_forward.41} parent=31 // pred_check
                _
              $region45: #{transformer_encoder_decoder_seg_forward.41} parent=31 // pred_check_branch
                %215 = sbr.rel (0) target = $region47
              $region46: #{transformer_encoder_decoder_seg_forward.41} parent=31 // pred_region
                loop: start=0, step=1, limit=1
                $region48: #{transformer_encoder_decoder_seg_forward.41} parent=46 // loop_pre_header
                  _
                $region49: #{transformer_encoder_decoder_seg_forward.41} parent=46 // loop_header
                  %s217 = sphi 0, %s221
                  %p218 = scmp.ge.s32.totalorder %s217, 1
                  %s222 = sphi %s181, %s181
                  %s223 = sphi %s175, %s175
                $region50: #{transformer_encoder_decoder_seg_forward.41} parent=46 // loop_header_branch
                  %220 = sbr.rel (%p218) target = $region54
                $region51: #{transformer_encoder_decoder_seg_forward.41} parent=46 // loop_body
                  %v224 = vld [vmem:[%s222] sm:$0xff]
                  %225 = vst [vmem:[%s223] sm:$0xff] %v224
                  %v226 = vld [vmem:[%s222 + $0x20] sm:$0xff]
                  %227 = vst [vmem:[%s223 + $0x8] sm:$0xff] %v226
                  %v228 = vld [vmem:[%s222 + $0x40] sm:$0xff]
                  %229 = vst [vmem:[%s223 + $0x10] sm:$0xff] %v228
                  %v230 = vld [vmem:[%s222 + $0x60] sm:$0xff]
                  %231 = vst [vmem:[%s223 + $0x18] sm:$0xff] %v230
                  %v232 = vld [vmem:[%s222 + $0x80] sm:$0xff]
                  %233 = vst [vmem:[%s223 + $0x20] sm:$0xff] %v232
                  %v234 = vld [vmem:[%s222 + $0xa0] sm:$0xff]
                  %235 = vst [vmem:[%s223 + $0x28] sm:$0xff] %v234
                  %v236 = vld [vmem:[%s222 + $0xc0] sm:$0xff]
                  %237 = vst [vmem:[%s223 + $0x30] sm:$0xff] %v236
                  %v238 = vld [vmem:[%s222 + $0xe0] sm:$0xff]
                  %239 = vst [vmem:[%s223 + $0x38] sm:$0xff] %v238
                $region52: #{transformer_encoder_decoder_seg_forward.41} parent=46 // loop_footer
                  %s221 = sadd.s32 1, %s217
                $region53: #{transformer_encoder_decoder_seg_forward.41} parent=46 // loop_footer_branch
                  %216 = sbr.rel target = $region49
                $region54: #{transformer_encoder_decoder_seg_forward.41} parent=46 // loop_exit
                  _
              $region47: #{transformer_encoder_decoder_seg_forward.41} parent=31 // pred_fallthru
                _
              // Predicated region
              $region55: #{transformer_encoder_decoder_seg_forward.41} parent=31 // pred_check
                _
              $region56: #{transformer_encoder_decoder_seg_forward.41} parent=31 // pred_check_branch
                %241 = sbr.rel target = $region58
              $region57: #{transformer_encoder_decoder_seg_forward.41} parent=31 // pred_region
                _
              $region58: #{transformer_encoder_decoder_seg_forward.41} parent=31 // pred_fallthru
                _
            $region32: #{transformer_encoder_decoder_seg_forward.41} parent=27 // pred_fallthru
              _
            // Predicated region
            $region33: #{transformer_encoder_decoder_seg_forward.41} parent=27 // pred_check
              _
            $region34: #{transformer_encoder_decoder_seg_forward.41} parent=27 // pred_check_branch
              %187 = sbr.rel target = $region36
            $region35: #{transformer_encoder_decoder_seg_forward.41} parent=27 // pred_region
              %s189 = ssub.s32 256, 1
              loop: start=0, step=1, limit=1
              $region37: #{transformer_encoder_decoder_seg_forward.41} parent=35 // loop_pre_header
                _
              $region38: #{transformer_encoder_decoder_seg_forward.41} parent=35 // loop_header
                %s191 = sphi 0, %s195
                %p192 = scmp.ge.s32.totalorder %s191, 1
                %s196 = sphi %s181, %s181
                %s197 = sphi %s175, %s175
              $region39: #{transformer_encoder_decoder_seg_forward.41} parent=35 // loop_header_branch
                %194 = sbr.rel (%p192) target = $region43
              $region40: #{transformer_encoder_decoder_seg_forward.41} parent=35 // loop_body
                %v198 = vld [vmem:[%s196] sm:%s189]
                %199 = vst [vmem:[%s197] sm:%s189] %v198
                %v200 = vld [vmem:[%s196 + $0x20] sm:%s189]
                %201 = vst [vmem:[%s197 + $0x8] sm:%s189] %v200
                %v202 = vld [vmem:[%s196 + $0x40] sm:%s189]
                %203 = vst [vmem:[%s197 + $0x10] sm:%s189] %v202
                %v204 = vld [vmem:[%s196 + $0x60] sm:%s189]
                %205 = vst [vmem:[%s197 + $0x18] sm:%s189] %v204
                %v206 = vld [vmem:[%s196 + $0x80] sm:%s189]
                %207 = vst [vmem:[%s197 + $0x20] sm:%s189] %v206
                %v208 = vld [vmem:[%s196 + $0xa0] sm:%s189]
                %209 = vst [vmem:[%s197 + $0x28] sm:%s189] %v208
                %v210 = vld [vmem:[%s196 + $0xc0] sm:%s189]
                %211 = vst [vmem:[%s197 + $0x30] sm:%s189] %v210
                %v212 = vld [vmem:[%s196 + $0xe0] sm:%s189]
                %213 = vst [vmem:[%s197 + $0x38] sm:%s189] %v212
              $region41: #{transformer_encoder_decoder_seg_forward.41} parent=35 // loop_footer
                %s195 = sadd.s32 1, %s191
              $region42: #{transformer_encoder_decoder_seg_forward.41} parent=35 // loop_footer_branch
                %190 = sbr.rel target = $region38
              $region43: #{transformer_encoder_decoder_seg_forward.41} parent=35 // loop_exit
                _
            $region36: #{transformer_encoder_decoder_seg_forward.41} parent=27 // pred_fallthru
              _
          $region28: #{transformer_encoder_decoder_seg_forward.41} parent=23 // pred_fallthru
            _
          %242 = vnop
        $region24: #{transformer_encoder_decoder_seg_forward.41} parent=19 // pred_fallthru
          _
        // Predicated region
        $region59: #{transformer_encoder_decoder_seg_forward.41} parent=19 // pred_check
          %p243 = pneg %p104
        $region60: #{transformer_encoder_decoder_seg_forward.41} parent=19 // pred_check_branch
          %245 = sbr.rel (%p243) target = $region62
        $region61: #{transformer_encoder_decoder_seg_forward.41} parent=19 // pred_region
          %s246 = smul.u32 2, %s17
          %p247 = scmp.lt.s32.totalorder %s246, 7
          %s248 = scalar_select %p247, %s246, 7
          %s249 = scalar_lea.vmem %s2, %s248
          %s250 = smul.u32 2, %s17
        $region62: #{transformer_encoder_decoder_seg_forward.41} parent=19 // pred_fallthru
          _
      $region20: #{transformer_encoder_decoder_seg_forward.41} parent=5 // pred_fallthru
        _
      %p251 = scmp.le.s32.totalorder 1, %s9
      %p252 = scmp.lt.s32.totalorder %s9, 5
      %p253 = pnand %p251, %p252
      %p254 = pneg %p253
      // Predicated region
      $region63: #{transformer_encoder_decoder_seg_forward.41} parent=5 // pred_check
        _
      $region64: #{transformer_encoder_decoder_seg_forward.41} parent=5 // pred_check_branch
        %256 = sbr.rel (%p253) target = $region66
      $region65: #{transformer_encoder_decoder_seg_forward.41} parent=5 // pred_region
        %s257 = ssub.s32 %s9, 1
        %s258 = sand.u32 %s71, 1
        %s259 = sand.u32 %s71, 1
        %s260 = smul.addr %s259, 64
        %s261 = scalar_lea.vmem [#allocation2], %s260
        // Predicated region
        $region67: #{transformer_encoder_decoder_seg_forward.41} parent=65 // pred_check
          %p262 = pneg %p84
        $region68: #{transformer_encoder_decoder_seg_forward.41} parent=65 // pred_check_branch
          %264 = sbr.rel (%p262) target = $region70
        $region69: #{transformer_encoder_decoder_seg_forward.41} parent=65 // pred_region
          _
        $region70: #{transformer_encoder_decoder_seg_forward.41} parent=65 // pred_fallthru
          _
        %s265 = smul.u32 4, %s19
        %p266 = scmp.lt.s32.totalorder %s265, 3
        %s267 = scalar_select %p266, %s265, 3
        %p268 = scmp.lt.s32.totalorder %s21, 0
        %s269 = scalar_select %p268, %s21, 0
        %s270 = sadd.s32 %s269, %s267
        %s271 = smul.addr %s270, 4
        %s272 = scalar_lea.vmem %s0, %s271
        %p273 = pneg %p56
        %p274 = pneg %p53
        %s275 = sand.u32 %s71, 1
        %s276 = sand.u32 %s71, 1
        %s277 = smul.addr %s276, 64
        %s278 = scalar_lea.vmem [#allocation2], %s277
        %p279 = pneg %p84
        %p280 = pneg %p81
        %s281 = smul.u32 2, %s20
        %p282 = scmp.lt.s32.totalorder %s281, 7
        %s283 = scalar_select %p282, %s281, 7
        %s284 = scalar_lea.vmem %s2, %s283
        %p285 = pneg %p110
        %p286 = pneg %p107
        %p287 = pneg %p138
        %p288 = pneg %p135
        %s289 = sand.u32 %s125, 1
        %s290 = sand.u32 %s125, 1
        %s291 = smul.addr %s290, 64
        %s292 = scalar_lea.vmem [#allocation3], %s291
        %s293 = smul.u32 4, %s19
        %p294 = scmp.lt.s32.totalorder %s293, 3
        %s295 = scalar_select %p294, %s293, 3
        %p296 = scmp.lt.s32.totalorder %s21, 0
        %s297 = scalar_select %p296, %s21, 0
        %s298 = sadd.s32 %s297, %s295
        %s299 = smul.addr %s298, 4
        %s300 = scalar_lea.vmem %s0, %s299
        %s301 = smul.u32 4, %s19
        %s302 = smul.u32 8, %s21
        %s303 = smul.u32 2, %s20
        %s304 = smul.u32 2, %s20
        %p305 = scmp.lt.s32.totalorder %s304, 7
        %s306 = scalar_select %p305, %s304, 7
        %s307 = scalar_lea.vmem %s2, %s306
        %s308 = smul.u32 2, %s20
        %s309 = smul.u32 4, %s19
        %s310 = smul.u32 2, %s20
        %p312 = scmp.eq.s32.totalorder %s21, 0
        // Predicated region
        $region71: #{transformer_encoder_decoder_seg_forward.41} parent=65 // pred_check
          %p313 = pneg %p312
        $region72: #{transformer_encoder_decoder_seg_forward.41} parent=65 // pred_check_branch
          %315 = sbr.rel (%p313) target = $region74
        $region73: #{transformer_encoder_decoder_seg_forward.41} parent=65 // pred_region
          %316 = vst [vmem:[%s292] sm:$0xff] 0.0
          %317 = vst [vmem:[%s292 + $0x8] sm:$0xff] 0.0
          %318 = vst [vmem:[%s292 + $0x10] sm:$0xff] 0.0
          %319 = vst [vmem:[%s292 + $0x18] sm:$0xff] 0.0
          %320 = vst [vmem:[%s292 + $0x20] sm:$0xff] 0.0
          %321 = vst [vmem:[%s292 + $0x28] sm:$0xff] 0.0
          %322 = vst [vmem:[%s292 + $0x30] sm:$0xff] 0.0
          %323 = vst [vmem:[%s292 + $0x38] sm:$0xff] 0.0
        $region74: #{transformer_encoder_decoder_seg_forward.41} parent=65 // pred_fallthru
          _
        %v324 = vld [vmem:[%s292] sm:$0xff]
        %v325 = vld [vmem:[%s292 + $0x8] sm:$0xff]
        %v326 = vld [vmem:[%s292 + $0x10] sm:$0xff]
        %v327 = vld [vmem:[%s292 + $0x18] sm:$0xff]
        %v328 = vld [vmem:[%s292 + $0x20] sm:$0xff]
        %v329 = vld [vmem:[%s292 + $0x28] sm:$0xff]
        %v330 = vld [vmem:[%s292 + $0x30] sm:$0xff]
        %v331 = vld [vmem:[%s292 + $0x38] sm:$0xff]
        %v332 = vld [vmem:[%s300] sm:$0xf]
        %v333 = vld [vmem:[%s300 + $0x4] sm:$0xf]
        %v334 = vld [vmem:[%s300 + $0x8] sm:$0xf]
        %v335 = vld [vmem:[%s300 + $0xc] sm:$0xf]
        %v336 = vld [vmem:[%s261] sm:$0xff]
        %v337 = vld [vmem:[%s261 + $0x8] sm:$0xff]
        %v338 = vld [vmem:[%s261 + $0x10] sm:$0xff]
        %v339 = vld [vmem:[%s261 + $0x18] sm:$0xff]
        %v340 = vld [vmem:[%s261 + $0x20] sm:$0xff]
        %v341 = vld [vmem:[%s261 + $0x28] sm:$0xff]
        %v342 = vld [vmem:[%s261 + $0x30] sm:$0xff]
        %v343 = vld [vmem:[%s261 + $0x38] sm:$0xff]
        %v348 = vunpack.c.l.b16 %v332
        %v349 = vunpack.c.l.b16 %v333
        %v350 = vunpack.c.l.b16 %v334
        %v351 = vunpack.c.l.b16 %v335
        %v352 = vpack.c.b16 %v349, %v348
        %v353 = vpack.c.b16 %v351, %v350
        %v362 = vunpack.c.l.b16 %v336
        %v363 = vunpack.c.h.b16 %v336
        %v364 = vunpack.c.l.b16 %v337
        %v365 = vunpack.c.h.b16 %v337
        %v366 = vunpack.c.l.b16 %v338
        %v367 = vunpack.c.h.b16 %v338
        %v368 = vunpack.c.l.b16 %v339
        %v369 = vunpack.c.h.b16 %v339
        %v370 = vunpack.c.l.b16 %v340
        %v371 = vunpack.c.h.b16 %v340
        %v372 = vunpack.c.l.b16 %v341
        %v373 = vunpack.c.h.b16 %v341
        %v374 = vunpack.c.l.b16 %v342
        %v375 = vunpack.c.h.b16 %v342
        %v376 = vunpack.c.l.b16 %v343
        %v377 = vunpack.c.h.b16 %v343
        %v378 = vpack.c.b16 %v364, %v362
        %v379 = vpack.c.b16 %v365, %v363
        %v380 = vpack.c.b16 %v368, %v366
        %v381 = vpack.c.b16 %v369, %v367
        %v382 = vpack.c.b16 %v372, %v370
        %v383 = vpack.c.b16 %v373, %v371
        %v384 = vpack.c.b16 %v376, %v374
        %v385 = vpack.c.b16 %v377, %v375
        %vm394 = vcmask 523264
        %v396 = vsel %vm394, %v352, 0
        %v399 = vsel %vm394, %v353, 0
        %401 = vmatprep.subr.bf16.mxu0 0
        %402 = vmatpush1.bf16.msra.mxu0 0
        %403 = vmatprep.subr.bf16.mxu0 0
        %404 = vmatpush1.bf16.msra.mxu0 0
        %405 = vmatprep.subr.bf16.mxu0 0
        %406 = vmatpush1.bf16.msra.mxu0 0
        %407 = vmatprep.subr.bf16.mxu0 0
        %408 = vmatpush1.bf16.msra.mxu0 0
        %409 = vmatprep.subr.bf16.mxu0 %v385
        %410 = vmatpush1.bf16.msra.mxu0 %v384
        %411 = vmatprep.subr.bf16.mxu0 %v383
        %412 = vmatpush1.bf16.msra.mxu0 %v382
        %413 = vmatprep.subr.bf16.mxu0 %v381
        %414 = vmatpush1.bf16.msra.mxu0 %v380
        %415 = vmatprep.subr.bf16.mxu0 %v379
        %416 = vmatpush1.bf16.msra.mxu0 %v378
        %417 = vmatprep.subr.bf16.mxu0 0
        %418 = vmatpush2.bf16.msra.mxu0 0
        %419 = vmatprep.subr.bf16.mxu0 0
        %420 = vmatpush2.bf16.msra.mxu0 0
        %421 = vmatprep.subr.bf16.mxu0 0
        %422 = vmatpush2.bf16.msra.mxu0 0
        %423 = vmatprep.subr.bf16.mxu0 0
        %424 = vmatpush2.bf16.msra.mxu0 0
        %425 = vmatprep.subr.bf16.mxu0 0
        %426 = vmatpush2.bf16.msra.mxu0 0
        %427 = vmatprep.subr.bf16.mxu0 0
        %428 = vmatpush2.bf16.msra.mxu0 0
        %429 = vmatprep.subr.bf16.mxu0 0
        %430 = vmatpush2.bf16.msra.mxu0 0
        %431 = vmatprep.subr.bf16.mxu0 0
        %432 = vmatpush2.bf16.msra.mxu0 0
        %433 = vmatprep.mubr.bf16.mxu0 0
        %434 = vmatmul.mubr.bf16.gmra.mxu0 %v396
        %v435 = vpop.f32.mrf.mxu0
        %v436 = vadd.f32 0.0, %v435
        %v437 = vpop.f32.mrf.mxu0
        %v438 = vadd.f32 0.0, %v437
        %v439 = vpop.f32.mrf.mxu0
        %v440 = vadd.f32 0.0, %v439
        %v441 = vpop.f32.mrf.mxu0
        %v442 = vadd.f32 0.0, %v441
        %443 = vmatprep.mubr.bf16.mxu0 0
        %444 = vmatmul.mubr.bf16.gmra.mxu0 %v399
        %v445 = vpop.f32.mrf.mxu0
        %v446 = vadd.f32 0.0, %v445
        %v447 = vpop.f32.mrf.mxu0
        %v448 = vadd.f32 0.0, %v447
        %v449 = vpop.f32.mrf.mxu0
        %v450 = vadd.f32 0.0, %v449
        %v451 = vpop.f32.mrf.mxu0
        %v452 = vadd.f32 0.0, %v451
        %453 = vdwg.mxu0
        %v454 = vadd.f32 %v324, %v436
        %v455 = vadd.f32 %v325, %v438
        %v456 = vadd.f32 %v326, %v440
        %v457 = vadd.f32 %v327, %v442
        %v458 = vadd.f32 %v328, %v446
        %v459 = vadd.f32 %v329, %v448
        %v460 = vadd.f32 %v330, %v450
        %v461 = vadd.f32 %v331, %v452
        %462 = vst [vmem:[%s292] sm:$0xff] %v454
        %463 = vst [vmem:[%s292 + $0x8] sm:$0xff] %v455
        %464 = vst [vmem:[%s292 + $0x10] sm:$0xff] %v456
        %465 = vst [vmem:[%s292 + $0x18] sm:$0xff] %v457
        %466 = vst [vmem:[%s292 + $0x20] sm:$0xff] %v458
        %467 = vst [vmem:[%s292 + $0x28] sm:$0xff] %v459
        %468 = vst [vmem:[%s292 + $0x30] sm:$0xff] %v460
        %469 = vst [vmem:[%s292 + $0x38] sm:$0xff] %v461
        // Predicated region
        $region75: #{transformer_encoder_decoder_seg_forward.41} parent=65 // pred_check
          %p470 = pneg %p312
        $region76: #{transformer_encoder_decoder_seg_forward.41} parent=65 // pred_check_branch
          %472 = sbr.rel (%p470) target = $region78
        $region77: #{transformer_encoder_decoder_seg_forward.41} parent=65 // pred_region
          %v473 = vld [vmem:[%s292] sm:$0xff]
          %v474 = vld [vmem:[%s292 + $0x8] sm:$0xff]
          %v475 = vld [vmem:[%s292 + $0x10] sm:$0xff]
          %v476 = vld [vmem:[%s292 + $0x18] sm:$0xff]
          %v477 = vld [vmem:[%s292 + $0x20] sm:$0xff]
          %v478 = vld [vmem:[%s292 + $0x28] sm:$0xff]
          %v479 = vld [vmem:[%s292 + $0x30] sm:$0xff]
          %v480 = vld [vmem:[%s292 + $0x38] sm:$0xff]
          %v481 = vld [vmem:[%s307] sm:$0x3]
          %v483 = vlaneseq
          %v484 = vshrl.u32 %v483, 7
          %v485 = vsub.s32 0, %v484
          %v486 = vrot.slane %v481, %v485
          %v487 = vlaneseq
          %v488 = vshrl.u32 %v487, 7
          %v489 = vsub.s32 1, %v488
          %v490 = vrot.slane %v481, %v489
          %v493 = vadd.f32 %v473, %v486
          %v494 = vadd.f32 %v474, %v490
          %v495 = vadd.f32 %v475, %v486
          %v496 = vadd.f32 %v476, %v490
          %v497 = vadd.f32 %v477, %v486
          %v498 = vadd.f32 %v478, %v490
          %v499 = vadd.f32 %v479, %v486
          %v500 = vadd.f32 %v480, %v490
          %v501 = vmax.f32 %v493, 0.0
          %v502 = vmax.f32 %v494, 0.0
          %v503 = vmax.f32 %v495, 0.0
          %v504 = vmax.f32 %v496, 0.0
          %v505 = vmax.f32 %v497, 0.0
          %v506 = vmax.f32 %v498, 0.0
          %v507 = vmax.f32 %v499, 0.0
          %v508 = vmax.f32 %v500, 0.0
          %509 = vst [vmem:[%s292] sm:$0xff] %v501
          %510 = vst [vmem:[%s292 + $0x8] sm:$0xff] %v502
          %511 = vst [vmem:[%s292 + $0x10] sm:$0xff] %v503
          %512 = vst [vmem:[%s292 + $0x18] sm:$0xff] %v504
          %513 = vst [vmem:[%s292 + $0x20] sm:$0xff] %v505
          %514 = vst [vmem:[%s292 + $0x28] sm:$0xff] %v506
          %515 = vst [vmem:[%s292 + $0x30] sm:$0xff] %v507
          %516 = vst [vmem:[%s292 + $0x38] sm:$0xff] %v508
        $region78: #{transformer_encoder_decoder_seg_forward.41} parent=65 // pred_fallthru
          _
        %s517 = sand.u32 %s125, 1
        %s518 = sand.u32 %s125, 1
        %s519 = smul.addr %s518, 64
        %s520 = scalar_lea.vmem [#allocation3], %s519
        // Predicated region
        $region79: #{transformer_encoder_decoder_seg_forward.41} parent=65 // pred_check
          %p521 = pneg %p135
        $region80: #{transformer_encoder_decoder_seg_forward.41} parent=65 // pred_check_branch
          %523 = sbr.rel (%p521) target = $region82
        $region81: #{transformer_encoder_decoder_seg_forward.41} parent=65 // pred_region
          %s524 = smul.u32 4, %s19
          %s525 = smul.u32 2, %s20
          %s526 = smul.addr %s524, 8
          %s527 = sadd.s32 %s525, %s526
          %s528 = smul.addr %s527, 8
          %s529 = scalar_lea.vmem %s3, %s528
          // Predicated region
          $region83: #{transformer_encoder_decoder_seg_forward.41} parent=81 // pred_check
            _
          $region84: #{transformer_encoder_decoder_seg_forward.41} parent=81 // pred_check_branch
            %531 = sbr.rel (0) target = $region86
          $region85: #{transformer_encoder_decoder_seg_forward.41} parent=81 // pred_region
            // Predicated region
            $region87: #{transformer_encoder_decoder_seg_forward.41} parent=85 // pred_check
              _
            $region88: #{transformer_encoder_decoder_seg_forward.41} parent=85 // pred_check_branch
              %533 = sbr.rel (0) target = $region90
            $region89: #{transformer_encoder_decoder_seg_forward.41} parent=85 // pred_region
              loop: start=0, step=1, limit=1
              $region91: #{transformer_encoder_decoder_seg_forward.41} parent=89 // loop_pre_header
                _
              $region92: #{transformer_encoder_decoder_seg_forward.41} parent=89 // loop_header
                %s535 = sphi 0, %s539
                %p536 = scmp.ge.s32.totalorder %s535, 1
                %s540 = sphi %s520, %s520
                %s541 = sphi %s529, %s529
              $region93: #{transformer_encoder_decoder_seg_forward.41} parent=89 // loop_header_branch
                %538 = sbr.rel (%p536) target = $region97
              $region94: #{transformer_encoder_decoder_seg_forward.41} parent=89 // loop_body
                %v542 = vld [vmem:[%s540] sm:$0xff]
                %543 = vst [vmem:[%s541] sm:$0xff] %v542
                %v544 = vld [vmem:[%s540 + $0x8] sm:$0xff]
                %545 = vst [vmem:[%s541 + $0x8] sm:$0xff] %v544
                %v546 = vld [vmem:[%s540 + $0x10] sm:$0xff]
                %547 = vst [vmem:[%s541 + $0x40] sm:$0xff] %v546
                %v548 = vld [vmem:[%s540 + $0x18] sm:$0xff]
                %549 = vst [vmem:[%s541 + $0x48] sm:$0xff] %v548
                %v550 = vld [vmem:[%s540 + $0x20] sm:$0xff]
                %551 = vst [vmem:[%s541 + $0x80] sm:$0xff] %v550
                %v552 = vld [vmem:[%s540 + $0x28] sm:$0xff]
                %553 = vst [vmem:[%s541 + $0x88] sm:$0xff] %v552
                %v554 = vld [vmem:[%s540 + $0x30] sm:$0xff]
                %555 = vst [vmem:[%s541 + $0xc0] sm:$0xff] %v554
                %v556 = vld [vmem:[%s540 + $0x38] sm:$0xff]
                %557 = vst [vmem:[%s541 + $0xc8] sm:$0xff] %v556
              $region95: #{transformer_encoder_decoder_seg_forward.41} parent=89 // loop_footer
                %s539 = sadd.s32 1, %s535
              $region96: #{transformer_encoder_decoder_seg_forward.41} parent=89 // loop_footer_branch
                %534 = sbr.rel target = $region92
              $region97: #{transformer_encoder_decoder_seg_forward.41} parent=89 // loop_exit
                _
            $region90: #{transformer_encoder_decoder_seg_forward.41} parent=85 // pred_fallthru
              _
            // Predicated region
            $region98: #{transformer_encoder_decoder_seg_forward.41} parent=85 // pred_check
              _
            $region99: #{transformer_encoder_decoder_seg_forward.41} parent=85 // pred_check_branch
              %559 = sbr.rel target = $region101
            $region100: #{transformer_encoder_decoder_seg_forward.41} parent=85 // pred_region
              _
            $region101: #{transformer_encoder_decoder_seg_forward.41} parent=85 // pred_fallthru
              _
          $region86: #{transformer_encoder_decoder_seg_forward.41} parent=81 // pred_fallthru
            _
          %560 = vnop
        $region82: #{transformer_encoder_decoder_seg_forward.41} parent=65 // pred_fallthru
          _
      $region66: #{transformer_encoder_decoder_seg_forward.41} parent=5 // pred_fallthru
        _
      %p561 = scmp.le.s32.totalorder 2, %s9
      // Predicated region
      $region102: #{transformer_encoder_decoder_seg_forward.41} parent=5 // pred_check
        %p562 = pneg %p561
      $region103: #{transformer_encoder_decoder_seg_forward.41} parent=5 // pred_check_branch
        %564 = sbr.rel (%p562) target = $region105
      $region104: #{transformer_encoder_decoder_seg_forward.41} parent=5 // pred_region
        %s565 = ssub.s32 %s9, 2
        // Predicated region
        $region106: #{transformer_encoder_decoder_seg_forward.41} parent=104 // pred_check
          %p566 = pneg %p141
        $region107: #{transformer_encoder_decoder_seg_forward.41} parent=104 // pred_check_branch
          %568 = sbr.rel (%p566) target = $region109
        $region108: #{transformer_encoder_decoder_seg_forward.41} parent=104 // pred_region
          %s569 = sand.u32 %s126, 1
          %s570 = sand.u32 %s126, 1
          %s571 = smul.addr %s570, 64
          %s572 = scalar_lea.vmem [#allocation3], %s571
        $region109: #{transformer_encoder_decoder_seg_forward.41} parent=104 // pred_fallthru
          _
      $region105: #{transformer_encoder_decoder_seg_forward.41} parent=5 // pred_fallthru
        _
    $region6: #{transformer_encoder_decoder_seg_forward.41} parent=1 // loop_footer
      %s13 = sadd.s32 1, %s9
    $region7: #{transformer_encoder_decoder_seg_forward.41} parent=1 // loop_footer_branch
      %8 = sbr.rel target = $region3
    $region8: #{transformer_encoder_decoder_seg_forward.41} parent=1 // loop_exit
      _

// kernel: transformer_encoder_decoder_seg_forward.42
$region0: #{transformer_encoder_decoder_seg_forward.42}
  #allocation0 [shape = 'u32[]', space=smem, size = 0x4, offset = 0x4, fixed_abs, tag = 'smem constant byte address 0x4 - core index']
  #allocation1 [shape = 'u32[144,128]{1,0:T(1,128)}', space=vmem, size = 0x12000, scoped, tag = 'internal scratch']
  %s0 = inlined_call_operand.vmem [shape: bf16[32,1024], index: 0, kind: input, shape index: {}]
  %s1 = inlined_call_operand.vmem [shape: bf16[1024,64], index: 1, kind: input, shape index: {}]
  %s2 = inlined_call_operand.vmem [shape: f32[1,64], index: 2, kind: input, shape index: {}]
  %s3 = inlined_call_operand.vmem [shape: f32[32,64], index: 3, kind: input, shape index: {}]
  %s4 = inlined_call_operand.vmem [shape: f32[1,64], index: 4, kind: input, shape index: {}]
  %s5 = inlined_call_operand.vmem [shape: f32[1,64], index: 5, kind: input, shape index: {}]
  %s6 = inlined_call_operand.vmem [shape: f32[32,64], index: 6, kind: output, shape index: {}]
  %s7 = sld [smem:[#allocation0]]
  $region88: #{transformer_encoder_decoder_seg_forward.42} parent=0
    _
  %s9 = ssub.s32 1, %s7
  %s10 = scalar_select 0, %s9, %s7
  $region1: #{transformer_encoder_decoder_seg_forward.42} parent=0
    #allocation2 [shape = 'u8[65536]{0}', space=vmem, size = 0x10000, scoped, tag = 'input window, operand 0']
    loop: start=0, step=1, limit=4
    $region2: #{transformer_encoder_decoder_seg_forward.42} parent=1 // loop_pre_header
      _
    $region3: #{transformer_encoder_decoder_seg_forward.42} parent=1 // loop_header
      %s12 = sphi 0, %s16
      %p13 = scmp.ge.s32.totalorder %s12, 4
      %s19 = sphi 0, %s38
      %s20 = sphi 0, %s34
      %s21 = sphi 0, %s30
      %s22 = sphi 0, %s19
      %s23 = sphi 0, %s20
      %s24 = sphi 0, %s21
      %s25 = sphi 0, %s22
      %s26 = sphi 0, %s23
      %s27 = sphi 0, %s24
      %s43 = sphi 0, %s45
      %s46 = sphi 0, %s43
      %s47 = sphi 0, %s46
      %s63 = sphi 0, %s47
      %s71 = sphi 0, %s73
      %s74 = sphi 0, %s71
      %s75 = sphi 0, %s74
      %s91 = sphi 0, %s75
      %s97 = sphi 0, %s99
      %s100 = sphi 0, %s97
      %s101 = sphi 0, %s100
      %s117 = sphi 0, %s101
      %s125 = sphi 0, %s127
      %s128 = sphi 0, %s125
      %s129 = sphi 0, %s128
      %s145 = sphi 0, %s129
      %s151 = sphi 0, %s153
      %s154 = sphi 0, %s151
      %s155 = sphi 0, %s154
      %s171 = sphi 0, %s155
      %s177 = sphi 0, %s179
      %s180 = sphi 0, %s177
      %s181 = sphi 0, %s180
      %s197 = sphi 0, %s181
      %s205 = sphi 0, %s207
      %s208 = sphi 0, %s205
      %s209 = sphi 0, %s208
      %s225 = sphi 0, %s209
    $region4: #{transformer_encoder_decoder_seg_forward.42} parent=1 // loop_header_branch
      %15 = sbr.rel (%p13) target = $region8
    $region5: #{transformer_encoder_decoder_seg_forward.42} parent=1 // loop_body
      %s17 = ssub.s32 %s12, 1
      %s18 = ssub.s32 %s12, 2
      %s28 = sadd.s32 1, %s21
      %p29 = scmp.ge.s32.totalorder %s28, 2
      %s30 = scalar_select %p29, 0, %s28
      %s31 = sadd.s32 1, %s20
      %s32 = scalar_select %p29, %s31, %s20
      %p33 = scmp.ge.s32.totalorder %s32, 1
      %s34 = scalar_select %p33, 0, %s32
      %s35 = sadd.s32 1, %s19
      %s36 = scalar_select %p33, %s35, %s19
      %p37 = scmp.ge.s32.totalorder %s36, 1
      %s38 = scalar_select %p37, 0, %s36
      %s39 = ssub.s32 %s19, %s38
      %s40 = ssub.s32 %s21, %s30
      %s41 = sor.u32 %s39, %s40
      %p42 = scmp.eq.s32.totalorder %s41, 0
      %s44 = sadd.s32 %s43, 1
      %s45 = scalar_select %p42, %s43, %s44
      %p48 = pneg %p42
      %p49 = scmp.eq.s32.totalorder %s12, 1
      %p50 = por %p48, %p49
      %p51 = scmp.ne.s32.totalorder %s43, %s46
      %p52 = scmp.eq.s32.totalorder %s12, 0
      %p53 = por %p51, %p52
      %p54 = scmp.ne.s32.totalorder %s43, %s46
      %p55 = scmp.eq.s32.totalorder %s17, 1
      %p56 = por %p54, %p55
      %p57 = scmp.ne.s32.totalorder %s46, %s47
      %p58 = scmp.eq.s32.totalorder %s17, 0
      %p59 = por %p57, %p58
      %p60 = scmp.ne.s32.totalorder %s46, %s47
      %p61 = scmp.eq.s32.totalorder %s18, 1
      %p62 = por %p60, %p61
      %p64 = scmp.ne.s32.totalorder %s47, %s63
      %p65 = scmp.eq.s32.totalorder %s18, 0
      %p66 = por %p64, %p65
      %s67 = ssub.s32 %s21, %s30
      %s68 = ssub.s32 %s20, %s34
      %s69 = sor.u32 %s67, %s68
      %p70 = scmp.eq.s32.totalorder %s69, 0
      %s72 = sadd.s32 %s71, 1
      %s73 = scalar_select %p70, %s71, %s72
      %p76 = pneg %p70
      %p77 = scmp.eq.s32.totalorder %s12, 1
      %p78 = por %p76, %p77
      %p79 = scmp.ne.s32.totalorder %s71, %s74
      %p80 = scmp.eq.s32.totalorder %s12, 0
      %p81 = por %p79, %p80
      %p82 = scmp.ne.s32.totalorder %s71, %s74
      %p83 = scmp.eq.s32.totalorder %s17, 1
      %p84 = por %p82, %p83
      %p85 = scmp.ne.s32.totalorder %s74, %s75
      %p86 = scmp.eq.s32.totalorder %s17, 0
      %p87 = por %p85, %p86
      %p88 = scmp.ne.s32.totalorder %s74, %s75
      %p89 = scmp.eq.s32.totalorder %s18, 1
      %p90 = por %p88, %p89
      %p92 = scmp.ne.s32.totalorder %s75, %s91
      %p93 = scmp.eq.s32.totalorder %s18, 0
      %p94 = por %p92, %p93
      %s95 = ssub.s32 %s20, %s34
      %p96 = scmp.eq.s32.totalorder %s95, 0
      %s98 = sadd.s32 %s97, 1
      %s99 = scalar_select %p96, %s97, %s98
      %p102 = pneg %p96
      %p103 = scmp.eq.s32.totalorder %s12, 1
      %p104 = por %p102, %p103
      %p105 = scmp.ne.s32.totalorder %s97, %s100
      %p106 = scmp.eq.s32.totalorder %s12, 0
      %p107 = por %p105, %p106
      %p108 = scmp.ne.s32.totalorder %s97, %s100
      %p109 = scmp.eq.s32.totalorder %s17, 1
      %p110 = por %p108, %p109
      %p111 = scmp.ne.s32.totalorder %s100, %s101
      %p112 = scmp.eq.s32.totalorder %s17, 0
      %p113 = por %p111, %p112
      %p114 = scmp.ne.s32.totalorder %s100, %s101
      %p115 = scmp.eq.s32.totalorder %s18, 1
      %p116 = por %p114, %p115
      %p118 = scmp.ne.s32.totalorder %s101, %s117
      %p119 = scmp.eq.s32.totalorder %s18, 0
      %p120 = por %p118, %p119
      %s121 = ssub.s32 %s19, %s38
      %s122 = ssub.s32 %s20, %s34
      %s123 = sor.u32 %s121, %s122
      %p124 = scmp.eq.s32.totalorder %s123, 0
      %s126 = sadd.s32 %s125, 1
      %s127 = scalar_select %p124, %s125, %s126
      %p130 = pneg %p124
      %p131 = scmp.eq.s32.totalorder %s12, 1
      %p132 = por %p130, %p131
      %p133 = scmp.ne.s32.totalorder %s125, %s128
      %p134 = scmp.eq.s32.totalorder %s12, 0
      %p135 = por %p133, %p134
      %p136 = scmp.ne.s32.totalorder %s125, %s128
      %p137 = scmp.eq.s32.totalorder %s17, 1
      %p138 = por %p136, %p137
      %p139 = scmp.ne.s32.totalorder %s128, %s129
      %p140 = scmp.eq.s32.totalorder %s17, 0
      %p141 = por %p139, %p140
      %p142 = scmp.ne.s32.totalorder %s128, %s129
      %p143 = scmp.eq.s32.totalorder %s18, 1
      %p144 = por %p142, %p143
      %p146 = scmp.ne.s32.totalorder %s129, %s145
      %p147 = scmp.eq.s32.totalorder %s18, 0
      %p148 = por %p146, %p147
      %s149 = ssub.s32 %s20, %s34
      %p150 = scmp.eq.s32.totalorder %s149, 0
      %s152 = sadd.s32 %s151, 1
      %s153 = scalar_select %p150, %s151, %s152
      %p156 = pneg %p150
      %p157 = scmp.eq.s32.totalorder %s12, 1
      %p158 = por %p156, %p157
      %p159 = scmp.ne.s32.totalorder %s151, %s154
      %p160 = scmp.eq.s32.totalorder %s12, 0
      %p161 = por %p159, %p160
      %p162 = scmp.ne.s32.totalorder %s151, %s154
      %p163 = scmp.eq.s32.totalorder %s17, 1
      %p164 = por %p162, %p163
      %p165 = scmp.ne.s32.totalorder %s154, %s155
      %p166 = scmp.eq.s32.totalorder %s17, 0
      %p167 = por %p165, %p166
      %p168 = scmp.ne.s32.totalorder %s154, %s155
      %p169 = scmp.eq.s32.totalorder %s18, 1
      %p170 = por %p168, %p169
      %p172 = scmp.ne.s32.totalorder %s155, %s171
      %p173 = scmp.eq.s32.totalorder %s18, 0
      %p174 = por %p172, %p173
      %s175 = ssub.s32 %s20, %s34
      %p176 = scmp.eq.s32.totalorder %s175, 0
      %s178 = sadd.s32 %s177, 1
      %s179 = scalar_select %p176, %s177, %s178
      %p182 = pneg %p176
      %p183 = scmp.eq.s32.totalorder %s12, 1
      %p184 = por %p182, %p183
      %p185 = scmp.ne.s32.totalorder %s177, %s180
      %p186 = scmp.eq.s32.totalorder %s12, 0
      %p187 = por %p185, %p186
      %p188 = scmp.ne.s32.totalorder %s177, %s180
      %p189 = scmp.eq.s32.totalorder %s17, 1
      %p190 = por %p188, %p189
      %p191 = scmp.ne.s32.totalorder %s180, %s181
      %p192 = scmp.eq.s32.totalorder %s17, 0
      %p193 = por %p191, %p192
      %p194 = scmp.ne.s32.totalorder %s180, %s181
      %p195 = scmp.eq.s32.totalorder %s18, 1
      %p196 = por %p194, %p195
      %p198 = scmp.ne.s32.totalorder %s181, %s197
      %p199 = scmp.eq.s32.totalorder %s18, 0
      %p200 = por %p198, %p199
      %s201 = ssub.s32 %s19, %s38
      %s202 = ssub.s32 %s20, %s34
      %s203 = sor.u32 %s201, %s202
      %p204 = scmp.eq.s32.totalorder %s203, 0
      %s206 = sadd.s32 %s205, 1
      %s207 = scalar_select %p204, %s205, %s206
      %p210 = pneg %p204
      %p211 = scmp.eq.s32.totalorder %s12, 1
      %p212 = por %p210, %p211
      %p213 = scmp.ne.s32.totalorder %s205, %s208
      %p214 = scmp.eq.s32.totalorder %s12, 0
      %p215 = por %p213, %p214
      %p216 = scmp.ne.s32.totalorder %s205, %s208
      %p217 = scmp.eq.s32.totalorder %s17, 1
      %p218 = por %p216, %p217
      %p219 = scmp.ne.s32.totalorder %s208, %s209
      %p220 = scmp.eq.s32.totalorder %s17, 0
      %p221 = por %p219, %p220
      %p222 = scmp.ne.s32.totalorder %s208, %s209
      %p223 = scmp.eq.s32.totalorder %s18, 1
      %p224 = por %p222, %p223
      %p226 = scmp.ne.s32.totalorder %s209, %s225
      %p227 = scmp.eq.s32.totalorder %s18, 0
      %p228 = por %p226, %p227
      %p229 = scmp.le.s32.totalorder 1, %s12
      %p230 = scmp.lt.s32.totalorder %s12, 3
      %p231 = pnand %p229, %p230
      %p232 = pneg %p231
      // Predicated region
      $region9: #{transformer_encoder_decoder_seg_forward.42} parent=5 // pred_check
        _
      $region10: #{transformer_encoder_decoder_seg_forward.42} parent=5 // pred_check_branch
        %234 = sbr.rel (%p231) target = $region12
      $region11: #{transformer_encoder_decoder_seg_forward.42} parent=5 // pred_region
        %s235 = ssub.s32 %s12, 1
        // Predicated region
        $region13: #{transformer_encoder_decoder_seg_forward.42} parent=11 // pred_check
          %p236 = pneg %p113
        $region14: #{transformer_encoder_decoder_seg_forward.42} parent=11 // pred_check_branch
          %238 = sbr.rel (%p236) target = $region16
        $region15: #{transformer_encoder_decoder_seg_forward.42} parent=11 // pred_region
          %p239 = scmp.lt.s32.totalorder %s23, 0
          %s240 = scalar_select %p239, %s23, 0
          %s241 = scalar_lea.vmem %s2, %s240
        $region16: #{transformer_encoder_decoder_seg_forward.42} parent=11 // pred_fallthru
          _
        // Predicated region
        $region17: #{transformer_encoder_decoder_seg_forward.42} parent=11 // pred_check
          %p242 = pneg %p141
        $region18: #{transformer_encoder_decoder_seg_forward.42} parent=11 // pred_check_branch
          %244 = sbr.rel (%p242) target = $region20
        $region19: #{transformer_encoder_decoder_seg_forward.42} parent=11 // pred_region
          %s245 = smul.u32 4, %s22
          %p246 = scmp.lt.s32.totalorder %s245, 3
          %s247 = scalar_select %p246, %s245, 3
          %p248 = scmp.lt.s32.totalorder %s23, 0
          %s249 = scalar_select %p248, %s23, 0
          %s250 = sadd.s32 %s249, %s247
          %s251 = smul.addr %s250, 8
          %s252 = scalar_lea.vmem %s3, %s251
          %s253 = smul.u32 4, %s22
        $region20: #{transformer_encoder_decoder_seg_forward.42} parent=11 // pred_fallthru
          _
        // Predicated region
        $region21: #{transformer_encoder_decoder_seg_forward.42} parent=11 // pred_check
          %p254 = pneg %p167
        $region22: #{transformer_encoder_decoder_seg_forward.42} parent=11 // pred_check_branch
          %256 = sbr.rel (%p254) target = $region24
        $region23: #{transformer_encoder_decoder_seg_forward.42} parent=11 // pred_region
          %p257 = scmp.lt.s32.totalorder %s23, 0
          %s258 = scalar_select %p257, %s23, 0
          %s259 = scalar_lea.vmem %s4, %s258
        $region24: #{transformer_encoder_decoder_seg_forward.42} parent=11 // pred_fallthru
          _
        // Predicated region
        $region25: #{transformer_encoder_decoder_seg_forward.42} parent=11 // pred_check
          %p260 = pneg %p193
        $region26: #{transformer_encoder_decoder_seg_forward.42} parent=11 // pred_check_branch
          %262 = sbr.rel (%p260) target = $region28
        $region27: #{transformer_encoder_decoder_seg_forward.42} parent=11 // pred_region
          %p263 = scmp.lt.s32.totalorder %s23, 0
          %s264 = scalar_select %p263, %s23, 0
          %s265 = scalar_lea.vmem %s5, %s264
        $region28: #{transformer_encoder_decoder_seg_forward.42} parent=11 // pred_fallthru
          _
      $region12: #{transformer_encoder_decoder_seg_forward.42} parent=5 // pred_fallthru
        _
      %p266 = scmp.lt.s32.totalorder %s12, 2
      // Predicated region
      $region29: #{transformer_encoder_decoder_seg_forward.42} parent=5 // pred_check
        %p267 = pneg %p266
      $region30: #{transformer_encoder_decoder_seg_forward.42} parent=5 // pred_check_branch
        %269 = sbr.rel (%p267) target = $region32
      $region31: #{transformer_encoder_decoder_seg_forward.42} parent=5 // pred_region
        // Predicated region
        $region33: #{transformer_encoder_decoder_seg_forward.42} parent=31 // pred_check
          %p270 = pneg %p53
        $region34: #{transformer_encoder_decoder_seg_forward.42} parent=31 // pred_check_branch
          %272 = sbr.rel (%p270) target = $region36
        $region35: #{transformer_encoder_decoder_seg_forward.42} parent=31 // pred_region
          %s273 = sand.u32 %s43, 1
          %s274 = sand.u32 %s43, 1
          %s275 = smul.addr %s274, 64
          %s276 = scalar_lea.vmem [#allocation2], %s275
          %s277 = smul.u32 4, %s19
          %s278 = smul.u32 4, %s21
          %s279 = smul.addr %s277, 8
          %s280 = sadd.s32 %s278, %s279
          %s281 = smul.addr %s280, 4
          %s282 = scalar_lea.vmem %s0, %s281
          // Predicated region
          $region37: #{transformer_encoder_decoder_seg_forward.42} parent=35 // pred_check
            _
          $region38: #{transformer_encoder_decoder_seg_forward.42} parent=35 // pred_check_branch
            %284 = sbr.rel (0) target = $region40
          $region39: #{transformer_encoder_decoder_seg_forward.42} parent=35 // pred_region
            // Predicated region
            $region41: #{transformer_encoder_decoder_seg_forward.42} parent=39 // pred_check
              _
            $region42: #{transformer_encoder_decoder_seg_forward.42} parent=39 // pred_check_branch
              %286 = sbr.rel (0) target = $region44
            $region43: #{transformer_encoder_decoder_seg_forward.42} parent=39 // pred_region
              loop: start=0, step=1, limit=1
              $region45: #{transformer_encoder_decoder_seg_forward.42} parent=43 // loop_pre_header
                _
              $region46: #{transformer_encoder_decoder_seg_forward.42} parent=43 // loop_header
                %s288 = sphi 0, %s292
                %p289 = scmp.ge.s32.totalorder %s288, 1
                %s293 = sphi %s282, %s282
                %s294 = sphi %s276, %s276
              $region47: #{transformer_encoder_decoder_seg_forward.42} parent=43 // loop_header_branch
                %291 = sbr.rel (%p289) target = $region51
              $region48: #{transformer_encoder_decoder_seg_forward.42} parent=43 // loop_body
                %v295 = vld [vmem:[%s293] sm:$0xff]
                %296 = vst [vmem:[%s294] sm:$0xff] %v295
                %v297 = vld [vmem:[%s293 + $0x8] sm:$0xff]
                %298 = vst [vmem:[%s294 + $0x8] sm:$0xff] %v297
                %v299 = vld [vmem:[%s293 + $0x20] sm:$0xff]
                %300 = vst [vmem:[%s294 + $0x10] sm:$0xff] %v299
                %v301 = vld [vmem:[%s293 + $0x28] sm:$0xff]
                %302 = vst [vmem:[%s294 + $0x18] sm:$0xff] %v301
                %v303 = vld [vmem:[%s293 + $0x40] sm:$0xff]
                %304 = vst [vmem:[%s294 + $0x20] sm:$0xff] %v303
                %v305 = vld [vmem:[%s293 + $0x48] sm:$0xff]
                %306 = vst [vmem:[%s294 + $0x28] sm:$0xff] %v305
                %v307 = vld [vmem:[%s293 + $0x60] sm:$0xff]
                %308 = vst [vmem:[%s294 + $0x30] sm:$0xff] %v307
                %v309 = vld [vmem:[%s293 + $0x68] sm:$0xff]
                %310 = vst [vmem:[%s294 + $0x38] sm:$0xff] %v309
              $region49: #{transformer_encoder_decoder_seg_forward.42} parent=43 // loop_footer
                %s292 = sadd.s32 1, %s288
              $region50: #{transformer_encoder_decoder_seg_forward.42} parent=43 // loop_footer_branch
                %287 = sbr.rel target = $region46
              $region51: #{transformer_encoder_decoder_seg_forward.42} parent=43 // loop_exit
                _
            $region44: #{transformer_encoder_decoder_seg_forward.42} parent=39 // pred_fallthru
              _
            // Predicated region
            $region52: #{transformer_encoder_decoder_seg_forward.42} parent=39 // pred_check
              _
            $region53: #{transformer_encoder_decoder_seg_forward.42} parent=39 // pred_check_branch
              %312 = sbr.rel target = $region55
            $region54: #{transformer_encoder_decoder_seg_forward.42} parent=39 // pred_region
              _
            $region55: #{transformer_encoder_decoder_seg_forward.42} parent=39 // pred_fallthru
              _
          $region40: #{transformer_encoder_decoder_seg_forward.42} parent=35 // pred_fallthru
            _
          %313 = vnop
        $region36: #{transformer_encoder_decoder_seg_forward.42} parent=31 // pred_fallthru
          _
        // Predicated region
        $region56: #{transformer_encoder_decoder_seg_forward.42} parent=31 // pred_check
          %p314 = pneg %p81
        $region57: #{transformer_encoder_decoder_seg_forward.42} parent=31 // pred_check_branch
          %316 = sbr.rel (%p314) target = $region59
        $region58: #{transformer_encoder_decoder_seg_forward.42} parent=31 // pred_region
          %s317 = smul.u32 64, %s21
          %p318 = scmp.lt.s32.totalorder %s317, 127
          %s319 = scalar_select %p318, %s317, 127
          %p320 = scmp.lt.s32.totalorder %s20, 0
          %s321 = scalar_select %p320, %s20, 0
          %s322 = sadd.s32 %s321, %s319
          %s323 = smul.addr %s322, 4
          %s324 = scalar_lea.vmem %s1, %s323
          %s325 = smul.u32 64, %s21
        $region59: #{transformer_encoder_decoder_seg_forward.42} parent=31 // pred_fallthru
          _
      $region32: #{transformer_encoder_decoder_seg_forward.42} parent=5 // pred_fallthru
        _
      %p326 = scmp.le.s32.totalorder 1, %s12
      %p327 = scmp.lt.s32.totalorder %s12, 3
      %p328 = pnand %p326, %p327
      %p329 = pneg %p328
      // Predicated region
      $region60: #{transformer_encoder_decoder_seg_forward.42} parent=5 // pred_check
        _
      $region61: #{transformer_encoder_decoder_seg_forward.42} parent=5 // pred_check_branch
        %331 = sbr.rel (%p328) target = $region63
      $region62: #{transformer_encoder_decoder_seg_forward.42} parent=5 // pred_region
        %s332 = ssub.s32 %s12, 1
        %s333 = sand.u32 %s46, 1
        %s334 = sand.u32 %s46, 1
        %s335 = smul.addr %s334, 64
        %s336 = scalar_lea.vmem [#allocation2], %s335
        // Predicated region
        $region64: #{transformer_encoder_decoder_seg_forward.42} parent=62 // pred_check
          %p337 = pneg %p59
        $region65: #{transformer_encoder_decoder_seg_forward.42} parent=62 // pred_check_branch
          %339 = sbr.rel (%p337) target = $region67
        $region66: #{transformer_encoder_decoder_seg_forward.42} parent=62 // pred_region
          _
        $region67: #{transformer_encoder_decoder_seg_forward.42} parent=62 // pred_fallthru
          _
        %s340 = sand.u32 %s46, 1
        %s341 = sand.u32 %s46, 1
        %s342 = smul.addr %s341, 64
        %s343 = scalar_lea.vmem [#allocation2], %s342
        %p344 = pneg %p59
        %p345 = pneg %p56
        %s346 = smul.u32 64, %s24
        %p347 = scmp.lt.s32.totalorder %s346, 127
        %s348 = scalar_select %p347, %s346, 127
        %p349 = scmp.lt.s32.totalorder %s23, 0
        %s350 = scalar_select %p349, %s23, 0
        %s351 = sadd.s32 %s350, %s348
        %s352 = smul.addr %s351, 4
        %s353 = scalar_lea.vmem %s1, %s352
        %p354 = pneg %p87
        %p355 = pneg %p84
        %p356 = scmp.lt.s32.totalorder %s23, 0
        %s357 = scalar_select %p356, %s23, 0
        %s358 = scalar_lea.vmem %s2, %s357
        %p359 = pneg %p113
        %p360 = pneg %p110
        %s361 = smul.u32 4, %s22
        %p362 = scmp.lt.s32.totalorder %s361, 3
        %s363 = scalar_select %p362, %s361, 3
        %p364 = scmp.lt.s32.totalorder %s23, 0
        %s365 = scalar_select %p364, %s23, 0
        %s366 = sadd.s32 %s365, %s363
        %s367 = smul.addr %s366, 8
        %s368 = scalar_lea.vmem %s3, %s367
        %p369 = pneg %p141
        %p370 = pneg %p138
        %p371 = scmp.lt.s32.totalorder %s23, 0
        %s372 = scalar_select %p371, %s23, 0
        %s373 = scalar_lea.vmem %s4, %s372
        %p374 = pneg %p167
        %p375 = pneg %p164
        %p376 = scmp.lt.s32.totalorder %s23, 0
        %s377 = scalar_select %p376, %s23, 0
        %s378 = scalar_lea.vmem %s5, %s377
        %p379 = pneg %p193
        %p380 = pneg %p190
        %p381 = pneg %p221
        %p382 = pneg %p218
        %s383 = smul.u32 4, %s22
        %p384 = scmp.lt.s32.totalorder %s383, 3
        %s385 = scalar_select %p384, %s383, 3
        %p386 = scmp.lt.s32.totalorder %s23, 0
        %s387 = scalar_select %p386, %s23, 0
        %s388 = sadd.s32 %s387, %s385
        %s389 = smul.addr %s388, 8
        %s390 = scalar_lea.vmem %s6, %s389
        %s391 = smul.u32 4, %s22
        %s392 = smul.u32 4, %s24
        %s393 = smul.u32 64, %s24
        %p394 = scmp.lt.s32.totalorder %s393, 127
        %s395 = scalar_select %p394, %s393, 127
        %p396 = scmp.lt.s32.totalorder %s23, 0
        %s397 = scalar_select %p396, %s23, 0
        %s398 = sadd.s32 %s397, %s395
        %s399 = smul.addr %s398, 4
        %s400 = scalar_lea.vmem %s1, %s399
        %s401 = smul.u32 64, %s24
        %p402 = scmp.lt.s32.totalorder %s23, 0
        %s403 = scalar_select %p402, %s23, 0
        %s404 = scalar_lea.vmem %s2, %s403
        %s405 = smul.u32 4, %s22
        %p406 = scmp.lt.s32.totalorder %s405, 3
        %s407 = scalar_select %p406, %s405, 3
        %p408 = scmp.lt.s32.totalorder %s23, 0
        %s409 = scalar_select %p408, %s23, 0
        %s410 = sadd.s32 %s409, %s407
        %s411 = smul.addr %s410, 8
        %s412 = scalar_lea.vmem %s3, %s411
        %s413 = smul.u32 4, %s22
        %p414 = scmp.lt.s32.totalorder %s23, 0
        %s415 = scalar_select %p414, %s23, 0
        %s416 = scalar_lea.vmem %s4, %s415
        %p417 = scmp.lt.s32.totalorder %s23, 0
        %s418 = scalar_select %p417, %s23, 0
        %s419 = scalar_lea.vmem %s5, %s418
        %s420 = smul.u32 4, %s22
        %p421 = scmp.lt.s32.totalorder %s420, 3
        %s422 = scalar_select %p421, %s420, 3
        %p423 = scmp.lt.s32.totalorder %s23, 0
        %s424 = scalar_select %p423, %s23, 0
        %s425 = sadd.s32 %s424, %s422
        %s426 = smul.addr %s425, 8
        %s427 = scalar_lea.vmem %s6, %s426
        %s428 = smul.u32 4, %s22
        %p430 = scmp.eq.s32.totalorder %s24, 0
        // Predicated region
        $region68: #{transformer_encoder_decoder_seg_forward.42} parent=62 // pred_check
          %p431 = pneg %p430
        $region69: #{transformer_encoder_decoder_seg_forward.42} parent=62 // pred_check_branch
          %433 = sbr.rel (%p431) target = $region71
        $region70: #{transformer_encoder_decoder_seg_forward.42} parent=62 // pred_region
          %vm434 = vcmask 523264
          %435 = vst.msk [vmem:[%s427] sm:$0xff] %vm434, 0.0
          %436 = vst.msk [vmem:[%s427 + $0x8] sm:$0xff] %vm434, 0.0
          %437 = vst.msk [vmem:[%s427 + $0x10] sm:$0xff] %vm434, 0.0
          %438 = vst.msk [vmem:[%s427 + $0x18] sm:$0xff] %vm434, 0.0
        $region71: #{transformer_encoder_decoder_seg_forward.42} parent=62 // pred_fallthru
          _
        %v439 = vld [vmem:[%s427] sm:$0xff]
        %v440 = vld [vmem:[%s427 + $0x8] sm:$0xff]
        %v441 = vld [vmem:[%s427 + $0x10] sm:$0xff]
        %v442 = vld [vmem:[%s427 + $0x18] sm:$0xff]
        %v443 = vld [vmem:[%s336] sm:$0xff]
        %v444 = vld [vmem:[%s336 + $0x8] sm:$0xff]
        %v445 = vld [vmem:[%s336 + $0x10] sm:$0xff]
        %v446 = vld [vmem:[%s336 + $0x18] sm:$0xff]
        %v447 = vld [vmem:[%s336 + $0x20] sm:$0xff]
        %v448 = vld [vmem:[%s336 + $0x28] sm:$0xff]
        %v449 = vld [vmem:[%s336 + $0x30] sm:$0xff]
        %v450 = vld [vmem:[%s336 + $0x38] sm:$0xff]
        %v451 = vld [vmem:[%s400] sm:$0xf]
        %v452 = vld [vmem:[%s400 + $0x4] sm:$0xf]
        %v453 = vld [vmem:[%s400 + $0x8] sm:$0xf]
        %v454 = vld [vmem:[%s400 + $0xc] sm:$0xf]
        %v455 = vld [vmem:[%s400 + $0x10] sm:$0xf]
        %v456 = vld [vmem:[%s400 + $0x14] sm:$0xf]
        %v457 = vld [vmem:[%s400 + $0x18] sm:$0xf]
        %v458 = vld [vmem:[%s400 + $0x1c] sm:$0xf]
        %v459 = vld [vmem:[%s400 + $0x20] sm:$0xf]
        %v460 = vld [vmem:[%s400 + $0x24] sm:$0xf]
        %v461 = vld [vmem:[%s400 + $0x28] sm:$0xf]
        %v462 = vld [vmem:[%s400 + $0x2c] sm:$0xf]
        %v463 = vld [vmem:[%s400 + $0x30] sm:$0xf]
        %v464 = vld [vmem:[%s400 + $0x34] sm:$0xf]
        %v465 = vld [vmem:[%s400 + $0x38] sm:$0xf]
        %v466 = vld [vmem:[%s400 + $0x3c] sm:$0xf]
        %v467 = vld [vmem:[%s400 + $0x40] sm:$0xf]
        %v468 = vld [vmem:[%s400 + $0x44] sm:$0xf]
        %v469 = vld [vmem:[%s400 + $0x48] sm:$0xf]
        %v470 = vld [vmem:[%s400 + $0x4c] sm:$0xf]
        %v471 = vld [vmem:[%s400 + $0x50] sm:$0xf]
        %v472 = vld [vmem:[%s400 + $0x54] sm:$0xf]
        %v473 = vld [vmem:[%s400 + $0x58] sm:$0xf]
        %v474 = vld [vmem:[%s400 + $0x5c] sm:$0xf]
        %v475 = vld [vmem:[%s400 + $0x60] sm:$0xf]
        %v476 = vld [vmem:[%s400 + $0x64] sm:$0xf]
        %v477 = vld [vmem:[%s400 + $0x68] sm:$0xf]
        %v478 = vld [vmem:[%s400 + $0x6c] sm:$0xf]
        %v479 = vld [vmem:[%s400 + $0x70] sm:$0xf]
        %v480 = vld [vmem:[%s400 + $0x74] sm:$0xf]
        %v481 = vld [vmem:[%s400 + $0x78] sm:$0xf]
        %v482 = vld [vmem:[%s400 + $0x7c] sm:$0xf]
        %v483 = vld [vmem:[%s400 + $0x80] sm:$0xf]
        %v484 = vld [vmem:[%s400 + $0x84] sm:$0xf]
        %v485 = vld [vmem:[%s400 + $0x88] sm:$0xf]
        %v486 = vld [vmem:[%s400 + $0x8c] sm:$0xf]
        %v487 = vld [vmem:[%s400 + $0x90] sm:$0xf]
        %v488 = vld [vmem:[%s400 + $0x94] sm:$0xf]
        %v489 = vld [vmem:[%s400 + $0x98] sm:$0xf]
        %v490 = vld [vmem:[%s400 + $0x9c] sm:$0xf]
        %v491 = vld [vmem:[%s400 + $0xa0] sm:$0xf]
        %v492 = vld [vmem:[%s400 + $0xa4] sm:$0xf]
        %v493 = vld [vmem:[%s400 + $0xa8] sm:$0xf]
        %v494 = vld [vmem:[%s400 + $0xac] sm:$0xf]
        %v495 = vld [vmem:[%s400 + $0xb0] sm:$0xf]
        %v496 = vld [vmem:[%s400 + $0xb4] sm:$0xf]
        %v497 = vld [vmem:[%s400 + $0xb8] sm:$0xf]
        %v498 = vld [vmem:[%s400 + $0xbc] sm:$0xf]
        %v499 = vld [vmem:[%s400 + $0xc0] sm:$0xf]
        %v500 = vld [vmem:[%s400 + $0xc4] sm:$0xf]
        %v501 = vld [vmem:[%s400 + $0xc8] sm:$0xf]
        %v502 = vld [vmem:[%s400 + $0xcc] sm:$0xf]
        %v503 = vld [vmem:[%s400 + $0xd0] sm:$0xf]
        %v504 = vld [vmem:[%s400 + $0xd4] sm:$0xf]
        %v505 = vld [vmem:[%s400 + $0xd8] sm:$0xf]
        %v506 = vld [vmem:[%s400 + $0xdc] sm:$0xf]
        %v507 = vld [vmem:[%s400 + $0xe0] sm:$0xf]
        %v508 = vld [vmem:[%s400 + $0xe4] sm:$0xf]
        %v509 = vld [vmem:[%s400 + $0xe8] sm:$0xf]
        %v510 = vld [vmem:[%s400 + $0xec] sm:$0xf]
        %v511 = vld [vmem:[%s400 + $0xf0] sm:$0xf]
        %v512 = vld [vmem:[%s400 + $0xf4] sm:$0xf]
        %v513 = vld [vmem:[%s400 + $0xf8] sm:$0xf]
        %v514 = vld [vmem:[%s400 + $0xfc] sm:$0xf]
        %v523 = vunpack.c.l.b16 %v443
        %v524 = vunpack.c.h.b16 %v443
        %v525 = vunpack.c.l.b16 %v444
        %v526 = vunpack.c.h.b16 %v444
        %v527 = vunpack.c.l.b16 %v445
        %v528 = vunpack.c.h.b16 %v445
        %v529 = vunpack.c.l.b16 %v446
        %v530 = vunpack.c.h.b16 %v446
        %v531 = vunpack.c.l.b16 %v447
        %v532 = vunpack.c.h.b16 %v447
        %v533 = vunpack.c.l.b16 %v448
        %v534 = vunpack.c.h.b16 %v448
        %v535 = vunpack.c.l.b16 %v449
        %v536 = vunpack.c.h.b16 %v449
        %v537 = vunpack.c.l.b16 %v450
        %v538 = vunpack.c.h.b16 %v450
        %v539 = vpack.c.b16 %v527, %v523
        %v540 = vpack.c.b16 %v528, %v524
        %v541 = vpack.c.b16 %v529, %v525
        %v542 = vpack.c.b16 %v530, %v526
        %v543 = vpack.c.b16 %v535, %v531
        %v544 = vpack.c.b16 %v536, %v532
        %v545 = vpack.c.b16 %v537, %v533
        %v546 = vpack.c.b16 %v538, %v534
        %v619 = vunpack.c.l.b16 %v451
        %v620 = vunpack.c.l.b16 %v452
        %v621 = vunpack.c.l.b16 %v453
        %v622 = vunpack.c.l.b16 %v454
        %v623 = vunpack.c.l.b16 %v455
        %v624 = vunpack.c.l.b16 %v456
        %v625 = vunpack.c.l.b16 %v457
        %v626 = vunpack.c.l.b16 %v458
        %v627 = vunpack.c.l.b16 %v459
        %v628 = vunpack.c.l.b16 %v460
        %v629 = vunpack.c.l.b16 %v461
        %v630 = vunpack.c.l.b16 %v462
        %v631 = vunpack.c.l.b16 %v463
        %v632 = vunpack.c.l.b16 %v464
        %v633 = vunpack.c.l.b16 %v465
        %v634 = vunpack.c.l.b16 %v466
        %v635 = vunpack.c.l.b16 %v467
        %v636 = vunpack.c.l.b16 %v468
        %v637 = vunpack.c.l.b16 %v469
        %v638 = vunpack.c.l.b16 %v470
        %v639 = vunpack.c.l.b16 %v471
        %v640 = vunpack.c.l.b16 %v472
        %v641 = vunpack.c.l.b16 %v473
        %v642 = vunpack.c.l.b16 %v474
        %v643 = vunpack.c.l.b16 %v475
        %v644 = vunpack.c.l.b16 %v476
        %v645 = vunpack.c.l.b16 %v477
        %v646 = vunpack.c.l.b16 %v478
        %v647 = vunpack.c.l.b16 %v479
        %v648 = vunpack.c.l.b16 %v480
        %v649 = vunpack.c.l.b16 %v481
        %v650 = vunpack.c.l.b16 %v482
        %v651 = vunpack.c.l.b16 %v483
        %v652 = vunpack.c.l.b16 %v484
        %v653 = vunpack.c.l.b16 %v485
        %v654 = vunpack.c.l.b16 %v486
        %v655 = vunpack.c.l.b16 %v487
        %v656 = vunpack.c.l.b16 %v488
        %v657 = vunpack.c.l.b16 %v489
        %v658 = vunpack.c.l.b16 %v490
        %v659 = vunpack.c.l.b16 %v491
        %v660 = vunpack.c.l.b16 %v492
        %v661 = vunpack.c.l.b16 %v493
        %v662 = vunpack.c.l.b16 %v494
        %v663 = vunpack.c.l.b16 %v495
        %v664 = vunpack.c.l.b16 %v496
        %v665 = vunpack.c.l.b16 %v497
        %v666 = vunpack.c.l.b16 %v498
        %v667 = vunpack.c.l.b16 %v499
        %v668 = vunpack.c.l.b16 %v500
        %v669 = vunpack.c.l.b16 %v501
        %v670 = vunpack.c.l.b16 %v502
        %v671 = vunpack.c.l.b16 %v503
        %v672 = vunpack.c.l.b16 %v504
        %v673 = vunpack.c.l.b16 %v505
        %v674 = vunpack.c.l.b16 %v506
        %v675 = vunpack.c.l.b16 %v507
        %v676 = vunpack.c.l.b16 %v508
        %v677 = vunpack.c.l.b16 %v509
        %v678 = vunpack.c.l.b16 %v510
        %v679 = vunpack.c.l.b16 %v511
        %v680 = vunpack.c.l.b16 %v512
        %v681 = vunpack.c.l.b16 %v513
        %v682 = vunpack.c.l.b16 %v514
        %v683 = vpack.c.b16 %v620, %v619
        %v684 = vpack.c.b16 %v622, %v621
        %v685 = vpack.c.b16 %v624, %v623
        %v686 = vpack.c.b16 %v626, %v625
        %v687 = vpack.c.b16 %v628, %v627
        %v688 = vpack.c.b16 %v630, %v629
        %v689 = vpack.c.b16 %v632, %v631
        %v690 = vpack.c.b16 %v634, %v633
        %v691 = vpack.c.b16 %v636, %v635
        %v692 = vpack.c.b16 %v638, %v637
        %v693 = vpack.c.b16 %v640, %v639
        %v694 = vpack.c.b16 %v642, %v641
        %v695 = vpack.c.b16 %v644, %v643
        %v696 = vpack.c.b16 %v646, %v645
        %v697 = vpack.c.b16 %v648, %v647
        %v698 = vpack.c.b16 %v650, %v649
        %v699 = vpack.c.b16 %v652, %v651
        %v700 = vpack.c.b16 %v654, %v653
        %v701 = vpack.c.b16 %v656, %v655
        %v702 = vpack.c.b16 %v658, %v657
        %v703 = vpack.c.b16 %v660, %v659
        %v704 = vpack.c.b16 %v662, %v661
        %v705 = vpack.c.b16 %v664, %v663
        %v706 = vpack.c.b16 %v666, %v665
        %v707 = vpack.c.b16 %v668, %v667
        %v708 = vpack.c.b16 %v670, %v669
        %v709 = vpack.c.b16 %v672, %v671
        %v710 = vpack.c.b16 %v674, %v673
        %v711 = vpack.c.b16 %v676, %v675
        %v712 = vpack.c.b16 %v678, %v677
        %v713 = vpack.c.b16 %v680, %v679
        %v714 = vpack.c.b16 %v682, %v681
        %747 = vmatprep.subr.bf16.mxu0 0
        %748 = vmatpush1.bf16.msra.mxu0 %v690
        %749 = vmatprep.subr.bf16.mxu0 0
        %750 = vmatpush1.bf16.msra.mxu0 %v689
        %751 = vmatprep.subr.bf16.mxu0 0
        %752 = vmatpush1.bf16.msra.mxu0 %v688
        %753 = vmatprep.subr.bf16.mxu0 0
        %754 = vmatpush1.bf16.msra.mxu0 %v687
        %755 = vmatprep.subr.bf16.mxu0 0
        %756 = vmatpush1.bf16.msra.mxu0 %v686
        %757 = vmatprep.subr.bf16.mxu0 0
        %758 = vmatpush1.bf16.msra.mxu0 %v685
        %759 = vmatprep.subr.bf16.mxu0 0
        %760 = vmatpush1.bf16.msra.mxu0 %v684
        %761 = vmatprep.subr.bf16.mxu0 0
        %762 = vmatpush1.bf16.msra.mxu0 %v683
        %763 = vmatprep.subr.bf16.mxu0 0
        %764 = vmatpush2.bf16.msra.mxu0 %v698
        %765 = vmatprep.subr.bf16.mxu0 0
        %766 = vmatpush2.bf16.msra.mxu0 %v697
        %767 = vmatprep.subr.bf16.mxu0 0
        %768 = vmatpush2.bf16.msra.mxu0 %v696
        %769 = vmatprep.subr.bf16.mxu0 0
        %770 = vmatpush2.bf16.msra.mxu0 %v695
        %771 = vmatprep.subr.bf16.mxu0 0
        %772 = vmatpush2.bf16.msra.mxu0 %v694
        %773 = vmatprep.subr.bf16.mxu0 0
        %774 = vmatpush2.bf16.msra.mxu0 %v693
        %775 = vmatprep.subr.bf16.mxu0 0
        %776 = vmatpush2.bf16.msra.mxu0 %v692
        %777 = vmatprep.subr.bf16.mxu0 0
        %778 = vmatpush2.bf16.msra.mxu0 %v691
        %779 = vmatprep.mubr.bf16.mxu0 %v540
        %780 = vmatmul.mubr.bf16.gmra.mxu0 %v539
        %v781 = vpop.f32.mrf.mxu0
        %v782 = vadd.f32 0.0, %v781
        %v783 = vpop.f32.mrf.mxu0
        %v784 = vpop.f32.mrf.mxu0
        %v785 = vadd.f32 0.0, %v784
        %v786 = vpop.f32.mrf.mxu0
        %787 = vmatprep.mubr.bf16.mxu0 %v544
        %788 = vmatmul.mubr.bf16.gmra.mxu0 %v543
        %v789 = vpop.f32.mrf.mxu0
        %v790 = vadd.f32 0.0, %v789
        %v791 = vpop.f32.mrf.mxu0
        %v792 = vpop.f32.mrf.mxu0
        %v793 = vadd.f32 0.0, %v792
        %v794 = vpop.f32.mrf.mxu0
        %795 = vdwg.mxu0
        %796 = vmatprep.subr.bf16.mxu0 0
        %797 = vmatpush1.bf16.msra.mxu0 %v706
        %798 = vmatprep.subr.bf16.mxu0 0
        %799 = vmatpush1.bf16.msra.mxu0 %v705
        %800 = vmatprep.subr.bf16.mxu0 0
        %801 = vmatpush1.bf16.msra.mxu0 %v704
        %802 = vmatprep.subr.bf16.mxu0 0
        %803 = vmatpush1.bf16.msra.mxu0 %v703
        %804 = vmatprep.subr.bf16.mxu0 0
        %805 = vmatpush1.bf16.msra.mxu0 %v702
        %806 = vmatprep.subr.bf16.mxu0 0
        %807 = vmatpush1.bf16.msra.mxu0 %v701
        %808 = vmatprep.subr.bf16.mxu0 0
        %809 = vmatpush1.bf16.msra.mxu0 %v700
        %810 = vmatprep.subr.bf16.mxu0 0
        %811 = vmatpush1.bf16.msra.mxu0 %v699
        %812 = vmatprep.subr.bf16.mxu0 0
        %813 = vmatpush2.bf16.msra.mxu0 %v714
        %814 = vmatprep.subr.bf16.mxu0 0
        %815 = vmatpush2.bf16.msra.mxu0 %v713
        %816 = vmatprep.subr.bf16.mxu0 0
        %817 = vmatpush2.bf16.msra.mxu0 %v712
        %818 = vmatprep.subr.bf16.mxu0 0
        %819 = vmatpush2.bf16.msra.mxu0 %v711
        %820 = vmatprep.subr.bf16.mxu0 0
        %821 = vmatpush2.bf16.msra.mxu0 %v710
        %822 = vmatprep.subr.bf16.mxu0 0
        %823 = vmatpush2.bf16.msra.mxu0 %v709
        %824 = vmatprep.subr.bf16.mxu0 0
        %825 = vmatpush2.bf16.msra.mxu0 %v708
        %826 = vmatprep.subr.bf16.mxu0 0
        %827 = vmatpush2.bf16.msra.mxu0 %v707
        %828 = vmatprep.mubr.bf16.mxu0 %v542
        %829 = vmatmul.mubr.bf16.gmra.mxu0 %v541
        %v830 = vpop.f32.mrf.mxu0
        %v831 = vadd.f32 %v782, %v830
        %v832 = vpop.f32.mrf.mxu0
        %v833 = vpop.f32.mrf.mxu0
        %v834 = vadd.f32 %v785, %v833
        %v835 = vpop.f32.mrf.mxu0
        %836 = vmatprep.mubr.bf16.mxu0 %v546
        %837 = vmatmul.mubr.bf16.gmra.mxu0 %v545
        %v838 = vpop.f32.mrf.mxu0
        %v839 = vadd.f32 %v790, %v838
        %v840 = vpop.f32.mrf.mxu0
        %v841 = vpop.f32.mrf.mxu0
        %v842 = vadd.f32 %v793, %v841
        %v843 = vpop.f32.mrf.mxu0
        %844 = vdwg.mxu0
        %v845 = vadd.f32 %v439, %v831
        %v846 = vadd.f32 %v440, %v834
        %v847 = vadd.f32 %v441, %v839
        %v848 = vadd.f32 %v442, %v842
        %vm849 = vcmask 523264
        %850 = vst.msk [vmem:[%s427] sm:$0xff] %vm849, %v845
        %851 = vst.msk [vmem:[%s427 + $0x8] sm:$0xff] %vm849, %v846
        %852 = vst.msk [vmem:[%s427 + $0x10] sm:$0xff] %vm849, %v847
        %853 = vst.msk [vmem:[%s427 + $0x18] sm:$0xff] %vm849, %v848
        %p854 = scmp.eq.s32.totalorder %s24, 1
        // Predicated region
        $region72: #{transformer_encoder_decoder_seg_forward.42} parent=62 // pred_check
          %p855 = pneg %p854
        $region73: #{transformer_encoder_decoder_seg_forward.42} parent=62 // pred_check_branch
          %857 = sbr.rel (%p855) target = $region75
        $region74: #{transformer_encoder_decoder_seg_forward.42} parent=62 // pred_region
          %v858 = vld [vmem:[%s427] sm:$0xff]
          %v859 = vld [vmem:[%s427 + $0x8] sm:$0xff]
          %v860 = vld [vmem:[%s427 + $0x10] sm:$0xff]
          %v861 = vld [vmem:[%s427 + $0x18] sm:$0xff]
          %v862 = vld [vmem:[%s404] sm:$0x1]
          %v864 = vlaneseq
          %v865 = vshrl.u32 %v864, 7
          %v866 = vsub.s32 0, %v865
          %v867 = vrot.slane %v862, %v866
          %v869 = vadd.f32 %v858, %v867
          %v870 = vadd.f32 %v859, %v867
          %v871 = vadd.f32 %v860, %v867
          %v872 = vadd.f32 %v861, %v867
          %v873 = vld [vmem:[%s412] sm:$0xff]
          %v874 = vld [vmem:[%s412 + $0x8] sm:$0xff]
          %v875 = vld [vmem:[%s412 + $0x10] sm:$0xff]
          %v876 = vld [vmem:[%s412 + $0x18] sm:$0xff]
          %v877 = vadd.f32 %v869, %v873
          %v878 = vadd.f32 %v870, %v874
          %v879 = vadd.f32 %v871, %v875
          %v880 = vadd.f32 %v872, %v876
          %v881 = vsel %vm849, %v877, 0.0
          %882 = vadd.xlane.f32.xlu0 %v881
          %v883 = vpop.xlane.xlu0 %882
          %v884 = vsel %vm849, %v878, 0.0
          %885 = vadd.xlane.f32.xlu0 %v884
          %v886 = vpop.xlane.xlu0 %885
          %v887 = vsel %vm849, %v879, 0.0
          %888 = vadd.xlane.f32.xlu0 %v887
          %v889 = vpop.xlane.xlu0 %888
          %v890 = vsel %vm849, %v880, 0.0
          %891 = vadd.xlane.f32.xlu0 %v890
          %v892 = vpop.xlane.xlu0 %891
          %v893 = vrcp.pop 64.0
          %v894 = vmul.f32 %v883, %v893
          %v895 = vmul.f32 %v886, %v893
          %v896 = vmul.f32 %v889, %v893
          %v897 = vmul.f32 %v892, %v893
          %v898 = vsub.f32 %v877, %v894
          %v899 = vsub.f32 %v878, %v895
          %v900 = vsub.f32 %v879, %v896
          %v901 = vsub.f32 %v880, %v897
          %v902 = vmul.f32 %v898, %v898
          %v903 = vmul.f32 %v899, %v899
          %v904 = vmul.f32 %v900, %v900
          %v905 = vmul.f32 %v901, %v901
          %v906 = vsel %vm849, %v902, 0.0
          %907 = vadd.xlane.f32.xlu0 %v906
          %v908 = vpop.xlane.xlu0 %907
          %v909 = vsel %vm849, %v903, 0.0
          %910 = vadd.xlane.f32.xlu0 %v909
          %v911 = vpop.xlane.xlu0 %910
          %v912 = vsel %vm849, %v904, 0.0
          %913 = vadd.xlane.f32.xlu0 %v912
          %v914 = vpop.xlane.xlu0 %913
          %v915 = vsel %vm849, %v905, 0.0
          %916 = vadd.xlane.f32.xlu0 %v915
          %v917 = vpop.xlane.xlu0 %916
          %v918 = vmul.f32 %v908, %v893
          %v919 = vmul.f32 %v911, %v893
          %v920 = vmul.f32 %v914, %v893
          %v921 = vmul.f32 %v917, %v893
          %v922 = vadd.f32 %v918, 1e-05
          %v923 = vadd.f32 %v919, 1e-05
          %v924 = vadd.f32 %v920, 1e-05
          %v925 = vadd.f32 %v921, 1e-05
          %v926 = vrsqrt.pop %v922
          %v927 = vrsqrt.pop %v923
          %v928 = vrsqrt.pop %v924
          %v929 = vrsqrt.pop %v925
          %v930 = vmul.f32 %v898, %v926
          %v931 = vmul.f32 %v899, %v927
          %v932 = vmul.f32 %v900, %v928
          %v933 = vmul.f32 %v901, %v929
          %v934 = vld [vmem:[%s416] sm:$0x1]
          %v936 = vlaneseq
          %v937 = vshrl.u32 %v936, 7
          %v938 = vsub.s32 0, %v937
          %v939 = vrot.slane %v934, %v938
          %v941 = vmul.f32 %v930, %v939
          %v942 = vmul.f32 %v931, %v939
          %v943 = vmul.f32 %v932, %v939
          %v944 = vmul.f32 %v933, %v939
          %v945 = vld [vmem:[%s419] sm:$0x1]
          %v947 = vlaneseq
          %v948 = vshrl.u32 %v947, 7
          %v949 = vsub.s32 0, %v948
          %v950 = vrot.slane %v945, %v949
          %v952 = vadd.f32 %v941, %v950
          %v953 = vadd.f32 %v942, %v950
          %v954 = vadd.f32 %v943, %v950
          %v955 = vadd.f32 %v944, %v950
          %956 = vst.msk [vmem:[%s427] sm:$0xff] %vm849, %v952
          %957 = vst.msk [vmem:[%s427 + $0x8] sm:$0xff] %vm849, %v953
          %958 = vst.msk [vmem:[%s427 + $0x10] sm:$0xff] %vm849, %v954
          %959 = vst.msk [vmem:[%s427 + $0x18] sm:$0xff] %vm849, %v955
        $region75: #{transformer_encoder_decoder_seg_forward.42} parent=62 // pred_fallthru
          _
        %s960 = smul.u32 4, %s22
        %p961 = scmp.lt.s32.totalorder %s960, 3
        %s962 = scalar_select %p961, %s960, 3
        %p963 = scmp.lt.s32.totalorder %s23, 0
        %s964 = scalar_select %p963, %s23, 0
        %s965 = sadd.s32 %s964, %s962
        %s966 = smul.addr %s965, 8
        %s967 = scalar_lea.vmem %s6, %s966
        // Predicated region
        $region76: #{transformer_encoder_decoder_seg_forward.42} parent=62 // pred_check
          %p968 = pneg %p218
        $region77: #{transformer_encoder_decoder_seg_forward.42} parent=62 // pred_check_branch
          %970 = sbr.rel (%p968) target = $region79
        $region78: #{transformer_encoder_decoder_seg_forward.42} parent=62 // pred_region
          %s971 = smul.u32 4, %s22
        $region79: #{transformer_encoder_decoder_seg_forward.42} parent=62 // pred_fallthru
          _
        // Predicated region
        $region80: #{transformer_encoder_decoder_seg_forward.42} parent=62 // pred_check
          %p972 = pneg %p218
        $region81: #{transformer_encoder_decoder_seg_forward.42} parent=62 // pred_check_branch
          %974 = sbr.rel (%p972) target = $region83
        $region82: #{transformer_encoder_decoder_seg_forward.42} parent=62 // pred_region
          %s975 = smul.u32 4, %s22
          %p976 = scmp.lt.s32.totalorder %s975, 3
          %s977 = scalar_select %p976, %s975, 3
          %p978 = scmp.lt.s32.totalorder %s23, 0
          %s979 = scalar_select %p978, %s23, 0
          %s980 = sadd.s32 %s979, %s977
          %s981 = smul.addr %s980, 8
          %s982 = scalar_lea.vmem %s6, %s981
        $region83: #{transformer_encoder_decoder_seg_forward.42} parent=62 // pred_fallthru
          _
      $region63: #{transformer_encoder_decoder_seg_forward.42} parent=5 // pred_fallthru
        _
      %p983 = scmp.le.s32.totalorder 2, %s12
      // Predicated region
      $region84: #{transformer_encoder_decoder_seg_forward.42} parent=5 // pred_check
        %p984 = pneg %p983
      $region85: #{transformer_encoder_decoder_seg_forward.42} parent=5 // pred_check_branch
        %986 = sbr.rel (%p984) target = $region87
      $region86: #{transformer_encoder_decoder_seg_forward.42} parent=5 // pred_region
        %s987 = ssub.s32 %s12, 2
      $region87: #{transformer_encoder_decoder_seg_forward.42} parent=5 // pred_fallthru
        _
    $region6: #{transformer_encoder_decoder_seg_forward.42} parent=1 // loop_footer
      %s16 = sadd.s32 1, %s12
    $region7: #{transformer_encoder_decoder_seg_forward.42} parent=1 // loop_footer_branch
      %11 = sbr.rel target = $region3
    $region8: #{transformer_encoder_decoder_seg_forward.42} parent=1 // loop_exit
      _

// kernel: transformer_encoder_decoder_seg_forward.43
$region0: #{transformer_encoder_decoder_seg_forward.43}
  #allocation0 [shape = 'u32[]', space=smem, size = 0x4, offset = 0x4, fixed_abs, tag = 'smem constant byte address 0x4 - core index']
  #allocation1 [shape = 'u32[144,128]{1,0:T(1,128)}', space=vmem, size = 0x12000, scoped, tag = 'internal scratch']
  %s0 = inlined_call_operand.vmem [shape: bf16[32,64], index: 0, kind: input, shape index: {}]
  %s1 = inlined_call_operand.vmem [shape: bf16[64,128], index: 1, kind: input, shape index: {}]
  %s2 = inlined_call_operand.vmem [shape: f32[1,128], index: 2, kind: input, shape index: {}]
  %s3 = inlined_call_operand.hbm [shape: f32[32,128], index: 3, kind: output, shape index: {}]
  %s4 = sld [smem:[#allocation0]]
  $region30: #{transformer_encoder_decoder_seg_forward.43} parent=0
    _
  %s6 = ssub.s32 1, %s4
  %s7 = scalar_select 0, %s6, %s4
  $region1: #{transformer_encoder_decoder_seg_forward.43} parent=0
    #allocation2 [shape = 'u8[16384]{0}', space=vmem, size = 0x4000, scoped, tag = 'output window, operand 0, single buffered']
    #allocation3 [shape = 's32[1]{0}', space=sflag, size = 0x4, scoped, tag = 'scoped memory for transformer_encoder_decoder_seg_forward.43']
    %8 = vsyncpa [#allocation3], 0
    // Predicated region
    $region2: #{transformer_encoder_decoder_seg_forward.43} parent=1 // pred_check
      _
    $region3: #{transformer_encoder_decoder_seg_forward.43} parent=1 // pred_check_branch
      %10 = sbr.rel (0) target = $region5
    $region4: #{transformer_encoder_decoder_seg_forward.43} parent=1 // pred_region
      _
    $region5: #{transformer_encoder_decoder_seg_forward.43} parent=1 // pred_fallthru
      _
    // Predicated region
    $region6: #{transformer_encoder_decoder_seg_forward.43} parent=1 // pred_check
      _
    $region7: #{transformer_encoder_decoder_seg_forward.43} parent=1 // pred_check_branch
      %12 = sbr.rel (0) target = $region9
    $region8: #{transformer_encoder_decoder_seg_forward.43} parent=1 // pred_region
      _
    $region9: #{transformer_encoder_decoder_seg_forward.43} parent=1 // pred_fallthru
      _
    // Predicated region
    $region10: #{transformer_encoder_decoder_seg_forward.43} parent=1 // pred_check
      _
    $region11: #{transformer_encoder_decoder_seg_forward.43} parent=1 // pred_check_branch
      %14 = sbr.rel (0) target = $region13
    $region12: #{transformer_encoder_decoder_seg_forward.43} parent=1 // pred_region
      _
    $region13: #{transformer_encoder_decoder_seg_forward.43} parent=1 // pred_fallthru
      _
    %p16 = scmp.eq.s32.totalorder 0, 0
    // Predicated region
    $region14: #{transformer_encoder_decoder_seg_forward.43} parent=1 // pred_check
      %p17 = pneg %p16
    $region15: #{transformer_encoder_decoder_seg_forward.43} parent=1 // pred_check_branch
      %19 = sbr.rel (%p17) target = $region17
    $region16: #{transformer_encoder_decoder_seg_forward.43} parent=1 // pred_region
      %20 = vst [vmem:[#allocation2] sm:$0xff] 0.0
      %21 = vst [vmem:[#allocation2 + $0x8] sm:$0xff] 0.0
      %22 = vst [vmem:[#allocation2 + $0x10] sm:$0xff] 0.0
      %23 = vst [vmem:[#allocation2 + $0x18] sm:$0xff] 0.0
    $region17: #{transformer_encoder_decoder_seg_forward.43} parent=1 // pred_fallthru
      _
    %v24 = vld [vmem:[#allocation2] sm:$0xff]
    %v25 = vld [vmem:[#allocation2 + $0x8] sm:$0xff]
    %v26 = vld [vmem:[#allocation2 + $0x10] sm:$0xff]
    %v27 = vld [vmem:[#allocation2 + $0x18] sm:$0xff]
    %v28 = vld [vmem:[%s0] sm:$0xf]
    %v29 = vld [vmem:[%s0 + $0x4] sm:$0xf]
    %v30 = vld [vmem:[%s0 + $0x8] sm:$0xf]
    %v31 = vld [vmem:[%s0 + $0xc] sm:$0xf]
    %v32 = vld [vmem:[%s1] sm:$0xf]
    %v33 = vld [vmem:[%s1 + $0x4] sm:$0xf]
    %v34 = vld [vmem:[%s1 + $0x8] sm:$0xf]
    %v35 = vld [vmem:[%s1 + $0xc] sm:$0xf]
    %v36 = vld [vmem:[%s1 + $0x10] sm:$0xf]
    %v37 = vld [vmem:[%s1 + $0x14] sm:$0xf]
    %v38 = vld [vmem:[%s1 + $0x18] sm:$0xf]
    %v39 = vld [vmem:[%s1 + $0x1c] sm:$0xf]
    %v44 = vunpack.c.l.b16 %v28
    %v45 = vunpack.c.l.b16 %v29
    %v46 = vunpack.c.l.b16 %v30
    %v47 = vunpack.c.l.b16 %v31
    %v48 = vpack.c.b16 %v45, %v44
    %v49 = vpack.c.b16 %v47, %v46
    %v58 = vunpack.c.l.b16 %v32
    %v59 = vunpack.c.l.b16 %v33
    %v60 = vunpack.c.l.b16 %v34
    %v61 = vunpack.c.l.b16 %v35
    %v62 = vunpack.c.l.b16 %v36
    %v63 = vunpack.c.l.b16 %v37
    %v64 = vunpack.c.l.b16 %v38
    %v65 = vunpack.c.l.b16 %v39
    %v66 = vpack.c.b16 %v59, %v58
    %v67 = vpack.c.b16 %v61, %v60
    %v68 = vpack.c.b16 %v63, %v62
    %v69 = vpack.c.b16 %v65, %v64
    %vm74 = vcmask 523264
    %v76 = vsel %vm74, %v48, 0
    %v79 = vsel %vm74, %v49, 0
    %81 = vmatprep.subr.bf16.mxu0 0
    %82 = vmatpush1.bf16.msra.mxu0 0
    %83 = vmatprep.subr.bf16.mxu0 0
    %84 = vmatpush1.bf16.msra.mxu0 0
    %85 = vmatprep.subr.bf16.mxu0 0
    %86 = vmatpush1.bf16.msra.mxu0 0
    %87 = vmatprep.subr.bf16.mxu0 0
    %88 = vmatpush1.bf16.msra.mxu0 0
    %89 = vmatprep.subr.bf16.mxu0 0
    %90 = vmatpush1.bf16.msra.mxu0 %v69
    %91 = vmatprep.subr.bf16.mxu0 0
    %92 = vmatpush1.bf16.msra.mxu0 %v68
    %93 = vmatprep.subr.bf16.mxu0 0
    %94 = vmatpush1.bf16.msra.mxu0 %v67
    %95 = vmatprep.subr.bf16.mxu0 0
    %96 = vmatpush1.bf16.msra.mxu0 %v66
    %97 = vmatprep.subr.bf16.mxu0 0
    %98 = vmatpush2.bf16.msra.mxu0 0
    %99 = vmatprep.subr.bf16.mxu0 0
    %100 = vmatpush2.bf16.msra.mxu0 0
    %101 = vmatprep.subr.bf16.mxu0 0
    %102 = vmatpush2.bf16.msra.mxu0 0
    %103 = vmatprep.subr.bf16.mxu0 0
    %104 = vmatpush2.bf16.msra.mxu0 0
    %105 = vmatprep.subr.bf16.mxu0 0
    %106 = vmatpush2.bf16.msra.mxu0 0
    %107 = vmatprep.subr.bf16.mxu0 0
    %108 = vmatpush2.bf16.msra.mxu0 0
    %109 = vmatprep.subr.bf16.mxu0 0
    %110 = vmatpush2.bf16.msra.mxu0 0
    %111 = vmatprep.subr.bf16.mxu0 0
    %112 = vmatpush2.bf16.msra.mxu0 0
    %113 = vmatprep.mubr.bf16.mxu0 0
    %114 = vmatmul.mubr.bf16.gmra.mxu0 %v76
    %v115 = vpop.f32.mrf.mxu0
    %v116 = vadd.f32 0.0, %v115
    %v117 = vpop.f32.mrf.mxu0
    %v118 = vpop.f32.mrf.mxu0
    %v119 = vadd.f32 0.0, %v118
    %v120 = vpop.f32.mrf.mxu0
    %121 = vmatprep.mubr.bf16.mxu0 0
    %122 = vmatmul.mubr.bf16.gmra.mxu0 %v79
    %v123 = vpop.f32.mrf.mxu0
    %v124 = vadd.f32 0.0, %v123
    %v125 = vpop.f32.mrf.mxu0
    %v126 = vpop.f32.mrf.mxu0
    %v127 = vadd.f32 0.0, %v126
    %v128 = vpop.f32.mrf.mxu0
    %129 = vdwg.mxu0
    %v130 = vadd.f32 %v24, %v116
    %v131 = vadd.f32 %v25, %v119
    %v132 = vadd.f32 %v26, %v124
    %v133 = vadd.f32 %v27, %v127
    %134 = vst [vmem:[#allocation2] sm:$0xff] %v130
    %135 = vst [vmem:[#allocation2 + $0x8] sm:$0xff] %v131
    %136 = vst [vmem:[#allocation2 + $0x10] sm:$0xff] %v132
    %137 = vst [vmem:[#allocation2 + $0x18] sm:$0xff] %v133
    // Predicated region
    $region18: #{transformer_encoder_decoder_seg_forward.43} parent=1 // pred_check
      %p138 = pneg %p16
    $region19: #{transformer_encoder_decoder_seg_forward.43} parent=1 // pred_check_branch
      %140 = sbr.rel (%p138) target = $region21
    $region20: #{transformer_encoder_decoder_seg_forward.43} parent=1 // pred_region
      %v141 = vld [vmem:[#allocation2] sm:$0xff]
      %v142 = vld [vmem:[#allocation2 + $0x8] sm:$0xff]
      %v143 = vld [vmem:[#allocation2 + $0x10] sm:$0xff]
      %v144 = vld [vmem:[#allocation2 + $0x18] sm:$0xff]
      %v145 = vld [vmem:[%s2] sm:$0x1]
      %v147 = vlaneseq
      %v148 = vshrl.u32 %v147, 7
      %v149 = vsub.s32 0, %v148
      %v150 = vrot.slane %v145, %v149
      %v152 = vadd.f32 %v141, %v150
      %v153 = vadd.f32 %v142, %v150
      %v154 = vadd.f32 %v143, %v150
      %v155 = vadd.f32 %v144, %v150
      %156 = vst [vmem:[#allocation2] sm:$0xff] %v152
      %157 = vst [vmem:[#allocation2 + $0x8] sm:$0xff] %v153
      %158 = vst [vmem:[#allocation2 + $0x10] sm:$0xff] %v154
      %159 = vst [vmem:[#allocation2 + $0x18] sm:$0xff] %v155
    $region21: #{transformer_encoder_decoder_seg_forward.43} parent=1 // pred_fallthru
      _
    // Predicated region
    $region22: #{transformer_encoder_decoder_seg_forward.43} parent=1 // pred_check
      _
    $region23: #{transformer_encoder_decoder_seg_forward.43} parent=1 // pred_check_branch
      %161 = sbr.rel (0) target = $region25
    $region24: #{transformer_encoder_decoder_seg_forward.43} parent=1 // pred_region
      %s163 = ssub.s32 512, 512
      %164 = vsyncadd [#allocation3], %s163
      %s165 = sshll.u32 [#allocation2], 4
      %s166 = int_to_ptr.vmem [resolvable:$true] %s165
      %171 = dma.vmem_to_hbm [thread:$0]  %s166, 512, %s3, [#allocation3], 128, 128, 8
    $region25: #{transformer_encoder_decoder_seg_forward.43} parent=1 // pred_fallthru
      _
    // Predicated region
    $region26: #{transformer_encoder_decoder_seg_forward.43} parent=1 // pred_check
      _
    $region27: #{transformer_encoder_decoder_seg_forward.43} parent=1 // pred_check_branch
      %173 = sbr.rel (0) target = $region29
    $region28: #{transformer_encoder_decoder_seg_forward.43} parent=1 // pred_region
      %174 = dma.done [#allocation3], 512
    $region29: #{transformer_encoder_decoder_seg_forward.43} parent=1 // pred_fallthru
      _
    %175 = vsyncpa [#allocation3], 1

</llo_original>
